<compile_context>
chip_gen: v7x
topology: tpu7x:2x2x1
jax: 0.10.0
libtpu: 0.0.40
codegen_flags: <defaults>
</compile_context>

<pallas_src>
import functools

import jax
import jax.numpy as jnp
import numpy as np
from jax.experimental import pallas as pl
from jax.experimental.pallas import tpu as pltpu

_LANE = 128


def _round_up(x, m):
    return (x + m - 1) // m * m


def _pad_to(x, shape):
    return jnp.pad(x, [(0, s - d) for d, s in zip(x.shape, shape)])


def _pad_last(x, n):
    pad = [(0, 0)] * (x.ndim - 1) + [(0, n - x.shape[-1])]
    return jnp.pad(x, pad)


def _pad_gate_cols(w, h, hp):
    """(K, 4*h) -> (K, 4*hp): zero-pad each of the i/f/g/o gate blocks from h to hp lanes."""
    k = w.shape[0]
    w = w.reshape(k, 4, h)
    w = jnp.pad(w, ((0, 0), (0, 0), (0, hp - h)))
    return w.reshape(k, 4 * hp)


def _attention_decoder_kernel(
    bH_ref,       # (bt, T, Dp)       encoder features (feature dim zero-padded to Dp)
    Hp_ref,       # (bt, T, Hp)       precomputed i2h(batch_H), hidden padded to Hp
    ohp_ref,      # (S, bt, 4*Hp)     precomputed one-hot @ w_ih_oh per step (gate-padded)
    w_h2h_ref,    # (Hp, Hp)
    b_h2h_ref,    # (1, Hp)
    w_score_ref,  # (Hp, 1)
    w_x_ref,      # (Dp + Hp, 4*Hp)   fused [w_ih_ctx ; w_hh]
    b_lstm_ref,   # (1, 4*Hp)         b_ih + b_hh (gate-padded)
    w_gen_ref,    # (Hp, Cp)
    b_gen_ref,    # (1, Cp)
    probs_ref,    # (S, bt, Cp)       output
):
    bt, _, _ = bH_ref.shape
    HP = w_h2h_ref.shape[0]
    S = ohp_ref.shape[0]
    f32 = jnp.float32

    # Load invariants once (resident for the whole recurrence).
    bH = bH_ref[...]
    Hp = Hp_ref[...]
    w_h2h = w_h2h_ref[...]
    b_h2h = b_h2h_ref[...]
    w_score = w_score_ref[...]
    w_x = w_x_ref[...]
    b_lstm = b_lstm_ref[...]
    w_gen = w_gen_ref[...]
    b_gen = b_gen_ref[...]

    def step(s, h, c):
        # --- attention ---
        hp = jnp.dot(h, w_h2h, preferred_element_type=f32) + b_h2h        # (bt, Hp)
        t = jnp.tanh(Hp + hp[:, None, :])                                  # (bt, T, Hp)
        # score on the MXU: (bt, T, Hp) x (Hp, 1) -> (bt, T, 1)
        e = jax.lax.dot_general(t, w_score, (((2,), (0,)), ((), ())),
                                preferred_element_type=f32)
        e_max = jnp.max(e, axis=1, keepdims=True)
        p = jnp.exp(e - e_max)
        alpha = p * pl.reciprocal(jnp.sum(p, axis=1, keepdims=True), approx=False)
        # context = sum_t alpha * batch_H, contracted on the MXU:
        # (bt, T, 1) x (bt, T, Dp) -> (bt, 1, Dp)
        ctx = jax.lax.dot_general(alpha, bH, (((1,), (1,)), ((0,), (0,))),
                                  preferred_element_type=f32)[:, 0, :]      # (bt, Dp)

        # --- LSTMCell on [context, char_onehot]: single fused gate matmul ---
        x = jnp.concatenate([ctx, h], axis=1)                               # (bt, Dp+Hp)
        gates = (jnp.dot(x, w_x, preferred_element_type=f32)
                 + ohp_ref[s] + b_lstm)                                     # (bt, 4*Hp)
        i_g = jax.nn.sigmoid(gates[:, 0 * HP:1 * HP])
        f_g = jax.nn.sigmoid(gates[:, 1 * HP:2 * HP])
        g_g = jnp.tanh(gates[:, 2 * HP:3 * HP])
        o_g = jax.nn.sigmoid(gates[:, 3 * HP:4 * HP])
        c_new = f_g * c + i_g * g_g
        h_new = o_g * jnp.tanh(c_new)

        # --- generator (lane-dense Cp-wide store) ---
        probs_ref[s] = jnp.dot(h_new, w_gen, preferred_element_type=f32) + b_gen
        return h_new, c_new

    h = jnp.zeros((bt, HP), f32)
    c = jnp.zeros((bt, HP), f32)
    # S is small and static: fully unroll at trace time (static store indices, LLO can
    # overlap adjacent steps' independent work).  For very large S switch to lax.fori_loop.
    for s in range(S):
        h, c = step(s, h, c)


def attention_forward(batch_H, text, params, *, num_classes, hidden_size,
                      batch_max_length, batch_tile=None):
    """Train-mode forward of the PyTorch `Attention` module."""
    B, T, Din = batch_H.shape
    H = hidden_size
    C = num_classes
    S = batch_max_length + 1

    HP = _round_up(H, _LANE)
    CP = _round_up(C, _LANE)
    DP = _round_up(Din, _LANE)
    G = 4 * HP
    f32 = jnp.float32

    bH = batch_H.astype(f32)

    # ---- step-invariant precompute (hoisted out of the recurrent kernel) ----
    # encoder projection Hp = i2h(batch_H), hidden padded to HP lanes
    w_i2h_t = params["w_i2h"].T.astype(f32)                     # (Din, H)
    Hp = jnp.einsum("btd,dh->bth", bH, w_i2h_t)                 # (B, T, H)
    Hp = _pad_last(Hp, HP)                                      # (B, T, HP)
    bH_p = _pad_last(bH, DP)                                    # (B, T, DP)

    # attention weights
    w_h2h = _pad_to(params["w_h2h"].T.astype(f32), (HP, HP))
    b_h2h = _pad_to(params["b_h2h"].astype(f32)[None, :], (1, HP))
    w_score = _pad_to(params["w_score"].astype(f32).T, (HP, 1))  # (HP, 1)

    # LSTM weights: split w_ih into context / one-hot parts; pad each gate block to HP lanes
    w_ih = params["w_ih"].astype(f32)                            # (4H, Din + C)
    w_ih_ctx = _pad_gate_cols(w_ih[:, :Din].T, H, HP)            # (Din, 4HP)
    w_ih_oh = _pad_gate_cols(w_ih[:, Din:].T, H, HP)             # (C,   4HP)
    w_hh_t = _pad_gate_cols(params["w_hh"].astype(f32).T, H, HP)  # (H,  4HP)
    w_x = jnp.concatenate(
        [_pad_to(w_ih_ctx, (DP, G)), _pad_to(w_hh_t, (HP, G))], axis=0)  # (DP+HP, 4HP)
    b_lstm = _pad_gate_cols(
        (params["b_ih"] + params["b_hh"]).astype(f32)[None, :], H, HP)   # (1, 4HP)

    # one-hot projection == row gather of w_ih_oh (no in-kernel (B,C)x(C,4H) matmul)
    oh_proj = jnp.take(w_ih_oh, text.astype(jnp.int32).T, axis=0)        # (S, B, 4HP)

    # generator
    w_gen = _pad_to(params["w_gen"].T.astype(f32), (HP, CP))
    b_gen = _pad_to(params["b_gen"].astype(f32)[None, :], (1, CP))

    # ---- grid: optional batch tiling ("parallel") for multi-TensorCore chips (v7x) ----
    bt = B if batch_tile is None else batch_tile
    if B % bt != 0:
        raise ValueError("batch_tile must divide the batch size")
    if bt != B and bt % 8 != 0:
        raise ValueError("batch_tile must equal B or be a multiple of 8 (sublane tiling)")
    n_bt = B // bt

    def _const(shape):
        nd = len(shape)
        return pl.BlockSpec(shape, lambda b, _nd=nd: (0,) * _nd)

    grid_spec = pltpu.PrefetchScalarGridSpec(
        num_scalar_prefetch=0,
        grid=(n_bt,),
        in_specs=[
            pl.BlockSpec((bt, T, DP), lambda b: (b, 0, 0)),   # batch_H (padded)
            pl.BlockSpec((bt, T, HP), lambda b: (b, 0, 0)),   # Hp
            pl.BlockSpec((S, bt, G), lambda b: (0, b, 0)),    # one-hot projections
            _const((HP, HP)),                                 # w_h2h
            _const((1, HP)),                                  # b_h2h
            _const((HP, 1)),                                  # w_score
            _const((DP + HP, G)),                             # fused gate weight
            _const((1, G)),                                   # LSTM bias
            _const((HP, CP)),                                 # w_gen
            _const((1, CP)),                                  # b_gen
        ],
        out_specs=pl.BlockSpec((S, bt, CP), lambda b: (0, b, 0)),
    )

    probs_steps = pl.pallas_call(
        _attention_decoder_kernel,
        out_shape=jax.ShapeDtypeStruct((S, B, CP), jnp.float32),
        grid_spec=grid_spec,
        compiler_params=pltpu.CompilerParams(
            dimension_semantics=("parallel",),  # batch tiles are independent
        ),
    )(bH_p, Hp, oh_proj, w_h2h, b_h2h, w_score, w_x, b_lstm, w_gen, b_gen)

    # (S, B, CP) -> (B, S, C): drop the padded class lanes.
    return jnp.transpose(probs_steps, (1, 0, 2))[:, :, :C]


def attention_forward_ref(batch_H, text, params, *, num_classes, hidden_size, batch_max_length):
    """Pure-JAX reference mirroring the PyTorch module exactly (train mode)."""
    B, T, Din = batch_H.shape
    H = hidden_size
    C = num_classes
    S = batch_max_length + 1
    h = jnp.zeros((B, H), jnp.float32)
    c = jnp.zeros((B, H), jnp.float32)
    out_hidden = []
    for i in range(S):
        onehot = jax.nn.one_hot(text[:, i], C, dtype=jnp.float32)
        Hp = jnp.einsum("btd,hd->bth", batch_H, params["w_i2h"])
        hp = h @ params["w_h2h"].T + params["b_h2h"]
        e = jnp.tanh(Hp + hp[:, None, :]) @ params["w_score"].T      # (B, T, 1)
        alpha = jax.nn.softmax(e, axis=1)
        context = jnp.sum(alpha * batch_H, axis=1)
        x = jnp.concatenate([context, onehot], axis=1)
        gates = x @ params["w_ih"].T + params["b_ih"] + h @ params["w_hh"].T + params["b_hh"]
        i_g, f_g, g_g, o_g = jnp.split(gates, 4, axis=1)
        c = jax.nn.sigmoid(f_g) * c + jax.nn.sigmoid(i_g) * jnp.tanh(g_g)
        h = jax.nn.sigmoid(o_g) * jnp.tanh(c)
        out_hidden.append(h)
    output_hiddens = jnp.stack(out_hidden, axis=1)                    # (B, S, H)
    return output_hiddens @ params["w_gen"].T + params["b_gen"]


def init_params(key, input_size, hidden_size, num_classes):
    """Deterministic synthetic parameters with the same shapes as the PyTorch module."""
    Din, H, C = input_size, hidden_size, num_classes
    ks = jax.random.split(key, 10)
    n = lambda k, shape: (0.1 * jax.random.normal(k, shape)).astype(jnp.float32)
    return {
        "w_i2h": n(ks[0], (H, Din)),              # nn.Linear(input_size, hidden_size, bias=False)
        "w_h2h": n(ks[1], (H, H)),                # nn.Linear(hidden_size, hidden_size)
        "b_h2h": n(ks[2], (H,)),
        "w_score": n(ks[3], (1, H)),              # nn.Linear(hidden_size, 1, bias=False)
        "w_ih": n(ks[4], (4 * H, Din + C)),       # LSTMCell(input_size + num_classes, hidden_size)
        "w_hh": n(ks[5], (4 * H, H)),
        "b_ih": n(ks[6], (4 * H,)),
        "b_hh": n(ks[7], (4 * H,)),
        "w_gen": n(ks[8], (C, H)),                # nn.Linear(hidden_size, num_classes)
        "b_gen": n(ks[9], (C,)),
    }


if __name__ == "__main__":
    B, T, Din = 2, 8, 32          # batch, num encoder steps, contextual feature channels
    H, C = 32, 38                 # hidden_size, num_classes
    batch_max_length = 7          # -> num_steps = 8

    key = jax.random.PRNGKey(0)
    k_p, k_h, k_t = jax.random.split(key, 3)
    params = init_params(k_p, Din, H, C)
    batch_H = jax.random.normal(k_h, (B, T, Din), dtype=jnp.float32)
    text = jax.random.randint(k_t, (B, batch_max_length + 1), 0, C, dtype=jnp.int32)

    fwd = functools.partial(
        attention_forward,
        num_classes=C, hidden_size=H, batch_max_length=batch_max_length,
    )
    probs = jax.jit(fwd)(batch_H, text, params)
    probs = jax.block_until_ready(probs)

    ref = attention_forward_ref(
        batch_H, text, params,
        num_classes=C, hidden_size=H, batch_max_length=batch_max_length,
    )
    np.testing.assert_allclose(np.asarray(probs), np.asarray(ref), rtol=1e-4, atol=1e-4)
    assert probs.shape == (B, batch_max_length + 1, C)
    # TODO(synk): the is_train=False greedy-decode branch (argmax feedback) is not implemented.
    print("KERNEL_OK")
</pallas_src>

<mosaic_0001>
module attributes {stable_mosaic.version = 11 : i64} {
  func.func @_attention_decoder_kernel(%arg0: i32, %arg1: memref<2x8x128xf32, #tpu.memory_space<vmem>>, %arg2: memref<2x8x128xf32, #tpu.memory_space<vmem>>, %arg3: memref<8x2x512xf32, #tpu.memory_space<vmem>>, %arg4: memref<128x128xf32, #tpu.memory_space<vmem>>, %arg5: memref<1x128xf32, #tpu.memory_space<vmem>>, %arg6: memref<128x1xf32, #tpu.memory_space<vmem>>, %arg7: memref<256x512xf32, #tpu.memory_space<vmem>>, %arg8: memref<1x512xf32, #tpu.memory_space<vmem>>, %arg9: memref<128x128xf32, #tpu.memory_space<vmem>>, %arg10: memref<1x128xf32, #tpu.memory_space<vmem>>, %arg11: memref<8x2x128xf32, #tpu.memory_space<vmem>>) attributes {dimension_semantics = [#tpu.dimension_semantics<parallel>], iteration_bounds = array<i64: 1>, scalar_prefetch = 0 : i64, scratch_operands = 0 : i64, tpu.core_type = #tpu.core_type<tc>, window_params = [{transform_indices = @transform_0, window_bounds = array<i64: 2, 8, 128>}, {transform_indices = @transform_1, window_bounds = array<i64: 2, 8, 128>}, {transform_indices = @transform_2, window_bounds = array<i64: 8, 2, 512>}, {pipeline_mode = #tpu.pipeline_mode<synchronous>, transform_indices = @transform_3, window_bounds = array<i64: 128, 128>}, {pipeline_mode = #tpu.pipeline_mode<synchronous>, transform_indices = @transform_4, window_bounds = array<i64: 1, 128>}, {pipeline_mode = #tpu.pipeline_mode<synchronous>, transform_indices = @transform_5, window_bounds = array<i64: 128, 1>}, {pipeline_mode = #tpu.pipeline_mode<synchronous>, transform_indices = @transform_6, window_bounds = array<i64: 256, 512>}, {pipeline_mode = #tpu.pipeline_mode<synchronous>, transform_indices = @transform_7, window_bounds = array<i64: 1, 512>}, {pipeline_mode = #tpu.pipeline_mode<synchronous>, transform_indices = @transform_8, window_bounds = array<i64: 128, 128>}, {pipeline_mode = #tpu.pipeline_mode<synchronous>, transform_indices = @transform_9, window_bounds = array<i64: 1, 128>}, {transform_indices = @transform_10, window_bounds = array<i64: 8, 2, 128>}]} {
    %c0 = arith.constant 0 : index
    %c0_0 = arith.constant 0 : index
    %c0_1 = arith.constant 0 : index
    %0 = vector.load %arg1[%c0, %c0_0, %c0_1] : memref<2x8x128xf32, #tpu.memory_space<vmem>>, vector<2x8x128xf32>
    %c0_2 = arith.constant 0 : index
    %c0_3 = arith.constant 0 : index
    %c0_4 = arith.constant 0 : index
    %1 = vector.load %arg2[%c0_2, %c0_3, %c0_4] : memref<2x8x128xf32, #tpu.memory_space<vmem>>, vector<2x8x128xf32>
    %c0_5 = arith.constant 0 : index
    %c0_6 = arith.constant 0 : index
    %2 = vector.load %arg4[%c0_5, %c0_6] : memref<128x128xf32, #tpu.memory_space<vmem>>, vector<128x128xf32>
    %c0_7 = arith.constant 0 : index
    %c0_8 = arith.constant 0 : index
    %3 = vector.load %arg5[%c0_7, %c0_8] : memref<1x128xf32, #tpu.memory_space<vmem>>, vector<1x128xf32>
    %c0_9 = arith.constant 0 : index
    %c0_10 = arith.constant 0 : index
    %4 = vector.load %arg6[%c0_9, %c0_10] : memref<128x1xf32, #tpu.memory_space<vmem>>, vector<128x1xf32>
    %c0_11 = arith.constant 0 : index
    %c0_12 = arith.constant 0 : index
    %5 = vector.load %arg7[%c0_11, %c0_12] : memref<256x512xf32, #tpu.memory_space<vmem>>, vector<256x512xf32>
    %c0_13 = arith.constant 0 : index
    %c0_14 = arith.constant 0 : index
    %6 = vector.load %arg8[%c0_13, %c0_14] : memref<1x512xf32, #tpu.memory_space<vmem>>, vector<1x512xf32>
    %c0_15 = arith.constant 0 : index
    %c0_16 = arith.constant 0 : index
    %7 = vector.load %arg9[%c0_15, %c0_16] : memref<128x128xf32, #tpu.memory_space<vmem>>, vector<128x128xf32>
    %c0_17 = arith.constant 0 : index
    %c0_18 = arith.constant 0 : index
    %8 = vector.load %arg10[%c0_17, %c0_18] : memref<1x128xf32, #tpu.memory_space<vmem>>, vector<1x128xf32>
    %cst = arith.constant 0.000000e+00 : f32
    %9 = vector.broadcast %cst : f32 to vector<2x128xf32>
    %cst_19 = arith.constant 0.000000e+00 : f32
    %10 = vector.broadcast %cst_19 : f32 to vector<2x128xf32>
    %cst_20 = arith.constant dense<0.000000e+00> : vector<2x128xf32>
    %11 = tpu.matmul %9, %2, %cst_20 {dimension_numbers = #tpu.dot_dimension_numbers<[1], [0], [0], [1], [0, 0, 1, 1], [], []>} : vector<2x128xf32>, vector<128x128xf32>, vector<2x128xf32> -> vector<2x128xf32>
    %12 = vector.broadcast %3 : vector<1x128xf32> to vector<2x128xf32>
    %13 = arith.addf %11, %12 : vector<2x128xf32>
    %14 = vector.shape_cast %13 : vector<2x128xf32> to vector<2x1x128xf32>
    %15 = vector.broadcast %14 : vector<2x1x128xf32> to vector<2x8x128xf32>
    %16 = arith.addf %1, %15 : vector<2x8x128xf32>
    %17 = math.tanh %16 : vector<2x8x128xf32>
    %cst_21 = arith.constant dense<0.000000e+00> : vector<2x8x1xf32>
    %18 = tpu.matmul %17, %4, %cst_21 {dimension_numbers = #tpu.dot_dimension_numbers<[2], [0], [0, 1], [1], [0, 0, 0, 1, 1, 1], [], []>} : vector<2x8x128xf32>, vector<128x1xf32>, vector<2x8x1xf32> -> vector<2x8x1xf32>
    %cst_22 = arith.constant dense<0xFF800000> : vector<2x1xf32>
    %19 = vector.multi_reduction <maximumf>, %18, %cst_22 [1] : vector<2x8x1xf32> to vector<2x1xf32>
    %20 = vector.shape_cast %19 : vector<2x1xf32> to vector<2x1x1xf32>
    %21 = vector.broadcast %20 : vector<2x1x1xf32> to vector<2x8x1xf32>
    %22 = arith.subf %18, %21 : vector<2x8x1xf32>
    %23 = math.exp %22 : vector<2x8x1xf32>
    %cst_23 = arith.constant dense<0.000000e+00> : vector<2x1xf32>
    %24 = vector.multi_reduction <add>, %23, %cst_23 [1] : vector<2x8x1xf32> to vector<2x1xf32>
    %25 = vector.shape_cast %24 : vector<2x1xf32> to vector<2x1x1xf32>
    %26 = tpu.reciprocal %25 : vector<2x1x1xf32> -> vector<2x1x1xf32>
    %27 = vector.broadcast %26 : vector<2x1x1xf32> to vector<2x8x1xf32>
    %28 = arith.mulf %23, %27 : vector<2x8x1xf32>
    %cst_24 = arith.constant dense<0.000000e+00> : vector<2x1x128xf32>
    %29 = tpu.matmul %28, %0, %cst_24 {dimension_numbers = #tpu.dot_dimension_numbers<[1], [1], [2], [2], [0, 0, 0, 2, 1, 2], [0], [0]>} : vector<2x8x1xf32>, vector<2x8x128xf32>, vector<2x1x128xf32> -> vector<2x1x128xf32>
    %30 = vector.shape_cast %29 : vector<2x1x128xf32> to vector<2x128xf32>
    %31 = tpu.concatenate %30, %9 in 1 : vector<2x128xf32>, vector<2x128xf32> -> vector<2x256xf32>
    %cst_25 = arith.constant dense<0.000000e+00> : vector<2x512xf32>
    %32 = tpu.matmul %31, %5, %cst_25 {dimension_numbers = #tpu.dot_dimension_numbers<[1], [0], [0], [1], [0, 0, 1, 1], [], []>} : vector<2x256xf32>, vector<256x512xf32>, vector<2x512xf32> -> vector<2x512xf32>
    %c0_26 = arith.constant 0 : index
    %c0_27 = arith.constant 0 : index
    %c0_28 = arith.constant 0 : index
    %33 = vector.load %arg3[%c0_26, %c0_27, %c0_28] : memref<8x2x512xf32, #tpu.memory_space<vmem>>, vector<1x2x512xf32>
    %34 = vector.shape_cast %33 : vector<1x2x512xf32> to vector<2x512xf32>
    %35 = arith.addf %32, %34 : vector<2x512xf32>
    %36 = vector.broadcast %6 : vector<1x512xf32> to vector<2x512xf32>
    %37 = arith.addf %35, %36 : vector<2x512xf32>
    %38 = vector.extract_strided_slice %37 {offsets = [0, 0], sizes = [2, 128], strides = [1, 1]} : vector<2x512xf32> to vector<2x128xf32>
    %39 = arith.negf %38 : vector<2x128xf32>
    %40 = math.exp %39 : vector<2x128xf32>
    %cst_29 = arith.constant 1.000000e+00 : f32
    %41 = vector.broadcast %cst_29 : f32 to vector<2x128xf32>
    %42 = arith.addf %41, %40 : vector<2x128xf32>
    %43 = arith.divf %41, %42 : vector<2x128xf32>
    %44 = vector.extract_strided_slice %37 {offsets = [0, 128], sizes = [2, 128], strides = [1, 1]} : vector<2x512xf32> to vector<2x128xf32>
    %45 = arith.negf %44 : vector<2x128xf32>
    %46 = math.exp %45 : vector<2x128xf32>
    %cst_30 = arith.constant 1.000000e+00 : f32
    %47 = vector.broadcast %cst_30 : f32 to vector<2x128xf32>
    %48 = arith.addf %47, %46 : vector<2x128xf32>
    %49 = arith.divf %47, %48 : vector<2x128xf32>
    %50 = vector.extract_strided_slice %37 {offsets = [0, 256], sizes = [2, 128], strides = [1, 1]} : vector<2x512xf32> to vector<2x128xf32>
    %51 = math.tanh %50 : vector<2x128xf32>
    %52 = vector.extract_strided_slice %37 {offsets = [0, 384], sizes = [2, 128], strides = [1, 1]} : vector<2x512xf32> to vector<2x128xf32>
    %53 = arith.negf %52 : vector<2x128xf32>
    %54 = math.exp %53 : vector<2x128xf32>
    %cst_31 = arith.constant 1.000000e+00 : f32
    %55 = vector.broadcast %cst_31 : f32 to vector<2x128xf32>
    %56 = arith.addf %55, %54 : vector<2x128xf32>
    %57 = arith.divf %55, %56 : vector<2x128xf32>
    %58 = arith.mulf %49, %10 : vector<2x128xf32>
    %59 = arith.mulf %43, %51 : vector<2x128xf32>
    %60 = arith.addf %58, %59 : vector<2x128xf32>
    %61 = math.tanh %60 : vector<2x128xf32>
    %62 = arith.mulf %57, %61 : vector<2x128xf32>
    %cst_32 = arith.constant dense<0.000000e+00> : vector<2x128xf32>
    %63 = tpu.matmul %62, %7, %cst_32 {dimension_numbers = #tpu.dot_dimension_numbers<[1], [0], [0], [1], [0, 0, 1, 1], [], []>} : vector<2x128xf32>, vector<128x128xf32>, vector<2x128xf32> -> vector<2x128xf32>
    %64 = vector.broadcast %8 : vector<1x128xf32> to vector<2x128xf32>
    %65 = arith.addf %63, %64 : vector<2x128xf32>
    %c0_33 = arith.constant 0 : index
    %c0_34 = arith.constant 0 : index
    %c0_35 = arith.constant 0 : index
    %66 = vector.load %arg11[%c0_33, %c0_34, %c0_35] : memref<8x2x128xf32, #tpu.memory_space<vmem>>, vector<1x2x128xf32>
    %67 = vector.shape_cast %66 : vector<1x2x128xf32> to vector<2x128xf32>
    %68 = vector.shape_cast %65 : vector<2x128xf32> to vector<1x2x128xf32>
    tpu.vector_store %arg11[%c0_33, %c0_34, %c0_35], %68 {strides = array<i32>} : memref<8x2x128xf32, #tpu.memory_space<vmem>>, vector<1x2x128xf32>,
    %cst_36 = arith.constant dense<0.000000e+00> : vector<2x128xf32>
    %69 = tpu.matmul %62, %2, %cst_36 {dimension_numbers = #tpu.dot_dimension_numbers<[1], [0], [0], [1], [0, 0, 1, 1], [], []>} : vector<2x128xf32>, vector<128x128xf32>, vector<2x128xf32> -> vector<2x128xf32>
    %70 = vector.broadcast %3 : vector<1x128xf32> to vector<2x128xf32>
    %71 = arith.addf %69, %70 : vector<2x128xf32>
    %72 = vector.shape_cast %71 : vector<2x128xf32> to vector<2x1x128xf32>
    %73 = vector.broadcast %72 : vector<2x1x128xf32> to vector<2x8x128xf32>
    %74 = arith.addf %1, %73 : vector<2x8x128xf32>
    %75 = math.tanh %74 : vector<2x8x128xf32>
    %cst_37 = arith.constant dense<0.000000e+00> : vector<2x8x1xf32>
    %76 = tpu.matmul %75, %4, %cst_37 {dimension_numbers = #tpu.dot_dimension_numbers<[2], [0], [0, 1], [1], [0, 0, 0, 1, 1, 1], [], []>} : vector<2x8x128xf32>, vector<128x1xf32>, vector<2x8x1xf32> -> vector<2x8x1xf32>
    %cst_38 = arith.constant dense<0xFF800000> : vector<2x1xf32>
    %77 = vector.multi_reduction <maximumf>, %76, %cst_38 [1] : vector<2x8x1xf32> to vector<2x1xf32>
    %78 = vector.shape_cast %77 : vector<2x1xf32> to vector<2x1x1xf32>
    %79 = vector.broadcast %78 : vector<2x1x1xf32> to vector<2x8x1xf32>
    %80 = arith.subf %76, %79 : vector<2x8x1xf32>
    %81 = math.exp %80 : vector<2x8x1xf32>
    %cst_39 = arith.constant dense<0.000000e+00> : vector<2x1xf32>
    %82 = vector.multi_reduction <add>, %81, %cst_39 [1] : vector<2x8x1xf32> to vector<2x1xf32>
    %83 = vector.shape_cast %82 : vector<2x1xf32> to vector<2x1x1xf32>
    %84 = tpu.reciprocal %83 : vector<2x1x1xf32> -> vector<2x1x1xf32>
    %85 = vector.broadcast %84 : vector<2x1x1xf32> to vector<2x8x1xf32>
    %86 = arith.mulf %81, %85 : vector<2x8x1xf32>
    %cst_40 = arith.constant dense<0.000000e+00> : vector<2x1x128xf32>
    %87 = tpu.matmul %86, %0, %cst_40 {dimension_numbers = #tpu.dot_dimension_numbers<[1], [1], [2], [2], [0, 0, 0, 2, 1, 2], [0], [0]>} : vector<2x8x1xf32>, vector<2x8x128xf32>, vector<2x1x128xf32> -> vector<2x1x128xf32>
    %88 = vector.shape_cast %87 : vector<2x1x128xf32> to vector<2x128xf32>
    %89 = tpu.concatenate %88, %62 in 1 : vector<2x128xf32>, vector<2x128xf32> -> vector<2x256xf32>
    %cst_41 = arith.constant dense<0.000000e+00> : vector<2x512xf32>
    %90 = tpu.matmul %89, %5, %cst_41 {dimension_numbers = #tpu.dot_dimension_numbers<[1], [0], [0], [1], [0, 0, 1, 1], [], []>} : vector<2x256xf32>, vector<256x512xf32>, vector<2x512xf32> -> vector<2x512xf32>
    %c1 = arith.constant 1 : index
    %c0_42 = arith.constant 0 : index
    %c0_43 = arith.constant 0 : index
    %91 = vector.load %arg3[%c1, %c0_42, %c0_43] : memref<8x2x512xf32, #tpu.memory_space<vmem>>, vector<1x2x512xf32>
    %92 = vector.shape_cast %91 : vector<1x2x512xf32> to vector<2x512xf32>
    %93 = arith.addf %90, %92 : vector<2x512xf32>
    %94 = vector.broadcast %6 : vector<1x512xf32> to vector<2x512xf32>
    %95 = arith.addf %93, %94 : vector<2x512xf32>
    %96 = vector.extract_strided_slice %95 {offsets = [0, 0], sizes = [2, 128], strides = [1, 1]} : vector<2x512xf32> to vector<2x128xf32>
    %97 = arith.negf %96 : vector<2x128xf32>
    %98 = math.exp %97 : vector<2x128xf32>
    %cst_44 = arith.constant 1.000000e+00 : f32
    %99 = vector.broadcast %cst_44 : f32 to vector<2x128xf32>
    %100 = arith.addf %99, %98 : vector<2x128xf32>
    %101 = arith.divf %99, %100 : vector<2x128xf32>
    %102 = vector.extract_strided_slice %95 {offsets = [0, 128], sizes = [2, 128], strides = [1, 1]} : vector<2x512xf32> to vector<2x128xf32>
    %103 = arith.negf %102 : vector<2x128xf32>
    %104 = math.exp %103 : vector<2x128xf32>
    %cst_45 = arith.constant 1.000000e+00 : f32
    %105 = vector.broadcast %cst_45 : f32 to vector<2x128xf32>
    %106 = arith.addf %105, %104 : vector<2x128xf32>
    %107 = arith.divf %105, %106 : vector<2x128xf32>
    %108 = vector.extract_strided_slice %95 {offsets = [0, 256], sizes = [2, 128], strides = [1, 1]} : vector<2x512xf32> to vector<2x128xf32>
    %109 = math.tanh %108 : vector<2x128xf32>
    %110 = vector.extract_strided_slice %95 {offsets = [0, 384], sizes = [2, 128], strides = [1, 1]} : vector<2x512xf32> to vector<2x128xf32>
    %111 = arith.negf %110 : vector<2x128xf32>
    %112 = math.exp %111 : vector<2x128xf32>
    %cst_46 = arith.constant 1.000000e+00 : f32
    %113 = vector.broadcast %cst_46 : f32 to vector<2x128xf32>
    %114 = arith.addf %113, %112 : vector<2x128xf32>
    %115 = arith.divf %113, %114 : vector<2x128xf32>
    %116 = arith.mulf %107, %60 : vector<2x128xf32>
    %117 = arith.mulf %101, %109 : vector<2x128xf32>
    %118 = arith.addf %116, %117 : vector<2x128xf32>
    %119 = math.tanh %118 : vector<2x128xf32>
    %120 = arith.mulf %115, %119 : vector<2x128xf32>
    %cst_47 = arith.constant dense<0.000000e+00> : vector<2x128xf32>
    %121 = tpu.matmul %120, %7, %cst_47 {dimension_numbers = #tpu.dot_dimension_numbers<[1], [0], [0], [1], [0, 0, 1, 1], [], []>} : vector<2x128xf32>, vector<128x128xf32>, vector<2x128xf32> -> vector<2x128xf32>
    %122 = vector.broadcast %8 : vector<1x128xf32> to vector<2x128xf32>
    %123 = arith.addf %121, %122 : vector<2x128xf32>
    %c1_48 = arith.constant 1 : index
    %c0_49 = arith.constant 0 : index
    %c0_50 = arith.constant 0 : index
    %124 = vector.load %arg11[%c1_48, %c0_49, %c0_50] : memref<8x2x128xf32, #tpu.memory_space<vmem>>, vector<1x2x128xf32>
    %125 = vector.shape_cast %124 : vector<1x2x128xf32> to vector<2x128xf32>
    %126 = vector.shape_cast %123 : vector<2x128xf32> to vector<1x2x128xf32>
    tpu.vector_store %arg11[%c1_48, %c0_49, %c0_50], %126 {strides = array<i32>} : memref<8x2x128xf32, #tpu.memory_space<vmem>>, vector<1x2x128xf32>,
    %cst_51 = arith.constant dense<0.000000e+00> : vector<2x128xf32>
    %127 = tpu.matmul %120, %2, %cst_51 {dimension_numbers = #tpu.dot_dimension_numbers<[1], [0], [0], [1], [0, 0, 1, 1], [], []>} : vector<2x128xf32>, vector<128x128xf32>, vector<2x128xf32> -> vector<2x128xf32>
    %128 = vector.broadcast %3 : vector<1x128xf32> to vector<2x128xf32>
    %129 = arith.addf %127, %128 : vector<2x128xf32>
    %130 = vector.shape_cast %129 : vector<2x128xf32> to vector<2x1x128xf32>
    %131 = vector.broadcast %130 : vector<2x1x128xf32> to vector<2x8x128xf32>
    %132 = arith.addf %1, %131 : vector<2x8x128xf32>
    %133 = math.tanh %132 : vector<2x8x128xf32>
    %cst_52 = arith.constant dense<0.000000e+00> : vector<2x8x1xf32>
    %134 = tpu.matmul %133, %4, %cst_52 {dimension_numbers = #tpu.dot_dimension_numbers<[2], [0], [0, 1], [1], [0, 0, 0, 1, 1, 1], [], []>} : vector<2x8x128xf32>, vector<128x1xf32>, vector<2x8x1xf32> -> vector<2x8x1xf32>
    %cst_53 = arith.constant dense<0xFF800000> : vector<2x1xf32>
    %135 = vector.multi_reduction <maximumf>, %134, %cst_53 [1] : vector<2x8x1xf32> to vector<2x1xf32>
    %136 = vector.shape_cast %135 : vector<2x1xf32> to vector<2x1x1xf32>
    %137 = vector.broadcast %136 : vector<2x1x1xf32> to vector<2x8x1xf32>
    %138 = arith.subf %134, %137 : vector<2x8x1xf32>
    %139 = math.exp %138 : vector<2x8x1xf32>
    %cst_54 = arith.constant dense<0.000000e+00> : vector<2x1xf32>
    %140 = vector.multi_reduction <add>, %139, %cst_54 [1] : vector<2x8x1xf32> to vector<2x1xf32>
    %141 = vector.shape_cast %140 : vector<2x1xf32> to vector<2x1x1xf32>
    %142 = tpu.reciprocal %141 : vector<2x1x1xf32> -> vector<2x1x1xf32>
    %143 = vector.broadcast %142 : vector<2x1x1xf32> to vector<2x8x1xf32>
    %144 = arith.mulf %139, %143 : vector<2x8x1xf32>
    %cst_55 = arith.constant dense<0.000000e+00> : vector<2x1x128xf32>
    %145 = tpu.matmul %144, %0, %cst_55 {dimension_numbers = #tpu.dot_dimension_numbers<[1], [1], [2], [2], [0, 0, 0, 2, 1, 2], [0], [0]>} : vector<2x8x1xf32>, vector<2x8x128xf32>, vector<2x1x128xf32> -> vector<2x1x128xf32>
    %146 = vector.shape_cast %145 : vector<2x1x128xf32> to vector<2x128xf32>
    %147 = tpu.concatenate %146, %120 in 1 : vector<2x128xf32>, vector<2x128xf32> -> vector<2x256xf32>
    %cst_56 = arith.constant dense<0.000000e+00> : vector<2x512xf32>
    %148 = tpu.matmul %147, %5, %cst_56 {dimension_numbers = #tpu.dot_dimension_numbers<[1], [0], [0], [1], [0, 0, 1, 1], [], []>} : vector<2x256xf32>, vector<256x512xf32>, vector<2x512xf32> -> vector<2x512xf32>
    %c2 = arith.constant 2 : index
    %c0_57 = arith.constant 0 : index
    %c0_58 = arith.constant 0 : index
    %149 = vector.load %arg3[%c2, %c0_57, %c0_58] : memref<8x2x512xf32, #tpu.memory_space<vmem>>, vector<1x2x512xf32>
    %150 = vector.shape_cast %149 : vector<1x2x512xf32> to vector<2x512xf32>
    %151 = arith.addf %148, %150 : vector<2x512xf32>
    %152 = vector.broadcast %6 : vector<1x512xf32> to vector<2x512xf32>
    %153 = arith.addf %151, %152 : vector<2x512xf32>
    %154 = vector.extract_strided_slice %153 {offsets = [0, 0], sizes = [2, 128], strides = [1, 1]} : vector<2x512xf32> to vector<2x128xf32>
    %155 = arith.negf %154 : vector<2x128xf32>
    %156 = math.exp %155 : vector<2x128xf32>
    %cst_59 = arith.constant 1.000000e+00 : f32
    %157 = vector.broadcast %cst_59 : f32 to vector<2x128xf32>
    %158 = arith.addf %157, %156 : vector<2x128xf32>
    %159 = arith.divf %157, %158 : vector<2x128xf32>
    %160 = vector.extract_strided_slice %153 {offsets = [0, 128], sizes = [2, 128], strides = [1, 1]} : vector<2x512xf32> to vector<2x128xf32>
    %161 = arith.negf %160 : vector<2x128xf32>
    %162 = math.exp %161 : vector<2x128xf32>
    %cst_60 = arith.constant 1.000000e+00 : f32
    %163 = vector.broadcast %cst_60 : f32 to vector<2x128xf32>
    %164 = arith.addf %163, %162 : vector<2x128xf32>
    %165 = arith.divf %163, %164 : vector<2x128xf32>
    %166 = vector.extract_strided_slice %153 {offsets = [0, 256], sizes = [2, 128], strides = [1, 1]} : vector<2x512xf32> to vector<2x128xf32>
    %167 = math.tanh %166 : vector<2x128xf32>
    %168 = vector.extract_strided_slice %153 {offsets = [0, 384], sizes = [2, 128], strides = [1, 1]} : vector<2x512xf32> to vector<2x128xf32>
    %169 = arith.negf %168 : vector<2x128xf32>
    %170 = math.exp %169 : vector<2x128xf32>
    %cst_61 = arith.constant 1.000000e+00 : f32
    %171 = vector.broadcast %cst_61 : f32 to vector<2x128xf32>
    %172 = arith.addf %171, %170 : vector<2x128xf32>
    %173 = arith.divf %171, %172 : vector<2x128xf32>
    %174 = arith.mulf %165, %118 : vector<2x128xf32>
    %175 = arith.mulf %159, %167 : vector<2x128xf32>
    %176 = arith.addf %174, %175 : vector<2x128xf32>
    %177 = math.tanh %176 : vector<2x128xf32>
    %178 = arith.mulf %173, %177 : vector<2x128xf32>
    %cst_62 = arith.constant dense<0.000000e+00> : vector<2x128xf32>
    %179 = tpu.matmul %178, %7, %cst_62 {dimension_numbers = #tpu.dot_dimension_numbers<[1], [0], [0], [1], [0, 0, 1, 1], [], []>} : vector<2x128xf32>, vector<128x128xf32>, vector<2x128xf32> -> vector<2x128xf32>
    %180 = vector.broadcast %8 : vector<1x128xf32> to vector<2x128xf32>
    %181 = arith.addf %179, %180 : vector<2x128xf32>
    %c2_63 = arith.constant 2 : index
    %c0_64 = arith.constant 0 : index
    %c0_65 = arith.constant 0 : index
    %182 = vector.load %arg11[%c2_63, %c0_64, %c0_65] : memref<8x2x128xf32, #tpu.memory_space<vmem>>, vector<1x2x128xf32>
    %183 = vector.shape_cast %182 : vector<1x2x128xf32> to vector<2x128xf32>
    %184 = vector.shape_cast %181 : vector<2x128xf32> to vector<1x2x128xf32>
    tpu.vector_store %arg11[%c2_63, %c0_64, %c0_65], %184 {strides = array<i32>} : memref<8x2x128xf32, #tpu.memory_space<vmem>>, vector<1x2x128xf32>,
    %cst_66 = arith.constant dense<0.000000e+00> : vector<2x128xf32>
    %185 = tpu.matmul %178, %2, %cst_66 {dimension_numbers = #tpu.dot_dimension_numbers<[1], [0], [0], [1], [0, 0, 1, 1], [], []>} : vector<2x128xf32>, vector<128x128xf32>, vector<2x128xf32> -> vector<2x128xf32>
    %186 = vector.broadcast %3 : vector<1x128xf32> to vector<2x128xf32>
    %187 = arith.addf %185, %186 : vector<2x128xf32>
    %188 = vector.shape_cast %187 : vector<2x128xf32> to vector<2x1x128xf32>
    %189 = vector.broadcast %188 : vector<2x1x128xf32> to vector<2x8x128xf32>
    %190 = arith.addf %1, %189 : vector<2x8x128xf32>
    %191 = math.tanh %190 : vector<2x8x128xf32>
    %cst_67 = arith.constant dense<0.000000e+00> : vector<2x8x1xf32>
    %192 = tpu.matmul %191, %4, %cst_67 {dimension_numbers = #tpu.dot_dimension_numbers<[2], [0], [0, 1], [1], [0, 0, 0, 1, 1, 1], [], []>} : vector<2x8x128xf32>, vector<128x1xf32>, vector<2x8x1xf32> -> vector<2x8x1xf32>
    %cst_68 = arith.constant dense<0xFF800000> : vector<2x1xf32>
    %193 = vector.multi_reduction <maximumf>, %192, %cst_68 [1] : vector<2x8x1xf32> to vector<2x1xf32>
    %194 = vector.shape_cast %193 : vector<2x1xf32> to vector<2x1x1xf32>
    %195 = vector.broadcast %194 : vector<2x1x1xf32> to vector<2x8x1xf32>
    %196 = arith.subf %192, %195 : vector<2x8x1xf32>
    %197 = math.exp %196 : vector<2x8x1xf32>
    %cst_69 = arith.constant dense<0.000000e+00> : vector<2x1xf32>
    %198 = vector.multi_reduction <add>, %197, %cst_69 [1] : vector<2x8x1xf32> to vector<2x1xf32>
    %199 = vector.shape_cast %198 : vector<2x1xf32> to vector<2x1x1xf32>
    %200 = tpu.reciprocal %199 : vector<2x1x1xf32> -> vector<2x1x1xf32>
    %201 = vector.broadcast %200 : vector<2x1x1xf32> to vector<2x8x1xf32>
    %202 = arith.mulf %197, %201 : vector<2x8x1xf32>
    %cst_70 = arith.constant dense<0.000000e+00> : vector<2x1x128xf32>
    %203 = tpu.matmul %202, %0, %cst_70 {dimension_numbers = #tpu.dot_dimension_numbers<[1], [1], [2], [2], [0, 0, 0, 2, 1, 2], [0], [0]>} : vector<2x8x1xf32>, vector<2x8x128xf32>, vector<2x1x128xf32> -> vector<2x1x128xf32>
    %204 = vector.shape_cast %203 : vector<2x1x128xf32> to vector<2x128xf32>
    %205 = tpu.concatenate %204, %178 in 1 : vector<2x128xf32>, vector<2x128xf32> -> vector<2x256xf32>
    %cst_71 = arith.constant dense<0.000000e+00> : vector<2x512xf32>
    %206 = tpu.matmul %205, %5, %cst_71 {dimension_numbers = #tpu.dot_dimension_numbers<[1], [0], [0], [1], [0, 0, 1, 1], [], []>} : vector<2x256xf32>, vector<256x512xf32>, vector<2x512xf32> -> vector<2x512xf32>
    %c3 = arith.constant 3 : index
    %c0_72 = arith.constant 0 : index
    %c0_73 = arith.constant 0 : index
    %207 = vector.load %arg3[%c3, %c0_72, %c0_73] : memref<8x2x512xf32, #tpu.memory_space<vmem>>, vector<1x2x512xf32>
    %208 = vector.shape_cast %207 : vector<1x2x512xf32> to vector<2x512xf32>
    %209 = arith.addf %206, %208 : vector<2x512xf32>
    %210 = vector.broadcast %6 : vector<1x512xf32> to vector<2x512xf32>
    %211 = arith.addf %209, %210 : vector<2x512xf32>
    %212 = vector.extract_strided_slice %211 {offsets = [0, 0], sizes = [2, 128], strides = [1, 1]} : vector<2x512xf32> to vector<2x128xf32>
    %213 = arith.negf %212 : vector<2x128xf32>
    %214 = math.exp %213 : vector<2x128xf32>
    %cst_74 = arith.constant 1.000000e+00 : f32
    %215 = vector.broadcast %cst_74 : f32 to vector<2x128xf32>
    %216 = arith.addf %215, %214 : vector<2x128xf32>
    %217 = arith.divf %215, %216 : vector<2x128xf32>
    %218 = vector.extract_strided_slice %211 {offsets = [0, 128], sizes = [2, 128], strides = [1, 1]} : vector<2x512xf32> to vector<2x128xf32>
    %219 = arith.negf %218 : vector<2x128xf32>
    %220 = math.exp %219 : vector<2x128xf32>
    %cst_75 = arith.constant 1.000000e+00 : f32
    %221 = vector.broadcast %cst_75 : f32 to vector<2x128xf32>
    %222 = arith.addf %221, %220 : vector<2x128xf32>
    %223 = arith.divf %221, %222 : vector<2x128xf32>
    %224 = vector.extract_strided_slice %211 {offsets = [0, 256], sizes = [2, 128], strides = [1, 1]} : vector<2x512xf32> to vector<2x128xf32>
    %225 = math.tanh %224 : vector<2x128xf32>
    %226 = vector.extract_strided_slice %211 {offsets = [0, 384], sizes = [2, 128], strides = [1, 1]} : vector<2x512xf32> to vector<2x128xf32>
    %227 = arith.negf %226 : vector<2x128xf32>
    %228 = math.exp %227 : vector<2x128xf32>
    %cst_76 = arith.constant 1.000000e+00 : f32
    %229 = vector.broadcast %cst_76 : f32 to vector<2x128xf32>
    %230 = arith.addf %229, %228 : vector<2x128xf32>
    %231 = arith.divf %229, %230 : vector<2x128xf32>
    %232 = arith.mulf %223, %176 : vector<2x128xf32>
    %233 = arith.mulf %217, %225 : vector<2x128xf32>
    %234 = arith.addf %232, %233 : vector<2x128xf32>
    %235 = math.tanh %234 : vector<2x128xf32>
    %236 = arith.mulf %231, %235 : vector<2x128xf32>
    %cst_77 = arith.constant dense<0.000000e+00> : vector<2x128xf32>
    %237 = tpu.matmul %236, %7, %cst_77 {dimension_numbers = #tpu.dot_dimension_numbers<[1], [0], [0], [1], [0, 0, 1, 1], [], []>} : vector<2x128xf32>, vector<128x128xf32>, vector<2x128xf32> -> vector<2x128xf32>
    %238 = vector.broadcast %8 : vector<1x128xf32> to vector<2x128xf32>
    %239 = arith.addf %237, %238 : vector<2x128xf32>
    %c3_78 = arith.constant 3 : index
    %c0_79 = arith.constant 0 : index
    %c0_80 = arith.constant 0 : index
    %240 = vector.load %arg11[%c3_78, %c0_79, %c0_80] : memref<8x2x128xf32, #tpu.memory_space<vmem>>, vector<1x2x128xf32>
    %241 = vector.shape_cast %240 : vector<1x2x128xf32> to vector<2x128xf32>
    %242 = vector.shape_cast %239 : vector<2x128xf32> to vector<1x2x128xf32>
    tpu.vector_store %arg11[%c3_78, %c0_79, %c0_80], %242 {strides = array<i32>} : memref<8x2x128xf32, #tpu.memory_space<vmem>>, vector<1x2x128xf32>,
    %cst_81 = arith.constant dense<0.000000e+00> : vector<2x128xf32>
    %243 = tpu.matmul %236, %2, %cst_81 {dimension_numbers = #tpu.dot_dimension_numbers<[1], [0], [0], [1], [0, 0, 1, 1], [], []>} : vector<2x128xf32>, vector<128x128xf32>, vector<2x128xf32> -> vector<2x128xf32>
    %244 = vector.broadcast %3 : vector<1x128xf32> to vector<2x128xf32>
    %245 = arith.addf %243, %244 : vector<2x128xf32>
    %246 = vector.shape_cast %245 : vector<2x128xf32> to vector<2x1x128xf32>
    %247 = vector.broadcast %246 : vector<2x1x128xf32> to vector<2x8x128xf32>
    %248 = arith.addf %1, %247 : vector<2x8x128xf32>
    %249 = math.tanh %248 : vector<2x8x128xf32>
    %cst_82 = arith.constant dense<0.000000e+00> : vector<2x8x1xf32>
    %250 = tpu.matmul %249, %4, %cst_82 {dimension_numbers = #tpu.dot_dimension_numbers<[2], [0], [0, 1], [1], [0, 0, 0, 1, 1, 1], [], []>} : vector<2x8x128xf32>, vector<128x1xf32>, vector<2x8x1xf32> -> vector<2x8x1xf32>
    %cst_83 = arith.constant dense<0xFF800000> : vector<2x1xf32>
    %251 = vector.multi_reduction <maximumf>, %250, %cst_83 [1] : vector<2x8x1xf32> to vector<2x1xf32>
    %252 = vector.shape_cast %251 : vector<2x1xf32> to vector<2x1x1xf32>
    %253 = vector.broadcast %252 : vector<2x1x1xf32> to vector<2x8x1xf32>
    %254 = arith.subf %250, %253 : vector<2x8x1xf32>
    %255 = math.exp %254 : vector<2x8x1xf32>
    %cst_84 = arith.constant dense<0.000000e+00> : vector<2x1xf32>
    %256 = vector.multi_reduction <add>, %255, %cst_84 [1] : vector<2x8x1xf32> to vector<2x1xf32>
    %257 = vector.shape_cast %256 : vector<2x1xf32> to vector<2x1x1xf32>
    %258 = tpu.reciprocal %257 : vector<2x1x1xf32> -> vector<2x1x1xf32>
    %259 = vector.broadcast %258 : vector<2x1x1xf32> to vector<2x8x1xf32>
    %260 = arith.mulf %255, %259 : vector<2x8x1xf32>
    %cst_85 = arith.constant dense<0.000000e+00> : vector<2x1x128xf32>
    %261 = tpu.matmul %260, %0, %cst_85 {dimension_numbers = #tpu.dot_dimension_numbers<[1], [1], [2], [2], [0, 0, 0, 2, 1, 2], [0], [0]>} : vector<2x8x1xf32>, vector<2x8x128xf32>, vector<2x1x128xf32> -> vector<2x1x128xf32>
    %262 = vector.shape_cast %261 : vector<2x1x128xf32> to vector<2x128xf32>
    %263 = tpu.concatenate %262, %236 in 1 : vector<2x128xf32>, vector<2x128xf32> -> vector<2x256xf32>
    %cst_86 = arith.constant dense<0.000000e+00> : vector<2x512xf32>
    %264 = tpu.matmul %263, %5, %cst_86 {dimension_numbers = #tpu.dot_dimension_numbers<[1], [0], [0], [1], [0, 0, 1, 1], [], []>} : vector<2x256xf32>, vector<256x512xf32>, vector<2x512xf32> -> vector<2x512xf32>
    %c4 = arith.constant 4 : index
    %c0_87 = arith.constant 0 : index
    %c0_88 = arith.constant 0 : index
    %265 = vector.load %arg3[%c4, %c0_87, %c0_88] : memref<8x2x512xf32, #tpu.memory_space<vmem>>, vector<1x2x512xf32>
    %266 = vector.shape_cast %265 : vector<1x2x512xf32> to vector<2x512xf32>
    %267 = arith.addf %264, %266 : vector<2x512xf32>
    %268 = vector.broadcast %6 : vector<1x512xf32> to vector<2x512xf32>
    %269 = arith.addf %267, %268 : vector<2x512xf32>
    %270 = vector.extract_strided_slice %269 {offsets = [0, 0], sizes = [2, 128], strides = [1, 1]} : vector<2x512xf32> to vector<2x128xf32>
    %271 = arith.negf %270 : vector<2x128xf32>
    %272 = math.exp %271 : vector<2x128xf32>
    %cst_89 = arith.constant 1.000000e+00 : f32
    %273 = vector.broadcast %cst_89 : f32 to vector<2x128xf32>
    %274 = arith.addf %273, %272 : vector<2x128xf32>
    %275 = arith.divf %273, %274 : vector<2x128xf32>
    %276 = vector.extract_strided_slice %269 {offsets = [0, 128], sizes = [2, 128], strides = [1, 1]} : vector<2x512xf32> to vector<2x128xf32>
    %277 = arith.negf %276 : vector<2x128xf32>
    %278 = math.exp %277 : vector<2x128xf32>
    %cst_90 = arith.constant 1.000000e+00 : f32
    %279 = vector.broadcast %cst_90 : f32 to vector<2x128xf32>
    %280 = arith.addf %279, %278 : vector<2x128xf32>
    %281 = arith.divf %279, %280 : vector<2x128xf32>
    %282 = vector.extract_strided_slice %269 {offsets = [0, 256], sizes = [2, 128], strides = [1, 1]} : vector<2x512xf32> to vector<2x128xf32>
    %283 = math.tanh %282 : vector<2x128xf32>
    %284 = vector.extract_strided_slice %269 {offsets = [0, 384], sizes = [2, 128], strides = [1, 1]} : vector<2x512xf32> to vector<2x128xf32>
    %285 = arith.negf %284 : vector<2x128xf32>
    %286 = math.exp %285 : vector<2x128xf32>
    %cst_91 = arith.constant 1.000000e+00 : f32
    %287 = vector.broadcast %cst_91 : f32 to vector<2x128xf32>
    %288 = arith.addf %287, %286 : vector<2x128xf32>
    %289 = arith.divf %287, %288 : vector<2x128xf32>
    %290 = arith.mulf %281, %234 : vector<2x128xf32>
    %291 = arith.mulf %275, %283 : vector<2x128xf32>
    %292 = arith.addf %290, %291 : vector<2x128xf32>
    %293 = math.tanh %292 : vector<2x128xf32>
    %294 = arith.mulf %289, %293 : vector<2x128xf32>
    %cst_92 = arith.constant dense<0.000000e+00> : vector<2x128xf32>
    %295 = tpu.matmul %294, %7, %cst_92 {dimension_numbers = #tpu.dot_dimension_numbers<[1], [0], [0], [1], [0, 0, 1, 1], [], []>} : vector<2x128xf32>, vector<128x128xf32>, vector<2x128xf32> -> vector<2x128xf32>
    %296 = vector.broadcast %8 : vector<1x128xf32> to vector<2x128xf32>
    %297 = arith.addf %295, %296 : vector<2x128xf32>
    %c4_93 = arith.constant 4 : index
    %c0_94 = arith.constant 0 : index
    %c0_95 = arith.constant 0 : index
    %298 = vector.load %arg11[%c4_93, %c0_94, %c0_95] : memref<8x2x128xf32, #tpu.memory_space<vmem>>, vector<1x2x128xf32>
    %299 = vector.shape_cast %298 : vector<1x2x128xf32> to vector<2x128xf32>
    %300 = vector.shape_cast %297 : vector<2x128xf32> to vector<1x2x128xf32>
    tpu.vector_store %arg11[%c4_93, %c0_94, %c0_95], %300 {strides = array<i32>} : memref<8x2x128xf32, #tpu.memory_space<vmem>>, vector<1x2x128xf32>,
    %cst_96 = arith.constant dense<0.000000e+00> : vector<2x128xf32>
    %301 = tpu.matmul %294, %2, %cst_96 {dimension_numbers = #tpu.dot_dimension_numbers<[1], [0], [0], [1], [0, 0, 1, 1], [], []>} : vector<2x128xf32>, vector<128x128xf32>, vector<2x128xf32> -> vector<2x128xf32>
    %302 = vector.broadcast %3 : vector<1x128xf32> to vector<2x128xf32>
    %303 = arith.addf %301, %302 : vector<2x128xf32>
    %304 = vector.shape_cast %303 : vector<2x128xf32> to vector<2x1x128xf32>
    %305 = vector.broadcast %304 : vector<2x1x128xf32> to vector<2x8x128xf32>
    %306 = arith.addf %1, %305 : vector<2x8x128xf32>
    %307 = math.tanh %306 : vector<2x8x128xf32>
    %cst_97 = arith.constant dense<0.000000e+00> : vector<2x8x1xf32>
    %308 = tpu.matmul %307, %4, %cst_97 {dimension_numbers = #tpu.dot_dimension_numbers<[2], [0], [0, 1], [1], [0, 0, 0, 1, 1, 1], [], []>} : vector<2x8x128xf32>, vector<128x1xf32>, vector<2x8x1xf32> -> vector<2x8x1xf32>
    %cst_98 = arith.constant dense<0xFF800000> : vector<2x1xf32>
    %309 = vector.multi_reduction <maximumf>, %308, %cst_98 [1] : vector<2x8x1xf32> to vector<2x1xf32>
    %310 = vector.shape_cast %309 : vector<2x1xf32> to vector<2x1x1xf32>
    %311 = vector.broadcast %310 : vector<2x1x1xf32> to vector<2x8x1xf32>
    %312 = arith.subf %308, %311 : vector<2x8x1xf32>
    %313 = math.exp %312 : vector<2x8x1xf32>
    %cst_99 = arith.constant dense<0.000000e+00> : vector<2x1xf32>
    %314 = vector.multi_reduction <add>, %313, %cst_99 [1] : vector<2x8x1xf32> to vector<2x1xf32>
    %315 = vector.shape_cast %314 : vector<2x1xf32> to vector<2x1x1xf32>
    %316 = tpu.reciprocal %315 : vector<2x1x1xf32> -> vector<2x1x1xf32>
    %317 = vector.broadcast %316 : vector<2x1x1xf32> to vector<2x8x1xf32>
    %318 = arith.mulf %313, %317 : vector<2x8x1xf32>
    %cst_100 = arith.constant dense<0.000000e+00> : vector<2x1x128xf32>
    %319 = tpu.matmul %318, %0, %cst_100 {dimension_numbers = #tpu.dot_dimension_numbers<[1], [1], [2], [2], [0, 0, 0, 2, 1, 2], [0], [0]>} : vector<2x8x1xf32>, vector<2x8x128xf32>, vector<2x1x128xf32> -> vector<2x1x128xf32>
    %320 = vector.shape_cast %319 : vector<2x1x128xf32> to vector<2x128xf32>
    %321 = tpu.concatenate %320, %294 in 1 : vector<2x128xf32>, vector<2x128xf32> -> vector<2x256xf32>
    %cst_101 = arith.constant dense<0.000000e+00> : vector<2x512xf32>
    %322 = tpu.matmul %321, %5, %cst_101 {dimension_numbers = #tpu.dot_dimension_numbers<[1], [0], [0], [1], [0, 0, 1, 1], [], []>} : vector<2x256xf32>, vector<256x512xf32>, vector<2x512xf32> -> vector<2x512xf32>
    %c5 = arith.constant 5 : index
    %c0_102 = arith.constant 0 : index
    %c0_103 = arith.constant 0 : index
    %323 = vector.load %arg3[%c5, %c0_102, %c0_103] : memref<8x2x512xf32, #tpu.memory_space<vmem>>, vector<1x2x512xf32>
    %324 = vector.shape_cast %323 : vector<1x2x512xf32> to vector<2x512xf32>
    %325 = arith.addf %322, %324 : vector<2x512xf32>
    %326 = vector.broadcast %6 : vector<1x512xf32> to vector<2x512xf32>
    %327 = arith.addf %325, %326 : vector<2x512xf32>
    %328 = vector.extract_strided_slice %327 {offsets = [0, 0], sizes = [2, 128], strides = [1, 1]} : vector<2x512xf32> to vector<2x128xf32>
    %329 = arith.negf %328 : vector<2x128xf32>
    %330 = math.exp %329 : vector<2x128xf32>
    %cst_104 = arith.constant 1.000000e+00 : f32
    %331 = vector.broadcast %cst_104 : f32 to vector<2x128xf32>
    %332 = arith.addf %331, %330 : vector<2x128xf32>
    %333 = arith.divf %331, %332 : vector<2x128xf32>
    %334 = vector.extract_strided_slice %327 {offsets = [0, 128], sizes = [2, 128], strides = [1, 1]} : vector<2x512xf32> to vector<2x128xf32>
    %335 = arith.negf %334 : vector<2x128xf32>
    %336 = math.exp %335 : vector<2x128xf32>
    %cst_105 = arith.constant 1.000000e+00 : f32
    %337 = vector.broadcast %cst_105 : f32 to vector<2x128xf32>
    %338 = arith.addf %337, %336 : vector<2x128xf32>
    %339 = arith.divf %337, %338 : vector<2x128xf32>
    %340 = vector.extract_strided_slice %327 {offsets = [0, 256], sizes = [2, 128], strides = [1, 1]} : vector<2x512xf32> to vector<2x128xf32>
    %341 = math.tanh %340 : vector<2x128xf32>
    %342 = vector.extract_strided_slice %327 {offsets = [0, 384], sizes = [2, 128], strides = [1, 1]} : vector<2x512xf32> to vector<2x128xf32>
    %343 = arith.negf %342 : vector<2x128xf32>
    %344 = math.exp %343 : vector<2x128xf32>
    %cst_106 = arith.constant 1.000000e+00 : f32
    %345 = vector.broadcast %cst_106 : f32 to vector<2x128xf32>
    %346 = arith.addf %345, %344 : vector<2x128xf32>
    %347 = arith.divf %345, %346 : vector<2x128xf32>
    %348 = arith.mulf %339, %292 : vector<2x128xf32>
    %349 = arith.mulf %333, %341 : vector<2x128xf32>
    %350 = arith.addf %348, %349 : vector<2x128xf32>
    %351 = math.tanh %350 : vector<2x128xf32>
    %352 = arith.mulf %347, %351 : vector<2x128xf32>
    %cst_107 = arith.constant dense<0.000000e+00> : vector<2x128xf32>
    %353 = tpu.matmul %352, %7, %cst_107 {dimension_numbers = #tpu.dot_dimension_numbers<[1], [0], [0], [1], [0, 0, 1, 1], [], []>} : vector<2x128xf32>, vector<128x128xf32>, vector<2x128xf32> -> vector<2x128xf32>
    %354 = vector.broadcast %8 : vector<1x128xf32> to vector<2x128xf32>
    %355 = arith.addf %353, %354 : vector<2x128xf32>
    %c5_108 = arith.constant 5 : index
    %c0_109 = arith.constant 0 : index
    %c0_110 = arith.constant 0 : index
    %356 = vector.load %arg11[%c5_108, %c0_109, %c0_110] : memref<8x2x128xf32, #tpu.memory_space<vmem>>, vector<1x2x128xf32>
    %357 = vector.shape_cast %356 : vector<1x2x128xf32> to vector<2x128xf32>
    %358 = vector.shape_cast %355 : vector<2x128xf32> to vector<1x2x128xf32>
    tpu.vector_store %arg11[%c5_108, %c0_109, %c0_110], %358 {strides = array<i32>} : memref<8x2x128xf32, #tpu.memory_space<vmem>>, vector<1x2x128xf32>,
    %cst_111 = arith.constant dense<0.000000e+00> : vector<2x128xf32>
    %359 = tpu.matmul %352, %2, %cst_111 {dimension_numbers = #tpu.dot_dimension_numbers<[1], [0], [0], [1], [0, 0, 1, 1], [], []>} : vector<2x128xf32>, vector<128x128xf32>, vector<2x128xf32> -> vector<2x128xf32>
    %360 = vector.broadcast %3 : vector<1x128xf32> to vector<2x128xf32>
    %361 = arith.addf %359, %360 : vector<2x128xf32>
    %362 = vector.shape_cast %361 : vector<2x128xf32> to vector<2x1x128xf32>
    %363 = vector.broadcast %362 : vector<2x1x128xf32> to vector<2x8x128xf32>
    %364 = arith.addf %1, %363 : vector<2x8x128xf32>
    %365 = math.tanh %364 : vector<2x8x128xf32>
    %cst_112 = arith.constant dense<0.000000e+00> : vector<2x8x1xf32>
    %366 = tpu.matmul %365, %4, %cst_112 {dimension_numbers = #tpu.dot_dimension_numbers<[2], [0], [0, 1], [1], [0, 0, 0, 1, 1, 1], [], []>} : vector<2x8x128xf32>, vector<128x1xf32>, vector<2x8x1xf32> -> vector<2x8x1xf32>
    %cst_113 = arith.constant dense<0xFF800000> : vector<2x1xf32>
    %367 = vector.multi_reduction <maximumf>, %366, %cst_113 [1] : vector<2x8x1xf32> to vector<2x1xf32>
    %368 = vector.shape_cast %367 : vector<2x1xf32> to vector<2x1x1xf32>
    %369 = vector.broadcast %368 : vector<2x1x1xf32> to vector<2x8x1xf32>
    %370 = arith.subf %366, %369 : vector<2x8x1xf32>
    %371 = math.exp %370 : vector<2x8x1xf32>
    %cst_114 = arith.constant dense<0.000000e+00> : vector<2x1xf32>
    %372 = vector.multi_reduction <add>, %371, %cst_114 [1] : vector<2x8x1xf32> to vector<2x1xf32>
    %373 = vector.shape_cast %372 : vector<2x1xf32> to vector<2x1x1xf32>
    %374 = tpu.reciprocal %373 : vector<2x1x1xf32> -> vector<2x1x1xf32>
    %375 = vector.broadcast %374 : vector<2x1x1xf32> to vector<2x8x1xf32>
    %376 = arith.mulf %371, %375 : vector<2x8x1xf32>
    %cst_115 = arith.constant dense<0.000000e+00> : vector<2x1x128xf32>
    %377 = tpu.matmul %376, %0, %cst_115 {dimension_numbers = #tpu.dot_dimension_numbers<[1], [1], [2], [2], [0, 0, 0, 2, 1, 2], [0], [0]>} : vector<2x8x1xf32>, vector<2x8x128xf32>, vector<2x1x128xf32> -> vector<2x1x128xf32>
    %378 = vector.shape_cast %377 : vector<2x1x128xf32> to vector<2x128xf32>
    %379 = tpu.concatenate %378, %352 in 1 : vector<2x128xf32>, vector<2x128xf32> -> vector<2x256xf32>
    %cst_116 = arith.constant dense<0.000000e+00> : vector<2x512xf32>
    %380 = tpu.matmul %379, %5, %cst_116 {dimension_numbers = #tpu.dot_dimension_numbers<[1], [0], [0], [1], [0, 0, 1, 1], [], []>} : vector<2x256xf32>, vector<256x512xf32>, vector<2x512xf32> -> vector<2x512xf32>
    %c6 = arith.constant 6 : index
    %c0_117 = arith.constant 0 : index
    %c0_118 = arith.constant 0 : index
    %381 = vector.load %arg3[%c6, %c0_117, %c0_118] : memref<8x2x512xf32, #tpu.memory_space<vmem>>, vector<1x2x512xf32>
    %382 = vector.shape_cast %381 : vector<1x2x512xf32> to vector<2x512xf32>
    %383 = arith.addf %380, %382 : vector<2x512xf32>
    %384 = vector.broadcast %6 : vector<1x512xf32> to vector<2x512xf32>
    %385 = arith.addf %383, %384 : vector<2x512xf32>
    %386 = vector.extract_strided_slice %385 {offsets = [0, 0], sizes = [2, 128], strides = [1, 1]} : vector<2x512xf32> to vector<2x128xf32>
    %387 = arith.negf %386 : vector<2x128xf32>
    %388 = math.exp %387 : vector<2x128xf32>
    %cst_119 = arith.constant 1.000000e+00 : f32
    %389 = vector.broadcast %cst_119 : f32 to vector<2x128xf32>
    %390 = arith.addf %389, %388 : vector<2x128xf32>
    %391 = arith.divf %389, %390 : vector<2x128xf32>
    %392 = vector.extract_strided_slice %385 {offsets = [0, 128], sizes = [2, 128], strides = [1, 1]} : vector<2x512xf32> to vector<2x128xf32>
    %393 = arith.negf %392 : vector<2x128xf32>
    %394 = math.exp %393 : vector<2x128xf32>
    %cst_120 = arith.constant 1.000000e+00 : f32
    %395 = vector.broadcast %cst_120 : f32 to vector<2x128xf32>
    %396 = arith.addf %395, %394 : vector<2x128xf32>
    %397 = arith.divf %395, %396 : vector<2x128xf32>
    %398 = vector.extract_strided_slice %385 {offsets = [0, 256], sizes = [2, 128], strides = [1, 1]} : vector<2x512xf32> to vector<2x128xf32>
    %399 = math.tanh %398 : vector<2x128xf32>
    %400 = vector.extract_strided_slice %385 {offsets = [0, 384], sizes = [2, 128], strides = [1, 1]} : vector<2x512xf32> to vector<2x128xf32>
    %401 = arith.negf %400 : vector<2x128xf32>
    %402 = math.exp %401 : vector<2x128xf32>
    %cst_121 = arith.constant 1.000000e+00 : f32
    %403 = vector.broadcast %cst_121 : f32 to vector<2x128xf32>
    %404 = arith.addf %403, %402 : vector<2x128xf32>
    %405 = arith.divf %403, %404 : vector<2x128xf32>
    %406 = arith.mulf %397, %350 : vector<2x128xf32>
    %407 = arith.mulf %391, %399 : vector<2x128xf32>
    %408 = arith.addf %406, %407 : vector<2x128xf32>
    %409 = math.tanh %408 : vector<2x128xf32>
    %410 = arith.mulf %405, %409 : vector<2x128xf32>
    %cst_122 = arith.constant dense<0.000000e+00> : vector<2x128xf32>
    %411 = tpu.matmul %410, %7, %cst_122 {dimension_numbers = #tpu.dot_dimension_numbers<[1], [0], [0], [1], [0, 0, 1, 1], [], []>} : vector<2x128xf32>, vector<128x128xf32>, vector<2x128xf32> -> vector<2x128xf32>
    %412 = vector.broadcast %8 : vector<1x128xf32> to vector<2x128xf32>
    %413 = arith.addf %411, %412 : vector<2x128xf32>
    %c6_123 = arith.constant 6 : index
    %c0_124 = arith.constant 0 : index
    %c0_125 = arith.constant 0 : index
    %414 = vector.load %arg11[%c6_123, %c0_124, %c0_125] : memref<8x2x128xf32, #tpu.memory_space<vmem>>, vector<1x2x128xf32>
    %415 = vector.shape_cast %414 : vector<1x2x128xf32> to vector<2x128xf32>
    %416 = vector.shape_cast %413 : vector<2x128xf32> to vector<1x2x128xf32>
    tpu.vector_store %arg11[%c6_123, %c0_124, %c0_125], %416 {strides = array<i32>} : memref<8x2x128xf32, #tpu.memory_space<vmem>>, vector<1x2x128xf32>,
    %cst_126 = arith.constant dense<0.000000e+00> : vector<2x128xf32>
    %417 = tpu.matmul %410, %2, %cst_126 {dimension_numbers = #tpu.dot_dimension_numbers<[1], [0], [0], [1], [0, 0, 1, 1], [], []>} : vector<2x128xf32>, vector<128x128xf32>, vector<2x128xf32> -> vector<2x128xf32>
    %418 = vector.broadcast %3 : vector<1x128xf32> to vector<2x128xf32>
    %419 = arith.addf %417, %418 : vector<2x128xf32>
    %420 = vector.shape_cast %419 : vector<2x128xf32> to vector<2x1x128xf32>
    %421 = vector.broadcast %420 : vector<2x1x128xf32> to vector<2x8x128xf32>
    %422 = arith.addf %1, %421 : vector<2x8x128xf32>
    %423 = math.tanh %422 : vector<2x8x128xf32>
    %cst_127 = arith.constant dense<0.000000e+00> : vector<2x8x1xf32>
    %424 = tpu.matmul %423, %4, %cst_127 {dimension_numbers = #tpu.dot_dimension_numbers<[2], [0], [0, 1], [1], [0, 0, 0, 1, 1, 1], [], []>} : vector<2x8x128xf32>, vector<128x1xf32>, vector<2x8x1xf32> -> vector<2x8x1xf32>
    %cst_128 = arith.constant dense<0xFF800000> : vector<2x1xf32>
    %425 = vector.multi_reduction <maximumf>, %424, %cst_128 [1] : vector<2x8x1xf32> to vector<2x1xf32>
    %426 = vector.shape_cast %425 : vector<2x1xf32> to vector<2x1x1xf32>
    %427 = vector.broadcast %426 : vector<2x1x1xf32> to vector<2x8x1xf32>
    %428 = arith.subf %424, %427 : vector<2x8x1xf32>
    %429 = math.exp %428 : vector<2x8x1xf32>
    %cst_129 = arith.constant dense<0.000000e+00> : vector<2x1xf32>
    %430 = vector.multi_reduction <add>, %429, %cst_129 [1] : vector<2x8x1xf32> to vector<2x1xf32>
    %431 = vector.shape_cast %430 : vector<2x1xf32> to vector<2x1x1xf32>
    %432 = tpu.reciprocal %431 : vector<2x1x1xf32> -> vector<2x1x1xf32>
    %433 = vector.broadcast %432 : vector<2x1x1xf32> to vector<2x8x1xf32>
    %434 = arith.mulf %429, %433 : vector<2x8x1xf32>
    %cst_130 = arith.constant dense<0.000000e+00> : vector<2x1x128xf32>
    %435 = tpu.matmul %434, %0, %cst_130 {dimension_numbers = #tpu.dot_dimension_numbers<[1], [1], [2], [2], [0, 0, 0, 2, 1, 2], [0], [0]>} : vector<2x8x1xf32>, vector<2x8x128xf32>, vector<2x1x128xf32> -> vector<2x1x128xf32>
    %436 = vector.shape_cast %435 : vector<2x1x128xf32> to vector<2x128xf32>
    %437 = tpu.concatenate %436, %410 in 1 : vector<2x128xf32>, vector<2x128xf32> -> vector<2x256xf32>
    %cst_131 = arith.constant dense<0.000000e+00> : vector<2x512xf32>
    %438 = tpu.matmul %437, %5, %cst_131 {dimension_numbers = #tpu.dot_dimension_numbers<[1], [0], [0], [1], [0, 0, 1, 1], [], []>} : vector<2x256xf32>, vector<256x512xf32>, vector<2x512xf32> -> vector<2x512xf32>
    %c7 = arith.constant 7 : index
    %c0_132 = arith.constant 0 : index
    %c0_133 = arith.constant 0 : index
    %439 = vector.load %arg3[%c7, %c0_132, %c0_133] : memref<8x2x512xf32, #tpu.memory_space<vmem>>, vector<1x2x512xf32>
    %440 = vector.shape_cast %439 : vector<1x2x512xf32> to vector<2x512xf32>
    %441 = arith.addf %438, %440 : vector<2x512xf32>
    %442 = vector.broadcast %6 : vector<1x512xf32> to vector<2x512xf32>
    %443 = arith.addf %441, %442 : vector<2x512xf32>
    %444 = vector.extract_strided_slice %443 {offsets = [0, 0], sizes = [2, 128], strides = [1, 1]} : vector<2x512xf32> to vector<2x128xf32>
    %445 = arith.negf %444 : vector<2x128xf32>
    %446 = math.exp %445 : vector<2x128xf32>
    %cst_134 = arith.constant 1.000000e+00 : f32
    %447 = vector.broadcast %cst_134 : f32 to vector<2x128xf32>
    %448 = arith.addf %447, %446 : vector<2x128xf32>
    %449 = arith.divf %447, %448 : vector<2x128xf32>
    %450 = vector.extract_strided_slice %443 {offsets = [0, 128], sizes = [2, 128], strides = [1, 1]} : vector<2x512xf32> to vector<2x128xf32>
    %451 = arith.negf %450 : vector<2x128xf32>
    %452 = math.exp %451 : vector<2x128xf32>
    %cst_135 = arith.constant 1.000000e+00 : f32
    %453 = vector.broadcast %cst_135 : f32 to vector<2x128xf32>
    %454 = arith.addf %453, %452 : vector<2x128xf32>
    %455 = arith.divf %453, %454 : vector<2x128xf32>
    %456 = vector.extract_strided_slice %443 {offsets = [0, 256], sizes = [2, 128], strides = [1, 1]} : vector<2x512xf32> to vector<2x128xf32>
    %457 = math.tanh %456 : vector<2x128xf32>
    %458 = vector.extract_strided_slice %443 {offsets = [0, 384], sizes = [2, 128], strides = [1, 1]} : vector<2x512xf32> to vector<2x128xf32>
    %459 = arith.negf %458 : vector<2x128xf32>
    %460 = math.exp %459 : vector<2x128xf32>
    %cst_136 = arith.constant 1.000000e+00 : f32
    %461 = vector.broadcast %cst_136 : f32 to vector<2x128xf32>
    %462 = arith.addf %461, %460 : vector<2x128xf32>
    %463 = arith.divf %461, %462 : vector<2x128xf32>
    %464 = arith.mulf %455, %408 : vector<2x128xf32>
    %465 = arith.mulf %449, %457 : vector<2x128xf32>
    %466 = arith.addf %464, %465 : vector<2x128xf32>
    %467 = math.tanh %466 : vector<2x128xf32>
    %468 = arith.mulf %463, %467 : vector<2x128xf32>
    %cst_137 = arith.constant dense<0.000000e+00> : vector<2x128xf32>
    %469 = tpu.matmul %468, %7, %cst_137 {dimension_numbers = #tpu.dot_dimension_numbers<[1], [0], [0], [1], [0, 0, 1, 1], [], []>} : vector<2x128xf32>, vector<128x128xf32>, vector<2x128xf32> -> vector<2x128xf32>
    %470 = vector.broadcast %8 : vector<1x128xf32> to vector<2x128xf32>
    %471 = arith.addf %469, %470 : vector<2x128xf32>
    %c7_138 = arith.constant 7 : index
    %c0_139 = arith.constant 0 : index
    %c0_140 = arith.constant 0 : index
    %472 = vector.load %arg11[%c7_138, %c0_139, %c0_140] : memref<8x2x128xf32, #tpu.memory_space<vmem>>, vector<1x2x128xf32>
    %473 = vector.shape_cast %472 : vector<1x2x128xf32> to vector<2x128xf32>
    %474 = vector.shape_cast %471 : vector<2x128xf32> to vector<1x2x128xf32>
    tpu.vector_store %arg11[%c7_138, %c0_139, %c0_140], %474 {strides = array<i32>} : memref<8x2x128xf32, #tpu.memory_space<vmem>>, vector<1x2x128xf32>,
    return
  }
  func.func @transform_0(%arg0: i32) -> (i32, i32, i32) {
    %c0_i32 = arith.constant 0 : i32
    %c0_i32_0 = arith.constant 0 : i32
    %c0_i32_1 = arith.constant 0 : i32
    return %arg0, %c0_i32, %c0_i32_0 : i32, i32, i32
  }
  func.func @transform_1(%arg0: i32) -> (i32, i32, i32) {
    %c0_i32 = arith.constant 0 : i32
    %c0_i32_0 = arith.constant 0 : i32
    %c0_i32_1 = arith.constant 0 : i32
    return %arg0, %c0_i32, %c0_i32_0 : i32, i32, i32
  }
  func.func @transform_2(%arg0: i32) -> (i32, i32, i32) {
    %c0_i32 = arith.constant 0 : i32
    %c0_i32_0 = arith.constant 0 : i32
    %c0_i32_1 = arith.constant 0 : i32
    return %c0_i32, %arg0, %c0_i32_0 : i32, i32, i32
  }
  func.func @transform_3(%arg0: i32) -> (i32, i32) {
    %c0_i32 = arith.constant 0 : i32
    %c0_i32_0 = arith.constant 0 : i32
    %c0_i32_1 = arith.constant 0 : i32
    return %c0_i32, %c0_i32_0 : i32, i32
  }
  func.func @transform_4(%arg0: i32) -> (i32, i32) {
    %c0_i32 = arith.constant 0 : i32
    %c0_i32_0 = arith.constant 0 : i32
    %c0_i32_1 = arith.constant 0 : i32
    return %c0_i32, %c0_i32_0 : i32, i32
  }
  func.func @transform_5(%arg0: i32) -> (i32, i32) {
    %c0_i32 = arith.constant 0 : i32
    %c0_i32_0 = arith.constant 0 : i32
    %c0_i32_1 = arith.constant 0 : i32
    return %c0_i32, %c0_i32_0 : i32, i32
  }
  func.func @transform_6(%arg0: i32) -> (i32, i32) {
    %c0_i32 = arith.constant 0 : i32
    %c0_i32_0 = arith.constant 0 : i32
    %c0_i32_1 = arith.constant 0 : i32
    return %c0_i32, %c0_i32_0 : i32, i32
  }
  func.func @transform_7(%arg0: i32) -> (i32, i32) {
    %c0_i32 = arith.constant 0 : i32
    %c0_i32_0 = arith.constant 0 : i32
    %c0_i32_1 = arith.constant 0 : i32
    return %c0_i32, %c0_i32_0 : i32, i32
  }
  func.func @transform_8(%arg0: i32) -> (i32, i32) {
    %c0_i32 = arith.constant 0 : i32
    %c0_i32_0 = arith.constant 0 : i32
    %c0_i32_1 = arith.constant 0 : i32
    return %c0_i32, %c0_i32_0 : i32, i32
  }
  func.func @transform_9(%arg0: i32) -> (i32, i32) {
    %c0_i32 = arith.constant 0 : i32
    %c0_i32_0 = arith.constant 0 : i32
    %c0_i32_1 = arith.constant 0 : i32
    return %c0_i32, %c0_i32_0 : i32, i32
  }
  func.func @transform_10(%arg0: i32) -> (i32, i32, i32) {
    %c0_i32 = arith.constant 0 : i32
    %c0_i32_0 = arith.constant 0 : i32
    %c0_i32_1 = arith.constant 0 : i32
    return %c0_i32, %arg0, %c0_i32_0 : i32, i32, i32
  }
}

</mosaic_0001>

<llo_original>
// kernel: attention_forward.1
$region0: #{attention_forward.1}
  #allocation0 [shape = 'u32[]', space=smem, size = 0x4, offset = 0x4, fixed_abs, tag = 'smem constant byte address 0x4 - core index']
  #allocation1 [shape = 'u32[144,128]{1,0:T(1,128)}', space=vmem, size = 0x12000, scoped, tag = 'internal scratch']
  %s0 = inlined_call_operand.vmem [shape: f32[2,8,128], index: 0, kind: input, shape index: {}]
  %s1 = inlined_call_operand.vmem [shape: f32[2,8,128], index: 1, kind: input, shape index: {}]
  %s2 = inlined_call_operand.vmem [shape: f32[8,2,512], index: 2, kind: input, shape index: {}]
  %s3 = inlined_call_operand.vmem [shape: f32[128,128], index: 3, kind: input, shape index: {}]
  %s4 = inlined_call_operand.vmem [shape: f32[1,128], index: 4, kind: input, shape index: {}]
  %s5 = inlined_call_operand.vmem [shape: f32[128,1], index: 5, kind: input, shape index: {}]
  %s6 = inlined_call_operand.vmem [shape: f32[256,512], index: 6, kind: input, shape index: {}]
  %s7 = inlined_call_operand.vmem [shape: f32[1,512], index: 7, kind: input, shape index: {}]
  %s8 = inlined_call_operand.vmem [shape: f32[128,128], index: 8, kind: input, shape index: {}]
  %s9 = inlined_call_operand.vmem [shape: f32[1,128], index: 9, kind: input, shape index: {}]
  %s10 = inlined_call_operand.vmem [shape: f32[8,2,128], index: 10, kind: output, shape index: {}]
  %s11 = sld [smem:[#allocation0]]
  $region50: #{attention_forward.1} parent=0
    _
  %s13 = ssub.s32 1, %s11
  %s14 = scalar_select 0, %s13, %s11
  // Predicated region
  $region2: #{attention_forward.1} parent=0 // pred_check
    _
  $region3: #{attention_forward.1} parent=0 // pred_check_branch
    %16 = sbr.rel (0) target = $region5
  $region4: #{attention_forward.1} parent=0 // pred_region
    _
  $region5: #{attention_forward.1} parent=0 // pred_fallthru
    _
  // Predicated region
  $region6: #{attention_forward.1} parent=0 // pred_check
    _
  $region7: #{attention_forward.1} parent=0 // pred_check_branch
    %18 = sbr.rel (0) target = $region9
  $region8: #{attention_forward.1} parent=0 // pred_region
    _
  $region9: #{attention_forward.1} parent=0 // pred_fallthru
    _
  // Predicated region
  $region10: #{attention_forward.1} parent=0 // pred_check
    _
  $region11: #{attention_forward.1} parent=0 // pred_check_branch
    %20 = sbr.rel (0) target = $region13
  $region12: #{attention_forward.1} parent=0 // pred_region
    _
  $region13: #{attention_forward.1} parent=0 // pred_fallthru
    _
  // Predicated region
  $region14: #{attention_forward.1} parent=0 // pred_check
    _
  $region15: #{attention_forward.1} parent=0 // pred_check_branch
    %22 = sbr.rel (0) target = $region17
  $region16: #{attention_forward.1} parent=0 // pred_region
    _
  $region17: #{attention_forward.1} parent=0 // pred_fallthru
    _
  // Predicated region
  $region18: #{attention_forward.1} parent=0 // pred_check
    _
  $region19: #{attention_forward.1} parent=0 // pred_check_branch
    %24 = sbr.rel (0) target = $region21
  $region20: #{attention_forward.1} parent=0 // pred_region
    _
  $region21: #{attention_forward.1} parent=0 // pred_fallthru
    _
  // Predicated region
  $region22: #{attention_forward.1} parent=0 // pred_check
    _
  $region23: #{attention_forward.1} parent=0 // pred_check_branch
    %26 = sbr.rel (0) target = $region25
  $region24: #{attention_forward.1} parent=0 // pred_region
    _
  $region25: #{attention_forward.1} parent=0 // pred_fallthru
    _
  // Predicated region
  $region26: #{attention_forward.1} parent=0 // pred_check
    _
  $region27: #{attention_forward.1} parent=0 // pred_check_branch
    %28 = sbr.rel (0) target = $region29
  $region28: #{attention_forward.1} parent=0 // pred_region
    _
  $region29: #{attention_forward.1} parent=0 // pred_fallthru
    _
  // Predicated region
  $region30: #{attention_forward.1} parent=0 // pred_check
    _
  $region31: #{attention_forward.1} parent=0 // pred_check_branch
    %30 = sbr.rel (0) target = $region33
  $region32: #{attention_forward.1} parent=0 // pred_region
    _
  $region33: #{attention_forward.1} parent=0 // pred_fallthru
    _
  // Predicated region
  $region34: #{attention_forward.1} parent=0 // pred_check
    _
  $region35: #{attention_forward.1} parent=0 // pred_check_branch
    %32 = sbr.rel (0) target = $region37
  $region36: #{attention_forward.1} parent=0 // pred_region
    _
  $region37: #{attention_forward.1} parent=0 // pred_fallthru
    _
  // Predicated region
  $region38: #{attention_forward.1} parent=0 // pred_check
    _
  $region39: #{attention_forward.1} parent=0 // pred_check_branch
    %34 = sbr.rel (0) target = $region41
  $region40: #{attention_forward.1} parent=0 // pred_region
    _
  $region41: #{attention_forward.1} parent=0 // pred_fallthru
    _
  %v35 = vld [vmem:[%s0] sm:$0xff]
  %v36 = vld [vmem:[%s0 + $0x8] sm:$0xff]
  %v37 = vld [vmem:[%s1] sm:$0xff]
  %v38 = vld [vmem:[%s1 + $0x8] sm:$0xff]
  %v39 = vld [vmem:[%s3] sm:$0xff]
  %v40 = vld [vmem:[%s3 + $0x8] sm:$0xff]
  %v41 = vld [vmem:[%s3 + $0x10] sm:$0xff]
  %v42 = vld [vmem:[%s3 + $0x18] sm:$0xff]
  %v43 = vld [vmem:[%s3 + $0x20] sm:$0xff]
  %v44 = vld [vmem:[%s3 + $0x28] sm:$0xff]
  %v45 = vld [vmem:[%s3 + $0x30] sm:$0xff]
  %v46 = vld [vmem:[%s3 + $0x38] sm:$0xff]
  %v47 = vld [vmem:[%s3 + $0x40] sm:$0xff]
  %v48 = vld [vmem:[%s3 + $0x48] sm:$0xff]
  %v49 = vld [vmem:[%s3 + $0x50] sm:$0xff]
  %v50 = vld [vmem:[%s3 + $0x58] sm:$0xff]
  %v51 = vld [vmem:[%s3 + $0x60] sm:$0xff]
  %v52 = vld [vmem:[%s3 + $0x68] sm:$0xff]
  %v53 = vld [vmem:[%s3 + $0x70] sm:$0xff]
  %v54 = vld [vmem:[%s3 + $0x78] sm:$0xff]
  %v55 = vld [vmem:[%s4] sm:$0x1]
  %v56 = vld [vmem:[%s5] sm:$0xff]
  %v57 = vld [vmem:[%s5 + $0x8] sm:$0xff]
  %v58 = vld [vmem:[%s5 + $0x10] sm:$0xff]
  %v59 = vld [vmem:[%s5 + $0x18] sm:$0xff]
  %v60 = vld [vmem:[%s5 + $0x20] sm:$0xff]
  %v61 = vld [vmem:[%s5 + $0x28] sm:$0xff]
  %v62 = vld [vmem:[%s5 + $0x30] sm:$0xff]
  %v63 = vld [vmem:[%s5 + $0x38] sm:$0xff]
  %v64 = vld [vmem:[%s5 + $0x40] sm:$0xff]
  %v65 = vld [vmem:[%s5 + $0x48] sm:$0xff]
  %v66 = vld [vmem:[%s5 + $0x50] sm:$0xff]
  %v67 = vld [vmem:[%s5 + $0x58] sm:$0xff]
  %v68 = vld [vmem:[%s5 + $0x60] sm:$0xff]
  %v69 = vld [vmem:[%s5 + $0x68] sm:$0xff]
  %v70 = vld [vmem:[%s5 + $0x70] sm:$0xff]
  %v71 = vld [vmem:[%s5 + $0x78] sm:$0xff]
  %v72 = vld [vmem:[%s6] sm:$0xff]
  %v73 = vld [vmem:[%s6 + $0x8] sm:$0xff]
  %v74 = vld [vmem:[%s6 + $0x10] sm:$0xff]
  %v75 = vld [vmem:[%s6 + $0x18] sm:$0xff]
  %v76 = vld [vmem:[%s6 + $0x20] sm:$0xff]
  %v77 = vld [vmem:[%s6 + $0x28] sm:$0xff]
  %v78 = vld [vmem:[%s6 + $0x30] sm:$0xff]
  %v79 = vld [vmem:[%s6 + $0x38] sm:$0xff]
  %v80 = vld [vmem:[%s6 + $0x40] sm:$0xff]
  %v81 = vld [vmem:[%s6 + $0x48] sm:$0xff]
  %v82 = vld [vmem:[%s6 + $0x50] sm:$0xff]
  %v83 = vld [vmem:[%s6 + $0x58] sm:$0xff]
  %v84 = vld [vmem:[%s6 + $0x60] sm:$0xff]
  %v85 = vld [vmem:[%s6 + $0x68] sm:$0xff]
  %v86 = vld [vmem:[%s6 + $0x70] sm:$0xff]
  %v87 = vld [vmem:[%s6 + $0x78] sm:$0xff]
  %v88 = vld [vmem:[%s6 + $0x80] sm:$0xff]
  %v89 = vld [vmem:[%s6 + $0x88] sm:$0xff]
  %v90 = vld [vmem:[%s6 + $0x90] sm:$0xff]
  %v91 = vld [vmem:[%s6 + $0x98] sm:$0xff]
  %v92 = vld [vmem:[%s6 + $0xa0] sm:$0xff]
  %v93 = vld [vmem:[%s6 + $0xa8] sm:$0xff]
  %v94 = vld [vmem:[%s6 + $0xb0] sm:$0xff]
  %v95 = vld [vmem:[%s6 + $0xb8] sm:$0xff]
  %v96 = vld [vmem:[%s6 + $0xc0] sm:$0xff]
  %v97 = vld [vmem:[%s6 + $0xc8] sm:$0xff]
  %v98 = vld [vmem:[%s6 + $0xd0] sm:$0xff]
  %v99 = vld [vmem:[%s6 + $0xd8] sm:$0xff]
  %v100 = vld [vmem:[%s6 + $0xe0] sm:$0xff]
  %v101 = vld [vmem:[%s6 + $0xe8] sm:$0xff]
  %v102 = vld [vmem:[%s6 + $0xf0] sm:$0xff]
  %v103 = vld [vmem:[%s6 + $0xf8] sm:$0xff]
  %v104 = vld [vmem:[%s6 + $0x100] sm:$0xff]
  %v105 = vld [vmem:[%s6 + $0x108] sm:$0xff]
  %v106 = vld [vmem:[%s6 + $0x110] sm:$0xff]
  %v107 = vld [vmem:[%s6 + $0x118] sm:$0xff]
  %v108 = vld [vmem:[%s6 + $0x120] sm:$0xff]
  %v109 = vld [vmem:[%s6 + $0x128] sm:$0xff]
  %v110 = vld [vmem:[%s6 + $0x130] sm:$0xff]
  %v111 = vld [vmem:[%s6 + $0x138] sm:$0xff]
  %v112 = vld [vmem:[%s6 + $0x140] sm:$0xff]
  %v113 = vld [vmem:[%s6 + $0x148] sm:$0xff]
  %v114 = vld [vmem:[%s6 + $0x150] sm:$0xff]
  %v115 = vld [vmem:[%s6 + $0x158] sm:$0xff]
  %v116 = vld [vmem:[%s6 + $0x160] sm:$0xff]
  %v117 = vld [vmem:[%s6 + $0x168] sm:$0xff]
  %v118 = vld [vmem:[%s6 + $0x170] sm:$0xff]
  %v119 = vld [vmem:[%s6 + $0x178] sm:$0xff]
  %v120 = vld [vmem:[%s6 + $0x180] sm:$0xff]
  %v121 = vld [vmem:[%s6 + $0x188] sm:$0xff]
  %v122 = vld [vmem:[%s6 + $0x190] sm:$0xff]
  %v123 = vld [vmem:[%s6 + $0x198] sm:$0xff]
  %v124 = vld [vmem:[%s6 + $0x1a0] sm:$0xff]
  %v125 = vld [vmem:[%s6 + $0x1a8] sm:$0xff]
  %v126 = vld [vmem:[%s6 + $0x1b0] sm:$0xff]
  %v127 = vld [vmem:[%s6 + $0x1b8] sm:$0xff]
  %v128 = vld [vmem:[%s6 + $0x1c0] sm:$0xff]
  %v129 = vld [vmem:[%s6 + $0x1c8] sm:$0xff]
  %v130 = vld [vmem:[%s6 + $0x1d0] sm:$0xff]
  %v131 = vld [vmem:[%s6 + $0x1d8] sm:$0xff]
  %v132 = vld [vmem:[%s6 + $0x1e0] sm:$0xff]
  %v133 = vld [vmem:[%s6 + $0x1e8] sm:$0xff]
  %v134 = vld [vmem:[%s6 + $0x1f0] sm:$0xff]
  %v135 = vld [vmem:[%s6 + $0x1f8] sm:$0xff]
  %v136 = vld [vmem:[%s6 + $0x200] sm:$0xff]
  %v137 = vld [vmem:[%s6 + $0x208] sm:$0xff]
  %v138 = vld [vmem:[%s6 + $0x210] sm:$0xff]
  %v139 = vld [vmem:[%s6 + $0x218] sm:$0xff]
  %v140 = vld [vmem:[%s6 + $0x220] sm:$0xff]
  %v141 = vld [vmem:[%s6 + $0x228] sm:$0xff]
  %v142 = vld [vmem:[%s6 + $0x230] sm:$0xff]
  %v143 = vld [vmem:[%s6 + $0x238] sm:$0xff]
  %v144 = vld [vmem:[%s6 + $0x240] sm:$0xff]
  %v145 = vld [vmem:[%s6 + $0x248] sm:$0xff]
  %v146 = vld [vmem:[%s6 + $0x250] sm:$0xff]
  %v147 = vld [vmem:[%s6 + $0x258] sm:$0xff]
  %v148 = vld [vmem:[%s6 + $0x260] sm:$0xff]
  %v149 = vld [vmem:[%s6 + $0x268] sm:$0xff]
  %v150 = vld [vmem:[%s6 + $0x270] sm:$0xff]
  %v151 = vld [vmem:[%s6 + $0x278] sm:$0xff]
  %v152 = vld [vmem:[%s6 + $0x280] sm:$0xff]
  %v153 = vld [vmem:[%s6 + $0x288] sm:$0xff]
  %v154 = vld [vmem:[%s6 + $0x290] sm:$0xff]
  %v155 = vld [vmem:[%s6 + $0x298] sm:$0xff]
  %v156 = vld [vmem:[%s6 + $0x2a0] sm:$0xff]
  %v157 = vld [vmem:[%s6 + $0x2a8] sm:$0xff]
  %v158 = vld [vmem:[%s6 + $0x2b0] sm:$0xff]
  %v159 = vld [vmem:[%s6 + $0x2b8] sm:$0xff]
  %v160 = vld [vmem:[%s6 + $0x2c0] sm:$0xff]
  %v161 = vld [vmem:[%s6 + $0x2c8] sm:$0xff]
  %v162 = vld [vmem:[%s6 + $0x2d0] sm:$0xff]
  %v163 = vld [vmem:[%s6 + $0x2d8] sm:$0xff]
  %v164 = vld [vmem:[%s6 + $0x2e0] sm:$0xff]
  %v165 = vld [vmem:[%s6 + $0x2e8] sm:$0xff]
  %v166 = vld [vmem:[%s6 + $0x2f0] sm:$0xff]
  %v167 = vld [vmem:[%s6 + $0x2f8] sm:$0xff]
  %v168 = vld [vmem:[%s6 + $0x300] sm:$0xff]
  %v169 = vld [vmem:[%s6 + $0x308] sm:$0xff]
  %v170 = vld [vmem:[%s6 + $0x310] sm:$0xff]
  %v171 = vld [vmem:[%s6 + $0x318] sm:$0xff]
  %v172 = vld [vmem:[%s6 + $0x320] sm:$0xff]
  %v173 = vld [vmem:[%s6 + $0x328] sm:$0xff]
  %v174 = vld [vmem:[%s6 + $0x330] sm:$0xff]
  %v175 = vld [vmem:[%s6 + $0x338] sm:$0xff]
  %v176 = vld [vmem:[%s6 + $0x340] sm:$0xff]
  %v177 = vld [vmem:[%s6 + $0x348] sm:$0xff]
  %v178 = vld [vmem:[%s6 + $0x350] sm:$0xff]
  %v179 = vld [vmem:[%s6 + $0x358] sm:$0xff]
  %v180 = vld [vmem:[%s6 + $0x360] sm:$0xff]
  %v181 = vld [vmem:[%s6 + $0x368] sm:$0xff]
  %v182 = vld [vmem:[%s6 + $0x370] sm:$0xff]
  %v183 = vld [vmem:[%s6 + $0x378] sm:$0xff]
  %v184 = vld [vmem:[%s6 + $0x380] sm:$0xff]
  %v185 = vld [vmem:[%s6 + $0x388] sm:$0xff]
  %v186 = vld [vmem:[%s6 + $0x390] sm:$0xff]
  %v187 = vld [vmem:[%s6 + $0x398] sm:$0xff]
  %v188 = vld [vmem:[%s6 + $0x3a0] sm:$0xff]
  %v189 = vld [vmem:[%s6 + $0x3a8] sm:$0xff]
  %v190 = vld [vmem:[%s6 + $0x3b0] sm:$0xff]
  %v191 = vld [vmem:[%s6 + $0x3b8] sm:$0xff]
  %v192 = vld [vmem:[%s6 + $0x3c0] sm:$0xff]
  %v193 = vld [vmem:[%s6 + $0x3c8] sm:$0xff]
  %v194 = vld [vmem:[%s6 + $0x3d0] sm:$0xff]
  %v195 = vld [vmem:[%s6 + $0x3d8] sm:$0xff]
  %v196 = vld [vmem:[%s6 + $0x3e0] sm:$0xff]
  %v197 = vld [vmem:[%s6 + $0x3e8] sm:$0xff]
  %v198 = vld [vmem:[%s6 + $0x3f0] sm:$0xff]
  %v199 = vld [vmem:[%s6 + $0x3f8] sm:$0xff]
  %v200 = vld [vmem:[%s7] sm:$0xf]
  %v201 = vld [vmem:[%s8] sm:$0xff]
  %v202 = vld [vmem:[%s8 + $0x8] sm:$0xff]
  %v203 = vld [vmem:[%s8 + $0x10] sm:$0xff]
  %v204 = vld [vmem:[%s8 + $0x18] sm:$0xff]
  %v205 = vld [vmem:[%s8 + $0x20] sm:$0xff]
  %v206 = vld [vmem:[%s8 + $0x28] sm:$0xff]
  %v207 = vld [vmem:[%s8 + $0x30] sm:$0xff]
  %v208 = vld [vmem:[%s8 + $0x38] sm:$0xff]
  %v209 = vld [vmem:[%s8 + $0x40] sm:$0xff]
  %v210 = vld [vmem:[%s8 + $0x48] sm:$0xff]
  %v211 = vld [vmem:[%s8 + $0x50] sm:$0xff]
  %v212 = vld [vmem:[%s8 + $0x58] sm:$0xff]
  %v213 = vld [vmem:[%s8 + $0x60] sm:$0xff]
  %v214 = vld [vmem:[%s8 + $0x68] sm:$0xff]
  %v215 = vld [vmem:[%s8 + $0x70] sm:$0xff]
  %v216 = vld [vmem:[%s8 + $0x78] sm:$0xff]
  %v217 = vld [vmem:[%s9] sm:$0x1]
  %v219 = vlaneseq
  %v220 = vshrl.u32 %v219, 7
  %v221 = vsub.s32 0, %v220
  %v222 = vrot.slane %v55, %v221
  %224 = vmatprep.subr.mxu0 0.0
  %225 = vmatpush1.msra.mxu0 %v39
  %226 = vmatprep.subr.mxu0 0.0
  %227 = vmatpush1.msra.mxu0 %v40
  %228 = vmatprep.subr.mxu0 0.0
  %229 = vmatpush1.msra.mxu0 %v41
  %230 = vmatprep.subr.mxu0 0.0
  %231 = vmatpush1.msra.mxu0 %v42
  %232 = vmatprep.subr.mxu0 0.0
  %233 = vmatpush1.msra.mxu0 %v43
  %234 = vmatprep.subr.mxu0 0.0
  %235 = vmatpush1.msra.mxu0 %v44
  %236 = vmatprep.subr.mxu0 0.0
  %237 = vmatpush1.msra.mxu0 %v45
  %238 = vmatprep.subr.mxu0 0.0
  %239 = vmatpush1.msra.mxu0 %v46
  %240 = vmatprep.subr.mxu0 0.0
  %241 = vmatpush1.msra.mxu0 %v47
  %242 = vmatprep.subr.mxu0 0.0
  %243 = vmatpush1.msra.mxu0 %v48
  %244 = vmatprep.subr.mxu0 0.0
  %245 = vmatpush1.msra.mxu0 %v49
  %246 = vmatprep.subr.mxu0 0.0
  %247 = vmatpush1.msra.mxu0 %v50
  %248 = vmatprep.subr.mxu0 0.0
  %249 = vmatpush1.msra.mxu0 %v51
  %250 = vmatprep.subr.mxu0 0.0
  %251 = vmatpush1.msra.mxu0 %v52
  %252 = vmatprep.subr.mxu0 0.0
  %253 = vmatpush1.msra.mxu0 %v53
  %254 = vmatprep.subr.mxu0 0.0
  %255 = vmatpush1.msra.mxu0 %v54
  %256 = vmatprep.subr.mxu0 0.0
  %257 = vmatpush1.msra.mxu0 0.0
  %258 = vmatprep.subr.mxu0 0.0
  %259 = vmatpush1.msra.mxu0 0.0
  %260 = vmatprep.subr.mxu0 0.0
  %261 = vmatpush1.msra.mxu0 0.0
  %262 = vmatprep.subr.mxu0 0.0
  %263 = vmatpush1.msra.mxu0 0.0
  %264 = vmatprep.subr.mxu0 0.0
  %265 = vmatpush1.msra.mxu0 0.0
  %266 = vmatprep.subr.mxu0 0.0
  %267 = vmatpush1.msra.mxu0 0.0
  %268 = vmatprep.subr.mxu0 0.0
  %269 = vmatpush1.msra.mxu0 0.0
  %270 = vmatprep.subr.mxu0 0.0
  %271 = vmatpush1.msra.mxu0 0.0
  %272 = vmatprep.subr.mxu0 0.0
  %273 = vmatpush1.msra.mxu0 0.0
  %274 = vmatprep.subr.mxu0 0.0
  %275 = vmatpush1.msra.mxu0 0.0
  %276 = vmatprep.subr.mxu0 0.0
  %277 = vmatpush1.msra.mxu0 0.0
  %278 = vmatprep.subr.mxu0 0.0
  %279 = vmatpush1.msra.mxu0 0.0
  %280 = vmatprep.subr.mxu0 0.0
  %281 = vmatpush1.msra.mxu0 0.0
  %282 = vmatprep.subr.mxu0 0.0
  %283 = vmatpush1.msra.mxu0 0.0
  %284 = vmatprep.subr.mxu0 0.0
  %285 = vmatpush1.msra.mxu0 0.0
  %286 = vmatprep.subr.mxu0 0.0
  %287 = vmatpush1.msra.mxu0 0.0
  %288 = vmatprep.mubr.f32.mxu0 0.0
  %289 = vmatmul.mubr.f32.gmra.mrb[0].mxu0 0.0
  %v290 = vpop.f32.mrb[0].mxu0
  %v291 = vadd.f32 %v222, %v290
  %v292 = vpop.f32.mrb[0].mxu0
  %293 = vdwg.mxu0
  %v296 = vunpack.c.l.s4 1966171168
  %v297 = vunpack.c.0.s8 %v296
  %v298 = vlaneseq
  %v299 = vshrl.u32 %v298, 7
  %v300 = vsub.s32 %v297, %v299
  %v301 = vrot.slane %v291, %v300
  %v302 = vcombine.high %v301, %v301
  %v304 = vunpack.c.l.s4 1966171168
  %v305 = vunpack.c.0.s8 %v304
  %v306 = vlaneseq
  %v307 = vshrl.u32 %v306, 7
  %v308 = vsub.s32 %v305, %v307
  %v309 = vrot.slane %v301, %v308
  %v311 = vunpack.c.l.s4 1966171168
  %v312 = vunpack.c.0.s8 %v311
  %v313 = vlaneseq
  %v314 = vshrl.u32 %v313, 7
  %v315 = vsub.s32 %v312, %v314
  %v316 = vrot.slane %v302, %v315
  %v317 = vlaneseq
  %v318 = vshrl.u32 %v317, 7
  %v319 = vsub.s32 0, %v318
  %v320 = vrot.slane %v309, %v319
  %v321 = vlaneseq
  %v322 = vshrl.u32 %v321, 7
  %v323 = vsub.s32 0, %v322
  %v324 = vrot.slane %v316, %v323
  %v327 = vadd.f32 %v37, %v320
  %v328 = vadd.f32 %v38, %v324
  %v329 = vtanh.pop %v327
  %v330 = vtanh.pop %v328
  %331 = vmatprep.subr.mxu0 0.0
  %332 = vmatpush1.msra.mxu0 %v56
  %333 = vmatprep.subr.mxu0 0.0
  %334 = vmatpush1.msra.mxu0 %v57
  %335 = vmatprep.subr.mxu0 0.0
  %336 = vmatpush1.msra.mxu0 %v58
  %337 = vmatprep.subr.mxu0 0.0
  %338 = vmatpush1.msra.mxu0 %v59
  %339 = vmatprep.subr.mxu0 0.0
  %340 = vmatpush1.msra.mxu0 %v60
  %341 = vmatprep.subr.mxu0 0.0
  %342 = vmatpush1.msra.mxu0 %v61
  %343 = vmatprep.subr.mxu0 0.0
  %344 = vmatpush1.msra.mxu0 %v62
  %345 = vmatprep.subr.mxu0 0.0
  %346 = vmatpush1.msra.mxu0 %v63
  %347 = vmatprep.subr.mxu0 0.0
  %348 = vmatpush1.msra.mxu0 %v64
  %349 = vmatprep.subr.mxu0 0.0
  %350 = vmatpush1.msra.mxu0 %v65
  %351 = vmatprep.subr.mxu0 0.0
  %352 = vmatpush1.msra.mxu0 %v66
  %353 = vmatprep.subr.mxu0 0.0
  %354 = vmatpush1.msra.mxu0 %v67
  %355 = vmatprep.subr.mxu0 0.0
  %356 = vmatpush1.msra.mxu0 %v68
  %357 = vmatprep.subr.mxu0 0.0
  %358 = vmatpush1.msra.mxu0 %v69
  %359 = vmatprep.subr.mxu0 0.0
  %360 = vmatpush1.msra.mxu0 %v70
  %361 = vmatprep.subr.mxu0 0.0
  %362 = vmatpush1.msra.mxu0 %v71
  %363 = vmatprep.subr.mxu0 0.0
  %364 = vmatpush1.msra.mxu0 0.0
  %365 = vmatprep.subr.mxu0 0.0
  %366 = vmatpush1.msra.mxu0 0.0
  %367 = vmatprep.subr.mxu0 0.0
  %368 = vmatpush1.msra.mxu0 0.0
  %369 = vmatprep.subr.mxu0 0.0
  %370 = vmatpush1.msra.mxu0 0.0
  %371 = vmatprep.subr.mxu0 0.0
  %372 = vmatpush1.msra.mxu0 0.0
  %373 = vmatprep.subr.mxu0 0.0
  %374 = vmatpush1.msra.mxu0 0.0
  %375 = vmatprep.subr.mxu0 0.0
  %376 = vmatpush1.msra.mxu0 0.0
  %377 = vmatprep.subr.mxu0 0.0
  %378 = vmatpush1.msra.mxu0 0.0
  %379 = vmatprep.subr.mxu0 0.0
  %380 = vmatpush1.msra.mxu0 0.0
  %381 = vmatprep.subr.mxu0 0.0
  %382 = vmatpush1.msra.mxu0 0.0
  %383 = vmatprep.subr.mxu0 0.0
  %384 = vmatpush1.msra.mxu0 0.0
  %385 = vmatprep.subr.mxu0 0.0
  %386 = vmatpush1.msra.mxu0 0.0
  %387 = vmatprep.subr.mxu0 0.0
  %388 = vmatpush1.msra.mxu0 0.0
  %389 = vmatprep.subr.mxu0 0.0
  %390 = vmatpush1.msra.mxu0 0.0
  %391 = vmatprep.subr.mxu0 0.0
  %392 = vmatpush1.msra.mxu0 0.0
  %393 = vmatprep.subr.mxu0 0.0
  %394 = vmatpush1.msra.mxu0 0.0
  %395 = vmatprep.mubr.f32.mxu0 0.0
  %396 = vmatmul.mubr.f32.gmra.mrb[0].mxu0 %v329
  %v397 = vpop.f32.mrb[0].mxu0
  %v398 = vadd.f32 0.0, %v397
  %v399 = vpop.f32.mrb[0].mxu0
  %400 = vmatprep.mubr.f32.mxu0 0.0
  %401 = vmatmul.mubr.f32.gmra.mrb[0].mxu0 %v330
  %v402 = vpop.f32.mrb[0].mxu0
  %v403 = vadd.f32 0.0, %v402
  %v404 = vpop.f32.mrb[0].mxu0
  %405 = vdwg.mxu0
  %vm406 = vcmask 7168
  %v407 = vsel %vm406, %v398, -inf
  %v408 = vrot.slane %v407, 4
  %v409 = vmax.f32 %v407, %v408
  %v410 = vrot.slane %v409, 2
  %v411 = vmax.f32 %v409, %v410
  %v412 = vrot.slane %v411, 1
  %v413 = vmax.f32 %v411, %v412
  %v414 = vsel %vm406, %v403, -inf
  %v415 = vrot.slane %v414, 4
  %v416 = vmax.f32 %v414, %v415
  %v417 = vrot.slane %v416, 2
  %v418 = vmax.f32 %v416, %v417
  %v419 = vrot.slane %v418, 1
  %v420 = vmax.f32 %v418, %v419
  %v421 = vsub.f32 %v398, %v413
  %v422 = vsub.f32 %v403, %v420
  %v423 = vmul.f32 %v421, 1.442695
  %v424 = vpow.pop %v423
  %v425 = vmul.f32 %v422, 1.442695
  %v426 = vpow.pop %v425
  %v427 = vsel %vm406, %v424, 0.0
  %v428 = vrot.slane %v427, 4
  %v429 = vadd.f32 %v427, %v428
  %v430 = vrot.slane %v429, 2
  %v431 = vadd.f32 %v429, %v430
  %v432 = vrot.slane %v431, 1
  %v433 = vadd.f32 %v431, %v432
  %v434 = vsel %vm406, %v426, 0.0
  %v435 = vrot.slane %v434, 4
  %v436 = vadd.f32 %v434, %v435
  %v437 = vrot.slane %v436, 2
  %v438 = vadd.f32 %v436, %v437
  %v439 = vrot.slane %v438, 1
  %v440 = vadd.f32 %v438, %v439
  %v441 = vrcp.pop %v433
  %v442 = vrcp.pop %v440
  %v443 = vmul.f32 %v424, %v441
  %v444 = vmul.f32 %v426, %v442
  %445 = vxpose.xlu0.b32.start [1/16] %v443, 128
  %446 = vxpose.xlu0.b32.cont [2/16] 0.0, 128
  %447 = vxpose.xlu0.b32.cont [3/16] 0.0, 128
  %448 = vxpose.xlu0.b32.cont [4/16] 0.0, 128
  %449 = vxpose.xlu0.b32.cont [5/16] 0.0, 128
  %450 = vxpose.xlu0.b32.cont [6/16] 0.0, 128
  %451 = vxpose.xlu0.b32.cont [7/16] 0.0, 128
  %452 = vxpose.xlu0.b32.cont [8/16] 0.0, 128
  %453 = vxpose.xlu0.b32.cont [9/16] 0.0, 128
  %454 = vxpose.xlu0.b32.cont [10/16] 0.0, 128
  %455 = vxpose.xlu0.b32.cont [11/16] 0.0, 128
  %456 = vxpose.xlu0.b32.cont [12/16] 0.0, 128
  %457 = vxpose.xlu0.b32.cont [13/16] 0.0, 128
  %458 = vxpose.xlu0.b32.cont [14/16] 0.0, 128
  %459 = vxpose.xlu0.b32.cont [15/16] 0.0, 128
  %460 = vxpose.xlu0.b32.end [16/16] 0.0, 128
  %v461 = vpop.trf.xlu0
  %v462 = vpop.trf.xlu0
  %v463 = vpop.trf.xlu0
  %v464 = vpop.trf.xlu0
  %v465 = vpop.trf.xlu0
  %v466 = vpop.trf.xlu0
  %v467 = vpop.trf.xlu0
  %v468 = vpop.trf.xlu0
  %v469 = vpop.trf.xlu0
  %v470 = vpop.trf.xlu0
  %v471 = vpop.trf.xlu0
  %v472 = vpop.trf.xlu0
  %v473 = vpop.trf.xlu0
  %v474 = vpop.trf.xlu0
  %v475 = vpop.trf.xlu0
  %v476 = vpop.trf.xlu0
  %vm477 = vcmask 64512
  %v479 = vsel %vm477, %v461, 0
  %481 = vmatprep.subr.mxu0 0.0
  %482 = vmatpush1.msra.mxu0 %v35
  %483 = vmatprep.subr.mxu0 0.0
  %484 = vmatpush1.msra.mxu0 0.0
  %485 = vmatprep.subr.mxu0 0.0
  %486 = vmatpush1.msra.mxu0 0.0
  %487 = vmatprep.subr.mxu0 0.0
  %488 = vmatpush1.msra.mxu0 0.0
  %489 = vmatprep.subr.mxu0 0.0
  %490 = vmatpush1.msra.mxu0 0.0
  %491 = vmatprep.subr.mxu0 0.0
  %492 = vmatpush1.msra.mxu0 0.0
  %493 = vmatprep.subr.mxu0 0.0
  %494 = vmatpush1.msra.mxu0 0.0
  %495 = vmatprep.subr.mxu0 0.0
  %496 = vmatpush1.msra.mxu0 0.0
  %497 = vmatprep.subr.mxu0 0.0
  %498 = vmatpush1.msra.mxu0 0.0
  %499 = vmatprep.subr.mxu0 0.0
  %500 = vmatpush1.msra.mxu0 0.0
  %501 = vmatprep.subr.mxu0 0.0
  %502 = vmatpush1.msra.mxu0 0.0
  %503 = vmatprep.subr.mxu0 0.0
  %504 = vmatpush1.msra.mxu0 0.0
  %505 = vmatprep.subr.mxu0 0.0
  %506 = vmatpush1.msra.mxu0 0.0
  %507 = vmatprep.subr.mxu0 0.0
  %508 = vmatpush1.msra.mxu0 0.0
  %509 = vmatprep.subr.mxu0 0.0
  %510 = vmatpush1.msra.mxu0 0.0
  %511 = vmatprep.subr.mxu0 0.0
  %512 = vmatpush1.msra.mxu0 0.0
  %513 = vmatprep.subr.mxu0 0.0
  %514 = vmatpush1.msra.mxu0 0.0
  %515 = vmatprep.subr.mxu0 0.0
  %516 = vmatpush1.msra.mxu0 0.0
  %517 = vmatprep.subr.mxu0 0.0
  %518 = vmatpush1.msra.mxu0 0.0
  %519 = vmatprep.subr.mxu0 0.0
  %520 = vmatpush1.msra.mxu0 0.0
  %521 = vmatprep.subr.mxu0 0.0
  %522 = vmatpush1.msra.mxu0 0.0
  %523 = vmatprep.subr.mxu0 0.0
  %524 = vmatpush1.msra.mxu0 0.0
  %525 = vmatprep.subr.mxu0 0.0
  %526 = vmatpush1.msra.mxu0 0.0
  %527 = vmatprep.subr.mxu0 0.0
  %528 = vmatpush1.msra.mxu0 0.0
  %529 = vmatprep.subr.mxu0 0.0
  %530 = vmatpush1.msra.mxu0 0.0
  %531 = vmatprep.subr.mxu0 0.0
  %532 = vmatpush1.msra.mxu0 0.0
  %533 = vmatprep.subr.mxu0 0.0
  %534 = vmatpush1.msra.mxu0 0.0
  %535 = vmatprep.subr.mxu0 0.0
  %536 = vmatpush1.msra.mxu0 0.0
  %537 = vmatprep.subr.mxu0 0.0
  %538 = vmatpush1.msra.mxu0 0.0
  %539 = vmatprep.subr.mxu0 0.0
  %540 = vmatpush1.msra.mxu0 0.0
  %541 = vmatprep.subr.mxu0 0.0
  %542 = vmatpush1.msra.mxu0 0.0
  %543 = vmatprep.subr.mxu0 0.0
  %544 = vmatpush1.msra.mxu0 0.0
  %545 = vmatprep.mubr.f32.mxu0 0.0
  %546 = vmatmul.mubr.f32.gmra.mrb[0].mxu0 %v479
  %v547 = vpop.f32.mrb[0].mxu0
  %v548 = vadd.f32 0.0, %v547
  %v549 = vpop.f32.mrb[0].mxu0
  %550 = vdwg.mxu0
  %551 = vxpose.xlu0.b32.start [1/16] %v444, 128
  %552 = vxpose.xlu0.b32.cont [2/16] 0.0, 128
  %553 = vxpose.xlu0.b32.cont [3/16] 0.0, 128
  %554 = vxpose.xlu0.b32.cont [4/16] 0.0, 128
  %555 = vxpose.xlu0.b32.cont [5/16] 0.0, 128
  %556 = vxpose.xlu0.b32.cont [6/16] 0.0, 128
  %557 = vxpose.xlu0.b32.cont [7/16] 0.0, 128
  %558 = vxpose.xlu0.b32.cont [8/16] 0.0, 128
  %559 = vxpose.xlu0.b32.cont [9/16] 0.0, 128
  %560 = vxpose.xlu0.b32.cont [10/16] 0.0, 128
  %561 = vxpose.xlu0.b32.cont [11/16] 0.0, 128
  %562 = vxpose.xlu0.b32.cont [12/16] 0.0, 128
  %563 = vxpose.xlu0.b32.cont [13/16] 0.0, 128
  %564 = vxpose.xlu0.b32.cont [14/16] 0.0, 128
  %565 = vxpose.xlu0.b32.cont [15/16] 0.0, 128
  %566 = vxpose.xlu0.b32.end [16/16] 0.0, 128
  %v567 = vpop.trf.xlu0
  %v568 = vpop.trf.xlu0
  %v569 = vpop.trf.xlu0
  %v570 = vpop.trf.xlu0
  %v571 = vpop.trf.xlu0
  %v572 = vpop.trf.xlu0
  %v573 = vpop.trf.xlu0
  %v574 = vpop.trf.xlu0
  %v575 = vpop.trf.xlu0
  %v576 = vpop.trf.xlu0
  %v577 = vpop.trf.xlu0
  %v578 = vpop.trf.xlu0
  %v579 = vpop.trf.xlu0
  %v580 = vpop.trf.xlu0
  %v581 = vpop.trf.xlu0
  %v582 = vpop.trf.xlu0
  %v584 = vsel %vm477, %v567, 0
  %586 = vmatprep.subr.mxu0 0.0
  %587 = vmatpush1.msra.mxu0 %v36
  %588 = vmatprep.subr.mxu0 0.0
  %589 = vmatpush1.msra.mxu0 0.0
  %590 = vmatprep.subr.mxu0 0.0
  %591 = vmatpush1.msra.mxu0 0.0
  %592 = vmatprep.subr.mxu0 0.0
  %593 = vmatpush1.msra.mxu0 0.0
  %594 = vmatprep.subr.mxu0 0.0
  %595 = vmatpush1.msra.mxu0 0.0
  %596 = vmatprep.subr.mxu0 0.0
  %597 = vmatpush1.msra.mxu0 0.0
  %598 = vmatprep.subr.mxu0 0.0
  %599 = vmatpush1.msra.mxu0 0.0
  %600 = vmatprep.subr.mxu0 0.0
  %601 = vmatpush1.msra.mxu0 0.0
  %602 = vmatprep.subr.mxu0 0.0
  %603 = vmatpush1.msra.mxu0 0.0
  %604 = vmatprep.subr.mxu0 0.0
  %605 = vmatpush1.msra.mxu0 0.0
  %606 = vmatprep.subr.mxu0 0.0
  %607 = vmatpush1.msra.mxu0 0.0
  %608 = vmatprep.subr.mxu0 0.0
  %609 = vmatpush1.msra.mxu0 0.0
  %610 = vmatprep.subr.mxu0 0.0
  %611 = vmatpush1.msra.mxu0 0.0
  %612 = vmatprep.subr.mxu0 0.0
  %613 = vmatpush1.msra.mxu0 0.0
  %614 = vmatprep.subr.mxu0 0.0
  %615 = vmatpush1.msra.mxu0 0.0
  %616 = vmatprep.subr.mxu0 0.0
  %617 = vmatpush1.msra.mxu0 0.0
  %618 = vmatprep.subr.mxu0 0.0
  %619 = vmatpush1.msra.mxu0 0.0
  %620 = vmatprep.subr.mxu0 0.0
  %621 = vmatpush1.msra.mxu0 0.0
  %622 = vmatprep.subr.mxu0 0.0
  %623 = vmatpush1.msra.mxu0 0.0
  %624 = vmatprep.subr.mxu0 0.0
  %625 = vmatpush1.msra.mxu0 0.0
  %626 = vmatprep.subr.mxu0 0.0
  %627 = vmatpush1.msra.mxu0 0.0
  %628 = vmatprep.subr.mxu0 0.0
  %629 = vmatpush1.msra.mxu0 0.0
  %630 = vmatprep.subr.mxu0 0.0
  %631 = vmatpush1.msra.mxu0 0.0
  %632 = vmatprep.subr.mxu0 0.0
  %633 = vmatpush1.msra.mxu0 0.0
  %634 = vmatprep.subr.mxu0 0.0
  %635 = vmatpush1.msra.mxu0 0.0
  %636 = vmatprep.subr.mxu0 0.0
  %637 = vmatpush1.msra.mxu0 0.0
  %638 = vmatprep.subr.mxu0 0.0
  %639 = vmatpush1.msra.mxu0 0.0
  %640 = vmatprep.subr.mxu0 0.0
  %641 = vmatpush1.msra.mxu0 0.0
  %642 = vmatprep.subr.mxu0 0.0
  %643 = vmatpush1.msra.mxu0 0.0
  %644 = vmatprep.subr.mxu0 0.0
  %645 = vmatpush1.msra.mxu0 0.0
  %646 = vmatprep.subr.mxu0 0.0
  %647 = vmatpush1.msra.mxu0 0.0
  %648 = vmatprep.subr.mxu0 0.0
  %649 = vmatpush1.msra.mxu0 0.0
  %650 = vmatprep.mubr.f32.mxu0 0.0
  %651 = vmatmul.mubr.f32.gmra.mrb[0].mxu0 %v584
  %v652 = vpop.f32.mrb[0].mxu0
  %v653 = vadd.f32 0.0, %v652
  %v654 = vpop.f32.mrb[0].mxu0
  %655 = vdwg.mxu0
  %v658 = vrot.slane %v653, 7
  %vm659 = vcmask 1041409
  %v660 = vsel %vm659, %v658, %v548
  %v662 = vld [vmem:[%s2] sm:$0xff]
  %v664 = vcombine.high %v662, %v662
  %v666 = vunpack.c.l.s4 1983009808
  %v667 = vunpack.c.0.s8 %v666
  %v668 = vlaneseq
  %v669 = vshrl.u32 %v668, 7
  %v670 = vsub.s32 %v667, %v669
  %v671 = vrot.slane %v662, %v670
  %v673 = vunpack.c.l.s4 1983009808
  %v674 = vunpack.c.0.s8 %v673
  %v675 = vlaneseq
  %v676 = vshrl.u32 %v675, 7
  %v677 = vsub.s32 %v674, %v676
  %v678 = vrot.slane %v664, %v677
  %v679 = vcombine.high %v671, %v671
  %v680 = vcombine.high %v678, %v678
  %685 = vmatprep.subr.mxu0 %v73
  %686 = vmatpush1.msra.mxu0 %v72
  %687 = vmatprep.subr.mxu0 %v77
  %688 = vmatpush1.msra.mxu0 %v76
  %689 = vmatprep.subr.mxu0 %v81
  %690 = vmatpush1.msra.mxu0 %v80
  %691 = vmatprep.subr.mxu0 %v85
  %692 = vmatpush1.msra.mxu0 %v84
  %693 = vmatprep.subr.mxu0 %v89
  %694 = vmatpush1.msra.mxu0 %v88
  %695 = vmatprep.subr.mxu0 %v93
  %696 = vmatpush1.msra.mxu0 %v92
  %697 = vmatprep.subr.mxu0 %v97
  %698 = vmatpush1.msra.mxu0 %v96
  %699 = vmatprep.subr.mxu0 %v101
  %700 = vmatpush1.msra.mxu0 %v100
  %701 = vmatprep.subr.mxu0 %v105
  %702 = vmatpush1.msra.mxu0 %v104
  %703 = vmatprep.subr.mxu0 %v109
  %704 = vmatpush1.msra.mxu0 %v108
  %705 = vmatprep.subr.mxu0 %v113
  %706 = vmatpush1.msra.mxu0 %v112
  %707 = vmatprep.subr.mxu0 %v117
  %708 = vmatpush1.msra.mxu0 %v116
  %709 = vmatprep.subr.mxu0 %v121
  %710 = vmatpush1.msra.mxu0 %v120
  %711 = vmatprep.subr.mxu0 %v125
  %712 = vmatpush1.msra.mxu0 %v124
  %713 = vmatprep.subr.mxu0 %v129
  %714 = vmatpush1.msra.mxu0 %v128
  %715 = vmatprep.subr.mxu0 %v133
  %716 = vmatpush1.msra.mxu0 %v132
  %717 = vmatprep.subr.mxu0 %v137
  %718 = vmatpush1.msra.mxu0 %v136
  %719 = vmatprep.subr.mxu0 %v141
  %720 = vmatpush1.msra.mxu0 %v140
  %721 = vmatprep.subr.mxu0 %v145
  %722 = vmatpush1.msra.mxu0 %v144
  %723 = vmatprep.subr.mxu0 %v149
  %724 = vmatpush1.msra.mxu0 %v148
  %725 = vmatprep.subr.mxu0 %v153
  %726 = vmatpush1.msra.mxu0 %v152
  %727 = vmatprep.subr.mxu0 %v157
  %728 = vmatpush1.msra.mxu0 %v156
  %729 = vmatprep.subr.mxu0 %v161
  %730 = vmatpush1.msra.mxu0 %v160
  %731 = vmatprep.subr.mxu0 %v165
  %732 = vmatpush1.msra.mxu0 %v164
  %733 = vmatprep.subr.mxu0 %v169
  %734 = vmatpush1.msra.mxu0 %v168
  %735 = vmatprep.subr.mxu0 %v173
  %736 = vmatpush1.msra.mxu0 %v172
  %737 = vmatprep.subr.mxu0 %v177
  %738 = vmatpush1.msra.mxu0 %v176
  %739 = vmatprep.subr.mxu0 %v181
  %740 = vmatpush1.msra.mxu0 %v180
  %741 = vmatprep.subr.mxu0 %v185
  %742 = vmatpush1.msra.mxu0 %v184
  %743 = vmatprep.subr.mxu0 %v189
  %744 = vmatpush1.msra.mxu0 %v188
  %745 = vmatprep.subr.mxu0 %v193
  %746 = vmatpush1.msra.mxu0 %v192
  %747 = vmatprep.subr.mxu0 %v197
  %748 = vmatpush1.msra.mxu0 %v196
  %749 = vmatprep.mubr.f32.mxu0 0.0
  %750 = vmatmul.mubr.f32.gmra.mrb[0].mxu0 %v660
  %v751 = vpop.f32.mrb[0].mxu0
  %v752 = vadd.f32 %v671, %v751
  %v753 = vpop.f32.mrb[0].mxu0
  %v754 = vadd.f32 %v679, %v753
  %755 = vdwg.mxu0
  %756 = vmatprep.subr.mxu0 %v75
  %757 = vmatpush1.msra.mxu0 %v74
  %758 = vmatprep.subr.mxu0 %v79
  %759 = vmatpush1.msra.mxu0 %v78
  %760 = vmatprep.subr.mxu0 %v83
  %761 = vmatpush1.msra.mxu0 %v82
  %762 = vmatprep.subr.mxu0 %v87
  %763 = vmatpush1.msra.mxu0 %v86
  %764 = vmatprep.subr.mxu0 %v91
  %765 = vmatpush1.msra.mxu0 %v90
  %766 = vmatprep.subr.mxu0 %v95
  %767 = vmatpush1.msra.mxu0 %v94
  %768 = vmatprep.subr.mxu0 %v99
  %769 = vmatpush1.msra.mxu0 %v98
  %770 = vmatprep.subr.mxu0 %v103
  %771 = vmatpush1.msra.mxu0 %v102
  %772 = vmatprep.subr.mxu0 %v107
  %773 = vmatpush1.msra.mxu0 %v106
  %774 = vmatprep.subr.mxu0 %v111
  %775 = vmatpush1.msra.mxu0 %v110
  %776 = vmatprep.subr.mxu0 %v115
  %777 = vmatpush1.msra.mxu0 %v114
  %778 = vmatprep.subr.mxu0 %v119
  %779 = vmatpush1.msra.mxu0 %v118
  %780 = vmatprep.subr.mxu0 %v123
  %781 = vmatpush1.msra.mxu0 %v122
  %782 = vmatprep.subr.mxu0 %v127
  %783 = vmatpush1.msra.mxu0 %v126
  %784 = vmatprep.subr.mxu0 %v131
  %785 = vmatpush1.msra.mxu0 %v130
  %786 = vmatprep.subr.mxu0 %v135
  %787 = vmatpush1.msra.mxu0 %v134
  %788 = vmatprep.subr.mxu0 %v139
  %789 = vmatpush1.msra.mxu0 %v138
  %790 = vmatprep.subr.mxu0 %v143
  %791 = vmatpush1.msra.mxu0 %v142
  %792 = vmatprep.subr.mxu0 %v147
  %793 = vmatpush1.msra.mxu0 %v146
  %794 = vmatprep.subr.mxu0 %v151
  %795 = vmatpush1.msra.mxu0 %v150
  %796 = vmatprep.subr.mxu0 %v155
  %797 = vmatpush1.msra.mxu0 %v154
  %798 = vmatprep.subr.mxu0 %v159
  %799 = vmatpush1.msra.mxu0 %v158
  %800 = vmatprep.subr.mxu0 %v163
  %801 = vmatpush1.msra.mxu0 %v162
  %802 = vmatprep.subr.mxu0 %v167
  %803 = vmatpush1.msra.mxu0 %v166
  %804 = vmatprep.subr.mxu0 %v171
  %805 = vmatpush1.msra.mxu0 %v170
  %806 = vmatprep.subr.mxu0 %v175
  %807 = vmatpush1.msra.mxu0 %v174
  %808 = vmatprep.subr.mxu0 %v179
  %809 = vmatpush1.msra.mxu0 %v178
  %810 = vmatprep.subr.mxu0 %v183
  %811 = vmatpush1.msra.mxu0 %v182
  %812 = vmatprep.subr.mxu0 %v187
  %813 = vmatpush1.msra.mxu0 %v186
  %814 = vmatprep.subr.mxu0 %v191
  %815 = vmatpush1.msra.mxu0 %v190
  %816 = vmatprep.subr.mxu0 %v195
  %817 = vmatpush1.msra.mxu0 %v194
  %818 = vmatprep.subr.mxu0 %v199
  %819 = vmatpush1.msra.mxu0 %v198
  %820 = vmatprep.mubr.f32.mxu0 0.0
  %821 = vmatmul.mubr.f32.gmra.mrb[0].mxu0 %v660
  %v822 = vpop.f32.mrb[0].mxu0
  %v823 = vadd.f32 %v678, %v822
  %v824 = vpop.f32.mrb[0].mxu0
  %v825 = vadd.f32 %v680, %v824
  %826 = vdwg.mxu0
  %v828 = vlaneseq
  %v829 = vshrl.u32 %v828, 7
  %v830 = vsub.s32 0, %v829
  %v831 = vrot.slane %v200, %v830
  %v832 = vlaneseq
  %v833 = vshrl.u32 %v832, 7
  %v834 = vsub.s32 1, %v833
  %v835 = vrot.slane %v200, %v834
  %v836 = vlaneseq
  %v837 = vshrl.u32 %v836, 7
  %v838 = vsub.s32 2, %v837
  %v839 = vrot.slane %v200, %v838
  %v840 = vlaneseq
  %v841 = vshrl.u32 %v840, 7
  %v842 = vsub.s32 3, %v841
  %v843 = vrot.slane %v200, %v842
  %v848 = vadd.f32 %v752, %v831
  %v849 = vadd.f32 %v754, %v835
  %v850 = vadd.f32 %v823, %v839
  %v851 = vadd.f32 %v825, %v843
  %v852 = vxor.u32 %v848, 2147483648
  %v853 = vmul.f32 %v852, 1.442695
  %v854 = vpow.pop %v853
  %v855 = vadd.f32 %v854, 1.0
  %v856 = vrcp.pop %v855
  %v857 = vmul.f32 1.0, %v856
  %v858 = vxor.u32 %v849, 2147483648
  %v859 = vmul.f32 %v858, 1.442695
  %v860 = vpow.pop %v859
  %v861 = vadd.f32 %v860, 1.0
  %v862 = vrcp.pop %v861
  %v863 = vmul.f32 1.0, %v862
  %v864 = vtanh.pop %v850
  %v865 = vxor.u32 %v851, 2147483648
  %v866 = vmul.f32 %v865, 1.442695
  %v867 = vpow.pop %v866
  %v868 = vadd.f32 %v867, 1.0
  %v869 = vrcp.pop %v868
  %v870 = vmul.f32 1.0, %v869
  %v871 = vmul.f32 %v863, 0.0
  %v872 = vmul.f32 %v857, %v864
  %v873 = vadd.f32 %v871, %v872
  %v874 = vtanh.pop %v873
  %v875 = vmul.f32 %v870, %v874
  %v877 = vlaneseq
  %v878 = vshrl.u32 %v877, 7
  %v879 = vsub.s32 0, %v878
  %v880 = vrot.slane %v217, %v879
  %882 = vmatprep.subr.mxu0 0.0
  %883 = vmatpush1.msra.mxu0 %v201
  %884 = vmatprep.subr.mxu0 0.0
  %885 = vmatpush1.msra.mxu0 %v202
  %886 = vmatprep.subr.mxu0 0.0
  %887 = vmatpush1.msra.mxu0 %v203
  %888 = vmatprep.subr.mxu0 0.0
  %889 = vmatpush1.msra.mxu0 %v204
  %890 = vmatprep.subr.mxu0 0.0
  %891 = vmatpush1.msra.mxu0 %v205
  %892 = vmatprep.subr.mxu0 0.0
  %893 = vmatpush1.msra.mxu0 %v206
  %894 = vmatprep.subr.mxu0 0.0
  %895 = vmatpush1.msra.mxu0 %v207
  %896 = vmatprep.subr.mxu0 0.0
  %897 = vmatpush1.msra.mxu0 %v208
  %898 = vmatprep.subr.mxu0 0.0
  %899 = vmatpush1.msra.mxu0 %v209
  %900 = vmatprep.subr.mxu0 0.0
  %901 = vmatpush1.msra.mxu0 %v210
  %902 = vmatprep.subr.mxu0 0.0
  %903 = vmatpush1.msra.mxu0 %v211
  %904 = vmatprep.subr.mxu0 0.0
  %905 = vmatpush1.msra.mxu0 %v212
  %906 = vmatprep.subr.mxu0 0.0
  %907 = vmatpush1.msra.mxu0 %v213
  %908 = vmatprep.subr.mxu0 0.0
  %909 = vmatpush1.msra.mxu0 %v214
  %910 = vmatprep.subr.mxu0 0.0
  %911 = vmatpush1.msra.mxu0 %v215
  %912 = vmatprep.subr.mxu0 0.0
  %913 = vmatpush1.msra.mxu0 %v216
  %914 = vmatprep.subr.mxu0 0.0
  %915 = vmatpush1.msra.mxu0 0.0
  %916 = vmatprep.subr.mxu0 0.0
  %917 = vmatpush1.msra.mxu0 0.0
  %918 = vmatprep.subr.mxu0 0.0
  %919 = vmatpush1.msra.mxu0 0.0
  %920 = vmatprep.subr.mxu0 0.0
  %921 = vmatpush1.msra.mxu0 0.0
  %922 = vmatprep.subr.mxu0 0.0
  %923 = vmatpush1.msra.mxu0 0.0
  %924 = vmatprep.subr.mxu0 0.0
  %925 = vmatpush1.msra.mxu0 0.0
  %926 = vmatprep.subr.mxu0 0.0
  %927 = vmatpush1.msra.mxu0 0.0
  %928 = vmatprep.subr.mxu0 0.0
  %929 = vmatpush1.msra.mxu0 0.0
  %930 = vmatprep.subr.mxu0 0.0
  %931 = vmatpush1.msra.mxu0 0.0
  %932 = vmatprep.subr.mxu0 0.0
  %933 = vmatpush1.msra.mxu0 0.0
  %934 = vmatprep.subr.mxu0 0.0
  %935 = vmatpush1.msra.mxu0 0.0
  %936 = vmatprep.subr.mxu0 0.0
  %937 = vmatpush1.msra.mxu0 0.0
  %938 = vmatprep.subr.mxu0 0.0
  %939 = vmatpush1.msra.mxu0 0.0
  %940 = vmatprep.subr.mxu0 0.0
  %941 = vmatpush1.msra.mxu0 0.0
  %942 = vmatprep.subr.mxu0 0.0
  %943 = vmatpush1.msra.mxu0 0.0
  %944 = vmatprep.subr.mxu0 0.0
  %945 = vmatpush1.msra.mxu0 0.0
  %946 = vmatprep.mubr.f32.mxu0 0.0
  %947 = vmatmul.mubr.f32.gmra.mrb[0].mxu0 %v875
  %v948 = vpop.f32.mrb[0].mxu0
  %v949 = vadd.f32 %v880, %v948
  %v950 = vpop.f32.mrb[0].mxu0
  %951 = vdwg.mxu0
  %952 = vst [vmem:[%s10] sm:$0x3] %v949
  %953 = vmatprep.subr.mxu0 0.0
  %954 = vmatpush1.msra.mxu0 %v39
  %955 = vmatprep.subr.mxu0 0.0
  %956 = vmatpush1.msra.mxu0 %v40
  %957 = vmatprep.subr.mxu0 0.0
  %958 = vmatpush1.msra.mxu0 %v41
  %959 = vmatprep.subr.mxu0 0.0
  %960 = vmatpush1.msra.mxu0 %v42
  %961 = vmatprep.subr.mxu0 0.0
  %962 = vmatpush1.msra.mxu0 %v43
  %963 = vmatprep.subr.mxu0 0.0
  %964 = vmatpush1.msra.mxu0 %v44
  %965 = vmatprep.subr.mxu0 0.0
  %966 = vmatpush1.msra.mxu0 %v45
  %967 = vmatprep.subr.mxu0 0.0
  %968 = vmatpush1.msra.mxu0 %v46
  %969 = vmatprep.subr.mxu0 0.0
  %970 = vmatpush1.msra.mxu0 %v47
  %971 = vmatprep.subr.mxu0 0.0
  %972 = vmatpush1.msra.mxu0 %v48
  %973 = vmatprep.subr.mxu0 0.0
  %974 = vmatpush1.msra.mxu0 %v49
  %975 = vmatprep.subr.mxu0 0.0
  %976 = vmatpush1.msra.mxu0 %v50
  %977 = vmatprep.subr.mxu0 0.0
  %978 = vmatpush1.msra.mxu0 %v51
  %979 = vmatprep.subr.mxu0 0.0
  %980 = vmatpush1.msra.mxu0 %v52
  %981 = vmatprep.subr.mxu0 0.0
  %982 = vmatpush1.msra.mxu0 %v53
  %983 = vmatprep.subr.mxu0 0.0
  %984 = vmatpush1.msra.mxu0 %v54
  %985 = vmatprep.subr.mxu0 0.0
  %986 = vmatpush1.msra.mxu0 0.0
  %987 = vmatprep.subr.mxu0 0.0
  %988 = vmatpush1.msra.mxu0 0.0
  %989 = vmatprep.subr.mxu0 0.0
  %990 = vmatpush1.msra.mxu0 0.0
  %991 = vmatprep.subr.mxu0 0.0
  %992 = vmatpush1.msra.mxu0 0.0
  %993 = vmatprep.subr.mxu0 0.0
  %994 = vmatpush1.msra.mxu0 0.0
  %995 = vmatprep.subr.mxu0 0.0
  %996 = vmatpush1.msra.mxu0 0.0
  %997 = vmatprep.subr.mxu0 0.0
  %998 = vmatpush1.msra.mxu0 0.0
  %999 = vmatprep.subr.mxu0 0.0
  %1000 = vmatpush1.msra.mxu0 0.0
  %1001 = vmatprep.subr.mxu0 0.0
  %1002 = vmatpush1.msra.mxu0 0.0
  %1003 = vmatprep.subr.mxu0 0.0
  %1004 = vmatpush1.msra.mxu0 0.0
  %1005 = vmatprep.subr.mxu0 0.0
  %1006 = vmatpush1.msra.mxu0 0.0
  %1007 = vmatprep.subr.mxu0 0.0
  %1008 = vmatpush1.msra.mxu0 0.0
  %1009 = vmatprep.subr.mxu0 0.0
  %1010 = vmatpush1.msra.mxu0 0.0
  %1011 = vmatprep.subr.mxu0 0.0
  %1012 = vmatpush1.msra.mxu0 0.0
  %1013 = vmatprep.subr.mxu0 0.0
  %1014 = vmatpush1.msra.mxu0 0.0
  %1015 = vmatprep.subr.mxu0 0.0
  %1016 = vmatpush1.msra.mxu0 0.0
  %1017 = vmatprep.mubr.f32.mxu0 0.0
  %1018 = vmatmul.mubr.f32.gmra.mrb[0].mxu0 %v875
  %v1019 = vpop.f32.mrb[0].mxu0
  %v1020 = vadd.f32 %v222, %v1019
  %v1021 = vpop.f32.mrb[0].mxu0
  %1022 = vdwg.mxu0
  %v1025 = vunpack.c.l.s4 1966171168
  %v1026 = vunpack.c.0.s8 %v1025
  %v1027 = vlaneseq
  %v1028 = vshrl.u32 %v1027, 7
  %v1029 = vsub.s32 %v1026, %v1028
  %v1030 = vrot.slane %v1020, %v1029
  %v1031 = vcombine.high %v1030, %v1030
  %v1033 = vunpack.c.l.s4 1966171168
  %v1034 = vunpack.c.0.s8 %v1033
  %v1035 = vlaneseq
  %v1036 = vshrl.u32 %v1035, 7
  %v1037 = vsub.s32 %v1034, %v1036
  %v1038 = vrot.slane %v1030, %v1037
  %v1040 = vunpack.c.l.s4 1966171168
  %v1041 = vunpack.c.0.s8 %v1040
  %v1042 = vlaneseq
  %v1043 = vshrl.u32 %v1042, 7
  %v1044 = vsub.s32 %v1041, %v1043
  %v1045 = vrot.slane %v1031, %v1044
  %v1046 = vlaneseq
  %v1047 = vshrl.u32 %v1046, 7
  %v1048 = vsub.s32 0, %v1047
  %v1049 = vrot.slane %v1038, %v1048
  %v1050 = vlaneseq
  %v1051 = vshrl.u32 %v1050, 7
  %v1052 = vsub.s32 0, %v1051
  %v1053 = vrot.slane %v1045, %v1052
  %v1056 = vadd.f32 %v37, %v1049
  %v1057 = vadd.f32 %v38, %v1053
  %v1058 = vtanh.pop %v1056
  %v1059 = vtanh.pop %v1057
  %1060 = vmatprep.subr.mxu0 0.0
  %1061 = vmatpush1.msra.mxu0 %v56
  %1062 = vmatprep.subr.mxu0 0.0
  %1063 = vmatpush1.msra.mxu0 %v57
  %1064 = vmatprep.subr.mxu0 0.0
  %1065 = vmatpush1.msra.mxu0 %v58
  %1066 = vmatprep.subr.mxu0 0.0
  %1067 = vmatpush1.msra.mxu0 %v59
  %1068 = vmatprep.subr.mxu0 0.0
  %1069 = vmatpush1.msra.mxu0 %v60
  %1070 = vmatprep.subr.mxu0 0.0
  %1071 = vmatpush1.msra.mxu0 %v61
  %1072 = vmatprep.subr.mxu0 0.0
  %1073 = vmatpush1.msra.mxu0 %v62
  %1074 = vmatprep.subr.mxu0 0.0
  %1075 = vmatpush1.msra.mxu0 %v63
  %1076 = vmatprep.subr.mxu0 0.0
  %1077 = vmatpush1.msra.mxu0 %v64
  %1078 = vmatprep.subr.mxu0 0.0
  %1079 = vmatpush1.msra.mxu0 %v65
  %1080 = vmatprep.subr.mxu0 0.0
  %1081 = vmatpush1.msra.mxu0 %v66
  %1082 = vmatprep.subr.mxu0 0.0
  %1083 = vmatpush1.msra.mxu0 %v67
  %1084 = vmatprep.subr.mxu0 0.0
  %1085 = vmatpush1.msra.mxu0 %v68
  %1086 = vmatprep.subr.mxu0 0.0
  %1087 = vmatpush1.msra.mxu0 %v69
  %1088 = vmatprep.subr.mxu0 0.0
  %1089 = vmatpush1.msra.mxu0 %v70
  %1090 = vmatprep.subr.mxu0 0.0
  %1091 = vmatpush1.msra.mxu0 %v71
  %1092 = vmatprep.subr.mxu0 0.0
  %1093 = vmatpush1.msra.mxu0 0.0
  %1094 = vmatprep.subr.mxu0 0.0
  %1095 = vmatpush1.msra.mxu0 0.0
  %1096 = vmatprep.subr.mxu0 0.0
  %1097 = vmatpush1.msra.mxu0 0.0
  %1098 = vmatprep.subr.mxu0 0.0
  %1099 = vmatpush1.msra.mxu0 0.0
  %1100 = vmatprep.subr.mxu0 0.0
  %1101 = vmatpush1.msra.mxu0 0.0
  %1102 = vmatprep.subr.mxu0 0.0
  %1103 = vmatpush1.msra.mxu0 0.0
  %1104 = vmatprep.subr.mxu0 0.0
  %1105 = vmatpush1.msra.mxu0 0.0
  %1106 = vmatprep.subr.mxu0 0.0
  %1107 = vmatpush1.msra.mxu0 0.0
  %1108 = vmatprep.subr.mxu0 0.0
  %1109 = vmatpush1.msra.mxu0 0.0
  %1110 = vmatprep.subr.mxu0 0.0
  %1111 = vmatpush1.msra.mxu0 0.0
  %1112 = vmatprep.subr.mxu0 0.0
  %1113 = vmatpush1.msra.mxu0 0.0
  %1114 = vmatprep.subr.mxu0 0.0
  %1115 = vmatpush1.msra.mxu0 0.0
  %1116 = vmatprep.subr.mxu0 0.0
  %1117 = vmatpush1.msra.mxu0 0.0
  %1118 = vmatprep.subr.mxu0 0.0
  %1119 = vmatpush1.msra.mxu0 0.0
  %1120 = vmatprep.subr.mxu0 0.0
  %1121 = vmatpush1.msra.mxu0 0.0
  %1122 = vmatprep.subr.mxu0 0.0
  %1123 = vmatpush1.msra.mxu0 0.0
  %1124 = vmatprep.mubr.f32.mxu0 0.0
  %1125 = vmatmul.mubr.f32.gmra.mrb[0].mxu0 %v1058
  %v1126 = vpop.f32.mrb[0].mxu0
  %v1127 = vadd.f32 0.0, %v1126
  %v1128 = vpop.f32.mrb[0].mxu0
  %1129 = vmatprep.mubr.f32.mxu0 0.0
  %1130 = vmatmul.mubr.f32.gmra.mrb[0].mxu0 %v1059
  %v1131 = vpop.f32.mrb[0].mxu0
  %v1132 = vadd.f32 0.0, %v1131
  %v1133 = vpop.f32.mrb[0].mxu0
  %1134 = vdwg.mxu0
  %v1135 = vsel %vm406, %v1127, -inf
  %v1136 = vrot.slane %v1135, 4
  %v1137 = vmax.f32 %v1135, %v1136
  %v1138 = vrot.slane %v1137, 2
  %v1139 = vmax.f32 %v1137, %v1138
  %v1140 = vrot.slane %v1139, 1
  %v1141 = vmax.f32 %v1139, %v1140
  %v1142 = vsel %vm406, %v1132, -inf
  %v1143 = vrot.slane %v1142, 4
  %v1144 = vmax.f32 %v1142, %v1143
  %v1145 = vrot.slane %v1144, 2
  %v1146 = vmax.f32 %v1144, %v1145
  %v1147 = vrot.slane %v1146, 1
  %v1148 = vmax.f32 %v1146, %v1147
  %v1149 = vsub.f32 %v1127, %v1141
  %v1150 = vsub.f32 %v1132, %v1148
  %v1151 = vmul.f32 %v1149, 1.442695
  %v1152 = vpow.pop %v1151
  %v1153 = vmul.f32 %v1150, 1.442695
  %v1154 = vpow.pop %v1153
  %v1155 = vsel %vm406, %v1152, 0.0
  %v1156 = vrot.slane %v1155, 4
  %v1157 = vadd.f32 %v1155, %v1156
  %v1158 = vrot.slane %v1157, 2
  %v1159 = vadd.f32 %v1157, %v1158
  %v1160 = vrot.slane %v1159, 1
  %v1161 = vadd.f32 %v1159, %v1160
  %v1162 = vsel %vm406, %v1154, 0.0
  %v1163 = vrot.slane %v1162, 4
  %v1164 = vadd.f32 %v1162, %v1163
  %v1165 = vrot.slane %v1164, 2
  %v1166 = vadd.f32 %v1164, %v1165
  %v1167 = vrot.slane %v1166, 1
  %v1168 = vadd.f32 %v1166, %v1167
  %v1169 = vrcp.pop %v1161
  %v1170 = vrcp.pop %v1168
  %v1171 = vmul.f32 %v1152, %v1169
  %v1172 = vmul.f32 %v1154, %v1170
  %1173 = vxpose.xlu0.b32.start [1/16] %v1171, 128
  %1174 = vxpose.xlu0.b32.cont [2/16] 0.0, 128
  %1175 = vxpose.xlu0.b32.cont [3/16] 0.0, 128
  %1176 = vxpose.xlu0.b32.cont [4/16] 0.0, 128
  %1177 = vxpose.xlu0.b32.cont [5/16] 0.0, 128
  %1178 = vxpose.xlu0.b32.cont [6/16] 0.0, 128
  %1179 = vxpose.xlu0.b32.cont [7/16] 0.0, 128
  %1180 = vxpose.xlu0.b32.cont [8/16] 0.0, 128
  %1181 = vxpose.xlu0.b32.cont [9/16] 0.0, 128
  %1182 = vxpose.xlu0.b32.cont [10/16] 0.0, 128
  %1183 = vxpose.xlu0.b32.cont [11/16] 0.0, 128
  %1184 = vxpose.xlu0.b32.cont [12/16] 0.0, 128
  %1185 = vxpose.xlu0.b32.cont [13/16] 0.0, 128
  %1186 = vxpose.xlu0.b32.cont [14/16] 0.0, 128
  %1187 = vxpose.xlu0.b32.cont [15/16] 0.0, 128
  %1188 = vxpose.xlu0.b32.end [16/16] 0.0, 128
  %v1189 = vpop.trf.xlu0
  %v1190 = vpop.trf.xlu0
  %v1191 = vpop.trf.xlu0
  %v1192 = vpop.trf.xlu0
  %v1193 = vpop.trf.xlu0
  %v1194 = vpop.trf.xlu0
  %v1195 = vpop.trf.xlu0
  %v1196 = vpop.trf.xlu0
  %v1197 = vpop.trf.xlu0
  %v1198 = vpop.trf.xlu0
  %v1199 = vpop.trf.xlu0
  %v1200 = vpop.trf.xlu0
  %v1201 = vpop.trf.xlu0
  %v1202 = vpop.trf.xlu0
  %v1203 = vpop.trf.xlu0
  %v1204 = vpop.trf.xlu0
  %v1206 = vsel %vm477, %v1189, 0
  %1208 = vmatprep.subr.mxu0 0.0
  %1209 = vmatpush1.msra.mxu0 %v35
  %1210 = vmatprep.subr.mxu0 0.0
  %1211 = vmatpush1.msra.mxu0 0.0
  %1212 = vmatprep.subr.mxu0 0.0
  %1213 = vmatpush1.msra.mxu0 0.0
  %1214 = vmatprep.subr.mxu0 0.0
  %1215 = vmatpush1.msra.mxu0 0.0
  %1216 = vmatprep.subr.mxu0 0.0
  %1217 = vmatpush1.msra.mxu0 0.0
  %1218 = vmatprep.subr.mxu0 0.0
  %1219 = vmatpush1.msra.mxu0 0.0
  %1220 = vmatprep.subr.mxu0 0.0
  %1221 = vmatpush1.msra.mxu0 0.0
  %1222 = vmatprep.subr.mxu0 0.0
  %1223 = vmatpush1.msra.mxu0 0.0
  %1224 = vmatprep.subr.mxu0 0.0
  %1225 = vmatpush1.msra.mxu0 0.0
  %1226 = vmatprep.subr.mxu0 0.0
  %1227 = vmatpush1.msra.mxu0 0.0
  %1228 = vmatprep.subr.mxu0 0.0
  %1229 = vmatpush1.msra.mxu0 0.0
  %1230 = vmatprep.subr.mxu0 0.0
  %1231 = vmatpush1.msra.mxu0 0.0
  %1232 = vmatprep.subr.mxu0 0.0
  %1233 = vmatpush1.msra.mxu0 0.0
  %1234 = vmatprep.subr.mxu0 0.0
  %1235 = vmatpush1.msra.mxu0 0.0
  %1236 = vmatprep.subr.mxu0 0.0
  %1237 = vmatpush1.msra.mxu0 0.0
  %1238 = vmatprep.subr.mxu0 0.0
  %1239 = vmatpush1.msra.mxu0 0.0
  %1240 = vmatprep.subr.mxu0 0.0
  %1241 = vmatpush1.msra.mxu0 0.0
  %1242 = vmatprep.subr.mxu0 0.0
  %1243 = vmatpush1.msra.mxu0 0.0
  %1244 = vmatprep.subr.mxu0 0.0
  %1245 = vmatpush1.msra.mxu0 0.0
  %1246 = vmatprep.subr.mxu0 0.0
  %1247 = vmatpush1.msra.mxu0 0.0
  %1248 = vmatprep.subr.mxu0 0.0
  %1249 = vmatpush1.msra.mxu0 0.0
  %1250 = vmatprep.subr.mxu0 0.0
  %1251 = vmatpush1.msra.mxu0 0.0
  %1252 = vmatprep.subr.mxu0 0.0
  %1253 = vmatpush1.msra.mxu0 0.0
  %1254 = vmatprep.subr.mxu0 0.0
  %1255 = vmatpush1.msra.mxu0 0.0
  %1256 = vmatprep.subr.mxu0 0.0
  %1257 = vmatpush1.msra.mxu0 0.0
  %1258 = vmatprep.subr.mxu0 0.0
  %1259 = vmatpush1.msra.mxu0 0.0
  %1260 = vmatprep.subr.mxu0 0.0
  %1261 = vmatpush1.msra.mxu0 0.0
  %1262 = vmatprep.subr.mxu0 0.0
  %1263 = vmatpush1.msra.mxu0 0.0
  %1264 = vmatprep.subr.mxu0 0.0
  %1265 = vmatpush1.msra.mxu0 0.0
  %1266 = vmatprep.subr.mxu0 0.0
  %1267 = vmatpush1.msra.mxu0 0.0
  %1268 = vmatprep.subr.mxu0 0.0
  %1269 = vmatpush1.msra.mxu0 0.0
  %1270 = vmatprep.subr.mxu0 0.0
  %1271 = vmatpush1.msra.mxu0 0.0
  %1272 = vmatprep.mubr.f32.mxu0 0.0
  %1273 = vmatmul.mubr.f32.gmra.mrb[0].mxu0 %v1206
  %v1274 = vpop.f32.mrb[0].mxu0
  %v1275 = vadd.f32 0.0, %v1274
  %v1276 = vpop.f32.mrb[0].mxu0
  %1277 = vdwg.mxu0
  %1278 = vxpose.xlu0.b32.start [1/16] %v1172, 128
  %1279 = vxpose.xlu0.b32.cont [2/16] 0.0, 128
  %1280 = vxpose.xlu0.b32.cont [3/16] 0.0, 128
  %1281 = vxpose.xlu0.b32.cont [4/16] 0.0, 128
  %1282 = vxpose.xlu0.b32.cont [5/16] 0.0, 128
  %1283 = vxpose.xlu0.b32.cont [6/16] 0.0, 128
  %1284 = vxpose.xlu0.b32.cont [7/16] 0.0, 128
  %1285 = vxpose.xlu0.b32.cont [8/16] 0.0, 128
  %1286 = vxpose.xlu0.b32.cont [9/16] 0.0, 128
  %1287 = vxpose.xlu0.b32.cont [10/16] 0.0, 128
  %1288 = vxpose.xlu0.b32.cont [11/16] 0.0, 128
  %1289 = vxpose.xlu0.b32.cont [12/16] 0.0, 128
  %1290 = vxpose.xlu0.b32.cont [13/16] 0.0, 128
  %1291 = vxpose.xlu0.b32.cont [14/16] 0.0, 128
  %1292 = vxpose.xlu0.b32.cont [15/16] 0.0, 128
  %1293 = vxpose.xlu0.b32.end [16/16] 0.0, 128
  %v1294 = vpop.trf.xlu0
  %v1295 = vpop.trf.xlu0
  %v1296 = vpop.trf.xlu0
  %v1297 = vpop.trf.xlu0
  %v1298 = vpop.trf.xlu0
  %v1299 = vpop.trf.xlu0
  %v1300 = vpop.trf.xlu0
  %v1301 = vpop.trf.xlu0
  %v1302 = vpop.trf.xlu0
  %v1303 = vpop.trf.xlu0
  %v1304 = vpop.trf.xlu0
  %v1305 = vpop.trf.xlu0
  %v1306 = vpop.trf.xlu0
  %v1307 = vpop.trf.xlu0
  %v1308 = vpop.trf.xlu0
  %v1309 = vpop.trf.xlu0
  %v1311 = vsel %vm477, %v1294, 0
  %1313 = vmatprep.subr.mxu0 0.0
  %1314 = vmatpush1.msra.mxu0 %v36
  %1315 = vmatprep.subr.mxu0 0.0
  %1316 = vmatpush1.msra.mxu0 0.0
  %1317 = vmatprep.subr.mxu0 0.0
  %1318 = vmatpush1.msra.mxu0 0.0
  %1319 = vmatprep.subr.mxu0 0.0
  %1320 = vmatpush1.msra.mxu0 0.0
  %1321 = vmatprep.subr.mxu0 0.0
  %1322 = vmatpush1.msra.mxu0 0.0
  %1323 = vmatprep.subr.mxu0 0.0
  %1324 = vmatpush1.msra.mxu0 0.0
  %1325 = vmatprep.subr.mxu0 0.0
  %1326 = vmatpush1.msra.mxu0 0.0
  %1327 = vmatprep.subr.mxu0 0.0
  %1328 = vmatpush1.msra.mxu0 0.0
  %1329 = vmatprep.subr.mxu0 0.0
  %1330 = vmatpush1.msra.mxu0 0.0
  %1331 = vmatprep.subr.mxu0 0.0
  %1332 = vmatpush1.msra.mxu0 0.0
  %1333 = vmatprep.subr.mxu0 0.0
  %1334 = vmatpush1.msra.mxu0 0.0
  %1335 = vmatprep.subr.mxu0 0.0
  %1336 = vmatpush1.msra.mxu0 0.0
  %1337 = vmatprep.subr.mxu0 0.0
  %1338 = vmatpush1.msra.mxu0 0.0
  %1339 = vmatprep.subr.mxu0 0.0
  %1340 = vmatpush1.msra.mxu0 0.0
  %1341 = vmatprep.subr.mxu0 0.0
  %1342 = vmatpush1.msra.mxu0 0.0
  %1343 = vmatprep.subr.mxu0 0.0
  %1344 = vmatpush1.msra.mxu0 0.0
  %1345 = vmatprep.subr.mxu0 0.0
  %1346 = vmatpush1.msra.mxu0 0.0
  %1347 = vmatprep.subr.mxu0 0.0
  %1348 = vmatpush1.msra.mxu0 0.0
  %1349 = vmatprep.subr.mxu0 0.0
  %1350 = vmatpush1.msra.mxu0 0.0
  %1351 = vmatprep.subr.mxu0 0.0
  %1352 = vmatpush1.msra.mxu0 0.0
  %1353 = vmatprep.subr.mxu0 0.0
  %1354 = vmatpush1.msra.mxu0 0.0
  %1355 = vmatprep.subr.mxu0 0.0
  %1356 = vmatpush1.msra.mxu0 0.0
  %1357 = vmatprep.subr.mxu0 0.0
  %1358 = vmatpush1.msra.mxu0 0.0
  %1359 = vmatprep.subr.mxu0 0.0
  %1360 = vmatpush1.msra.mxu0 0.0
  %1361 = vmatprep.subr.mxu0 0.0
  %1362 = vmatpush1.msra.mxu0 0.0
  %1363 = vmatprep.subr.mxu0 0.0
  %1364 = vmatpush1.msra.mxu0 0.0
  %1365 = vmatprep.subr.mxu0 0.0
  %1366 = vmatpush1.msra.mxu0 0.0
  %1367 = vmatprep.subr.mxu0 0.0
  %1368 = vmatpush1.msra.mxu0 0.0
  %1369 = vmatprep.subr.mxu0 0.0
  %1370 = vmatpush1.msra.mxu0 0.0
  %1371 = vmatprep.subr.mxu0 0.0
  %1372 = vmatpush1.msra.mxu0 0.0
  %1373 = vmatprep.subr.mxu0 0.0
  %1374 = vmatpush1.msra.mxu0 0.0
  %1375 = vmatprep.subr.mxu0 0.0
  %1376 = vmatpush1.msra.mxu0 0.0
  %1377 = vmatprep.mubr.f32.mxu0 0.0
  %1378 = vmatmul.mubr.f32.gmra.mrb[0].mxu0 %v1311
  %v1379 = vpop.f32.mrb[0].mxu0
  %v1380 = vadd.f32 0.0, %v1379
  %v1381 = vpop.f32.mrb[0].mxu0
  %1382 = vdwg.mxu0
  %v1385 = vrot.slane %v1380, 7
  %v1386 = vsel %vm659, %v1385, %v1275
  %s1388 = scalar_lea.vmem %s2, 8
  %v1389 = vld [vmem:[%s1388] sm:$0xff]
  %v1391 = vcombine.high %v1389, %v1389
  %v1393 = vunpack.c.l.s4 1983009808
  %v1394 = vunpack.c.0.s8 %v1393
  %v1395 = vlaneseq
  %v1396 = vshrl.u32 %v1395, 7
  %v1397 = vsub.s32 %v1394, %v1396
  %v1398 = vrot.slane %v1389, %v1397
  %v1400 = vunpack.c.l.s4 1983009808
  %v1401 = vunpack.c.0.s8 %v1400
  %v1402 = vlaneseq
  %v1403 = vshrl.u32 %v1402, 7
  %v1404 = vsub.s32 %v1401, %v1403
  %v1405 = vrot.slane %v1391, %v1404
  %v1406 = vcombine.high %v1398, %v1398
  %v1407 = vcombine.high %v1405, %v1405
  %1412 = vmatprep.subr.mxu0 %v73
  %1413 = vmatpush1.msra.mxu0 %v72
  %1414 = vmatprep.subr.mxu0 %v77
  %1415 = vmatpush1.msra.mxu0 %v76
  %1416 = vmatprep.subr.mxu0 %v81
  %1417 = vmatpush1.msra.mxu0 %v80
  %1418 = vmatprep.subr.mxu0 %v85
  %1419 = vmatpush1.msra.mxu0 %v84
  %1420 = vmatprep.subr.mxu0 %v89
  %1421 = vmatpush1.msra.mxu0 %v88
  %1422 = vmatprep.subr.mxu0 %v93
  %1423 = vmatpush1.msra.mxu0 %v92
  %1424 = vmatprep.subr.mxu0 %v97
  %1425 = vmatpush1.msra.mxu0 %v96
  %1426 = vmatprep.subr.mxu0 %v101
  %1427 = vmatpush1.msra.mxu0 %v100
  %1428 = vmatprep.subr.mxu0 %v105
  %1429 = vmatpush1.msra.mxu0 %v104
  %1430 = vmatprep.subr.mxu0 %v109
  %1431 = vmatpush1.msra.mxu0 %v108
  %1432 = vmatprep.subr.mxu0 %v113
  %1433 = vmatpush1.msra.mxu0 %v112
  %1434 = vmatprep.subr.mxu0 %v117
  %1435 = vmatpush1.msra.mxu0 %v116
  %1436 = vmatprep.subr.mxu0 %v121
  %1437 = vmatpush1.msra.mxu0 %v120
  %1438 = vmatprep.subr.mxu0 %v125
  %1439 = vmatpush1.msra.mxu0 %v124
  %1440 = vmatprep.subr.mxu0 %v129
  %1441 = vmatpush1.msra.mxu0 %v128
  %1442 = vmatprep.subr.mxu0 %v133
  %1443 = vmatpush1.msra.mxu0 %v132
  %1444 = vmatprep.subr.mxu0 %v137
  %1445 = vmatpush1.msra.mxu0 %v136
  %1446 = vmatprep.subr.mxu0 %v141
  %1447 = vmatpush1.msra.mxu0 %v140
  %1448 = vmatprep.subr.mxu0 %v145
  %1449 = vmatpush1.msra.mxu0 %v144
  %1450 = vmatprep.subr.mxu0 %v149
  %1451 = vmatpush1.msra.mxu0 %v148
  %1452 = vmatprep.subr.mxu0 %v153
  %1453 = vmatpush1.msra.mxu0 %v152
  %1454 = vmatprep.subr.mxu0 %v157
  %1455 = vmatpush1.msra.mxu0 %v156
  %1456 = vmatprep.subr.mxu0 %v161
  %1457 = vmatpush1.msra.mxu0 %v160
  %1458 = vmatprep.subr.mxu0 %v165
  %1459 = vmatpush1.msra.mxu0 %v164
  %1460 = vmatprep.subr.mxu0 %v169
  %1461 = vmatpush1.msra.mxu0 %v168
  %1462 = vmatprep.subr.mxu0 %v173
  %1463 = vmatpush1.msra.mxu0 %v172
  %1464 = vmatprep.subr.mxu0 %v177
  %1465 = vmatpush1.msra.mxu0 %v176
  %1466 = vmatprep.subr.mxu0 %v181
  %1467 = vmatpush1.msra.mxu0 %v180
  %1468 = vmatprep.subr.mxu0 %v185
  %1469 = vmatpush1.msra.mxu0 %v184
  %1470 = vmatprep.subr.mxu0 %v189
  %1471 = vmatpush1.msra.mxu0 %v188
  %1472 = vmatprep.subr.mxu0 %v193
  %1473 = vmatpush1.msra.mxu0 %v192
  %1474 = vmatprep.subr.mxu0 %v197
  %1475 = vmatpush1.msra.mxu0 %v196
  %1476 = vmatprep.mubr.f32.mxu0 %v875
  %1477 = vmatmul.mubr.f32.gmra.mrb[0].mxu0 %v1386
  %v1478 = vpop.f32.mrb[0].mxu0
  %v1479 = vadd.f32 %v1398, %v1478
  %v1480 = vpop.f32.mrb[0].mxu0
  %v1481 = vadd.f32 %v1406, %v1480
  %1482 = vdwg.mxu0
  %1483 = vmatprep.subr.mxu0 %v75
  %1484 = vmatpush1.msra.mxu0 %v74
  %1485 = vmatprep.subr.mxu0 %v79
  %1486 = vmatpush1.msra.mxu0 %v78
  %1487 = vmatprep.subr.mxu0 %v83
  %1488 = vmatpush1.msra.mxu0 %v82
  %1489 = vmatprep.subr.mxu0 %v87
  %1490 = vmatpush1.msra.mxu0 %v86
  %1491 = vmatprep.subr.mxu0 %v91
  %1492 = vmatpush1.msra.mxu0 %v90
  %1493 = vmatprep.subr.mxu0 %v95
  %1494 = vmatpush1.msra.mxu0 %v94
  %1495 = vmatprep.subr.mxu0 %v99
  %1496 = vmatpush1.msra.mxu0 %v98
  %1497 = vmatprep.subr.mxu0 %v103
  %1498 = vmatpush1.msra.mxu0 %v102
  %1499 = vmatprep.subr.mxu0 %v107
  %1500 = vmatpush1.msra.mxu0 %v106
  %1501 = vmatprep.subr.mxu0 %v111
  %1502 = vmatpush1.msra.mxu0 %v110
  %1503 = vmatprep.subr.mxu0 %v115
  %1504 = vmatpush1.msra.mxu0 %v114
  %1505 = vmatprep.subr.mxu0 %v119
  %1506 = vmatpush1.msra.mxu0 %v118
  %1507 = vmatprep.subr.mxu0 %v123
  %1508 = vmatpush1.msra.mxu0 %v122
  %1509 = vmatprep.subr.mxu0 %v127
  %1510 = vmatpush1.msra.mxu0 %v126
  %1511 = vmatprep.subr.mxu0 %v131
  %1512 = vmatpush1.msra.mxu0 %v130
  %1513 = vmatprep.subr.mxu0 %v135
  %1514 = vmatpush1.msra.mxu0 %v134
  %1515 = vmatprep.subr.mxu0 %v139
  %1516 = vmatpush1.msra.mxu0 %v138
  %1517 = vmatprep.subr.mxu0 %v143
  %1518 = vmatpush1.msra.mxu0 %v142
  %1519 = vmatprep.subr.mxu0 %v147
  %1520 = vmatpush1.msra.mxu0 %v146
  %1521 = vmatprep.subr.mxu0 %v151
  %1522 = vmatpush1.msra.mxu0 %v150
  %1523 = vmatprep.subr.mxu0 %v155
  %1524 = vmatpush1.msra.mxu0 %v154
  %1525 = vmatprep.subr.mxu0 %v159
  %1526 = vmatpush1.msra.mxu0 %v158
  %1527 = vmatprep.subr.mxu0 %v163
  %1528 = vmatpush1.msra.mxu0 %v162
  %1529 = vmatprep.subr.mxu0 %v167
  %1530 = vmatpush1.msra.mxu0 %v166
  %1531 = vmatprep.subr.mxu0 %v171
  %1532 = vmatpush1.msra.mxu0 %v170
  %1533 = vmatprep.subr.mxu0 %v175
  %1534 = vmatpush1.msra.mxu0 %v174
  %1535 = vmatprep.subr.mxu0 %v179
  %1536 = vmatpush1.msra.mxu0 %v178
  %1537 = vmatprep.subr.mxu0 %v183
  %1538 = vmatpush1.msra.mxu0 %v182
  %1539 = vmatprep.subr.mxu0 %v187
  %1540 = vmatpush1.msra.mxu0 %v186
  %1541 = vmatprep.subr.mxu0 %v191
  %1542 = vmatpush1.msra.mxu0 %v190
  %1543 = vmatprep.subr.mxu0 %v195
  %1544 = vmatpush1.msra.mxu0 %v194
  %1545 = vmatprep.subr.mxu0 %v199
  %1546 = vmatpush1.msra.mxu0 %v198
  %1547 = vmatprep.mubr.f32.mxu0 %v875
  %1548 = vmatmul.mubr.f32.gmra.mrb[0].mxu0 %v1386
  %v1549 = vpop.f32.mrb[0].mxu0
  %v1550 = vadd.f32 %v1405, %v1549
  %v1551 = vpop.f32.mrb[0].mxu0
  %v1552 = vadd.f32 %v1407, %v1551
  %1553 = vdwg.mxu0
  %v1554 = vadd.f32 %v1479, %v831
  %v1555 = vadd.f32 %v1481, %v835
  %v1556 = vadd.f32 %v1550, %v839
  %v1557 = vadd.f32 %v1552, %v843
  %v1558 = vxor.u32 %v1554, 2147483648
  %v1559 = vmul.f32 %v1558, 1.442695
  %v1560 = vpow.pop %v1559
  %v1561 = vadd.f32 %v1560, 1.0
  %v1562 = vrcp.pop %v1561
  %v1563 = vmul.f32 1.0, %v1562
  %v1564 = vxor.u32 %v1555, 2147483648
  %v1565 = vmul.f32 %v1564, 1.442695
  %v1566 = vpow.pop %v1565
  %v1567 = vadd.f32 %v1566, 1.0
  %v1568 = vrcp.pop %v1567
  %v1569 = vmul.f32 1.0, %v1568
  %v1570 = vtanh.pop %v1556
  %v1571 = vxor.u32 %v1557, 2147483648
  %v1572 = vmul.f32 %v1571, 1.442695
  %v1573 = vpow.pop %v1572
  %v1574 = vadd.f32 %v1573, 1.0
  %v1575 = vrcp.pop %v1574
  %v1576 = vmul.f32 1.0, %v1575
  %v1577 = vmul.f32 %v1569, %v873
  %v1578 = vmul.f32 %v1563, %v1570
  %v1579 = vadd.f32 %v1577, %v1578
  %v1580 = vtanh.pop %v1579
  %v1581 = vmul.f32 %v1576, %v1580
  %1582 = vmatprep.subr.mxu0 0.0
  %1583 = vmatpush1.msra.mxu0 %v201
  %1584 = vmatprep.subr.mxu0 0.0
  %1585 = vmatpush1.msra.mxu0 %v202
  %1586 = vmatprep.subr.mxu0 0.0
  %1587 = vmatpush1.msra.mxu0 %v203
  %1588 = vmatprep.subr.mxu0 0.0
  %1589 = vmatpush1.msra.mxu0 %v204
  %1590 = vmatprep.subr.mxu0 0.0
  %1591 = vmatpush1.msra.mxu0 %v205
  %1592 = vmatprep.subr.mxu0 0.0
  %1593 = vmatpush1.msra.mxu0 %v206
  %1594 = vmatprep.subr.mxu0 0.0
  %1595 = vmatpush1.msra.mxu0 %v207
  %1596 = vmatprep.subr.mxu0 0.0
  %1597 = vmatpush1.msra.mxu0 %v208
  %1598 = vmatprep.subr.mxu0 0.0
  %1599 = vmatpush1.msra.mxu0 %v209
  %1600 = vmatprep.subr.mxu0 0.0
  %1601 = vmatpush1.msra.mxu0 %v210
  %1602 = vmatprep.subr.mxu0 0.0
  %1603 = vmatpush1.msra.mxu0 %v211
  %1604 = vmatprep.subr.mxu0 0.0
  %1605 = vmatpush1.msra.mxu0 %v212
  %1606 = vmatprep.subr.mxu0 0.0
  %1607 = vmatpush1.msra.mxu0 %v213
  %1608 = vmatprep.subr.mxu0 0.0
  %1609 = vmatpush1.msra.mxu0 %v214
  %1610 = vmatprep.subr.mxu0 0.0
  %1611 = vmatpush1.msra.mxu0 %v215
  %1612 = vmatprep.subr.mxu0 0.0
  %1613 = vmatpush1.msra.mxu0 %v216
  %1614 = vmatprep.subr.mxu0 0.0
  %1615 = vmatpush1.msra.mxu0 0.0
  %1616 = vmatprep.subr.mxu0 0.0
  %1617 = vmatpush1.msra.mxu0 0.0
  %1618 = vmatprep.subr.mxu0 0.0
  %1619 = vmatpush1.msra.mxu0 0.0
  %1620 = vmatprep.subr.mxu0 0.0
  %1621 = vmatpush1.msra.mxu0 0.0
  %1622 = vmatprep.subr.mxu0 0.0
  %1623 = vmatpush1.msra.mxu0 0.0
  %1624 = vmatprep.subr.mxu0 0.0
  %1625 = vmatpush1.msra.mxu0 0.0
  %1626 = vmatprep.subr.mxu0 0.0
  %1627 = vmatpush1.msra.mxu0 0.0
  %1628 = vmatprep.subr.mxu0 0.0
  %1629 = vmatpush1.msra.mxu0 0.0
  %1630 = vmatprep.subr.mxu0 0.0
  %1631 = vmatpush1.msra.mxu0 0.0
  %1632 = vmatprep.subr.mxu0 0.0
  %1633 = vmatpush1.msra.mxu0 0.0
  %1634 = vmatprep.subr.mxu0 0.0
  %1635 = vmatpush1.msra.mxu0 0.0
  %1636 = vmatprep.subr.mxu0 0.0
  %1637 = vmatpush1.msra.mxu0 0.0
  %1638 = vmatprep.subr.mxu0 0.0
  %1639 = vmatpush1.msra.mxu0 0.0
  %1640 = vmatprep.subr.mxu0 0.0
  %1641 = vmatpush1.msra.mxu0 0.0
  %1642 = vmatprep.subr.mxu0 0.0
  %1643 = vmatpush1.msra.mxu0 0.0
  %1644 = vmatprep.subr.mxu0 0.0
  %1645 = vmatpush1.msra.mxu0 0.0
  %1646 = vmatprep.mubr.f32.mxu0 0.0
  %1647 = vmatmul.mubr.f32.gmra.mrb[0].mxu0 %v1581
  %v1648 = vpop.f32.mrb[0].mxu0
  %v1649 = vadd.f32 %v880, %v1648
  %v1650 = vpop.f32.mrb[0].mxu0
  %1651 = vdwg.mxu0
  %s1652 = scalar_lea.vmem %s10, 2
  %1653 = vst [vmem:[%s1652] sm:$0x3] %v1649
  %1654 = vmatprep.subr.mxu0 0.0
  %1655 = vmatpush1.msra.mxu0 %v39
  %1656 = vmatprep.subr.mxu0 0.0
  %1657 = vmatpush1.msra.mxu0 %v40
  %1658 = vmatprep.subr.mxu0 0.0
  %1659 = vmatpush1.msra.mxu0 %v41
  %1660 = vmatprep.subr.mxu0 0.0
  %1661 = vmatpush1.msra.mxu0 %v42
  %1662 = vmatprep.subr.mxu0 0.0
  %1663 = vmatpush1.msra.mxu0 %v43
  %1664 = vmatprep.subr.mxu0 0.0
  %1665 = vmatpush1.msra.mxu0 %v44
  %1666 = vmatprep.subr.mxu0 0.0
  %1667 = vmatpush1.msra.mxu0 %v45
  %1668 = vmatprep.subr.mxu0 0.0
  %1669 = vmatpush1.msra.mxu0 %v46
  %1670 = vmatprep.subr.mxu0 0.0
  %1671 = vmatpush1.msra.mxu0 %v47
  %1672 = vmatprep.subr.mxu0 0.0
  %1673 = vmatpush1.msra.mxu0 %v48
  %1674 = vmatprep.subr.mxu0 0.0
  %1675 = vmatpush1.msra.mxu0 %v49
  %1676 = vmatprep.subr.mxu0 0.0
  %1677 = vmatpush1.msra.mxu0 %v50
  %1678 = vmatprep.subr.mxu0 0.0
  %1679 = vmatpush1.msra.mxu0 %v51
  %1680 = vmatprep.subr.mxu0 0.0
  %1681 = vmatpush1.msra.mxu0 %v52
  %1682 = vmatprep.subr.mxu0 0.0
  %1683 = vmatpush1.msra.mxu0 %v53
  %1684 = vmatprep.subr.mxu0 0.0
  %1685 = vmatpush1.msra.mxu0 %v54
  %1686 = vmatprep.subr.mxu0 0.0
  %1687 = vmatpush1.msra.mxu0 0.0
  %1688 = vmatprep.subr.mxu0 0.0
  %1689 = vmatpush1.msra.mxu0 0.0
  %1690 = vmatprep.subr.mxu0 0.0
  %1691 = vmatpush1.msra.mxu0 0.0
  %1692 = vmatprep.subr.mxu0 0.0
  %1693 = vmatpush1.msra.mxu0 0.0
  %1694 = vmatprep.subr.mxu0 0.0
  %1695 = vmatpush1.msra.mxu0 0.0
  %1696 = vmatprep.subr.mxu0 0.0
  %1697 = vmatpush1.msra.mxu0 0.0
  %1698 = vmatprep.subr.mxu0 0.0
  %1699 = vmatpush1.msra.mxu0 0.0
  %1700 = vmatprep.subr.mxu0 0.0
  %1701 = vmatpush1.msra.mxu0 0.0
  %1702 = vmatprep.subr.mxu0 0.0
  %1703 = vmatpush1.msra.mxu0 0.0
  %1704 = vmatprep.subr.mxu0 0.0
  %1705 = vmatpush1.msra.mxu0 0.0
  %1706 = vmatprep.subr.mxu0 0.0
  %1707 = vmatpush1.msra.mxu0 0.0
  %1708 = vmatprep.subr.mxu0 0.0
  %1709 = vmatpush1.msra.mxu0 0.0
  %1710 = vmatprep.subr.mxu0 0.0
  %1711 = vmatpush1.msra.mxu0 0.0
  %1712 = vmatprep.subr.mxu0 0.0
  %1713 = vmatpush1.msra.mxu0 0.0
  %1714 = vmatprep.subr.mxu0 0.0
  %1715 = vmatpush1.msra.mxu0 0.0
  %1716 = vmatprep.subr.mxu0 0.0
  %1717 = vmatpush1.msra.mxu0 0.0
  %1718 = vmatprep.mubr.f32.mxu0 0.0
  %1719 = vmatmul.mubr.f32.gmra.mrb[0].mxu0 %v1581
  %v1720 = vpop.f32.mrb[0].mxu0
  %v1721 = vadd.f32 %v222, %v1720
  %v1722 = vpop.f32.mrb[0].mxu0
  %1723 = vdwg.mxu0
  %v1726 = vunpack.c.l.s4 1966171168
  %v1727 = vunpack.c.0.s8 %v1726
  %v1728 = vlaneseq
  %v1729 = vshrl.u32 %v1728, 7
  %v1730 = vsub.s32 %v1727, %v1729
  %v1731 = vrot.slane %v1721, %v1730
  %v1732 = vcombine.high %v1731, %v1731
  %v1734 = vunpack.c.l.s4 1966171168
  %v1735 = vunpack.c.0.s8 %v1734
  %v1736 = vlaneseq
  %v1737 = vshrl.u32 %v1736, 7
  %v1738 = vsub.s32 %v1735, %v1737
  %v1739 = vrot.slane %v1731, %v1738
  %v1741 = vunpack.c.l.s4 1966171168
  %v1742 = vunpack.c.0.s8 %v1741
  %v1743 = vlaneseq
  %v1744 = vshrl.u32 %v1743, 7
  %v1745 = vsub.s32 %v1742, %v1744
  %v1746 = vrot.slane %v1732, %v1745
  %v1747 = vlaneseq
  %v1748 = vshrl.u32 %v1747, 7
  %v1749 = vsub.s32 0, %v1748
  %v1750 = vrot.slane %v1739, %v1749
  %v1751 = vlaneseq
  %v1752 = vshrl.u32 %v1751, 7
  %v1753 = vsub.s32 0, %v1752
  %v1754 = vrot.slane %v1746, %v1753
  %v1757 = vadd.f32 %v37, %v1750
  %v1758 = vadd.f32 %v38, %v1754
  %v1759 = vtanh.pop %v1757
  %v1760 = vtanh.pop %v1758
  %1761 = vmatprep.subr.mxu0 0.0
  %1762 = vmatpush1.msra.mxu0 %v56
  %1763 = vmatprep.subr.mxu0 0.0
  %1764 = vmatpush1.msra.mxu0 %v57
  %1765 = vmatprep.subr.mxu0 0.0
  %1766 = vmatpush1.msra.mxu0 %v58
  %1767 = vmatprep.subr.mxu0 0.0
  %1768 = vmatpush1.msra.mxu0 %v59
  %1769 = vmatprep.subr.mxu0 0.0
  %1770 = vmatpush1.msra.mxu0 %v60
  %1771 = vmatprep.subr.mxu0 0.0
  %1772 = vmatpush1.msra.mxu0 %v61
  %1773 = vmatprep.subr.mxu0 0.0
  %1774 = vmatpush1.msra.mxu0 %v62
  %1775 = vmatprep.subr.mxu0 0.0
  %1776 = vmatpush1.msra.mxu0 %v63
  %1777 = vmatprep.subr.mxu0 0.0
  %1778 = vmatpush1.msra.mxu0 %v64
  %1779 = vmatprep.subr.mxu0 0.0
  %1780 = vmatpush1.msra.mxu0 %v65
  %1781 = vmatprep.subr.mxu0 0.0
  %1782 = vmatpush1.msra.mxu0 %v66
  %1783 = vmatprep.subr.mxu0 0.0
  %1784 = vmatpush1.msra.mxu0 %v67
  %1785 = vmatprep.subr.mxu0 0.0
  %1786 = vmatpush1.msra.mxu0 %v68
  %1787 = vmatprep.subr.mxu0 0.0
  %1788 = vmatpush1.msra.mxu0 %v69
  %1789 = vmatprep.subr.mxu0 0.0
  %1790 = vmatpush1.msra.mxu0 %v70
  %1791 = vmatprep.subr.mxu0 0.0
  %1792 = vmatpush1.msra.mxu0 %v71
  %1793 = vmatprep.subr.mxu0 0.0
  %1794 = vmatpush1.msra.mxu0 0.0
  %1795 = vmatprep.subr.mxu0 0.0
  %1796 = vmatpush1.msra.mxu0 0.0
  %1797 = vmatprep.subr.mxu0 0.0
  %1798 = vmatpush1.msra.mxu0 0.0
  %1799 = vmatprep.subr.mxu0 0.0
  %1800 = vmatpush1.msra.mxu0 0.0
  %1801 = vmatprep.subr.mxu0 0.0
  %1802 = vmatpush1.msra.mxu0 0.0
  %1803 = vmatprep.subr.mxu0 0.0
  %1804 = vmatpush1.msra.mxu0 0.0
  %1805 = vmatprep.subr.mxu0 0.0
  %1806 = vmatpush1.msra.mxu0 0.0
  %1807 = vmatprep.subr.mxu0 0.0
  %1808 = vmatpush1.msra.mxu0 0.0
  %1809 = vmatprep.subr.mxu0 0.0
  %1810 = vmatpush1.msra.mxu0 0.0
  %1811 = vmatprep.subr.mxu0 0.0
  %1812 = vmatpush1.msra.mxu0 0.0
  %1813 = vmatprep.subr.mxu0 0.0
  %1814 = vmatpush1.msra.mxu0 0.0
  %1815 = vmatprep.subr.mxu0 0.0
  %1816 = vmatpush1.msra.mxu0 0.0
  %1817 = vmatprep.subr.mxu0 0.0
  %1818 = vmatpush1.msra.mxu0 0.0
  %1819 = vmatprep.subr.mxu0 0.0
  %1820 = vmatpush1.msra.mxu0 0.0
  %1821 = vmatprep.subr.mxu0 0.0
  %1822 = vmatpush1.msra.mxu0 0.0
  %1823 = vmatprep.subr.mxu0 0.0
  %1824 = vmatpush1.msra.mxu0 0.0
  %1825 = vmatprep.mubr.f32.mxu0 0.0
  %1826 = vmatmul.mubr.f32.gmra.mrb[0].mxu0 %v1759
  %v1827 = vpop.f32.mrb[0].mxu0
  %v1828 = vadd.f32 0.0, %v1827
  %v1829 = vpop.f32.mrb[0].mxu0
  %1830 = vmatprep.mubr.f32.mxu0 0.0
  %1831 = vmatmul.mubr.f32.gmra.mrb[0].mxu0 %v1760
  %v1832 = vpop.f32.mrb[0].mxu0
  %v1833 = vadd.f32 0.0, %v1832
  %v1834 = vpop.f32.mrb[0].mxu0
  %1835 = vdwg.mxu0
  %v1836 = vsel %vm406, %v1828, -inf
  %v1837 = vrot.slane %v1836, 4
  %v1838 = vmax.f32 %v1836, %v1837
  %v1839 = vrot.slane %v1838, 2
  %v1840 = vmax.f32 %v1838, %v1839
  %v1841 = vrot.slane %v1840, 1
  %v1842 = vmax.f32 %v1840, %v1841
  %v1843 = vsel %vm406, %v1833, -inf
  %v1844 = vrot.slane %v1843, 4
  %v1845 = vmax.f32 %v1843, %v1844
  %v1846 = vrot.slane %v1845, 2
  %v1847 = vmax.f32 %v1845, %v1846
  %v1848 = vrot.slane %v1847, 1
  %v1849 = vmax.f32 %v1847, %v1848
  %v1850 = vsub.f32 %v1828, %v1842
  %v1851 = vsub.f32 %v1833, %v1849
  %v1852 = vmul.f32 %v1850, 1.442695
  %v1853 = vpow.pop %v1852
  %v1854 = vmul.f32 %v1851, 1.442695
  %v1855 = vpow.pop %v1854
  %v1856 = vsel %vm406, %v1853, 0.0
  %v1857 = vrot.slane %v1856, 4
  %v1858 = vadd.f32 %v1856, %v1857
  %v1859 = vrot.slane %v1858, 2
  %v1860 = vadd.f32 %v1858, %v1859
  %v1861 = vrot.slane %v1860, 1
  %v1862 = vadd.f32 %v1860, %v1861
  %v1863 = vsel %vm406, %v1855, 0.0
  %v1864 = vrot.slane %v1863, 4
  %v1865 = vadd.f32 %v1863, %v1864
  %v1866 = vrot.slane %v1865, 2
  %v1867 = vadd.f32 %v1865, %v1866
  %v1868 = vrot.slane %v1867, 1
  %v1869 = vadd.f32 %v1867, %v1868
  %v1870 = vrcp.pop %v1862
  %v1871 = vrcp.pop %v1869
  %v1872 = vmul.f32 %v1853, %v1870
  %v1873 = vmul.f32 %v1855, %v1871
  %1874 = vxpose.xlu0.b32.start [1/16] %v1872, 128
  %1875 = vxpose.xlu0.b32.cont [2/16] 0.0, 128
  %1876 = vxpose.xlu0.b32.cont [3/16] 0.0, 128
  %1877 = vxpose.xlu0.b32.cont [4/16] 0.0, 128
  %1878 = vxpose.xlu0.b32.cont [5/16] 0.0, 128
  %1879 = vxpose.xlu0.b32.cont [6/16] 0.0, 128
  %1880 = vxpose.xlu0.b32.cont [7/16] 0.0, 128
  %1881 = vxpose.xlu0.b32.cont [8/16] 0.0, 128
  %1882 = vxpose.xlu0.b32.cont [9/16] 0.0, 128
  %1883 = vxpose.xlu0.b32.cont [10/16] 0.0, 128
  %1884 = vxpose.xlu0.b32.cont [11/16] 0.0, 128
  %1885 = vxpose.xlu0.b32.cont [12/16] 0.0, 128
  %1886 = vxpose.xlu0.b32.cont [13/16] 0.0, 128
  %1887 = vxpose.xlu0.b32.cont [14/16] 0.0, 128
  %1888 = vxpose.xlu0.b32.cont [15/16] 0.0, 128
  %1889 = vxpose.xlu0.b32.end [16/16] 0.0, 128
  %v1890 = vpop.trf.xlu0
  %v1891 = vpop.trf.xlu0
  %v1892 = vpop.trf.xlu0
  %v1893 = vpop.trf.xlu0
  %v1894 = vpop.trf.xlu0
  %v1895 = vpop.trf.xlu0
  %v1896 = vpop.trf.xlu0
  %v1897 = vpop.trf.xlu0
  %v1898 = vpop.trf.xlu0
  %v1899 = vpop.trf.xlu0
  %v1900 = vpop.trf.xlu0
  %v1901 = vpop.trf.xlu0
  %v1902 = vpop.trf.xlu0
  %v1903 = vpop.trf.xlu0
  %v1904 = vpop.trf.xlu0
  %v1905 = vpop.trf.xlu0
  %v1907 = vsel %vm477, %v1890, 0
  %1909 = vmatprep.subr.mxu0 0.0
  %1910 = vmatpush1.msra.mxu0 %v35
  %1911 = vmatprep.subr.mxu0 0.0
  %1912 = vmatpush1.msra.mxu0 0.0
  %1913 = vmatprep.subr.mxu0 0.0
  %1914 = vmatpush1.msra.mxu0 0.0
  %1915 = vmatprep.subr.mxu0 0.0
  %1916 = vmatpush1.msra.mxu0 0.0
  %1917 = vmatprep.subr.mxu0 0.0
  %1918 = vmatpush1.msra.mxu0 0.0
  %1919 = vmatprep.subr.mxu0 0.0
  %1920 = vmatpush1.msra.mxu0 0.0
  %1921 = vmatprep.subr.mxu0 0.0
  %1922 = vmatpush1.msra.mxu0 0.0
  %1923 = vmatprep.subr.mxu0 0.0
  %1924 = vmatpush1.msra.mxu0 0.0
  %1925 = vmatprep.subr.mxu0 0.0
  %1926 = vmatpush1.msra.mxu0 0.0
  %1927 = vmatprep.subr.mxu0 0.0
  %1928 = vmatpush1.msra.mxu0 0.0
  %1929 = vmatprep.subr.mxu0 0.0
  %1930 = vmatpush1.msra.mxu0 0.0
  %1931 = vmatprep.subr.mxu0 0.0
  %1932 = vmatpush1.msra.mxu0 0.0
  %1933 = vmatprep.subr.mxu0 0.0
  %1934 = vmatpush1.msra.mxu0 0.0
  %1935 = vmatprep.subr.mxu0 0.0
  %1936 = vmatpush1.msra.mxu0 0.0
  %1937 = vmatprep.subr.mxu0 0.0
  %1938 = vmatpush1.msra.mxu0 0.0
  %1939 = vmatprep.subr.mxu0 0.0
  %1940 = vmatpush1.msra.mxu0 0.0
  %1941 = vmatprep.subr.mxu0 0.0
  %1942 = vmatpush1.msra.mxu0 0.0
  %1943 = vmatprep.subr.mxu0 0.0
  %1944 = vmatpush1.msra.mxu0 0.0
  %1945 = vmatprep.subr.mxu0 0.0
  %1946 = vmatpush1.msra.mxu0 0.0
  %1947 = vmatprep.subr.mxu0 0.0
  %1948 = vmatpush1.msra.mxu0 0.0
  %1949 = vmatprep.subr.mxu0 0.0
  %1950 = vmatpush1.msra.mxu0 0.0
  %1951 = vmatprep.subr.mxu0 0.0
  %1952 = vmatpush1.msra.mxu0 0.0
  %1953 = vmatprep.subr.mxu0 0.0
  %1954 = vmatpush1.msra.mxu0 0.0
  %1955 = vmatprep.subr.mxu0 0.0
  %1956 = vmatpush1.msra.mxu0 0.0
  %1957 = vmatprep.subr.mxu0 0.0
  %1958 = vmatpush1.msra.mxu0 0.0
  %1959 = vmatprep.subr.mxu0 0.0
  %1960 = vmatpush1.msra.mxu0 0.0
  %1961 = vmatprep.subr.mxu0 0.0
  %1962 = vmatpush1.msra.mxu0 0.0
  %1963 = vmatprep.subr.mxu0 0.0
  %1964 = vmatpush1.msra.mxu0 0.0
  %1965 = vmatprep.subr.mxu0 0.0
  %1966 = vmatpush1.msra.mxu0 0.0
  %1967 = vmatprep.subr.mxu0 0.0
  %1968 = vmatpush1.msra.mxu0 0.0
  %1969 = vmatprep.subr.mxu0 0.0
  %1970 = vmatpush1.msra.mxu0 0.0
  %1971 = vmatprep.subr.mxu0 0.0
  %1972 = vmatpush1.msra.mxu0 0.0
  %1973 = vmatprep.mubr.f32.mxu0 0.0
  %1974 = vmatmul.mubr.f32.gmra.mrb[0].mxu0 %v1907
  %v1975 = vpop.f32.mrb[0].mxu0
  %v1976 = vadd.f32 0.0, %v1975
  %v1977 = vpop.f32.mrb[0].mxu0
  %1978 = vdwg.mxu0
  %1979 = vxpose.xlu0.b32.start [1/16] %v1873, 128
  %1980 = vxpose.xlu0.b32.cont [2/16] 0.0, 128
  %1981 = vxpose.xlu0.b32.cont [3/16] 0.0, 128
  %1982 = vxpose.xlu0.b32.cont [4/16] 0.0, 128
  %1983 = vxpose.xlu0.b32.cont [5/16] 0.0, 128
  %1984 = vxpose.xlu0.b32.cont [6/16] 0.0, 128
  %1985 = vxpose.xlu0.b32.cont [7/16] 0.0, 128
  %1986 = vxpose.xlu0.b32.cont [8/16] 0.0, 128
  %1987 = vxpose.xlu0.b32.cont [9/16] 0.0, 128
  %1988 = vxpose.xlu0.b32.cont [10/16] 0.0, 128
  %1989 = vxpose.xlu0.b32.cont [11/16] 0.0, 128
  %1990 = vxpose.xlu0.b32.cont [12/16] 0.0, 128
  %1991 = vxpose.xlu0.b32.cont [13/16] 0.0, 128
  %1992 = vxpose.xlu0.b32.cont [14/16] 0.0, 128
  %1993 = vxpose.xlu0.b32.cont [15/16] 0.0, 128
  %1994 = vxpose.xlu0.b32.end [16/16] 0.0, 128
  %v1995 = vpop.trf.xlu0
  %v1996 = vpop.trf.xlu0
  %v1997 = vpop.trf.xlu0
  %v1998 = vpop.trf.xlu0
  %v1999 = vpop.trf.xlu0
  %v2000 = vpop.trf.xlu0
  %v2001 = vpop.trf.xlu0
  %v2002 = vpop.trf.xlu0
  %v2003 = vpop.trf.xlu0
  %v2004 = vpop.trf.xlu0
  %v2005 = vpop.trf.xlu0
  %v2006 = vpop.trf.xlu0
  %v2007 = vpop.trf.xlu0
  %v2008 = vpop.trf.xlu0
  %v2009 = vpop.trf.xlu0
  %v2010 = vpop.trf.xlu0
  %v2012 = vsel %vm477, %v1995, 0
  %2014 = vmatprep.subr.mxu0 0.0
  %2015 = vmatpush1.msra.mxu0 %v36
  %2016 = vmatprep.subr.mxu0 0.0
  %2017 = vmatpush1.msra.mxu0 0.0
  %2018 = vmatprep.subr.mxu0 0.0
  %2019 = vmatpush1.msra.mxu0 0.0
  %2020 = vmatprep.subr.mxu0 0.0
  %2021 = vmatpush1.msra.mxu0 0.0
  %2022 = vmatprep.subr.mxu0 0.0
  %2023 = vmatpush1.msra.mxu0 0.0
  %2024 = vmatprep.subr.mxu0 0.0
  %2025 = vmatpush1.msra.mxu0 0.0
  %2026 = vmatprep.subr.mxu0 0.0
  %2027 = vmatpush1.msra.mxu0 0.0
  %2028 = vmatprep.subr.mxu0 0.0
  %2029 = vmatpush1.msra.mxu0 0.0
  %2030 = vmatprep.subr.mxu0 0.0
  %2031 = vmatpush1.msra.mxu0 0.0
  %2032 = vmatprep.subr.mxu0 0.0
  %2033 = vmatpush1.msra.mxu0 0.0
  %2034 = vmatprep.subr.mxu0 0.0
  %2035 = vmatpush1.msra.mxu0 0.0
  %2036 = vmatprep.subr.mxu0 0.0
  %2037 = vmatpush1.msra.mxu0 0.0
  %2038 = vmatprep.subr.mxu0 0.0
  %2039 = vmatpush1.msra.mxu0 0.0
  %2040 = vmatprep.subr.mxu0 0.0
  %2041 = vmatpush1.msra.mxu0 0.0
  %2042 = vmatprep.subr.mxu0 0.0
  %2043 = vmatpush1.msra.mxu0 0.0
  %2044 = vmatprep.subr.mxu0 0.0
  %2045 = vmatpush1.msra.mxu0 0.0
  %2046 = vmatprep.subr.mxu0 0.0
  %2047 = vmatpush1.msra.mxu0 0.0
  %2048 = vmatprep.subr.mxu0 0.0
  %2049 = vmatpush1.msra.mxu0 0.0
  %2050 = vmatprep.subr.mxu0 0.0
  %2051 = vmatpush1.msra.mxu0 0.0
  %2052 = vmatprep.subr.mxu0 0.0
  %2053 = vmatpush1.msra.mxu0 0.0
  %2054 = vmatprep.subr.mxu0 0.0
  %2055 = vmatpush1.msra.mxu0 0.0
  %2056 = vmatprep.subr.mxu0 0.0
  %2057 = vmatpush1.msra.mxu0 0.0
  %2058 = vmatprep.subr.mxu0 0.0
  %2059 = vmatpush1.msra.mxu0 0.0
  %2060 = vmatprep.subr.mxu0 0.0
  %2061 = vmatpush1.msra.mxu0 0.0
  %2062 = vmatprep.subr.mxu0 0.0
  %2063 = vmatpush1.msra.mxu0 0.0
  %2064 = vmatprep.subr.mxu0 0.0
  %2065 = vmatpush1.msra.mxu0 0.0
  %2066 = vmatprep.subr.mxu0 0.0
  %2067 = vmatpush1.msra.mxu0 0.0
  %2068 = vmatprep.subr.mxu0 0.0
  %2069 = vmatpush1.msra.mxu0 0.0
  %2070 = vmatprep.subr.mxu0 0.0
  %2071 = vmatpush1.msra.mxu0 0.0
  %2072 = vmatprep.subr.mxu0 0.0
  %2073 = vmatpush1.msra.mxu0 0.0
  %2074 = vmatprep.subr.mxu0 0.0
  %2075 = vmatpush1.msra.mxu0 0.0
  %2076 = vmatprep.subr.mxu0 0.0
  %2077 = vmatpush1.msra.mxu0 0.0
  %2078 = vmatprep.mubr.f32.mxu0 0.0
  %2079 = vmatmul.mubr.f32.gmra.mrb[0].mxu0 %v2012
  %v2080 = vpop.f32.mrb[0].mxu0
  %v2081 = vadd.f32 0.0, %v2080
  %v2082 = vpop.f32.mrb[0].mxu0
  %2083 = vdwg.mxu0
  %v2086 = vrot.slane %v2081, 7
  %v2087 = vsel %vm659, %v2086, %v1976
  %s2089 = scalar_lea.vmem %s2, 16
  %v2090 = vld [vmem:[%s2089] sm:$0xff]
  %v2092 = vcombine.high %v2090, %v2090
  %v2094 = vunpack.c.l.s4 1983009808
  %v2095 = vunpack.c.0.s8 %v2094
  %v2096 = vlaneseq
  %v2097 = vshrl.u32 %v2096, 7
  %v2098 = vsub.s32 %v2095, %v2097
  %v2099 = vrot.slane %v2090, %v2098
  %v2101 = vunpack.c.l.s4 1983009808
  %v2102 = vunpack.c.0.s8 %v2101
  %v2103 = vlaneseq
  %v2104 = vshrl.u32 %v2103, 7
  %v2105 = vsub.s32 %v2102, %v2104
  %v2106 = vrot.slane %v2092, %v2105
  %v2107 = vcombine.high %v2099, %v2099
  %v2108 = vcombine.high %v2106, %v2106
  %2113 = vmatprep.subr.mxu0 %v73
  %2114 = vmatpush1.msra.mxu0 %v72
  %2115 = vmatprep.subr.mxu0 %v77
  %2116 = vmatpush1.msra.mxu0 %v76
  %2117 = vmatprep.subr.mxu0 %v81
  %2118 = vmatpush1.msra.mxu0 %v80
  %2119 = vmatprep.subr.mxu0 %v85
  %2120 = vmatpush1.msra.mxu0 %v84
  %2121 = vmatprep.subr.mxu0 %v89
  %2122 = vmatpush1.msra.mxu0 %v88
  %2123 = vmatprep.subr.mxu0 %v93
  %2124 = vmatpush1.msra.mxu0 %v92
  %2125 = vmatprep.subr.mxu0 %v97
  %2126 = vmatpush1.msra.mxu0 %v96
  %2127 = vmatprep.subr.mxu0 %v101
  %2128 = vmatpush1.msra.mxu0 %v100
  %2129 = vmatprep.subr.mxu0 %v105
  %2130 = vmatpush1.msra.mxu0 %v104
  %2131 = vmatprep.subr.mxu0 %v109
  %2132 = vmatpush1.msra.mxu0 %v108
  %2133 = vmatprep.subr.mxu0 %v113
  %2134 = vmatpush1.msra.mxu0 %v112
  %2135 = vmatprep.subr.mxu0 %v117
  %2136 = vmatpush1.msra.mxu0 %v116
  %2137 = vmatprep.subr.mxu0 %v121
  %2138 = vmatpush1.msra.mxu0 %v120
  %2139 = vmatprep.subr.mxu0 %v125
  %2140 = vmatpush1.msra.mxu0 %v124
  %2141 = vmatprep.subr.mxu0 %v129
  %2142 = vmatpush1.msra.mxu0 %v128
  %2143 = vmatprep.subr.mxu0 %v133
  %2144 = vmatpush1.msra.mxu0 %v132
  %2145 = vmatprep.subr.mxu0 %v137
  %2146 = vmatpush1.msra.mxu0 %v136
  %2147 = vmatprep.subr.mxu0 %v141
  %2148 = vmatpush1.msra.mxu0 %v140
  %2149 = vmatprep.subr.mxu0 %v145
  %2150 = vmatpush1.msra.mxu0 %v144
  %2151 = vmatprep.subr.mxu0 %v149
  %2152 = vmatpush1.msra.mxu0 %v148
  %2153 = vmatprep.subr.mxu0 %v153
  %2154 = vmatpush1.msra.mxu0 %v152
  %2155 = vmatprep.subr.mxu0 %v157
  %2156 = vmatpush1.msra.mxu0 %v156
  %2157 = vmatprep.subr.mxu0 %v161
  %2158 = vmatpush1.msra.mxu0 %v160
  %2159 = vmatprep.subr.mxu0 %v165
  %2160 = vmatpush1.msra.mxu0 %v164
  %2161 = vmatprep.subr.mxu0 %v169
  %2162 = vmatpush1.msra.mxu0 %v168
  %2163 = vmatprep.subr.mxu0 %v173
  %2164 = vmatpush1.msra.mxu0 %v172
  %2165 = vmatprep.subr.mxu0 %v177
  %2166 = vmatpush1.msra.mxu0 %v176
  %2167 = vmatprep.subr.mxu0 %v181
  %2168 = vmatpush1.msra.mxu0 %v180
  %2169 = vmatprep.subr.mxu0 %v185
  %2170 = vmatpush1.msra.mxu0 %v184
  %2171 = vmatprep.subr.mxu0 %v189
  %2172 = vmatpush1.msra.mxu0 %v188
  %2173 = vmatprep.subr.mxu0 %v193
  %2174 = vmatpush1.msra.mxu0 %v192
  %2175 = vmatprep.subr.mxu0 %v197
  %2176 = vmatpush1.msra.mxu0 %v196
  %2177 = vmatprep.mubr.f32.mxu0 %v1581
  %2178 = vmatmul.mubr.f32.gmra.mrb[0].mxu0 %v2087
  %v2179 = vpop.f32.mrb[0].mxu0
  %v2180 = vadd.f32 %v2099, %v2179
  %v2181 = vpop.f32.mrb[0].mxu0
  %v2182 = vadd.f32 %v2107, %v2181
  %2183 = vdwg.mxu0
  %2184 = vmatprep.subr.mxu0 %v75
  %2185 = vmatpush1.msra.mxu0 %v74
  %2186 = vmatprep.subr.mxu0 %v79
  %2187 = vmatpush1.msra.mxu0 %v78
  %2188 = vmatprep.subr.mxu0 %v83
  %2189 = vmatpush1.msra.mxu0 %v82
  %2190 = vmatprep.subr.mxu0 %v87
  %2191 = vmatpush1.msra.mxu0 %v86
  %2192 = vmatprep.subr.mxu0 %v91
  %2193 = vmatpush1.msra.mxu0 %v90
  %2194 = vmatprep.subr.mxu0 %v95
  %2195 = vmatpush1.msra.mxu0 %v94
  %2196 = vmatprep.subr.mxu0 %v99
  %2197 = vmatpush1.msra.mxu0 %v98
  %2198 = vmatprep.subr.mxu0 %v103
  %2199 = vmatpush1.msra.mxu0 %v102
  %2200 = vmatprep.subr.mxu0 %v107
  %2201 = vmatpush1.msra.mxu0 %v106
  %2202 = vmatprep.subr.mxu0 %v111
  %2203 = vmatpush1.msra.mxu0 %v110
  %2204 = vmatprep.subr.mxu0 %v115
  %2205 = vmatpush1.msra.mxu0 %v114
  %2206 = vmatprep.subr.mxu0 %v119
  %2207 = vmatpush1.msra.mxu0 %v118
  %2208 = vmatprep.subr.mxu0 %v123
  %2209 = vmatpush1.msra.mxu0 %v122
  %2210 = vmatprep.subr.mxu0 %v127
  %2211 = vmatpush1.msra.mxu0 %v126
  %2212 = vmatprep.subr.mxu0 %v131
  %2213 = vmatpush1.msra.mxu0 %v130
  %2214 = vmatprep.subr.mxu0 %v135
  %2215 = vmatpush1.msra.mxu0 %v134
  %2216 = vmatprep.subr.mxu0 %v139
  %2217 = vmatpush1.msra.mxu0 %v138
  %2218 = vmatprep.subr.mxu0 %v143
  %2219 = vmatpush1.msra.mxu0 %v142
  %2220 = vmatprep.subr.mxu0 %v147
  %2221 = vmatpush1.msra.mxu0 %v146
  %2222 = vmatprep.subr.mxu0 %v151
  %2223 = vmatpush1.msra.mxu0 %v150
  %2224 = vmatprep.subr.mxu0 %v155
  %2225 = vmatpush1.msra.mxu0 %v154
  %2226 = vmatprep.subr.mxu0 %v159
  %2227 = vmatpush1.msra.mxu0 %v158
  %2228 = vmatprep.subr.mxu0 %v163
  %2229 = vmatpush1.msra.mxu0 %v162
  %2230 = vmatprep.subr.mxu0 %v167
  %2231 = vmatpush1.msra.mxu0 %v166
  %2232 = vmatprep.subr.mxu0 %v171
  %2233 = vmatpush1.msra.mxu0 %v170
  %2234 = vmatprep.subr.mxu0 %v175
  %2235 = vmatpush1.msra.mxu0 %v174
  %2236 = vmatprep.subr.mxu0 %v179
  %2237 = vmatpush1.msra.mxu0 %v178
  %2238 = vmatprep.subr.mxu0 %v183
  %2239 = vmatpush1.msra.mxu0 %v182
  %2240 = vmatprep.subr.mxu0 %v187
  %2241 = vmatpush1.msra.mxu0 %v186
  %2242 = vmatprep.subr.mxu0 %v191
  %2243 = vmatpush1.msra.mxu0 %v190
  %2244 = vmatprep.subr.mxu0 %v195
  %2245 = vmatpush1.msra.mxu0 %v194
  %2246 = vmatprep.subr.mxu0 %v199
  %2247 = vmatpush1.msra.mxu0 %v198
  %2248 = vmatprep.mubr.f32.mxu0 %v1581
  %2249 = vmatmul.mubr.f32.gmra.mrb[0].mxu0 %v2087
  %v2250 = vpop.f32.mrb[0].mxu0
  %v2251 = vadd.f32 %v2106, %v2250
  %v2252 = vpop.f32.mrb[0].mxu0
  %v2253 = vadd.f32 %v2108, %v2252
  %2254 = vdwg.mxu0
  %v2255 = vadd.f32 %v2180, %v831
  %v2256 = vadd.f32 %v2182, %v835
  %v2257 = vadd.f32 %v2251, %v839
  %v2258 = vadd.f32 %v2253, %v843
  %v2259 = vxor.u32 %v2255, 2147483648
  %v2260 = vmul.f32 %v2259, 1.442695
  %v2261 = vpow.pop %v2260
  %v2262 = vadd.f32 %v2261, 1.0
  %v2263 = vrcp.pop %v2262
  %v2264 = vmul.f32 1.0, %v2263
  %v2265 = vxor.u32 %v2256, 2147483648
  %v2266 = vmul.f32 %v2265, 1.442695
  %v2267 = vpow.pop %v2266
  %v2268 = vadd.f32 %v2267, 1.0
  %v2269 = vrcp.pop %v2268
  %v2270 = vmul.f32 1.0, %v2269
  %v2271 = vtanh.pop %v2257
  %v2272 = vxor.u32 %v2258, 2147483648
  %v2273 = vmul.f32 %v2272, 1.442695
  %v2274 = vpow.pop %v2273
  %v2275 = vadd.f32 %v2274, 1.0
  %v2276 = vrcp.pop %v2275
  %v2277 = vmul.f32 1.0, %v2276
  %v2278 = vmul.f32 %v2270, %v1579
  %v2279 = vmul.f32 %v2264, %v2271
  %v2280 = vadd.f32 %v2278, %v2279
  %v2281 = vtanh.pop %v2280
  %v2282 = vmul.f32 %v2277, %v2281
  %2283 = vmatprep.subr.mxu0 0.0
  %2284 = vmatpush1.msra.mxu0 %v201
  %2285 = vmatprep.subr.mxu0 0.0
  %2286 = vmatpush1.msra.mxu0 %v202
  %2287 = vmatprep.subr.mxu0 0.0
  %2288 = vmatpush1.msra.mxu0 %v203
  %2289 = vmatprep.subr.mxu0 0.0
  %2290 = vmatpush1.msra.mxu0 %v204
  %2291 = vmatprep.subr.mxu0 0.0
  %2292 = vmatpush1.msra.mxu0 %v205
  %2293 = vmatprep.subr.mxu0 0.0
  %2294 = vmatpush1.msra.mxu0 %v206
  %2295 = vmatprep.subr.mxu0 0.0
  %2296 = vmatpush1.msra.mxu0 %v207
  %2297 = vmatprep.subr.mxu0 0.0
  %2298 = vmatpush1.msra.mxu0 %v208
  %2299 = vmatprep.subr.mxu0 0.0
  %2300 = vmatpush1.msra.mxu0 %v209
  %2301 = vmatprep.subr.mxu0 0.0
  %2302 = vmatpush1.msra.mxu0 %v210
  %2303 = vmatprep.subr.mxu0 0.0
  %2304 = vmatpush1.msra.mxu0 %v211
  %2305 = vmatprep.subr.mxu0 0.0
  %2306 = vmatpush1.msra.mxu0 %v212
  %2307 = vmatprep.subr.mxu0 0.0
  %2308 = vmatpush1.msra.mxu0 %v213
  %2309 = vmatprep.subr.mxu0 0.0
  %2310 = vmatpush1.msra.mxu0 %v214
  %2311 = vmatprep.subr.mxu0 0.0
  %2312 = vmatpush1.msra.mxu0 %v215
  %2313 = vmatprep.subr.mxu0 0.0
  %2314 = vmatpush1.msra.mxu0 %v216
  %2315 = vmatprep.subr.mxu0 0.0
  %2316 = vmatpush1.msra.mxu0 0.0
  %2317 = vmatprep.subr.mxu0 0.0
  %2318 = vmatpush1.msra.mxu0 0.0
  %2319 = vmatprep.subr.mxu0 0.0
  %2320 = vmatpush1.msra.mxu0 0.0
  %2321 = vmatprep.subr.mxu0 0.0
  %2322 = vmatpush1.msra.mxu0 0.0
  %2323 = vmatprep.subr.mxu0 0.0
  %2324 = vmatpush1.msra.mxu0 0.0
  %2325 = vmatprep.subr.mxu0 0.0
  %2326 = vmatpush1.msra.mxu0 0.0
  %2327 = vmatprep.subr.mxu0 0.0
  %2328 = vmatpush1.msra.mxu0 0.0
  %2329 = vmatprep.subr.mxu0 0.0
  %2330 = vmatpush1.msra.mxu0 0.0
  %2331 = vmatprep.subr.mxu0 0.0
  %2332 = vmatpush1.msra.mxu0 0.0
  %2333 = vmatprep.subr.mxu0 0.0
  %2334 = vmatpush1.msra.mxu0 0.0
  %2335 = vmatprep.subr.mxu0 0.0
  %2336 = vmatpush1.msra.mxu0 0.0
  %2337 = vmatprep.subr.mxu0 0.0
  %2338 = vmatpush1.msra.mxu0 0.0
  %2339 = vmatprep.subr.mxu0 0.0
  %2340 = vmatpush1.msra.mxu0 0.0
  %2341 = vmatprep.subr.mxu0 0.0
  %2342 = vmatpush1.msra.mxu0 0.0
  %2343 = vmatprep.subr.mxu0 0.0
  %2344 = vmatpush1.msra.mxu0 0.0
  %2345 = vmatprep.subr.mxu0 0.0
  %2346 = vmatpush1.msra.mxu0 0.0
  %2347 = vmatprep.mubr.f32.mxu0 0.0
  %2348 = vmatmul.mubr.f32.gmra.mrb[0].mxu0 %v2282
  %v2349 = vpop.f32.mrb[0].mxu0
  %v2350 = vadd.f32 %v880, %v2349
  %v2351 = vpop.f32.mrb[0].mxu0
  %2352 = vdwg.mxu0
  %s2353 = scalar_lea.vmem %s10, 4
  %2354 = vst [vmem:[%s2353] sm:$0x3] %v2350
  %2355 = vmatprep.subr.mxu0 0.0
  %2356 = vmatpush1.msra.mxu0 %v39
  %2357 = vmatprep.subr.mxu0 0.0
  %2358 = vmatpush1.msra.mxu0 %v40
  %2359 = vmatprep.subr.mxu0 0.0
  %2360 = vmatpush1.msra.mxu0 %v41
  %2361 = vmatprep.subr.mxu0 0.0
  %2362 = vmatpush1.msra.mxu0 %v42
  %2363 = vmatprep.subr.mxu0 0.0
  %2364 = vmatpush1.msra.mxu0 %v43
  %2365 = vmatprep.subr.mxu0 0.0
  %2366 = vmatpush1.msra.mxu0 %v44
  %2367 = vmatprep.subr.mxu0 0.0
  %2368 = vmatpush1.msra.mxu0 %v45
  %2369 = vmatprep.subr.mxu0 0.0
  %2370 = vmatpush1.msra.mxu0 %v46
  %2371 = vmatprep.subr.mxu0 0.0
  %2372 = vmatpush1.msra.mxu0 %v47
  %2373 = vmatprep.subr.mxu0 0.0
  %2374 = vmatpush1.msra.mxu0 %v48
  %2375 = vmatprep.subr.mxu0 0.0
  %2376 = vmatpush1.msra.mxu0 %v49
  %2377 = vmatprep.subr.mxu0 0.0
  %2378 = vmatpush1.msra.mxu0 %v50
  %2379 = vmatprep.subr.mxu0 0.0
  %2380 = vmatpush1.msra.mxu0 %v51
  %2381 = vmatprep.subr.mxu0 0.0
  %2382 = vmatpush1.msra.mxu0 %v52
  %2383 = vmatprep.subr.mxu0 0.0
  %2384 = vmatpush1.msra.mxu0 %v53
  %2385 = vmatprep.subr.mxu0 0.0
  %2386 = vmatpush1.msra.mxu0 %v54
  %2387 = vmatprep.subr.mxu0 0.0
  %2388 = vmatpush1.msra.mxu0 0.0
  %2389 = vmatprep.subr.mxu0 0.0
  %2390 = vmatpush1.msra.mxu0 0.0
  %2391 = vmatprep.subr.mxu0 0.0
  %2392 = vmatpush1.msra.mxu0 0.0
  %2393 = vmatprep.subr.mxu0 0.0
  %2394 = vmatpush1.msra.mxu0 0.0
  %2395 = vmatprep.subr.mxu0 0.0
  %2396 = vmatpush1.msra.mxu0 0.0
  %2397 = vmatprep.subr.mxu0 0.0
  %2398 = vmatpush1.msra.mxu0 0.0
  %2399 = vmatprep.subr.mxu0 0.0
  %2400 = vmatpush1.msra.mxu0 0.0
  %2401 = vmatprep.subr.mxu0 0.0
  %2402 = vmatpush1.msra.mxu0 0.0
  %2403 = vmatprep.subr.mxu0 0.0
  %2404 = vmatpush1.msra.mxu0 0.0
  %2405 = vmatprep.subr.mxu0 0.0
  %2406 = vmatpush1.msra.mxu0 0.0
  %2407 = vmatprep.subr.mxu0 0.0
  %2408 = vmatpush1.msra.mxu0 0.0
  %2409 = vmatprep.subr.mxu0 0.0
  %2410 = vmatpush1.msra.mxu0 0.0
  %2411 = vmatprep.subr.mxu0 0.0
  %2412 = vmatpush1.msra.mxu0 0.0
  %2413 = vmatprep.subr.mxu0 0.0
  %2414 = vmatpush1.msra.mxu0 0.0
  %2415 = vmatprep.subr.mxu0 0.0
  %2416 = vmatpush1.msra.mxu0 0.0
  %2417 = vmatprep.subr.mxu0 0.0
  %2418 = vmatpush1.msra.mxu0 0.0
  %2419 = vmatprep.mubr.f32.mxu0 0.0
  %2420 = vmatmul.mubr.f32.gmra.mrb[0].mxu0 %v2282
  %v2421 = vpop.f32.mrb[0].mxu0
  %v2422 = vadd.f32 %v222, %v2421
  %v2423 = vpop.f32.mrb[0].mxu0
  %2424 = vdwg.mxu0
  %v2427 = vunpack.c.l.s4 1966171168
  %v2428 = vunpack.c.0.s8 %v2427
  %v2429 = vlaneseq
  %v2430 = vshrl.u32 %v2429, 7
  %v2431 = vsub.s32 %v2428, %v2430
  %v2432 = vrot.slane %v2422, %v2431
  %v2433 = vcombine.high %v2432, %v2432
  %v2435 = vunpack.c.l.s4 1966171168
  %v2436 = vunpack.c.0.s8 %v2435
  %v2437 = vlaneseq
  %v2438 = vshrl.u32 %v2437, 7
  %v2439 = vsub.s32 %v2436, %v2438
  %v2440 = vrot.slane %v2432, %v2439
  %v2442 = vunpack.c.l.s4 1966171168
  %v2443 = vunpack.c.0.s8 %v2442
  %v2444 = vlaneseq
  %v2445 = vshrl.u32 %v2444, 7
  %v2446 = vsub.s32 %v2443, %v2445
  %v2447 = vrot.slane %v2433, %v2446
  %v2448 = vlaneseq
  %v2449 = vshrl.u32 %v2448, 7
  %v2450 = vsub.s32 0, %v2449
  %v2451 = vrot.slane %v2440, %v2450
  %v2452 = vlaneseq
  %v2453 = vshrl.u32 %v2452, 7
  %v2454 = vsub.s32 0, %v2453
  %v2455 = vrot.slane %v2447, %v2454
  %v2458 = vadd.f32 %v37, %v2451
  %v2459 = vadd.f32 %v38, %v2455
  %v2460 = vtanh.pop %v2458
  %v2461 = vtanh.pop %v2459
  %2462 = vmatprep.subr.mxu0 0.0
  %2463 = vmatpush1.msra.mxu0 %v56
  %2464 = vmatprep.subr.mxu0 0.0
  %2465 = vmatpush1.msra.mxu0 %v57
  %2466 = vmatprep.subr.mxu0 0.0
  %2467 = vmatpush1.msra.mxu0 %v58
  %2468 = vmatprep.subr.mxu0 0.0
  %2469 = vmatpush1.msra.mxu0 %v59
  %2470 = vmatprep.subr.mxu0 0.0
  %2471 = vmatpush1.msra.mxu0 %v60
  %2472 = vmatprep.subr.mxu0 0.0
  %2473 = vmatpush1.msra.mxu0 %v61
  %2474 = vmatprep.subr.mxu0 0.0
  %2475 = vmatpush1.msra.mxu0 %v62
  %2476 = vmatprep.subr.mxu0 0.0
  %2477 = vmatpush1.msra.mxu0 %v63
  %2478 = vmatprep.subr.mxu0 0.0
  %2479 = vmatpush1.msra.mxu0 %v64
  %2480 = vmatprep.subr.mxu0 0.0
  %2481 = vmatpush1.msra.mxu0 %v65
  %2482 = vmatprep.subr.mxu0 0.0
  %2483 = vmatpush1.msra.mxu0 %v66
  %2484 = vmatprep.subr.mxu0 0.0
  %2485 = vmatpush1.msra.mxu0 %v67
  %2486 = vmatprep.subr.mxu0 0.0
  %2487 = vmatpush1.msra.mxu0 %v68
  %2488 = vmatprep.subr.mxu0 0.0
  %2489 = vmatpush1.msra.mxu0 %v69
  %2490 = vmatprep.subr.mxu0 0.0
  %2491 = vmatpush1.msra.mxu0 %v70
  %2492 = vmatprep.subr.mxu0 0.0
  %2493 = vmatpush1.msra.mxu0 %v71
  %2494 = vmatprep.subr.mxu0 0.0
  %2495 = vmatpush1.msra.mxu0 0.0
  %2496 = vmatprep.subr.mxu0 0.0
  %2497 = vmatpush1.msra.mxu0 0.0
  %2498 = vmatprep.subr.mxu0 0.0
  %2499 = vmatpush1.msra.mxu0 0.0
  %2500 = vmatprep.subr.mxu0 0.0
  %2501 = vmatpush1.msra.mxu0 0.0
  %2502 = vmatprep.subr.mxu0 0.0
  %2503 = vmatpush1.msra.mxu0 0.0
  %2504 = vmatprep.subr.mxu0 0.0
  %2505 = vmatpush1.msra.mxu0 0.0
  %2506 = vmatprep.subr.mxu0 0.0
  %2507 = vmatpush1.msra.mxu0 0.0
  %2508 = vmatprep.subr.mxu0 0.0
  %2509 = vmatpush1.msra.mxu0 0.0
  %2510 = vmatprep.subr.mxu0 0.0
  %2511 = vmatpush1.msra.mxu0 0.0
  %2512 = vmatprep.subr.mxu0 0.0
  %2513 = vmatpush1.msra.mxu0 0.0
  %2514 = vmatprep.subr.mxu0 0.0
  %2515 = vmatpush1.msra.mxu0 0.0
  %2516 = vmatprep.subr.mxu0 0.0
  %2517 = vmatpush1.msra.mxu0 0.0
  %2518 = vmatprep.subr.mxu0 0.0
  %2519 = vmatpush1.msra.mxu0 0.0
  %2520 = vmatprep.subr.mxu0 0.0
  %2521 = vmatpush1.msra.mxu0 0.0
  %2522 = vmatprep.subr.mxu0 0.0
  %2523 = vmatpush1.msra.mxu0 0.0
  %2524 = vmatprep.subr.mxu0 0.0
  %2525 = vmatpush1.msra.mxu0 0.0
  %2526 = vmatprep.mubr.f32.mxu0 0.0
  %2527 = vmatmul.mubr.f32.gmra.mrb[0].mxu0 %v2460
  %v2528 = vpop.f32.mrb[0].mxu0
  %v2529 = vadd.f32 0.0, %v2528
  %v2530 = vpop.f32.mrb[0].mxu0
  %2531 = vmatprep.mubr.f32.mxu0 0.0
  %2532 = vmatmul.mubr.f32.gmra.mrb[0].mxu0 %v2461
  %v2533 = vpop.f32.mrb[0].mxu0
  %v2534 = vadd.f32 0.0, %v2533
  %v2535 = vpop.f32.mrb[0].mxu0
  %2536 = vdwg.mxu0
  %v2537 = vsel %vm406, %v2529, -inf
  %v2538 = vrot.slane %v2537, 4
  %v2539 = vmax.f32 %v2537, %v2538
  %v2540 = vrot.slane %v2539, 2
  %v2541 = vmax.f32 %v2539, %v2540
  %v2542 = vrot.slane %v2541, 1
  %v2543 = vmax.f32 %v2541, %v2542
  %v2544 = vsel %vm406, %v2534, -inf
  %v2545 = vrot.slane %v2544, 4
  %v2546 = vmax.f32 %v2544, %v2545
  %v2547 = vrot.slane %v2546, 2
  %v2548 = vmax.f32 %v2546, %v2547
  %v2549 = vrot.slane %v2548, 1
  %v2550 = vmax.f32 %v2548, %v2549
  %v2551 = vsub.f32 %v2529, %v2543
  %v2552 = vsub.f32 %v2534, %v2550
  %v2553 = vmul.f32 %v2551, 1.442695
  %v2554 = vpow.pop %v2553
  %v2555 = vmul.f32 %v2552, 1.442695
  %v2556 = vpow.pop %v2555
  %v2557 = vsel %vm406, %v2554, 0.0
  %v2558 = vrot.slane %v2557, 4
  %v2559 = vadd.f32 %v2557, %v2558
  %v2560 = vrot.slane %v2559, 2
  %v2561 = vadd.f32 %v2559, %v2560
  %v2562 = vrot.slane %v2561, 1
  %v2563 = vadd.f32 %v2561, %v2562
  %v2564 = vsel %vm406, %v2556, 0.0
  %v2565 = vrot.slane %v2564, 4
  %v2566 = vadd.f32 %v2564, %v2565
  %v2567 = vrot.slane %v2566, 2
  %v2568 = vadd.f32 %v2566, %v2567
  %v2569 = vrot.slane %v2568, 1
  %v2570 = vadd.f32 %v2568, %v2569
  %v2571 = vrcp.pop %v2563
  %v2572 = vrcp.pop %v2570
  %v2573 = vmul.f32 %v2554, %v2571
  %v2574 = vmul.f32 %v2556, %v2572
  %2575 = vxpose.xlu0.b32.start [1/16] %v2573, 128
  %2576 = vxpose.xlu0.b32.cont [2/16] 0.0, 128
  %2577 = vxpose.xlu0.b32.cont [3/16] 0.0, 128
  %2578 = vxpose.xlu0.b32.cont [4/16] 0.0, 128
  %2579 = vxpose.xlu0.b32.cont [5/16] 0.0, 128
  %2580 = vxpose.xlu0.b32.cont [6/16] 0.0, 128
  %2581 = vxpose.xlu0.b32.cont [7/16] 0.0, 128
  %2582 = vxpose.xlu0.b32.cont [8/16] 0.0, 128
  %2583 = vxpose.xlu0.b32.cont [9/16] 0.0, 128
  %2584 = vxpose.xlu0.b32.cont [10/16] 0.0, 128
  %2585 = vxpose.xlu0.b32.cont [11/16] 0.0, 128
  %2586 = vxpose.xlu0.b32.cont [12/16] 0.0, 128
  %2587 = vxpose.xlu0.b32.cont [13/16] 0.0, 128
  %2588 = vxpose.xlu0.b32.cont [14/16] 0.0, 128
  %2589 = vxpose.xlu0.b32.cont [15/16] 0.0, 128
  %2590 = vxpose.xlu0.b32.end [16/16] 0.0, 128
  %v2591 = vpop.trf.xlu0
  %v2592 = vpop.trf.xlu0
  %v2593 = vpop.trf.xlu0
  %v2594 = vpop.trf.xlu0
  %v2595 = vpop.trf.xlu0
  %v2596 = vpop.trf.xlu0
  %v2597 = vpop.trf.xlu0
  %v2598 = vpop.trf.xlu0
  %v2599 = vpop.trf.xlu0
  %v2600 = vpop.trf.xlu0
  %v2601 = vpop.trf.xlu0
  %v2602 = vpop.trf.xlu0
  %v2603 = vpop.trf.xlu0
  %v2604 = vpop.trf.xlu0
  %v2605 = vpop.trf.xlu0
  %v2606 = vpop.trf.xlu0
  %v2608 = vsel %vm477, %v2591, 0
  %2610 = vmatprep.subr.mxu0 0.0
  %2611 = vmatpush1.msra.mxu0 %v35
  %2612 = vmatprep.subr.mxu0 0.0
  %2613 = vmatpush1.msra.mxu0 0.0
  %2614 = vmatprep.subr.mxu0 0.0
  %2615 = vmatpush1.msra.mxu0 0.0
  %2616 = vmatprep.subr.mxu0 0.0
  %2617 = vmatpush1.msra.mxu0 0.0
  %2618 = vmatprep.subr.mxu0 0.0
  %2619 = vmatpush1.msra.mxu0 0.0
  %2620 = vmatprep.subr.mxu0 0.0
  %2621 = vmatpush1.msra.mxu0 0.0
  %2622 = vmatprep.subr.mxu0 0.0
  %2623 = vmatpush1.msra.mxu0 0.0
  %2624 = vmatprep.subr.mxu0 0.0
  %2625 = vmatpush1.msra.mxu0 0.0
  %2626 = vmatprep.subr.mxu0 0.0
  %2627 = vmatpush1.msra.mxu0 0.0
  %2628 = vmatprep.subr.mxu0 0.0
  %2629 = vmatpush1.msra.mxu0 0.0
  %2630 = vmatprep.subr.mxu0 0.0
  %2631 = vmatpush1.msra.mxu0 0.0
  %2632 = vmatprep.subr.mxu0 0.0
  %2633 = vmatpush1.msra.mxu0 0.0
  %2634 = vmatprep.subr.mxu0 0.0
  %2635 = vmatpush1.msra.mxu0 0.0
  %2636 = vmatprep.subr.mxu0 0.0
  %2637 = vmatpush1.msra.mxu0 0.0
  %2638 = vmatprep.subr.mxu0 0.0
  %2639 = vmatpush1.msra.mxu0 0.0
  %2640 = vmatprep.subr.mxu0 0.0
  %2641 = vmatpush1.msra.mxu0 0.0
  %2642 = vmatprep.subr.mxu0 0.0
  %2643 = vmatpush1.msra.mxu0 0.0
  %2644 = vmatprep.subr.mxu0 0.0
  %2645 = vmatpush1.msra.mxu0 0.0
  %2646 = vmatprep.subr.mxu0 0.0
  %2647 = vmatpush1.msra.mxu0 0.0
  %2648 = vmatprep.subr.mxu0 0.0
  %2649 = vmatpush1.msra.mxu0 0.0
  %2650 = vmatprep.subr.mxu0 0.0
  %2651 = vmatpush1.msra.mxu0 0.0
  %2652 = vmatprep.subr.mxu0 0.0
  %2653 = vmatpush1.msra.mxu0 0.0
  %2654 = vmatprep.subr.mxu0 0.0
  %2655 = vmatpush1.msra.mxu0 0.0
  %2656 = vmatprep.subr.mxu0 0.0
  %2657 = vmatpush1.msra.mxu0 0.0
  %2658 = vmatprep.subr.mxu0 0.0
  %2659 = vmatpush1.msra.mxu0 0.0
  %2660 = vmatprep.subr.mxu0 0.0
  %2661 = vmatpush1.msra.mxu0 0.0
  %2662 = vmatprep.subr.mxu0 0.0
  %2663 = vmatpush1.msra.mxu0 0.0
  %2664 = vmatprep.subr.mxu0 0.0
  %2665 = vmatpush1.msra.mxu0 0.0
  %2666 = vmatprep.subr.mxu0 0.0
  %2667 = vmatpush1.msra.mxu0 0.0
  %2668 = vmatprep.subr.mxu0 0.0
  %2669 = vmatpush1.msra.mxu0 0.0
  %2670 = vmatprep.subr.mxu0 0.0
  %2671 = vmatpush1.msra.mxu0 0.0
  %2672 = vmatprep.subr.mxu0 0.0
  %2673 = vmatpush1.msra.mxu0 0.0
  %2674 = vmatprep.mubr.f32.mxu0 0.0
  %2675 = vmatmul.mubr.f32.gmra.mrb[0].mxu0 %v2608
  %v2676 = vpop.f32.mrb[0].mxu0
  %v2677 = vadd.f32 0.0, %v2676
  %v2678 = vpop.f32.mrb[0].mxu0
  %2679 = vdwg.mxu0
  %2680 = vxpose.xlu0.b32.start [1/16] %v2574, 128
  %2681 = vxpose.xlu0.b32.cont [2/16] 0.0, 128
  %2682 = vxpose.xlu0.b32.cont [3/16] 0.0, 128
  %2683 = vxpose.xlu0.b32.cont [4/16] 0.0, 128
  %2684 = vxpose.xlu0.b32.cont [5/16] 0.0, 128
  %2685 = vxpose.xlu0.b32.cont [6/16] 0.0, 128
  %2686 = vxpose.xlu0.b32.cont [7/16] 0.0, 128
  %2687 = vxpose.xlu0.b32.cont [8/16] 0.0, 128
  %2688 = vxpose.xlu0.b32.cont [9/16] 0.0, 128
  %2689 = vxpose.xlu0.b32.cont [10/16] 0.0, 128
  %2690 = vxpose.xlu0.b32.cont [11/16] 0.0, 128
  %2691 = vxpose.xlu0.b32.cont [12/16] 0.0, 128
  %2692 = vxpose.xlu0.b32.cont [13/16] 0.0, 128
  %2693 = vxpose.xlu0.b32.cont [14/16] 0.0, 128
  %2694 = vxpose.xlu0.b32.cont [15/16] 0.0, 128
  %2695 = vxpose.xlu0.b32.end [16/16] 0.0, 128
  %v2696 = vpop.trf.xlu0
  %v2697 = vpop.trf.xlu0
  %v2698 = vpop.trf.xlu0
  %v2699 = vpop.trf.xlu0
  %v2700 = vpop.trf.xlu0
  %v2701 = vpop.trf.xlu0
  %v2702 = vpop.trf.xlu0
  %v2703 = vpop.trf.xlu0
  %v2704 = vpop.trf.xlu0
  %v2705 = vpop.trf.xlu0
  %v2706 = vpop.trf.xlu0
  %v2707 = vpop.trf.xlu0
  %v2708 = vpop.trf.xlu0
  %v2709 = vpop.trf.xlu0
  %v2710 = vpop.trf.xlu0
  %v2711 = vpop.trf.xlu0
  %v2713 = vsel %vm477, %v2696, 0
  %2715 = vmatprep.subr.mxu0 0.0
  %2716 = vmatpush1.msra.mxu0 %v36
  %2717 = vmatprep.subr.mxu0 0.0
  %2718 = vmatpush1.msra.mxu0 0.0
  %2719 = vmatprep.subr.mxu0 0.0
  %2720 = vmatpush1.msra.mxu0 0.0
  %2721 = vmatprep.subr.mxu0 0.0
  %2722 = vmatpush1.msra.mxu0 0.0
  %2723 = vmatprep.subr.mxu0 0.0
  %2724 = vmatpush1.msra.mxu0 0.0
  %2725 = vmatprep.subr.mxu0 0.0
  %2726 = vmatpush1.msra.mxu0 0.0
  %2727 = vmatprep.subr.mxu0 0.0
  %2728 = vmatpush1.msra.mxu0 0.0
  %2729 = vmatprep.subr.mxu0 0.0
  %2730 = vmatpush1.msra.mxu0 0.0
  %2731 = vmatprep.subr.mxu0 0.0
  %2732 = vmatpush1.msra.mxu0 0.0
  %2733 = vmatprep.subr.mxu0 0.0
  %2734 = vmatpush1.msra.mxu0 0.0
  %2735 = vmatprep.subr.mxu0 0.0
  %2736 = vmatpush1.msra.mxu0 0.0
  %2737 = vmatprep.subr.mxu0 0.0
  %2738 = vmatpush1.msra.mxu0 0.0
  %2739 = vmatprep.subr.mxu0 0.0
  %2740 = vmatpush1.msra.mxu0 0.0
  %2741 = vmatprep.subr.mxu0 0.0
  %2742 = vmatpush1.msra.mxu0 0.0
  %2743 = vmatprep.subr.mxu0 0.0
  %2744 = vmatpush1.msra.mxu0 0.0
  %2745 = vmatprep.subr.mxu0 0.0
  %2746 = vmatpush1.msra.mxu0 0.0
  %2747 = vmatprep.subr.mxu0 0.0
  %2748 = vmatpush1.msra.mxu0 0.0
  %2749 = vmatprep.subr.mxu0 0.0
  %2750 = vmatpush1.msra.mxu0 0.0
  %2751 = vmatprep.subr.mxu0 0.0
  %2752 = vmatpush1.msra.mxu0 0.0
  %2753 = vmatprep.subr.mxu0 0.0
  %2754 = vmatpush1.msra.mxu0 0.0
  %2755 = vmatprep.subr.mxu0 0.0
  %2756 = vmatpush1.msra.mxu0 0.0
  %2757 = vmatprep.subr.mxu0 0.0
  %2758 = vmatpush1.msra.mxu0 0.0
  %2759 = vmatprep.subr.mxu0 0.0
  %2760 = vmatpush1.msra.mxu0 0.0
  %2761 = vmatprep.subr.mxu0 0.0
  %2762 = vmatpush1.msra.mxu0 0.0
  %2763 = vmatprep.subr.mxu0 0.0
  %2764 = vmatpush1.msra.mxu0 0.0
  %2765 = vmatprep.subr.mxu0 0.0
  %2766 = vmatpush1.msra.mxu0 0.0
  %2767 = vmatprep.subr.mxu0 0.0
  %2768 = vmatpush1.msra.mxu0 0.0
  %2769 = vmatprep.subr.mxu0 0.0
  %2770 = vmatpush1.msra.mxu0 0.0
  %2771 = vmatprep.subr.mxu0 0.0
  %2772 = vmatpush1.msra.mxu0 0.0
  %2773 = vmatprep.subr.mxu0 0.0
  %2774 = vmatpush1.msra.mxu0 0.0
  %2775 = vmatprep.subr.mxu0 0.0
  %2776 = vmatpush1.msra.mxu0 0.0
  %2777 = vmatprep.subr.mxu0 0.0
  %2778 = vmatpush1.msra.mxu0 0.0
  %2779 = vmatprep.mubr.f32.mxu0 0.0
  %2780 = vmatmul.mubr.f32.gmra.mrb[0].mxu0 %v2713
  %v2781 = vpop.f32.mrb[0].mxu0
  %v2782 = vadd.f32 0.0, %v2781
  %v2783 = vpop.f32.mrb[0].mxu0
  %2784 = vdwg.mxu0
  %v2787 = vrot.slane %v2782, 7
  %v2788 = vsel %vm659, %v2787, %v2677
  %s2790 = scalar_lea.vmem %s2, 24
  %v2791 = vld [vmem:[%s2790] sm:$0xff]
  %v2793 = vcombine.high %v2791, %v2791
  %v2795 = vunpack.c.l.s4 1983009808
  %v2796 = vunpack.c.0.s8 %v2795
  %v2797 = vlaneseq
  %v2798 = vshrl.u32 %v2797, 7
  %v2799 = vsub.s32 %v2796, %v2798
  %v2800 = vrot.slane %v2791, %v2799
  %v2802 = vunpack.c.l.s4 1983009808
  %v2803 = vunpack.c.0.s8 %v2802
  %v2804 = vlaneseq
  %v2805 = vshrl.u32 %v2804, 7
  %v2806 = vsub.s32 %v2803, %v2805
  %v2807 = vrot.slane %v2793, %v2806
  %v2808 = vcombine.high %v2800, %v2800
  %v2809 = vcombine.high %v2807, %v2807
  %2814 = vmatprep.subr.mxu0 %v73
  %2815 = vmatpush1.msra.mxu0 %v72
  %2816 = vmatprep.subr.mxu0 %v77
  %2817 = vmatpush1.msra.mxu0 %v76
  %2818 = vmatprep.subr.mxu0 %v81
  %2819 = vmatpush1.msra.mxu0 %v80
  %2820 = vmatprep.subr.mxu0 %v85
  %2821 = vmatpush1.msra.mxu0 %v84
  %2822 = vmatprep.subr.mxu0 %v89
  %2823 = vmatpush1.msra.mxu0 %v88
  %2824 = vmatprep.subr.mxu0 %v93
  %2825 = vmatpush1.msra.mxu0 %v92
  %2826 = vmatprep.subr.mxu0 %v97
  %2827 = vmatpush1.msra.mxu0 %v96
  %2828 = vmatprep.subr.mxu0 %v101
  %2829 = vmatpush1.msra.mxu0 %v100
  %2830 = vmatprep.subr.mxu0 %v105
  %2831 = vmatpush1.msra.mxu0 %v104
  %2832 = vmatprep.subr.mxu0 %v109
  %2833 = vmatpush1.msra.mxu0 %v108
  %2834 = vmatprep.subr.mxu0 %v113
  %2835 = vmatpush1.msra.mxu0 %v112
  %2836 = vmatprep.subr.mxu0 %v117
  %2837 = vmatpush1.msra.mxu0 %v116
  %2838 = vmatprep.subr.mxu0 %v121
  %2839 = vmatpush1.msra.mxu0 %v120
  %2840 = vmatprep.subr.mxu0 %v125
  %2841 = vmatpush1.msra.mxu0 %v124
  %2842 = vmatprep.subr.mxu0 %v129
  %2843 = vmatpush1.msra.mxu0 %v128
  %2844 = vmatprep.subr.mxu0 %v133
  %2845 = vmatpush1.msra.mxu0 %v132
  %2846 = vmatprep.subr.mxu0 %v137
  %2847 = vmatpush1.msra.mxu0 %v136
  %2848 = vmatprep.subr.mxu0 %v141
  %2849 = vmatpush1.msra.mxu0 %v140
  %2850 = vmatprep.subr.mxu0 %v145
  %2851 = vmatpush1.msra.mxu0 %v144
  %2852 = vmatprep.subr.mxu0 %v149
  %2853 = vmatpush1.msra.mxu0 %v148
  %2854 = vmatprep.subr.mxu0 %v153
  %2855 = vmatpush1.msra.mxu0 %v152
  %2856 = vmatprep.subr.mxu0 %v157
  %2857 = vmatpush1.msra.mxu0 %v156
  %2858 = vmatprep.subr.mxu0 %v161
  %2859 = vmatpush1.msra.mxu0 %v160
  %2860 = vmatprep.subr.mxu0 %v165
  %2861 = vmatpush1.msra.mxu0 %v164
  %2862 = vmatprep.subr.mxu0 %v169
  %2863 = vmatpush1.msra.mxu0 %v168
  %2864 = vmatprep.subr.mxu0 %v173
  %2865 = vmatpush1.msra.mxu0 %v172
  %2866 = vmatprep.subr.mxu0 %v177
  %2867 = vmatpush1.msra.mxu0 %v176
  %2868 = vmatprep.subr.mxu0 %v181
  %2869 = vmatpush1.msra.mxu0 %v180
  %2870 = vmatprep.subr.mxu0 %v185
  %2871 = vmatpush1.msra.mxu0 %v184
  %2872 = vmatprep.subr.mxu0 %v189
  %2873 = vmatpush1.msra.mxu0 %v188
  %2874 = vmatprep.subr.mxu0 %v193
  %2875 = vmatpush1.msra.mxu0 %v192
  %2876 = vmatprep.subr.mxu0 %v197
  %2877 = vmatpush1.msra.mxu0 %v196
  %2878 = vmatprep.mubr.f32.mxu0 %v2282
  %2879 = vmatmul.mubr.f32.gmra.mrb[0].mxu0 %v2788
  %v2880 = vpop.f32.mrb[0].mxu0
  %v2881 = vadd.f32 %v2800, %v2880
  %v2882 = vpop.f32.mrb[0].mxu0
  %v2883 = vadd.f32 %v2808, %v2882
  %2884 = vdwg.mxu0
  %2885 = vmatprep.subr.mxu0 %v75
  %2886 = vmatpush1.msra.mxu0 %v74
  %2887 = vmatprep.subr.mxu0 %v79
  %2888 = vmatpush1.msra.mxu0 %v78
  %2889 = vmatprep.subr.mxu0 %v83
  %2890 = vmatpush1.msra.mxu0 %v82
  %2891 = vmatprep.subr.mxu0 %v87
  %2892 = vmatpush1.msra.mxu0 %v86
  %2893 = vmatprep.subr.mxu0 %v91
  %2894 = vmatpush1.msra.mxu0 %v90
  %2895 = vmatprep.subr.mxu0 %v95
  %2896 = vmatpush1.msra.mxu0 %v94
  %2897 = vmatprep.subr.mxu0 %v99
  %2898 = vmatpush1.msra.mxu0 %v98
  %2899 = vmatprep.subr.mxu0 %v103
  %2900 = vmatpush1.msra.mxu0 %v102
  %2901 = vmatprep.subr.mxu0 %v107
  %2902 = vmatpush1.msra.mxu0 %v106
  %2903 = vmatprep.subr.mxu0 %v111
  %2904 = vmatpush1.msra.mxu0 %v110
  %2905 = vmatprep.subr.mxu0 %v115
  %2906 = vmatpush1.msra.mxu0 %v114
  %2907 = vmatprep.subr.mxu0 %v119
  %2908 = vmatpush1.msra.mxu0 %v118
  %2909 = vmatprep.subr.mxu0 %v123
  %2910 = vmatpush1.msra.mxu0 %v122
  %2911 = vmatprep.subr.mxu0 %v127
  %2912 = vmatpush1.msra.mxu0 %v126
  %2913 = vmatprep.subr.mxu0 %v131
  %2914 = vmatpush1.msra.mxu0 %v130
  %2915 = vmatprep.subr.mxu0 %v135
  %2916 = vmatpush1.msra.mxu0 %v134
  %2917 = vmatprep.subr.mxu0 %v139
  %2918 = vmatpush1.msra.mxu0 %v138
  %2919 = vmatprep.subr.mxu0 %v143
  %2920 = vmatpush1.msra.mxu0 %v142
  %2921 = vmatprep.subr.mxu0 %v147
  %2922 = vmatpush1.msra.mxu0 %v146
  %2923 = vmatprep.subr.mxu0 %v151
  %2924 = vmatpush1.msra.mxu0 %v150
  %2925 = vmatprep.subr.mxu0 %v155
  %2926 = vmatpush1.msra.mxu0 %v154
  %2927 = vmatprep.subr.mxu0 %v159
  %2928 = vmatpush1.msra.mxu0 %v158
  %2929 = vmatprep.subr.mxu0 %v163
  %2930 = vmatpush1.msra.mxu0 %v162
  %2931 = vmatprep.subr.mxu0 %v167
  %2932 = vmatpush1.msra.mxu0 %v166
  %2933 = vmatprep.subr.mxu0 %v171
  %2934 = vmatpush1.msra.mxu0 %v170
  %2935 = vmatprep.subr.mxu0 %v175
  %2936 = vmatpush1.msra.mxu0 %v174
  %2937 = vmatprep.subr.mxu0 %v179
  %2938 = vmatpush1.msra.mxu0 %v178
  %2939 = vmatprep.subr.mxu0 %v183
  %2940 = vmatpush1.msra.mxu0 %v182
  %2941 = vmatprep.subr.mxu0 %v187
  %2942 = vmatpush1.msra.mxu0 %v186
  %2943 = vmatprep.subr.mxu0 %v191
  %2944 = vmatpush1.msra.mxu0 %v190
  %2945 = vmatprep.subr.mxu0 %v195
  %2946 = vmatpush1.msra.mxu0 %v194
  %2947 = vmatprep.subr.mxu0 %v199
  %2948 = vmatpush1.msra.mxu0 %v198
  %2949 = vmatprep.mubr.f32.mxu0 %v2282
  %2950 = vmatmul.mubr.f32.gmra.mrb[0].mxu0 %v2788
  %v2951 = vpop.f32.mrb[0].mxu0
  %v2952 = vadd.f32 %v2807, %v2951
  %v2953 = vpop.f32.mrb[0].mxu0
  %v2954 = vadd.f32 %v2809, %v2953
  %2955 = vdwg.mxu0
  %v2956 = vadd.f32 %v2881, %v831
  %v2957 = vadd.f32 %v2883, %v835
  %v2958 = vadd.f32 %v2952, %v839
  %v2959 = vadd.f32 %v2954, %v843
  %v2960 = vxor.u32 %v2956, 2147483648
  %v2961 = vmul.f32 %v2960, 1.442695
  %v2962 = vpow.pop %v2961
  %v2963 = vadd.f32 %v2962, 1.0
  %v2964 = vrcp.pop %v2963
  %v2965 = vmul.f32 1.0, %v2964
  %v2966 = vxor.u32 %v2957, 2147483648
  %v2967 = vmul.f32 %v2966, 1.442695
  %v2968 = vpow.pop %v2967
  %v2969 = vadd.f32 %v2968, 1.0
  %v2970 = vrcp.pop %v2969
  %v2971 = vmul.f32 1.0, %v2970
  %v2972 = vtanh.pop %v2958
  %v2973 = vxor.u32 %v2959, 2147483648
  %v2974 = vmul.f32 %v2973, 1.442695
  %v2975 = vpow.pop %v2974
  %v2976 = vadd.f32 %v2975, 1.0
  %v2977 = vrcp.pop %v2976
  %v2978 = vmul.f32 1.0, %v2977
  %v2979 = vmul.f32 %v2971, %v2280
  %v2980 = vmul.f32 %v2965, %v2972
  %v2981 = vadd.f32 %v2979, %v2980
  %v2982 = vtanh.pop %v2981
  %v2983 = vmul.f32 %v2978, %v2982
  %2984 = vmatprep.subr.mxu0 0.0
  %2985 = vmatpush1.msra.mxu0 %v201
  %2986 = vmatprep.subr.mxu0 0.0
  %2987 = vmatpush1.msra.mxu0 %v202
  %2988 = vmatprep.subr.mxu0 0.0
  %2989 = vmatpush1.msra.mxu0 %v203
  %2990 = vmatprep.subr.mxu0 0.0
  %2991 = vmatpush1.msra.mxu0 %v204
  %2992 = vmatprep.subr.mxu0 0.0
  %2993 = vmatpush1.msra.mxu0 %v205
  %2994 = vmatprep.subr.mxu0 0.0
  %2995 = vmatpush1.msra.mxu0 %v206
  %2996 = vmatprep.subr.mxu0 0.0
  %2997 = vmatpush1.msra.mxu0 %v207
  %2998 = vmatprep.subr.mxu0 0.0
  %2999 = vmatpush1.msra.mxu0 %v208
  %3000 = vmatprep.subr.mxu0 0.0
  %3001 = vmatpush1.msra.mxu0 %v209
  %3002 = vmatprep.subr.mxu0 0.0
  %3003 = vmatpush1.msra.mxu0 %v210
  %3004 = vmatprep.subr.mxu0 0.0
  %3005 = vmatpush1.msra.mxu0 %v211
  %3006 = vmatprep.subr.mxu0 0.0
  %3007 = vmatpush1.msra.mxu0 %v212
  %3008 = vmatprep.subr.mxu0 0.0
  %3009 = vmatpush1.msra.mxu0 %v213
  %3010 = vmatprep.subr.mxu0 0.0
  %3011 = vmatpush1.msra.mxu0 %v214
  %3012 = vmatprep.subr.mxu0 0.0
  %3013 = vmatpush1.msra.mxu0 %v215
  %3014 = vmatprep.subr.mxu0 0.0
  %3015 = vmatpush1.msra.mxu0 %v216
  %3016 = vmatprep.subr.mxu0 0.0
  %3017 = vmatpush1.msra.mxu0 0.0
  %3018 = vmatprep.subr.mxu0 0.0
  %3019 = vmatpush1.msra.mxu0 0.0
  %3020 = vmatprep.subr.mxu0 0.0
  %3021 = vmatpush1.msra.mxu0 0.0
  %3022 = vmatprep.subr.mxu0 0.0
  %3023 = vmatpush1.msra.mxu0 0.0
  %3024 = vmatprep.subr.mxu0 0.0
  %3025 = vmatpush1.msra.mxu0 0.0
  %3026 = vmatprep.subr.mxu0 0.0
  %3027 = vmatpush1.msra.mxu0 0.0
  %3028 = vmatprep.subr.mxu0 0.0
  %3029 = vmatpush1.msra.mxu0 0.0
  %3030 = vmatprep.subr.mxu0 0.0
  %3031 = vmatpush1.msra.mxu0 0.0
  %3032 = vmatprep.subr.mxu0 0.0
  %3033 = vmatpush1.msra.mxu0 0.0
  %3034 = vmatprep.subr.mxu0 0.0
  %3035 = vmatpush1.msra.mxu0 0.0
  %3036 = vmatprep.subr.mxu0 0.0
  %3037 = vmatpush1.msra.mxu0 0.0
  %3038 = vmatprep.subr.mxu0 0.0
  %3039 = vmatpush1.msra.mxu0 0.0
  %3040 = vmatprep.subr.mxu0 0.0
  %3041 = vmatpush1.msra.mxu0 0.0
  %3042 = vmatprep.subr.mxu0 0.0
  %3043 = vmatpush1.msra.mxu0 0.0
  %3044 = vmatprep.subr.mxu0 0.0
  %3045 = vmatpush1.msra.mxu0 0.0
  %3046 = vmatprep.subr.mxu0 0.0
  %3047 = vmatpush1.msra.mxu0 0.0
  %3048 = vmatprep.mubr.f32.mxu0 0.0
  %3049 = vmatmul.mubr.f32.gmra.mrb[0].mxu0 %v2983
  %v3050 = vpop.f32.mrb[0].mxu0
  %v3051 = vadd.f32 %v880, %v3050
  %v3052 = vpop.f32.mrb[0].mxu0
  %3053 = vdwg.mxu0
  %s3054 = scalar_lea.vmem %s10, 6
  %3055 = vst [vmem:[%s3054] sm:$0x3] %v3051
  %3056 = vmatprep.subr.mxu0 0.0
  %3057 = vmatpush1.msra.mxu0 %v39
  %3058 = vmatprep.subr.mxu0 0.0
  %3059 = vmatpush1.msra.mxu0 %v40
  %3060 = vmatprep.subr.mxu0 0.0
  %3061 = vmatpush1.msra.mxu0 %v41
  %3062 = vmatprep.subr.mxu0 0.0
  %3063 = vmatpush1.msra.mxu0 %v42
  %3064 = vmatprep.subr.mxu0 0.0
  %3065 = vmatpush1.msra.mxu0 %v43
  %3066 = vmatprep.subr.mxu0 0.0
  %3067 = vmatpush1.msra.mxu0 %v44
  %3068 = vmatprep.subr.mxu0 0.0
  %3069 = vmatpush1.msra.mxu0 %v45
  %3070 = vmatprep.subr.mxu0 0.0
  %3071 = vmatpush1.msra.mxu0 %v46
  %3072 = vmatprep.subr.mxu0 0.0
  %3073 = vmatpush1.msra.mxu0 %v47
  %3074 = vmatprep.subr.mxu0 0.0
  %3075 = vmatpush1.msra.mxu0 %v48
  %3076 = vmatprep.subr.mxu0 0.0
  %3077 = vmatpush1.msra.mxu0 %v49
  %3078 = vmatprep.subr.mxu0 0.0
  %3079 = vmatpush1.msra.mxu0 %v50
  %3080 = vmatprep.subr.mxu0 0.0
  %3081 = vmatpush1.msra.mxu0 %v51
  %3082 = vmatprep.subr.mxu0 0.0
  %3083 = vmatpush1.msra.mxu0 %v52
  %3084 = vmatprep.subr.mxu0 0.0
  %3085 = vmatpush1.msra.mxu0 %v53
  %3086 = vmatprep.subr.mxu0 0.0
  %3087 = vmatpush1.msra.mxu0 %v54
  %3088 = vmatprep.subr.mxu0 0.0
  %3089 = vmatpush1.msra.mxu0 0.0
  %3090 = vmatprep.subr.mxu0 0.0
  %3091 = vmatpush1.msra.mxu0 0.0
  %3092 = vmatprep.subr.mxu0 0.0
  %3093 = vmatpush1.msra.mxu0 0.0
  %3094 = vmatprep.subr.mxu0 0.0
  %3095 = vmatpush1.msra.mxu0 0.0
  %3096 = vmatprep.subr.mxu0 0.0
  %3097 = vmatpush1.msra.mxu0 0.0
  %3098 = vmatprep.subr.mxu0 0.0
  %3099 = vmatpush1.msra.mxu0 0.0
  %3100 = vmatprep.subr.mxu0 0.0
  %3101 = vmatpush1.msra.mxu0 0.0
  %3102 = vmatprep.subr.mxu0 0.0
  %3103 = vmatpush1.msra.mxu0 0.0
  %3104 = vmatprep.subr.mxu0 0.0
  %3105 = vmatpush1.msra.mxu0 0.0
  %3106 = vmatprep.subr.mxu0 0.0
  %3107 = vmatpush1.msra.mxu0 0.0
  %3108 = vmatprep.subr.mxu0 0.0
  %3109 = vmatpush1.msra.mxu0 0.0
  %3110 = vmatprep.subr.mxu0 0.0
  %3111 = vmatpush1.msra.mxu0 0.0
  %3112 = vmatprep.subr.mxu0 0.0
  %3113 = vmatpush1.msra.mxu0 0.0
  %3114 = vmatprep.subr.mxu0 0.0
  %3115 = vmatpush1.msra.mxu0 0.0
  %3116 = vmatprep.subr.mxu0 0.0
  %3117 = vmatpush1.msra.mxu0 0.0
  %3118 = vmatprep.subr.mxu0 0.0
  %3119 = vmatpush1.msra.mxu0 0.0
  %3120 = vmatprep.mubr.f32.mxu0 0.0
  %3121 = vmatmul.mubr.f32.gmra.mrb[0].mxu0 %v2983
  %v3122 = vpop.f32.mrb[0].mxu0
  %v3123 = vadd.f32 %v222, %v3122
  %v3124 = vpop.f32.mrb[0].mxu0
  %3125 = vdwg.mxu0
  %v3128 = vunpack.c.l.s4 1966171168
  %v3129 = vunpack.c.0.s8 %v3128
  %v3130 = vlaneseq
  %v3131 = vshrl.u32 %v3130, 7
  %v3132 = vsub.s32 %v3129, %v3131
  %v3133 = vrot.slane %v3123, %v3132
  %v3134 = vcombine.high %v3133, %v3133
  %v3136 = vunpack.c.l.s4 1966171168
  %v3137 = vunpack.c.0.s8 %v3136
  %v3138 = vlaneseq
  %v3139 = vshrl.u32 %v3138, 7
  %v3140 = vsub.s32 %v3137, %v3139
  %v3141 = vrot.slane %v3133, %v3140
  %v3143 = vunpack.c.l.s4 1966171168
  %v3144 = vunpack.c.0.s8 %v3143
  %v3145 = vlaneseq
  %v3146 = vshrl.u32 %v3145, 7
  %v3147 = vsub.s32 %v3144, %v3146
  %v3148 = vrot.slane %v3134, %v3147
  %v3149 = vlaneseq
  %v3150 = vshrl.u32 %v3149, 7
  %v3151 = vsub.s32 0, %v3150
  %v3152 = vrot.slane %v3141, %v3151
  %v3153 = vlaneseq
  %v3154 = vshrl.u32 %v3153, 7
  %v3155 = vsub.s32 0, %v3154
  %v3156 = vrot.slane %v3148, %v3155
  %v3159 = vadd.f32 %v37, %v3152
  %v3160 = vadd.f32 %v38, %v3156
  %v3161 = vtanh.pop %v3159
  %v3162 = vtanh.pop %v3160
  %3163 = vmatprep.subr.mxu0 0.0
  %3164 = vmatpush1.msra.mxu0 %v56
  %3165 = vmatprep.subr.mxu0 0.0
  %3166 = vmatpush1.msra.mxu0 %v57
  %3167 = vmatprep.subr.mxu0 0.0
  %3168 = vmatpush1.msra.mxu0 %v58
  %3169 = vmatprep.subr.mxu0 0.0
  %3170 = vmatpush1.msra.mxu0 %v59
  %3171 = vmatprep.subr.mxu0 0.0
  %3172 = vmatpush1.msra.mxu0 %v60
  %3173 = vmatprep.subr.mxu0 0.0
  %3174 = vmatpush1.msra.mxu0 %v61
  %3175 = vmatprep.subr.mxu0 0.0
  %3176 = vmatpush1.msra.mxu0 %v62
  %3177 = vmatprep.subr.mxu0 0.0
  %3178 = vmatpush1.msra.mxu0 %v63
  %3179 = vmatprep.subr.mxu0 0.0
  %3180 = vmatpush1.msra.mxu0 %v64
  %3181 = vmatprep.subr.mxu0 0.0
  %3182 = vmatpush1.msra.mxu0 %v65
  %3183 = vmatprep.subr.mxu0 0.0
  %3184 = vmatpush1.msra.mxu0 %v66
  %3185 = vmatprep.subr.mxu0 0.0
  %3186 = vmatpush1.msra.mxu0 %v67
  %3187 = vmatprep.subr.mxu0 0.0
  %3188 = vmatpush1.msra.mxu0 %v68
  %3189 = vmatprep.subr.mxu0 0.0
  %3190 = vmatpush1.msra.mxu0 %v69
  %3191 = vmatprep.subr.mxu0 0.0
  %3192 = vmatpush1.msra.mxu0 %v70
  %3193 = vmatprep.subr.mxu0 0.0
  %3194 = vmatpush1.msra.mxu0 %v71
  %3195 = vmatprep.subr.mxu0 0.0
  %3196 = vmatpush1.msra.mxu0 0.0
  %3197 = vmatprep.subr.mxu0 0.0
  %3198 = vmatpush1.msra.mxu0 0.0
  %3199 = vmatprep.subr.mxu0 0.0
  %3200 = vmatpush1.msra.mxu0 0.0
  %3201 = vmatprep.subr.mxu0 0.0
  %3202 = vmatpush1.msra.mxu0 0.0
  %3203 = vmatprep.subr.mxu0 0.0
  %3204 = vmatpush1.msra.mxu0 0.0
  %3205 = vmatprep.subr.mxu0 0.0
  %3206 = vmatpush1.msra.mxu0 0.0
  %3207 = vmatprep.subr.mxu0 0.0
  %3208 = vmatpush1.msra.mxu0 0.0
  %3209 = vmatprep.subr.mxu0 0.0
  %3210 = vmatpush1.msra.mxu0 0.0
  %3211 = vmatprep.subr.mxu0 0.0
  %3212 = vmatpush1.msra.mxu0 0.0
  %3213 = vmatprep.subr.mxu0 0.0
  %3214 = vmatpush1.msra.mxu0 0.0
  %3215 = vmatprep.subr.mxu0 0.0
  %3216 = vmatpush1.msra.mxu0 0.0
  %3217 = vmatprep.subr.mxu0 0.0
  %3218 = vmatpush1.msra.mxu0 0.0
  %3219 = vmatprep.subr.mxu0 0.0
  %3220 = vmatpush1.msra.mxu0 0.0
  %3221 = vmatprep.subr.mxu0 0.0
  %3222 = vmatpush1.msra.mxu0 0.0
  %3223 = vmatprep.subr.mxu0 0.0
  %3224 = vmatpush1.msra.mxu0 0.0
  %3225 = vmatprep.subr.mxu0 0.0
  %3226 = vmatpush1.msra.mxu0 0.0
  %3227 = vmatprep.mubr.f32.mxu0 0.0
  %3228 = vmatmul.mubr.f32.gmra.mrb[0].mxu0 %v3161
  %v3229 = vpop.f32.mrb[0].mxu0
  %v3230 = vadd.f32 0.0, %v3229
  %v3231 = vpop.f32.mrb[0].mxu0
  %3232 = vmatprep.mubr.f32.mxu0 0.0
  %3233 = vmatmul.mubr.f32.gmra.mrb[0].mxu0 %v3162
  %v3234 = vpop.f32.mrb[0].mxu0
  %v3235 = vadd.f32 0.0, %v3234
  %v3236 = vpop.f32.mrb[0].mxu0
  %3237 = vdwg.mxu0
  %v3238 = vsel %vm406, %v3230, -inf
  %v3239 = vrot.slane %v3238, 4
  %v3240 = vmax.f32 %v3238, %v3239
  %v3241 = vrot.slane %v3240, 2
  %v3242 = vmax.f32 %v3240, %v3241
  %v3243 = vrot.slane %v3242, 1
  %v3244 = vmax.f32 %v3242, %v3243
  %v3245 = vsel %vm406, %v3235, -inf
  %v3246 = vrot.slane %v3245, 4
  %v3247 = vmax.f32 %v3245, %v3246
  %v3248 = vrot.slane %v3247, 2
  %v3249 = vmax.f32 %v3247, %v3248
  %v3250 = vrot.slane %v3249, 1
  %v3251 = vmax.f32 %v3249, %v3250
  %v3252 = vsub.f32 %v3230, %v3244
  %v3253 = vsub.f32 %v3235, %v3251
  %v3254 = vmul.f32 %v3252, 1.442695
  %v3255 = vpow.pop %v3254
  %v3256 = vmul.f32 %v3253, 1.442695
  %v3257 = vpow.pop %v3256
  %v3258 = vsel %vm406, %v3255, 0.0
  %v3259 = vrot.slane %v3258, 4
  %v3260 = vadd.f32 %v3258, %v3259
  %v3261 = vrot.slane %v3260, 2
  %v3262 = vadd.f32 %v3260, %v3261
  %v3263 = vrot.slane %v3262, 1
  %v3264 = vadd.f32 %v3262, %v3263
  %v3265 = vsel %vm406, %v3257, 0.0
  %v3266 = vrot.slane %v3265, 4
  %v3267 = vadd.f32 %v3265, %v3266
  %v3268 = vrot.slane %v3267, 2
  %v3269 = vadd.f32 %v3267, %v3268
  %v3270 = vrot.slane %v3269, 1
  %v3271 = vadd.f32 %v3269, %v3270
  %v3272 = vrcp.pop %v3264
  %v3273 = vrcp.pop %v3271
  %v3274 = vmul.f32 %v3255, %v3272
  %v3275 = vmul.f32 %v3257, %v3273
  %3276 = vxpose.xlu0.b32.start [1/16] %v3274, 128
  %3277 = vxpose.xlu0.b32.cont [2/16] 0.0, 128
  %3278 = vxpose.xlu0.b32.cont [3/16] 0.0, 128
  %3279 = vxpose.xlu0.b32.cont [4/16] 0.0, 128
  %3280 = vxpose.xlu0.b32.cont [5/16] 0.0, 128
  %3281 = vxpose.xlu0.b32.cont [6/16] 0.0, 128
  %3282 = vxpose.xlu0.b32.cont [7/16] 0.0, 128
  %3283 = vxpose.xlu0.b32.cont [8/16] 0.0, 128
  %3284 = vxpose.xlu0.b32.cont [9/16] 0.0, 128
  %3285 = vxpose.xlu0.b32.cont [10/16] 0.0, 128
  %3286 = vxpose.xlu0.b32.cont [11/16] 0.0, 128
  %3287 = vxpose.xlu0.b32.cont [12/16] 0.0, 128
  %3288 = vxpose.xlu0.b32.cont [13/16] 0.0, 128
  %3289 = vxpose.xlu0.b32.cont [14/16] 0.0, 128
  %3290 = vxpose.xlu0.b32.cont [15/16] 0.0, 128
  %3291 = vxpose.xlu0.b32.end [16/16] 0.0, 128
  %v3292 = vpop.trf.xlu0
  %v3293 = vpop.trf.xlu0
  %v3294 = vpop.trf.xlu0
  %v3295 = vpop.trf.xlu0
  %v3296 = vpop.trf.xlu0
  %v3297 = vpop.trf.xlu0
  %v3298 = vpop.trf.xlu0
  %v3299 = vpop.trf.xlu0
  %v3300 = vpop.trf.xlu0
  %v3301 = vpop.trf.xlu0
  %v3302 = vpop.trf.xlu0
  %v3303 = vpop.trf.xlu0
  %v3304 = vpop.trf.xlu0
  %v3305 = vpop.trf.xlu0
  %v3306 = vpop.trf.xlu0
  %v3307 = vpop.trf.xlu0
  %v3309 = vsel %vm477, %v3292, 0
  %3311 = vmatprep.subr.mxu0 0.0
  %3312 = vmatpush1.msra.mxu0 %v35
  %3313 = vmatprep.subr.mxu0 0.0
  %3314 = vmatpush1.msra.mxu0 0.0
  %3315 = vmatprep.subr.mxu0 0.0
  %3316 = vmatpush1.msra.mxu0 0.0
  %3317 = vmatprep.subr.mxu0 0.0
  %3318 = vmatpush1.msra.mxu0 0.0
  %3319 = vmatprep.subr.mxu0 0.0
  %3320 = vmatpush1.msra.mxu0 0.0
  %3321 = vmatprep.subr.mxu0 0.0
  %3322 = vmatpush1.msra.mxu0 0.0
  %3323 = vmatprep.subr.mxu0 0.0
  %3324 = vmatpush1.msra.mxu0 0.0
  %3325 = vmatprep.subr.mxu0 0.0
  %3326 = vmatpush1.msra.mxu0 0.0
  %3327 = vmatprep.subr.mxu0 0.0
  %3328 = vmatpush1.msra.mxu0 0.0
  %3329 = vmatprep.subr.mxu0 0.0
  %3330 = vmatpush1.msra.mxu0 0.0
  %3331 = vmatprep.subr.mxu0 0.0
  %3332 = vmatpush1.msra.mxu0 0.0
  %3333 = vmatprep.subr.mxu0 0.0
  %3334 = vmatpush1.msra.mxu0 0.0
  %3335 = vmatprep.subr.mxu0 0.0
  %3336 = vmatpush1.msra.mxu0 0.0
  %3337 = vmatprep.subr.mxu0 0.0
  %3338 = vmatpush1.msra.mxu0 0.0
  %3339 = vmatprep.subr.mxu0 0.0
  %3340 = vmatpush1.msra.mxu0 0.0
  %3341 = vmatprep.subr.mxu0 0.0
  %3342 = vmatpush1.msra.mxu0 0.0
  %3343 = vmatprep.subr.mxu0 0.0
  %3344 = vmatpush1.msra.mxu0 0.0
  %3345 = vmatprep.subr.mxu0 0.0
  %3346 = vmatpush1.msra.mxu0 0.0
  %3347 = vmatprep.subr.mxu0 0.0
  %3348 = vmatpush1.msra.mxu0 0.0
  %3349 = vmatprep.subr.mxu0 0.0
  %3350 = vmatpush1.msra.mxu0 0.0
  %3351 = vmatprep.subr.mxu0 0.0
  %3352 = vmatpush1.msra.mxu0 0.0
  %3353 = vmatprep.subr.mxu0 0.0
  %3354 = vmatpush1.msra.mxu0 0.0
  %3355 = vmatprep.subr.mxu0 0.0
  %3356 = vmatpush1.msra.mxu0 0.0
  %3357 = vmatprep.subr.mxu0 0.0
  %3358 = vmatpush1.msra.mxu0 0.0
  %3359 = vmatprep.subr.mxu0 0.0
  %3360 = vmatpush1.msra.mxu0 0.0
  %3361 = vmatprep.subr.mxu0 0.0
  %3362 = vmatpush1.msra.mxu0 0.0
  %3363 = vmatprep.subr.mxu0 0.0
  %3364 = vmatpush1.msra.mxu0 0.0
  %3365 = vmatprep.subr.mxu0 0.0
  %3366 = vmatpush1.msra.mxu0 0.0
  %3367 = vmatprep.subr.mxu0 0.0
  %3368 = vmatpush1.msra.mxu0 0.0
  %3369 = vmatprep.subr.mxu0 0.0
  %3370 = vmatpush1.msra.mxu0 0.0
  %3371 = vmatprep.subr.mxu0 0.0
  %3372 = vmatpush1.msra.mxu0 0.0
  %3373 = vmatprep.subr.mxu0 0.0
  %3374 = vmatpush1.msra.mxu0 0.0
  %3375 = vmatprep.mubr.f32.mxu0 0.0
  %3376 = vmatmul.mubr.f32.gmra.mrb[0].mxu0 %v3309
  %v3377 = vpop.f32.mrb[0].mxu0
  %v3378 = vadd.f32 0.0, %v3377
  %v3379 = vpop.f32.mrb[0].mxu0
  %3380 = vdwg.mxu0
  %3381 = vxpose.xlu0.b32.start [1/16] %v3275, 128
  %3382 = vxpose.xlu0.b32.cont [2/16] 0.0, 128
  %3383 = vxpose.xlu0.b32.cont [3/16] 0.0, 128
  %3384 = vxpose.xlu0.b32.cont [4/16] 0.0, 128
  %3385 = vxpose.xlu0.b32.cont [5/16] 0.0, 128
  %3386 = vxpose.xlu0.b32.cont [6/16] 0.0, 128
  %3387 = vxpose.xlu0.b32.cont [7/16] 0.0, 128
  %3388 = vxpose.xlu0.b32.cont [8/16] 0.0, 128
  %3389 = vxpose.xlu0.b32.cont [9/16] 0.0, 128
  %3390 = vxpose.xlu0.b32.cont [10/16] 0.0, 128
  %3391 = vxpose.xlu0.b32.cont [11/16] 0.0, 128
  %3392 = vxpose.xlu0.b32.cont [12/16] 0.0, 128
  %3393 = vxpose.xlu0.b32.cont [13/16] 0.0, 128
  %3394 = vxpose.xlu0.b32.cont [14/16] 0.0, 128
  %3395 = vxpose.xlu0.b32.cont [15/16] 0.0, 128
  %3396 = vxpose.xlu0.b32.end [16/16] 0.0, 128
  %v3397 = vpop.trf.xlu0
  %v3398 = vpop.trf.xlu0
  %v3399 = vpop.trf.xlu0
  %v3400 = vpop.trf.xlu0
  %v3401 = vpop.trf.xlu0
  %v3402 = vpop.trf.xlu0
  %v3403 = vpop.trf.xlu0
  %v3404 = vpop.trf.xlu0
  %v3405 = vpop.trf.xlu0
  %v3406 = vpop.trf.xlu0
  %v3407 = vpop.trf.xlu0
  %v3408 = vpop.trf.xlu0
  %v3409 = vpop.trf.xlu0
  %v3410 = vpop.trf.xlu0
  %v3411 = vpop.trf.xlu0
  %v3412 = vpop.trf.xlu0
  %v3414 = vsel %vm477, %v3397, 0
  %3416 = vmatprep.subr.mxu0 0.0
  %3417 = vmatpush1.msra.mxu0 %v36
  %3418 = vmatprep.subr.mxu0 0.0
  %3419 = vmatpush1.msra.mxu0 0.0
  %3420 = vmatprep.subr.mxu0 0.0
  %3421 = vmatpush1.msra.mxu0 0.0
  %3422 = vmatprep.subr.mxu0 0.0
  %3423 = vmatpush1.msra.mxu0 0.0
  %3424 = vmatprep.subr.mxu0 0.0
  %3425 = vmatpush1.msra.mxu0 0.0
  %3426 = vmatprep.subr.mxu0 0.0
  %3427 = vmatpush1.msra.mxu0 0.0
  %3428 = vmatprep.subr.mxu0 0.0
  %3429 = vmatpush1.msra.mxu0 0.0
  %3430 = vmatprep.subr.mxu0 0.0
  %3431 = vmatpush1.msra.mxu0 0.0
  %3432 = vmatprep.subr.mxu0 0.0
  %3433 = vmatpush1.msra.mxu0 0.0
  %3434 = vmatprep.subr.mxu0 0.0
  %3435 = vmatpush1.msra.mxu0 0.0
  %3436 = vmatprep.subr.mxu0 0.0
  %3437 = vmatpush1.msra.mxu0 0.0
  %3438 = vmatprep.subr.mxu0 0.0
  %3439 = vmatpush1.msra.mxu0 0.0
  %3440 = vmatprep.subr.mxu0 0.0
  %3441 = vmatpush1.msra.mxu0 0.0
  %3442 = vmatprep.subr.mxu0 0.0
  %3443 = vmatpush1.msra.mxu0 0.0
  %3444 = vmatprep.subr.mxu0 0.0
  %3445 = vmatpush1.msra.mxu0 0.0
  %3446 = vmatprep.subr.mxu0 0.0
  %3447 = vmatpush1.msra.mxu0 0.0
  %3448 = vmatprep.subr.mxu0 0.0
  %3449 = vmatpush1.msra.mxu0 0.0
  %3450 = vmatprep.subr.mxu0 0.0
  %3451 = vmatpush1.msra.mxu0 0.0
  %3452 = vmatprep.subr.mxu0 0.0
  %3453 = vmatpush1.msra.mxu0 0.0
  %3454 = vmatprep.subr.mxu0 0.0
  %3455 = vmatpush1.msra.mxu0 0.0
  %3456 = vmatprep.subr.mxu0 0.0
  %3457 = vmatpush1.msra.mxu0 0.0
  %3458 = vmatprep.subr.mxu0 0.0
  %3459 = vmatpush1.msra.mxu0 0.0
  %3460 = vmatprep.subr.mxu0 0.0
  %3461 = vmatpush1.msra.mxu0 0.0
  %3462 = vmatprep.subr.mxu0 0.0
  %3463 = vmatpush1.msra.mxu0 0.0
  %3464 = vmatprep.subr.mxu0 0.0
  %3465 = vmatpush1.msra.mxu0 0.0
  %3466 = vmatprep.subr.mxu0 0.0
  %3467 = vmatpush1.msra.mxu0 0.0
  %3468 = vmatprep.subr.mxu0 0.0
  %3469 = vmatpush1.msra.mxu0 0.0
  %3470 = vmatprep.subr.mxu0 0.0
  %3471 = vmatpush1.msra.mxu0 0.0
  %3472 = vmatprep.subr.mxu0 0.0
  %3473 = vmatpush1.msra.mxu0 0.0
  %3474 = vmatprep.subr.mxu0 0.0
  %3475 = vmatpush1.msra.mxu0 0.0
  %3476 = vmatprep.subr.mxu0 0.0
  %3477 = vmatpush1.msra.mxu0 0.0
  %3478 = vmatprep.subr.mxu0 0.0
  %3479 = vmatpush1.msra.mxu0 0.0
  %3480 = vmatprep.mubr.f32.mxu0 0.0
  %3481 = vmatmul.mubr.f32.gmra.mrb[0].mxu0 %v3414
  %v3482 = vpop.f32.mrb[0].mxu0
  %v3483 = vadd.f32 0.0, %v3482
  %v3484 = vpop.f32.mrb[0].mxu0
  %3485 = vdwg.mxu0
  %v3488 = vrot.slane %v3483, 7
  %v3489 = vsel %vm659, %v3488, %v3378
  %s3491 = scalar_lea.vmem %s2, 32
  %v3492 = vld [vmem:[%s3491] sm:$0xff]
  %v3494 = vcombine.high %v3492, %v3492
  %v3496 = vunpack.c.l.s4 1983009808
  %v3497 = vunpack.c.0.s8 %v3496
  %v3498 = vlaneseq
  %v3499 = vshrl.u32 %v3498, 7
  %v3500 = vsub.s32 %v3497, %v3499
  %v3501 = vrot.slane %v3492, %v3500
  %v3503 = vunpack.c.l.s4 1983009808
  %v3504 = vunpack.c.0.s8 %v3503
  %v3505 = vlaneseq
  %v3506 = vshrl.u32 %v3505, 7
  %v3507 = vsub.s32 %v3504, %v3506
  %v3508 = vrot.slane %v3494, %v3507
  %v3509 = vcombine.high %v3501, %v3501
  %v3510 = vcombine.high %v3508, %v3508
  %3515 = vmatprep.subr.mxu0 %v73
  %3516 = vmatpush1.msra.mxu0 %v72
  %3517 = vmatprep.subr.mxu0 %v77
  %3518 = vmatpush1.msra.mxu0 %v76
  %3519 = vmatprep.subr.mxu0 %v81
  %3520 = vmatpush1.msra.mxu0 %v80
  %3521 = vmatprep.subr.mxu0 %v85
  %3522 = vmatpush1.msra.mxu0 %v84
  %3523 = vmatprep.subr.mxu0 %v89
  %3524 = vmatpush1.msra.mxu0 %v88
  %3525 = vmatprep.subr.mxu0 %v93
  %3526 = vmatpush1.msra.mxu0 %v92
  %3527 = vmatprep.subr.mxu0 %v97
  %3528 = vmatpush1.msra.mxu0 %v96
  %3529 = vmatprep.subr.mxu0 %v101
  %3530 = vmatpush1.msra.mxu0 %v100
  %3531 = vmatprep.subr.mxu0 %v105
  %3532 = vmatpush1.msra.mxu0 %v104
  %3533 = vmatprep.subr.mxu0 %v109
  %3534 = vmatpush1.msra.mxu0 %v108
  %3535 = vmatprep.subr.mxu0 %v113
  %3536 = vmatpush1.msra.mxu0 %v112
  %3537 = vmatprep.subr.mxu0 %v117
  %3538 = vmatpush1.msra.mxu0 %v116
  %3539 = vmatprep.subr.mxu0 %v121
  %3540 = vmatpush1.msra.mxu0 %v120
  %3541 = vmatprep.subr.mxu0 %v125
  %3542 = vmatpush1.msra.mxu0 %v124
  %3543 = vmatprep.subr.mxu0 %v129
  %3544 = vmatpush1.msra.mxu0 %v128
  %3545 = vmatprep.subr.mxu0 %v133
  %3546 = vmatpush1.msra.mxu0 %v132
  %3547 = vmatprep.subr.mxu0 %v137
  %3548 = vmatpush1.msra.mxu0 %v136
  %3549 = vmatprep.subr.mxu0 %v141
  %3550 = vmatpush1.msra.mxu0 %v140
  %3551 = vmatprep.subr.mxu0 %v145
  %3552 = vmatpush1.msra.mxu0 %v144
  %3553 = vmatprep.subr.mxu0 %v149
  %3554 = vmatpush1.msra.mxu0 %v148
  %3555 = vmatprep.subr.mxu0 %v153
  %3556 = vmatpush1.msra.mxu0 %v152
  %3557 = vmatprep.subr.mxu0 %v157
  %3558 = vmatpush1.msra.mxu0 %v156
  %3559 = vmatprep.subr.mxu0 %v161
  %3560 = vmatpush1.msra.mxu0 %v160
  %3561 = vmatprep.subr.mxu0 %v165
  %3562 = vmatpush1.msra.mxu0 %v164
  %3563 = vmatprep.subr.mxu0 %v169
  %3564 = vmatpush1.msra.mxu0 %v168
  %3565 = vmatprep.subr.mxu0 %v173
  %3566 = vmatpush1.msra.mxu0 %v172
  %3567 = vmatprep.subr.mxu0 %v177
  %3568 = vmatpush1.msra.mxu0 %v176
  %3569 = vmatprep.subr.mxu0 %v181
  %3570 = vmatpush1.msra.mxu0 %v180
  %3571 = vmatprep.subr.mxu0 %v185
  %3572 = vmatpush1.msra.mxu0 %v184
  %3573 = vmatprep.subr.mxu0 %v189
  %3574 = vmatpush1.msra.mxu0 %v188
  %3575 = vmatprep.subr.mxu0 %v193
  %3576 = vmatpush1.msra.mxu0 %v192
  %3577 = vmatprep.subr.mxu0 %v197
  %3578 = vmatpush1.msra.mxu0 %v196
  %3579 = vmatprep.mubr.f32.mxu0 %v2983
  %3580 = vmatmul.mubr.f32.gmra.mrb[0].mxu0 %v3489
  %v3581 = vpop.f32.mrb[0].mxu0
  %v3582 = vadd.f32 %v3501, %v3581
  %v3583 = vpop.f32.mrb[0].mxu0
  %v3584 = vadd.f32 %v3509, %v3583
  %3585 = vdwg.mxu0
  %3586 = vmatprep.subr.mxu0 %v75
  %3587 = vmatpush1.msra.mxu0 %v74
  %3588 = vmatprep.subr.mxu0 %v79
  %3589 = vmatpush1.msra.mxu0 %v78
  %3590 = vmatprep.subr.mxu0 %v83
  %3591 = vmatpush1.msra.mxu0 %v82
  %3592 = vmatprep.subr.mxu0 %v87
  %3593 = vmatpush1.msra.mxu0 %v86
  %3594 = vmatprep.subr.mxu0 %v91
  %3595 = vmatpush1.msra.mxu0 %v90
  %3596 = vmatprep.subr.mxu0 %v95
  %3597 = vmatpush1.msra.mxu0 %v94
  %3598 = vmatprep.subr.mxu0 %v99
  %3599 = vmatpush1.msra.mxu0 %v98
  %3600 = vmatprep.subr.mxu0 %v103
  %3601 = vmatpush1.msra.mxu0 %v102
  %3602 = vmatprep.subr.mxu0 %v107
  %3603 = vmatpush1.msra.mxu0 %v106
  %3604 = vmatprep.subr.mxu0 %v111
  %3605 = vmatpush1.msra.mxu0 %v110
  %3606 = vmatprep.subr.mxu0 %v115
  %3607 = vmatpush1.msra.mxu0 %v114
  %3608 = vmatprep.subr.mxu0 %v119
  %3609 = vmatpush1.msra.mxu0 %v118
  %3610 = vmatprep.subr.mxu0 %v123
  %3611 = vmatpush1.msra.mxu0 %v122
  %3612 = vmatprep.subr.mxu0 %v127
  %3613 = vmatpush1.msra.mxu0 %v126
  %3614 = vmatprep.subr.mxu0 %v131
  %3615 = vmatpush1.msra.mxu0 %v130
  %3616 = vmatprep.subr.mxu0 %v135
  %3617 = vmatpush1.msra.mxu0 %v134
  %3618 = vmatprep.subr.mxu0 %v139
  %3619 = vmatpush1.msra.mxu0 %v138
  %3620 = vmatprep.subr.mxu0 %v143
  %3621 = vmatpush1.msra.mxu0 %v142
  %3622 = vmatprep.subr.mxu0 %v147
  %3623 = vmatpush1.msra.mxu0 %v146
  %3624 = vmatprep.subr.mxu0 %v151
  %3625 = vmatpush1.msra.mxu0 %v150
  %3626 = vmatprep.subr.mxu0 %v155
  %3627 = vmatpush1.msra.mxu0 %v154
  %3628 = vmatprep.subr.mxu0 %v159
  %3629 = vmatpush1.msra.mxu0 %v158
  %3630 = vmatprep.subr.mxu0 %v163
  %3631 = vmatpush1.msra.mxu0 %v162
  %3632 = vmatprep.subr.mxu0 %v167
  %3633 = vmatpush1.msra.mxu0 %v166
  %3634 = vmatprep.subr.mxu0 %v171
  %3635 = vmatpush1.msra.mxu0 %v170
  %3636 = vmatprep.subr.mxu0 %v175
  %3637 = vmatpush1.msra.mxu0 %v174
  %3638 = vmatprep.subr.mxu0 %v179
  %3639 = vmatpush1.msra.mxu0 %v178
  %3640 = vmatprep.subr.mxu0 %v183
  %3641 = vmatpush1.msra.mxu0 %v182
  %3642 = vmatprep.subr.mxu0 %v187
  %3643 = vmatpush1.msra.mxu0 %v186
  %3644 = vmatprep.subr.mxu0 %v191
  %3645 = vmatpush1.msra.mxu0 %v190
  %3646 = vmatprep.subr.mxu0 %v195
  %3647 = vmatpush1.msra.mxu0 %v194
  %3648 = vmatprep.subr.mxu0 %v199
  %3649 = vmatpush1.msra.mxu0 %v198
  %3650 = vmatprep.mubr.f32.mxu0 %v2983
  %3651 = vmatmul.mubr.f32.gmra.mrb[0].mxu0 %v3489
  %v3652 = vpop.f32.mrb[0].mxu0
  %v3653 = vadd.f32 %v3508, %v3652
  %v3654 = vpop.f32.mrb[0].mxu0
  %v3655 = vadd.f32 %v3510, %v3654
  %3656 = vdwg.mxu0
  %v3657 = vadd.f32 %v3582, %v831
  %v3658 = vadd.f32 %v3584, %v835
  %v3659 = vadd.f32 %v3653, %v839
  %v3660 = vadd.f32 %v3655, %v843
  %v3661 = vxor.u32 %v3657, 2147483648
  %v3662 = vmul.f32 %v3661, 1.442695
  %v3663 = vpow.pop %v3662
  %v3664 = vadd.f32 %v3663, 1.0
  %v3665 = vrcp.pop %v3664
  %v3666 = vmul.f32 1.0, %v3665
  %v3667 = vxor.u32 %v3658, 2147483648
  %v3668 = vmul.f32 %v3667, 1.442695
  %v3669 = vpow.pop %v3668
  %v3670 = vadd.f32 %v3669, 1.0
  %v3671 = vrcp.pop %v3670
  %v3672 = vmul.f32 1.0, %v3671
  %v3673 = vtanh.pop %v3659
  %v3674 = vxor.u32 %v3660, 2147483648
  %v3675 = vmul.f32 %v3674, 1.442695
  %v3676 = vpow.pop %v3675
  %v3677 = vadd.f32 %v3676, 1.0
  %v3678 = vrcp.pop %v3677
  %v3679 = vmul.f32 1.0, %v3678
  %v3680 = vmul.f32 %v3672, %v2981
  %v3681 = vmul.f32 %v3666, %v3673
  %v3682 = vadd.f32 %v3680, %v3681
  %v3683 = vtanh.pop %v3682
  %v3684 = vmul.f32 %v3679, %v3683
  %3685 = vmatprep.subr.mxu0 0.0
  %3686 = vmatpush1.msra.mxu0 %v201
  %3687 = vmatprep.subr.mxu0 0.0
  %3688 = vmatpush1.msra.mxu0 %v202
  %3689 = vmatprep.subr.mxu0 0.0
  %3690 = vmatpush1.msra.mxu0 %v203
  %3691 = vmatprep.subr.mxu0 0.0
  %3692 = vmatpush1.msra.mxu0 %v204
  %3693 = vmatprep.subr.mxu0 0.0
  %3694 = vmatpush1.msra.mxu0 %v205
  %3695 = vmatprep.subr.mxu0 0.0
  %3696 = vmatpush1.msra.mxu0 %v206
  %3697 = vmatprep.subr.mxu0 0.0
  %3698 = vmatpush1.msra.mxu0 %v207
  %3699 = vmatprep.subr.mxu0 0.0
  %3700 = vmatpush1.msra.mxu0 %v208
  %3701 = vmatprep.subr.mxu0 0.0
  %3702 = vmatpush1.msra.mxu0 %v209
  %3703 = vmatprep.subr.mxu0 0.0
  %3704 = vmatpush1.msra.mxu0 %v210
  %3705 = vmatprep.subr.mxu0 0.0
  %3706 = vmatpush1.msra.mxu0 %v211
  %3707 = vmatprep.subr.mxu0 0.0
  %3708 = vmatpush1.msra.mxu0 %v212
  %3709 = vmatprep.subr.mxu0 0.0
  %3710 = vmatpush1.msra.mxu0 %v213
  %3711 = vmatprep.subr.mxu0 0.0
  %3712 = vmatpush1.msra.mxu0 %v214
  %3713 = vmatprep.subr.mxu0 0.0
  %3714 = vmatpush1.msra.mxu0 %v215
  %3715 = vmatprep.subr.mxu0 0.0
  %3716 = vmatpush1.msra.mxu0 %v216
  %3717 = vmatprep.subr.mxu0 0.0
  %3718 = vmatpush1.msra.mxu0 0.0
  %3719 = vmatprep.subr.mxu0 0.0
  %3720 = vmatpush1.msra.mxu0 0.0
  %3721 = vmatprep.subr.mxu0 0.0
  %3722 = vmatpush1.msra.mxu0 0.0
  %3723 = vmatprep.subr.mxu0 0.0
  %3724 = vmatpush1.msra.mxu0 0.0
  %3725 = vmatprep.subr.mxu0 0.0
  %3726 = vmatpush1.msra.mxu0 0.0
  %3727 = vmatprep.subr.mxu0 0.0
  %3728 = vmatpush1.msra.mxu0 0.0
  %3729 = vmatprep.subr.mxu0 0.0
  %3730 = vmatpush1.msra.mxu0 0.0
  %3731 = vmatprep.subr.mxu0 0.0
  %3732 = vmatpush1.msra.mxu0 0.0
  %3733 = vmatprep.subr.mxu0 0.0
  %3734 = vmatpush1.msra.mxu0 0.0
  %3735 = vmatprep.subr.mxu0 0.0
  %3736 = vmatpush1.msra.mxu0 0.0
  %3737 = vmatprep.subr.mxu0 0.0
  %3738 = vmatpush1.msra.mxu0 0.0
  %3739 = vmatprep.subr.mxu0 0.0
  %3740 = vmatpush1.msra.mxu0 0.0
  %3741 = vmatprep.subr.mxu0 0.0
  %3742 = vmatpush1.msra.mxu0 0.0
  %3743 = vmatprep.subr.mxu0 0.0
  %3744 = vmatpush1.msra.mxu0 0.0
  %3745 = vmatprep.subr.mxu0 0.0
  %3746 = vmatpush1.msra.mxu0 0.0
  %3747 = vmatprep.subr.mxu0 0.0
  %3748 = vmatpush1.msra.mxu0 0.0
  %3749 = vmatprep.mubr.f32.mxu0 0.0
  %3750 = vmatmul.mubr.f32.gmra.mrb[0].mxu0 %v3684
  %v3751 = vpop.f32.mrb[0].mxu0
  %v3752 = vadd.f32 %v880, %v3751
  %v3753 = vpop.f32.mrb[0].mxu0
  %3754 = vdwg.mxu0
  %s3755 = scalar_lea.vmem %s10, 8
  %3756 = vst [vmem:[%s3755] sm:$0x3] %v3752
  %3757 = vmatprep.subr.mxu0 0.0
  %3758 = vmatpush1.msra.mxu0 %v39
  %3759 = vmatprep.subr.mxu0 0.0
  %3760 = vmatpush1.msra.mxu0 %v40
  %3761 = vmatprep.subr.mxu0 0.0
  %3762 = vmatpush1.msra.mxu0 %v41
  %3763 = vmatprep.subr.mxu0 0.0
  %3764 = vmatpush1.msra.mxu0 %v42
  %3765 = vmatprep.subr.mxu0 0.0
  %3766 = vmatpush1.msra.mxu0 %v43
  %3767 = vmatprep.subr.mxu0 0.0
  %3768 = vmatpush1.msra.mxu0 %v44
  %3769 = vmatprep.subr.mxu0 0.0
  %3770 = vmatpush1.msra.mxu0 %v45
  %3771 = vmatprep.subr.mxu0 0.0
  %3772 = vmatpush1.msra.mxu0 %v46
  %3773 = vmatprep.subr.mxu0 0.0
  %3774 = vmatpush1.msra.mxu0 %v47
  %3775 = vmatprep.subr.mxu0 0.0
  %3776 = vmatpush1.msra.mxu0 %v48
  %3777 = vmatprep.subr.mxu0 0.0
  %3778 = vmatpush1.msra.mxu0 %v49
  %3779 = vmatprep.subr.mxu0 0.0
  %3780 = vmatpush1.msra.mxu0 %v50
  %3781 = vmatprep.subr.mxu0 0.0
  %3782 = vmatpush1.msra.mxu0 %v51
  %3783 = vmatprep.subr.mxu0 0.0
  %3784 = vmatpush1.msra.mxu0 %v52
  %3785 = vmatprep.subr.mxu0 0.0
  %3786 = vmatpush1.msra.mxu0 %v53
  %3787 = vmatprep.subr.mxu0 0.0
  %3788 = vmatpush1.msra.mxu0 %v54
  %3789 = vmatprep.subr.mxu0 0.0
  %3790 = vmatpush1.msra.mxu0 0.0
  %3791 = vmatprep.subr.mxu0 0.0
  %3792 = vmatpush1.msra.mxu0 0.0
  %3793 = vmatprep.subr.mxu0 0.0
  %3794 = vmatpush1.msra.mxu0 0.0
  %3795 = vmatprep.subr.mxu0 0.0
  %3796 = vmatpush1.msra.mxu0 0.0
  %3797 = vmatprep.subr.mxu0 0.0
  %3798 = vmatpush1.msra.mxu0 0.0
  %3799 = vmatprep.subr.mxu0 0.0
  %3800 = vmatpush1.msra.mxu0 0.0
  %3801 = vmatprep.subr.mxu0 0.0
  %3802 = vmatpush1.msra.mxu0 0.0
  %3803 = vmatprep.subr.mxu0 0.0
  %3804 = vmatpush1.msra.mxu0 0.0
  %3805 = vmatprep.subr.mxu0 0.0
  %3806 = vmatpush1.msra.mxu0 0.0
  %3807 = vmatprep.subr.mxu0 0.0
  %3808 = vmatpush1.msra.mxu0 0.0
  %3809 = vmatprep.subr.mxu0 0.0
  %3810 = vmatpush1.msra.mxu0 0.0
  %3811 = vmatprep.subr.mxu0 0.0
  %3812 = vmatpush1.msra.mxu0 0.0
  %3813 = vmatprep.subr.mxu0 0.0
  %3814 = vmatpush1.msra.mxu0 0.0
  %3815 = vmatprep.subr.mxu0 0.0
  %3816 = vmatpush1.msra.mxu0 0.0
  %3817 = vmatprep.subr.mxu0 0.0
  %3818 = vmatpush1.msra.mxu0 0.0
  %3819 = vmatprep.subr.mxu0 0.0
  %3820 = vmatpush1.msra.mxu0 0.0
  %3821 = vmatprep.mubr.f32.mxu0 0.0
  %3822 = vmatmul.mubr.f32.gmra.mrb[0].mxu0 %v3684
  %v3823 = vpop.f32.mrb[0].mxu0
  %v3824 = vadd.f32 %v222, %v3823
  %v3825 = vpop.f32.mrb[0].mxu0
  %3826 = vdwg.mxu0
  %v3829 = vunpack.c.l.s4 1966171168
  %v3830 = vunpack.c.0.s8 %v3829
  %v3831 = vlaneseq
  %v3832 = vshrl.u32 %v3831, 7
  %v3833 = vsub.s32 %v3830, %v3832
  %v3834 = vrot.slane %v3824, %v3833
  %v3835 = vcombine.high %v3834, %v3834
  %v3837 = vunpack.c.l.s4 1966171168
  %v3838 = vunpack.c.0.s8 %v3837
  %v3839 = vlaneseq
  %v3840 = vshrl.u32 %v3839, 7
  %v3841 = vsub.s32 %v3838, %v3840
  %v3842 = vrot.slane %v3834, %v3841
  %v3844 = vunpack.c.l.s4 1966171168
  %v3845 = vunpack.c.0.s8 %v3844
  %v3846 = vlaneseq
  %v3847 = vshrl.u32 %v3846, 7
  %v3848 = vsub.s32 %v3845, %v3847
  %v3849 = vrot.slane %v3835, %v3848
  %v3850 = vlaneseq
  %v3851 = vshrl.u32 %v3850, 7
  %v3852 = vsub.s32 0, %v3851
  %v3853 = vrot.slane %v3842, %v3852
  %v3854 = vlaneseq
  %v3855 = vshrl.u32 %v3854, 7
  %v3856 = vsub.s32 0, %v3855
  %v3857 = vrot.slane %v3849, %v3856
  %v3860 = vadd.f32 %v37, %v3853
  %v3861 = vadd.f32 %v38, %v3857
  %v3862 = vtanh.pop %v3860
  %v3863 = vtanh.pop %v3861
  %3864 = vmatprep.subr.mxu0 0.0
  %3865 = vmatpush1.msra.mxu0 %v56
  %3866 = vmatprep.subr.mxu0 0.0
  %3867 = vmatpush1.msra.mxu0 %v57
  %3868 = vmatprep.subr.mxu0 0.0
  %3869 = vmatpush1.msra.mxu0 %v58
  %3870 = vmatprep.subr.mxu0 0.0
  %3871 = vmatpush1.msra.mxu0 %v59
  %3872 = vmatprep.subr.mxu0 0.0
  %3873 = vmatpush1.msra.mxu0 %v60
  %3874 = vmatprep.subr.mxu0 0.0
  %3875 = vmatpush1.msra.mxu0 %v61
  %3876 = vmatprep.subr.mxu0 0.0
  %3877 = vmatpush1.msra.mxu0 %v62
  %3878 = vmatprep.subr.mxu0 0.0
  %3879 = vmatpush1.msra.mxu0 %v63
  %3880 = vmatprep.subr.mxu0 0.0
  %3881 = vmatpush1.msra.mxu0 %v64
  %3882 = vmatprep.subr.mxu0 0.0
  %3883 = vmatpush1.msra.mxu0 %v65
  %3884 = vmatprep.subr.mxu0 0.0
  %3885 = vmatpush1.msra.mxu0 %v66
  %3886 = vmatprep.subr.mxu0 0.0
  %3887 = vmatpush1.msra.mxu0 %v67
  %3888 = vmatprep.subr.mxu0 0.0
  %3889 = vmatpush1.msra.mxu0 %v68
  %3890 = vmatprep.subr.mxu0 0.0
  %3891 = vmatpush1.msra.mxu0 %v69
  %3892 = vmatprep.subr.mxu0 0.0
  %3893 = vmatpush1.msra.mxu0 %v70
  %3894 = vmatprep.subr.mxu0 0.0
  %3895 = vmatpush1.msra.mxu0 %v71
  %3896 = vmatprep.subr.mxu0 0.0
  %3897 = vmatpush1.msra.mxu0 0.0
  %3898 = vmatprep.subr.mxu0 0.0
  %3899 = vmatpush1.msra.mxu0 0.0
  %3900 = vmatprep.subr.mxu0 0.0
  %3901 = vmatpush1.msra.mxu0 0.0
  %3902 = vmatprep.subr.mxu0 0.0
  %3903 = vmatpush1.msra.mxu0 0.0
  %3904 = vmatprep.subr.mxu0 0.0
  %3905 = vmatpush1.msra.mxu0 0.0
  %3906 = vmatprep.subr.mxu0 0.0
  %3907 = vmatpush1.msra.mxu0 0.0
  %3908 = vmatprep.subr.mxu0 0.0
  %3909 = vmatpush1.msra.mxu0 0.0
  %3910 = vmatprep.subr.mxu0 0.0
  %3911 = vmatpush1.msra.mxu0 0.0
  %3912 = vmatprep.subr.mxu0 0.0
  %3913 = vmatpush1.msra.mxu0 0.0
  %3914 = vmatprep.subr.mxu0 0.0
  %3915 = vmatpush1.msra.mxu0 0.0
  %3916 = vmatprep.subr.mxu0 0.0
  %3917 = vmatpush1.msra.mxu0 0.0
  %3918 = vmatprep.subr.mxu0 0.0
  %3919 = vmatpush1.msra.mxu0 0.0
  %3920 = vmatprep.subr.mxu0 0.0
  %3921 = vmatpush1.msra.mxu0 0.0
  %3922 = vmatprep.subr.mxu0 0.0
  %3923 = vmatpush1.msra.mxu0 0.0
  %3924 = vmatprep.subr.mxu0 0.0
  %3925 = vmatpush1.msra.mxu0 0.0
  %3926 = vmatprep.subr.mxu0 0.0
  %3927 = vmatpush1.msra.mxu0 0.0
  %3928 = vmatprep.mubr.f32.mxu0 0.0
  %3929 = vmatmul.mubr.f32.gmra.mrb[0].mxu0 %v3862
  %v3930 = vpop.f32.mrb[0].mxu0
  %v3931 = vadd.f32 0.0, %v3930
  %v3932 = vpop.f32.mrb[0].mxu0
  %3933 = vmatprep.mubr.f32.mxu0 0.0
  %3934 = vmatmul.mubr.f32.gmra.mrb[0].mxu0 %v3863
  %v3935 = vpop.f32.mrb[0].mxu0
  %v3936 = vadd.f32 0.0, %v3935
  %v3937 = vpop.f32.mrb[0].mxu0
  %3938 = vdwg.mxu0
  %v3939 = vsel %vm406, %v3931, -inf
  %v3940 = vrot.slane %v3939, 4
  %v3941 = vmax.f32 %v3939, %v3940
  %v3942 = vrot.slane %v3941, 2
  %v3943 = vmax.f32 %v3941, %v3942
  %v3944 = vrot.slane %v3943, 1
  %v3945 = vmax.f32 %v3943, %v3944
  %v3946 = vsel %vm406, %v3936, -inf
  %v3947 = vrot.slane %v3946, 4
  %v3948 = vmax.f32 %v3946, %v3947
  %v3949 = vrot.slane %v3948, 2
  %v3950 = vmax.f32 %v3948, %v3949
  %v3951 = vrot.slane %v3950, 1
  %v3952 = vmax.f32 %v3950, %v3951
  %v3953 = vsub.f32 %v3931, %v3945
  %v3954 = vsub.f32 %v3936, %v3952
  %v3955 = vmul.f32 %v3953, 1.442695
  %v3956 = vpow.pop %v3955
  %v3957 = vmul.f32 %v3954, 1.442695
  %v3958 = vpow.pop %v3957
  %v3959 = vsel %vm406, %v3956, 0.0
  %v3960 = vrot.slane %v3959, 4
  %v3961 = vadd.f32 %v3959, %v3960
  %v3962 = vrot.slane %v3961, 2
  %v3963 = vadd.f32 %v3961, %v3962
  %v3964 = vrot.slane %v3963, 1
  %v3965 = vadd.f32 %v3963, %v3964
  %v3966 = vsel %vm406, %v3958, 0.0
  %v3967 = vrot.slane %v3966, 4
  %v3968 = vadd.f32 %v3966, %v3967
  %v3969 = vrot.slane %v3968, 2
  %v3970 = vadd.f32 %v3968, %v3969
  %v3971 = vrot.slane %v3970, 1
  %v3972 = vadd.f32 %v3970, %v3971
  %v3973 = vrcp.pop %v3965
  %v3974 = vrcp.pop %v3972
  %v3975 = vmul.f32 %v3956, %v3973
  %v3976 = vmul.f32 %v3958, %v3974
  %3977 = vxpose.xlu0.b32.start [1/16] %v3975, 128
  %3978 = vxpose.xlu0.b32.cont [2/16] 0.0, 128
  %3979 = vxpose.xlu0.b32.cont [3/16] 0.0, 128
  %3980 = vxpose.xlu0.b32.cont [4/16] 0.0, 128
  %3981 = vxpose.xlu0.b32.cont [5/16] 0.0, 128
  %3982 = vxpose.xlu0.b32.cont [6/16] 0.0, 128
  %3983 = vxpose.xlu0.b32.cont [7/16] 0.0, 128
  %3984 = vxpose.xlu0.b32.cont [8/16] 0.0, 128
  %3985 = vxpose.xlu0.b32.cont [9/16] 0.0, 128
  %3986 = vxpose.xlu0.b32.cont [10/16] 0.0, 128
  %3987 = vxpose.xlu0.b32.cont [11/16] 0.0, 128
  %3988 = vxpose.xlu0.b32.cont [12/16] 0.0, 128
  %3989 = vxpose.xlu0.b32.cont [13/16] 0.0, 128
  %3990 = vxpose.xlu0.b32.cont [14/16] 0.0, 128
  %3991 = vxpose.xlu0.b32.cont [15/16] 0.0, 128
  %3992 = vxpose.xlu0.b32.end [16/16] 0.0, 128
  %v3993 = vpop.trf.xlu0
  %v3994 = vpop.trf.xlu0
  %v3995 = vpop.trf.xlu0
  %v3996 = vpop.trf.xlu0
  %v3997 = vpop.trf.xlu0
  %v3998 = vpop.trf.xlu0
  %v3999 = vpop.trf.xlu0
  %v4000 = vpop.trf.xlu0
  %v4001 = vpop.trf.xlu0
  %v4002 = vpop.trf.xlu0
  %v4003 = vpop.trf.xlu0
  %v4004 = vpop.trf.xlu0
  %v4005 = vpop.trf.xlu0
  %v4006 = vpop.trf.xlu0
  %v4007 = vpop.trf.xlu0
  %v4008 = vpop.trf.xlu0
  %v4010 = vsel %vm477, %v3993, 0
  %4012 = vmatprep.subr.mxu0 0.0
  %4013 = vmatpush1.msra.mxu0 %v35
  %4014 = vmatprep.subr.mxu0 0.0
  %4015 = vmatpush1.msra.mxu0 0.0
  %4016 = vmatprep.subr.mxu0 0.0
  %4017 = vmatpush1.msra.mxu0 0.0
  %4018 = vmatprep.subr.mxu0 0.0
  %4019 = vmatpush1.msra.mxu0 0.0
  %4020 = vmatprep.subr.mxu0 0.0
  %4021 = vmatpush1.msra.mxu0 0.0
  %4022 = vmatprep.subr.mxu0 0.0
  %4023 = vmatpush1.msra.mxu0 0.0
  %4024 = vmatprep.subr.mxu0 0.0
  %4025 = vmatpush1.msra.mxu0 0.0
  %4026 = vmatprep.subr.mxu0 0.0
  %4027 = vmatpush1.msra.mxu0 0.0
  %4028 = vmatprep.subr.mxu0 0.0
  %4029 = vmatpush1.msra.mxu0 0.0
  %4030 = vmatprep.subr.mxu0 0.0
  %4031 = vmatpush1.msra.mxu0 0.0
  %4032 = vmatprep.subr.mxu0 0.0
  %4033 = vmatpush1.msra.mxu0 0.0
  %4034 = vmatprep.subr.mxu0 0.0
  %4035 = vmatpush1.msra.mxu0 0.0
  %4036 = vmatprep.subr.mxu0 0.0
  %4037 = vmatpush1.msra.mxu0 0.0
  %4038 = vmatprep.subr.mxu0 0.0
  %4039 = vmatpush1.msra.mxu0 0.0
  %4040 = vmatprep.subr.mxu0 0.0
  %4041 = vmatpush1.msra.mxu0 0.0
  %4042 = vmatprep.subr.mxu0 0.0
  %4043 = vmatpush1.msra.mxu0 0.0
  %4044 = vmatprep.subr.mxu0 0.0
  %4045 = vmatpush1.msra.mxu0 0.0
  %4046 = vmatprep.subr.mxu0 0.0
  %4047 = vmatpush1.msra.mxu0 0.0
  %4048 = vmatprep.subr.mxu0 0.0
  %4049 = vmatpush1.msra.mxu0 0.0
  %4050 = vmatprep.subr.mxu0 0.0
  %4051 = vmatpush1.msra.mxu0 0.0
  %4052 = vmatprep.subr.mxu0 0.0
  %4053 = vmatpush1.msra.mxu0 0.0
  %4054 = vmatprep.subr.mxu0 0.0
  %4055 = vmatpush1.msra.mxu0 0.0
  %4056 = vmatprep.subr.mxu0 0.0
  %4057 = vmatpush1.msra.mxu0 0.0
  %4058 = vmatprep.subr.mxu0 0.0
  %4059 = vmatpush1.msra.mxu0 0.0
  %4060 = vmatprep.subr.mxu0 0.0
  %4061 = vmatpush1.msra.mxu0 0.0
  %4062 = vmatprep.subr.mxu0 0.0
  %4063 = vmatpush1.msra.mxu0 0.0
  %4064 = vmatprep.subr.mxu0 0.0
  %4065 = vmatpush1.msra.mxu0 0.0
  %4066 = vmatprep.subr.mxu0 0.0
  %4067 = vmatpush1.msra.mxu0 0.0
  %4068 = vmatprep.subr.mxu0 0.0
  %4069 = vmatpush1.msra.mxu0 0.0
  %4070 = vmatprep.subr.mxu0 0.0
  %4071 = vmatpush1.msra.mxu0 0.0
  %4072 = vmatprep.subr.mxu0 0.0
  %4073 = vmatpush1.msra.mxu0 0.0
  %4074 = vmatprep.subr.mxu0 0.0
  %4075 = vmatpush1.msra.mxu0 0.0
  %4076 = vmatprep.mubr.f32.mxu0 0.0
  %4077 = vmatmul.mubr.f32.gmra.mrb[0].mxu0 %v4010
  %v4078 = vpop.f32.mrb[0].mxu0
  %v4079 = vadd.f32 0.0, %v4078
  %v4080 = vpop.f32.mrb[0].mxu0
  %4081 = vdwg.mxu0
  %4082 = vxpose.xlu0.b32.start [1/16] %v3976, 128
  %4083 = vxpose.xlu0.b32.cont [2/16] 0.0, 128
  %4084 = vxpose.xlu0.b32.cont [3/16] 0.0, 128
  %4085 = vxpose.xlu0.b32.cont [4/16] 0.0, 128
  %4086 = vxpose.xlu0.b32.cont [5/16] 0.0, 128
  %4087 = vxpose.xlu0.b32.cont [6/16] 0.0, 128
  %4088 = vxpose.xlu0.b32.cont [7/16] 0.0, 128
  %4089 = vxpose.xlu0.b32.cont [8/16] 0.0, 128
  %4090 = vxpose.xlu0.b32.cont [9/16] 0.0, 128
  %4091 = vxpose.xlu0.b32.cont [10/16] 0.0, 128
  %4092 = vxpose.xlu0.b32.cont [11/16] 0.0, 128
  %4093 = vxpose.xlu0.b32.cont [12/16] 0.0, 128
  %4094 = vxpose.xlu0.b32.cont [13/16] 0.0, 128
  %4095 = vxpose.xlu0.b32.cont [14/16] 0.0, 128
  %4096 = vxpose.xlu0.b32.cont [15/16] 0.0, 128
  %4097 = vxpose.xlu0.b32.end [16/16] 0.0, 128
  %v4098 = vpop.trf.xlu0
  %v4099 = vpop.trf.xlu0
  %v4100 = vpop.trf.xlu0
  %v4101 = vpop.trf.xlu0
  %v4102 = vpop.trf.xlu0
  %v4103 = vpop.trf.xlu0
  %v4104 = vpop.trf.xlu0
  %v4105 = vpop.trf.xlu0
  %v4106 = vpop.trf.xlu0
  %v4107 = vpop.trf.xlu0
  %v4108 = vpop.trf.xlu0
  %v4109 = vpop.trf.xlu0
  %v4110 = vpop.trf.xlu0
  %v4111 = vpop.trf.xlu0
  %v4112 = vpop.trf.xlu0
  %v4113 = vpop.trf.xlu0
  %v4115 = vsel %vm477, %v4098, 0
  %4117 = vmatprep.subr.mxu0 0.0
  %4118 = vmatpush1.msra.mxu0 %v36
  %4119 = vmatprep.subr.mxu0 0.0
  %4120 = vmatpush1.msra.mxu0 0.0
  %4121 = vmatprep.subr.mxu0 0.0
  %4122 = vmatpush1.msra.mxu0 0.0
  %4123 = vmatprep.subr.mxu0 0.0
  %4124 = vmatpush1.msra.mxu0 0.0
  %4125 = vmatprep.subr.mxu0 0.0
  %4126 = vmatpush1.msra.mxu0 0.0
  %4127 = vmatprep.subr.mxu0 0.0
  %4128 = vmatpush1.msra.mxu0 0.0
  %4129 = vmatprep.subr.mxu0 0.0
  %4130 = vmatpush1.msra.mxu0 0.0
  %4131 = vmatprep.subr.mxu0 0.0
  %4132 = vmatpush1.msra.mxu0 0.0
  %4133 = vmatprep.subr.mxu0 0.0
  %4134 = vmatpush1.msra.mxu0 0.0
  %4135 = vmatprep.subr.mxu0 0.0
  %4136 = vmatpush1.msra.mxu0 0.0
  %4137 = vmatprep.subr.mxu0 0.0
  %4138 = vmatpush1.msra.mxu0 0.0
  %4139 = vmatprep.subr.mxu0 0.0
  %4140 = vmatpush1.msra.mxu0 0.0
  %4141 = vmatprep.subr.mxu0 0.0
  %4142 = vmatpush1.msra.mxu0 0.0
  %4143 = vmatprep.subr.mxu0 0.0
  %4144 = vmatpush1.msra.mxu0 0.0
  %4145 = vmatprep.subr.mxu0 0.0
  %4146 = vmatpush1.msra.mxu0 0.0
  %4147 = vmatprep.subr.mxu0 0.0
  %4148 = vmatpush1.msra.mxu0 0.0
  %4149 = vmatprep.subr.mxu0 0.0
  %4150 = vmatpush1.msra.mxu0 0.0
  %4151 = vmatprep.subr.mxu0 0.0
  %4152 = vmatpush1.msra.mxu0 0.0
  %4153 = vmatprep.subr.mxu0 0.0
  %4154 = vmatpush1.msra.mxu0 0.0
  %4155 = vmatprep.subr.mxu0 0.0
  %4156 = vmatpush1.msra.mxu0 0.0
  %4157 = vmatprep.subr.mxu0 0.0
  %4158 = vmatpush1.msra.mxu0 0.0
  %4159 = vmatprep.subr.mxu0 0.0
  %4160 = vmatpush1.msra.mxu0 0.0
  %4161 = vmatprep.subr.mxu0 0.0
  %4162 = vmatpush1.msra.mxu0 0.0
  %4163 = vmatprep.subr.mxu0 0.0
  %4164 = vmatpush1.msra.mxu0 0.0
  %4165 = vmatprep.subr.mxu0 0.0
  %4166 = vmatpush1.msra.mxu0 0.0
  %4167 = vmatprep.subr.mxu0 0.0
  %4168 = vmatpush1.msra.mxu0 0.0
  %4169 = vmatprep.subr.mxu0 0.0
  %4170 = vmatpush1.msra.mxu0 0.0
  %4171 = vmatprep.subr.mxu0 0.0
  %4172 = vmatpush1.msra.mxu0 0.0
  %4173 = vmatprep.subr.mxu0 0.0
  %4174 = vmatpush1.msra.mxu0 0.0
  %4175 = vmatprep.subr.mxu0 0.0
  %4176 = vmatpush1.msra.mxu0 0.0
  %4177 = vmatprep.subr.mxu0 0.0
  %4178 = vmatpush1.msra.mxu0 0.0
  %4179 = vmatprep.subr.mxu0 0.0
  %4180 = vmatpush1.msra.mxu0 0.0
  %4181 = vmatprep.mubr.f32.mxu0 0.0
  %4182 = vmatmul.mubr.f32.gmra.mrb[0].mxu0 %v4115
  %v4183 = vpop.f32.mrb[0].mxu0
  %v4184 = vadd.f32 0.0, %v4183
  %v4185 = vpop.f32.mrb[0].mxu0
  %4186 = vdwg.mxu0
  %v4189 = vrot.slane %v4184, 7
  %v4190 = vsel %vm659, %v4189, %v4079
  %s4192 = scalar_lea.vmem %s2, 40
  %v4193 = vld [vmem:[%s4192] sm:$0xff]
  %v4195 = vcombine.high %v4193, %v4193
  %v4197 = vunpack.c.l.s4 1983009808
  %v4198 = vunpack.c.0.s8 %v4197
  %v4199 = vlaneseq
  %v4200 = vshrl.u32 %v4199, 7
  %v4201 = vsub.s32 %v4198, %v4200
  %v4202 = vrot.slane %v4193, %v4201
  %v4204 = vunpack.c.l.s4 1983009808
  %v4205 = vunpack.c.0.s8 %v4204
  %v4206 = vlaneseq
  %v4207 = vshrl.u32 %v4206, 7
  %v4208 = vsub.s32 %v4205, %v4207
  %v4209 = vrot.slane %v4195, %v4208
  %v4210 = vcombine.high %v4202, %v4202
  %v4211 = vcombine.high %v4209, %v4209
  %4216 = vmatprep.subr.mxu0 %v73
  %4217 = vmatpush1.msra.mxu0 %v72
  %4218 = vmatprep.subr.mxu0 %v77
  %4219 = vmatpush1.msra.mxu0 %v76
  %4220 = vmatprep.subr.mxu0 %v81
  %4221 = vmatpush1.msra.mxu0 %v80
  %4222 = vmatprep.subr.mxu0 %v85
  %4223 = vmatpush1.msra.mxu0 %v84
  %4224 = vmatprep.subr.mxu0 %v89
  %4225 = vmatpush1.msra.mxu0 %v88
  %4226 = vmatprep.subr.mxu0 %v93
  %4227 = vmatpush1.msra.mxu0 %v92
  %4228 = vmatprep.subr.mxu0 %v97
  %4229 = vmatpush1.msra.mxu0 %v96
  %4230 = vmatprep.subr.mxu0 %v101
  %4231 = vmatpush1.msra.mxu0 %v100
  %4232 = vmatprep.subr.mxu0 %v105
  %4233 = vmatpush1.msra.mxu0 %v104
  %4234 = vmatprep.subr.mxu0 %v109
  %4235 = vmatpush1.msra.mxu0 %v108
  %4236 = vmatprep.subr.mxu0 %v113
  %4237 = vmatpush1.msra.mxu0 %v112
  %4238 = vmatprep.subr.mxu0 %v117
  %4239 = vmatpush1.msra.mxu0 %v116
  %4240 = vmatprep.subr.mxu0 %v121
  %4241 = vmatpush1.msra.mxu0 %v120
  %4242 = vmatprep.subr.mxu0 %v125
  %4243 = vmatpush1.msra.mxu0 %v124
  %4244 = vmatprep.subr.mxu0 %v129
  %4245 = vmatpush1.msra.mxu0 %v128
  %4246 = vmatprep.subr.mxu0 %v133
  %4247 = vmatpush1.msra.mxu0 %v132
  %4248 = vmatprep.subr.mxu0 %v137
  %4249 = vmatpush1.msra.mxu0 %v136
  %4250 = vmatprep.subr.mxu0 %v141
  %4251 = vmatpush1.msra.mxu0 %v140
  %4252 = vmatprep.subr.mxu0 %v145
  %4253 = vmatpush1.msra.mxu0 %v144
  %4254 = vmatprep.subr.mxu0 %v149
  %4255 = vmatpush1.msra.mxu0 %v148
  %4256 = vmatprep.subr.mxu0 %v153
  %4257 = vmatpush1.msra.mxu0 %v152
  %4258 = vmatprep.subr.mxu0 %v157
  %4259 = vmatpush1.msra.mxu0 %v156
  %4260 = vmatprep.subr.mxu0 %v161
  %4261 = vmatpush1.msra.mxu0 %v160
  %4262 = vmatprep.subr.mxu0 %v165
  %4263 = vmatpush1.msra.mxu0 %v164
  %4264 = vmatprep.subr.mxu0 %v169
  %4265 = vmatpush1.msra.mxu0 %v168
  %4266 = vmatprep.subr.mxu0 %v173
  %4267 = vmatpush1.msra.mxu0 %v172
  %4268 = vmatprep.subr.mxu0 %v177
  %4269 = vmatpush1.msra.mxu0 %v176
  %4270 = vmatprep.subr.mxu0 %v181
  %4271 = vmatpush1.msra.mxu0 %v180
  %4272 = vmatprep.subr.mxu0 %v185
  %4273 = vmatpush1.msra.mxu0 %v184
  %4274 = vmatprep.subr.mxu0 %v189
  %4275 = vmatpush1.msra.mxu0 %v188
  %4276 = vmatprep.subr.mxu0 %v193
  %4277 = vmatpush1.msra.mxu0 %v192
  %4278 = vmatprep.subr.mxu0 %v197
  %4279 = vmatpush1.msra.mxu0 %v196
  %4280 = vmatprep.mubr.f32.mxu0 %v3684
  %4281 = vmatmul.mubr.f32.gmra.mrb[0].mxu0 %v4190
  %v4282 = vpop.f32.mrb[0].mxu0
  %v4283 = vadd.f32 %v4202, %v4282
  %v4284 = vpop.f32.mrb[0].mxu0
  %v4285 = vadd.f32 %v4210, %v4284
  %4286 = vdwg.mxu0
  %4287 = vmatprep.subr.mxu0 %v75
  %4288 = vmatpush1.msra.mxu0 %v74
  %4289 = vmatprep.subr.mxu0 %v79
  %4290 = vmatpush1.msra.mxu0 %v78
  %4291 = vmatprep.subr.mxu0 %v83
  %4292 = vmatpush1.msra.mxu0 %v82
  %4293 = vmatprep.subr.mxu0 %v87
  %4294 = vmatpush1.msra.mxu0 %v86
  %4295 = vmatprep.subr.mxu0 %v91
  %4296 = vmatpush1.msra.mxu0 %v90
  %4297 = vmatprep.subr.mxu0 %v95
  %4298 = vmatpush1.msra.mxu0 %v94
  %4299 = vmatprep.subr.mxu0 %v99
  %4300 = vmatpush1.msra.mxu0 %v98
  %4301 = vmatprep.subr.mxu0 %v103
  %4302 = vmatpush1.msra.mxu0 %v102
  %4303 = vmatprep.subr.mxu0 %v107
  %4304 = vmatpush1.msra.mxu0 %v106
  %4305 = vmatprep.subr.mxu0 %v111
  %4306 = vmatpush1.msra.mxu0 %v110
  %4307 = vmatprep.subr.mxu0 %v115
  %4308 = vmatpush1.msra.mxu0 %v114
  %4309 = vmatprep.subr.mxu0 %v119
  %4310 = vmatpush1.msra.mxu0 %v118
  %4311 = vmatprep.subr.mxu0 %v123
  %4312 = vmatpush1.msra.mxu0 %v122
  %4313 = vmatprep.subr.mxu0 %v127
  %4314 = vmatpush1.msra.mxu0 %v126
  %4315 = vmatprep.subr.mxu0 %v131
  %4316 = vmatpush1.msra.mxu0 %v130
  %4317 = vmatprep.subr.mxu0 %v135
  %4318 = vmatpush1.msra.mxu0 %v134
  %4319 = vmatprep.subr.mxu0 %v139
  %4320 = vmatpush1.msra.mxu0 %v138
  %4321 = vmatprep.subr.mxu0 %v143
  %4322 = vmatpush1.msra.mxu0 %v142
  %4323 = vmatprep.subr.mxu0 %v147
  %4324 = vmatpush1.msra.mxu0 %v146
  %4325 = vmatprep.subr.mxu0 %v151
  %4326 = vmatpush1.msra.mxu0 %v150
  %4327 = vmatprep.subr.mxu0 %v155
  %4328 = vmatpush1.msra.mxu0 %v154
  %4329 = vmatprep.subr.mxu0 %v159
  %4330 = vmatpush1.msra.mxu0 %v158
  %4331 = vmatprep.subr.mxu0 %v163
  %4332 = vmatpush1.msra.mxu0 %v162
  %4333 = vmatprep.subr.mxu0 %v167
  %4334 = vmatpush1.msra.mxu0 %v166
  %4335 = vmatprep.subr.mxu0 %v171
  %4336 = vmatpush1.msra.mxu0 %v170
  %4337 = vmatprep.subr.mxu0 %v175
  %4338 = vmatpush1.msra.mxu0 %v174
  %4339 = vmatprep.subr.mxu0 %v179
  %4340 = vmatpush1.msra.mxu0 %v178
  %4341 = vmatprep.subr.mxu0 %v183
  %4342 = vmatpush1.msra.mxu0 %v182
  %4343 = vmatprep.subr.mxu0 %v187
  %4344 = vmatpush1.msra.mxu0 %v186
  %4345 = vmatprep.subr.mxu0 %v191
  %4346 = vmatpush1.msra.mxu0 %v190
  %4347 = vmatprep.subr.mxu0 %v195
  %4348 = vmatpush1.msra.mxu0 %v194
  %4349 = vmatprep.subr.mxu0 %v199
  %4350 = vmatpush1.msra.mxu0 %v198
  %4351 = vmatprep.mubr.f32.mxu0 %v3684
  %4352 = vmatmul.mubr.f32.gmra.mrb[0].mxu0 %v4190
  %v4353 = vpop.f32.mrb[0].mxu0
  %v4354 = vadd.f32 %v4209, %v4353
  %v4355 = vpop.f32.mrb[0].mxu0
  %v4356 = vadd.f32 %v4211, %v4355
  %4357 = vdwg.mxu0
  %v4358 = vadd.f32 %v4283, %v831
  %v4359 = vadd.f32 %v4285, %v835
  %v4360 = vadd.f32 %v4354, %v839
  %v4361 = vadd.f32 %v4356, %v843
  %v4362 = vxor.u32 %v4358, 2147483648
  %v4363 = vmul.f32 %v4362, 1.442695
  %v4364 = vpow.pop %v4363
  %v4365 = vadd.f32 %v4364, 1.0
  %v4366 = vrcp.pop %v4365
  %v4367 = vmul.f32 1.0, %v4366
  %v4368 = vxor.u32 %v4359, 2147483648
  %v4369 = vmul.f32 %v4368, 1.442695
  %v4370 = vpow.pop %v4369
  %v4371 = vadd.f32 %v4370, 1.0
  %v4372 = vrcp.pop %v4371
  %v4373 = vmul.f32 1.0, %v4372
  %v4374 = vtanh.pop %v4360
  %v4375 = vxor.u32 %v4361, 2147483648
  %v4376 = vmul.f32 %v4375, 1.442695
  %v4377 = vpow.pop %v4376
  %v4378 = vadd.f32 %v4377, 1.0
  %v4379 = vrcp.pop %v4378
  %v4380 = vmul.f32 1.0, %v4379
  %v4381 = vmul.f32 %v4373, %v3682
  %v4382 = vmul.f32 %v4367, %v4374
  %v4383 = vadd.f32 %v4381, %v4382
  %v4384 = vtanh.pop %v4383
  %v4385 = vmul.f32 %v4380, %v4384
  %4386 = vmatprep.subr.mxu0 0.0
  %4387 = vmatpush1.msra.mxu0 %v201
  %4388 = vmatprep.subr.mxu0 0.0
  %4389 = vmatpush1.msra.mxu0 %v202
  %4390 = vmatprep.subr.mxu0 0.0
  %4391 = vmatpush1.msra.mxu0 %v203
  %4392 = vmatprep.subr.mxu0 0.0
  %4393 = vmatpush1.msra.mxu0 %v204
  %4394 = vmatprep.subr.mxu0 0.0
  %4395 = vmatpush1.msra.mxu0 %v205
  %4396 = vmatprep.subr.mxu0 0.0
  %4397 = vmatpush1.msra.mxu0 %v206
  %4398 = vmatprep.subr.mxu0 0.0
  %4399 = vmatpush1.msra.mxu0 %v207
  %4400 = vmatprep.subr.mxu0 0.0
  %4401 = vmatpush1.msra.mxu0 %v208
  %4402 = vmatprep.subr.mxu0 0.0
  %4403 = vmatpush1.msra.mxu0 %v209
  %4404 = vmatprep.subr.mxu0 0.0
  %4405 = vmatpush1.msra.mxu0 %v210
  %4406 = vmatprep.subr.mxu0 0.0
  %4407 = vmatpush1.msra.mxu0 %v211
  %4408 = vmatprep.subr.mxu0 0.0
  %4409 = vmatpush1.msra.mxu0 %v212
  %4410 = vmatprep.subr.mxu0 0.0
  %4411 = vmatpush1.msra.mxu0 %v213
  %4412 = vmatprep.subr.mxu0 0.0
  %4413 = vmatpush1.msra.mxu0 %v214
  %4414 = vmatprep.subr.mxu0 0.0
  %4415 = vmatpush1.msra.mxu0 %v215
  %4416 = vmatprep.subr.mxu0 0.0
  %4417 = vmatpush1.msra.mxu0 %v216
  %4418 = vmatprep.subr.mxu0 0.0
  %4419 = vmatpush1.msra.mxu0 0.0
  %4420 = vmatprep.subr.mxu0 0.0
  %4421 = vmatpush1.msra.mxu0 0.0
  %4422 = vmatprep.subr.mxu0 0.0
  %4423 = vmatpush1.msra.mxu0 0.0
  %4424 = vmatprep.subr.mxu0 0.0
  %4425 = vmatpush1.msra.mxu0 0.0
  %4426 = vmatprep.subr.mxu0 0.0
  %4427 = vmatpush1.msra.mxu0 0.0
  %4428 = vmatprep.subr.mxu0 0.0
  %4429 = vmatpush1.msra.mxu0 0.0
  %4430 = vmatprep.subr.mxu0 0.0
  %4431 = vmatpush1.msra.mxu0 0.0
  %4432 = vmatprep.subr.mxu0 0.0
  %4433 = vmatpush1.msra.mxu0 0.0
  %4434 = vmatprep.subr.mxu0 0.0
  %4435 = vmatpush1.msra.mxu0 0.0
  %4436 = vmatprep.subr.mxu0 0.0
  %4437 = vmatpush1.msra.mxu0 0.0
  %4438 = vmatprep.subr.mxu0 0.0
  %4439 = vmatpush1.msra.mxu0 0.0
  %4440 = vmatprep.subr.mxu0 0.0
  %4441 = vmatpush1.msra.mxu0 0.0
  %4442 = vmatprep.subr.mxu0 0.0
  %4443 = vmatpush1.msra.mxu0 0.0
  %4444 = vmatprep.subr.mxu0 0.0
  %4445 = vmatpush1.msra.mxu0 0.0
  %4446 = vmatprep.subr.mxu0 0.0
  %4447 = vmatpush1.msra.mxu0 0.0
  %4448 = vmatprep.subr.mxu0 0.0
  %4449 = vmatpush1.msra.mxu0 0.0
  %4450 = vmatprep.mubr.f32.mxu0 0.0
  %4451 = vmatmul.mubr.f32.gmra.mrb[0].mxu0 %v4385
  %v4452 = vpop.f32.mrb[0].mxu0
  %v4453 = vadd.f32 %v880, %v4452
  %v4454 = vpop.f32.mrb[0].mxu0
  %4455 = vdwg.mxu0
  %s4456 = scalar_lea.vmem %s10, 10
  %4457 = vst [vmem:[%s4456] sm:$0x3] %v4453
  %4458 = vmatprep.subr.mxu0 0.0
  %4459 = vmatpush1.msra.mxu0 %v39
  %4460 = vmatprep.subr.mxu0 0.0
  %4461 = vmatpush1.msra.mxu0 %v40
  %4462 = vmatprep.subr.mxu0 0.0
  %4463 = vmatpush1.msra.mxu0 %v41
  %4464 = vmatprep.subr.mxu0 0.0
  %4465 = vmatpush1.msra.mxu0 %v42
  %4466 = vmatprep.subr.mxu0 0.0
  %4467 = vmatpush1.msra.mxu0 %v43
  %4468 = vmatprep.subr.mxu0 0.0
  %4469 = vmatpush1.msra.mxu0 %v44
  %4470 = vmatprep.subr.mxu0 0.0
  %4471 = vmatpush1.msra.mxu0 %v45
  %4472 = vmatprep.subr.mxu0 0.0
  %4473 = vmatpush1.msra.mxu0 %v46
  %4474 = vmatprep.subr.mxu0 0.0
  %4475 = vmatpush1.msra.mxu0 %v47
  %4476 = vmatprep.subr.mxu0 0.0
  %4477 = vmatpush1.msra.mxu0 %v48
  %4478 = vmatprep.subr.mxu0 0.0
  %4479 = vmatpush1.msra.mxu0 %v49
  %4480 = vmatprep.subr.mxu0 0.0
  %4481 = vmatpush1.msra.mxu0 %v50
  %4482 = vmatprep.subr.mxu0 0.0
  %4483 = vmatpush1.msra.mxu0 %v51
  %4484 = vmatprep.subr.mxu0 0.0
  %4485 = vmatpush1.msra.mxu0 %v52
  %4486 = vmatprep.subr.mxu0 0.0
  %4487 = vmatpush1.msra.mxu0 %v53
  %4488 = vmatprep.subr.mxu0 0.0
  %4489 = vmatpush1.msra.mxu0 %v54
  %4490 = vmatprep.subr.mxu0 0.0
  %4491 = vmatpush1.msra.mxu0 0.0
  %4492 = vmatprep.subr.mxu0 0.0
  %4493 = vmatpush1.msra.mxu0 0.0
  %4494 = vmatprep.subr.mxu0 0.0
  %4495 = vmatpush1.msra.mxu0 0.0
  %4496 = vmatprep.subr.mxu0 0.0
  %4497 = vmatpush1.msra.mxu0 0.0
  %4498 = vmatprep.subr.mxu0 0.0
  %4499 = vmatpush1.msra.mxu0 0.0
  %4500 = vmatprep.subr.mxu0 0.0
  %4501 = vmatpush1.msra.mxu0 0.0
  %4502 = vmatprep.subr.mxu0 0.0
  %4503 = vmatpush1.msra.mxu0 0.0
  %4504 = vmatprep.subr.mxu0 0.0
  %4505 = vmatpush1.msra.mxu0 0.0
  %4506 = vmatprep.subr.mxu0 0.0
  %4507 = vmatpush1.msra.mxu0 0.0
  %4508 = vmatprep.subr.mxu0 0.0
  %4509 = vmatpush1.msra.mxu0 0.0
  %4510 = vmatprep.subr.mxu0 0.0
  %4511 = vmatpush1.msra.mxu0 0.0
  %4512 = vmatprep.subr.mxu0 0.0
  %4513 = vmatpush1.msra.mxu0 0.0
  %4514 = vmatprep.subr.mxu0 0.0
  %4515 = vmatpush1.msra.mxu0 0.0
  %4516 = vmatprep.subr.mxu0 0.0
  %4517 = vmatpush1.msra.mxu0 0.0
  %4518 = vmatprep.subr.mxu0 0.0
  %4519 = vmatpush1.msra.mxu0 0.0
  %4520 = vmatprep.subr.mxu0 0.0
  %4521 = vmatpush1.msra.mxu0 0.0
  %4522 = vmatprep.mubr.f32.mxu0 0.0
  %4523 = vmatmul.mubr.f32.gmra.mrb[0].mxu0 %v4385
  %v4524 = vpop.f32.mrb[0].mxu0
  %v4525 = vadd.f32 %v222, %v4524
  %v4526 = vpop.f32.mrb[0].mxu0
  %4527 = vdwg.mxu0
  %v4530 = vunpack.c.l.s4 1966171168
  %v4531 = vunpack.c.0.s8 %v4530
  %v4532 = vlaneseq
  %v4533 = vshrl.u32 %v4532, 7
  %v4534 = vsub.s32 %v4531, %v4533
  %v4535 = vrot.slane %v4525, %v4534
  %v4536 = vcombine.high %v4535, %v4535
  %v4538 = vunpack.c.l.s4 1966171168
  %v4539 = vunpack.c.0.s8 %v4538
  %v4540 = vlaneseq
  %v4541 = vshrl.u32 %v4540, 7
  %v4542 = vsub.s32 %v4539, %v4541
  %v4543 = vrot.slane %v4535, %v4542
  %v4545 = vunpack.c.l.s4 1966171168
  %v4546 = vunpack.c.0.s8 %v4545
  %v4547 = vlaneseq
  %v4548 = vshrl.u32 %v4547, 7
  %v4549 = vsub.s32 %v4546, %v4548
  %v4550 = vrot.slane %v4536, %v4549
  %v4551 = vlaneseq
  %v4552 = vshrl.u32 %v4551, 7
  %v4553 = vsub.s32 0, %v4552
  %v4554 = vrot.slane %v4543, %v4553
  %v4555 = vlaneseq
  %v4556 = vshrl.u32 %v4555, 7
  %v4557 = vsub.s32 0, %v4556
  %v4558 = vrot.slane %v4550, %v4557
  %v4561 = vadd.f32 %v37, %v4554
  %v4562 = vadd.f32 %v38, %v4558
  %v4563 = vtanh.pop %v4561
  %v4564 = vtanh.pop %v4562
  %4565 = vmatprep.subr.mxu0 0.0
  %4566 = vmatpush1.msra.mxu0 %v56
  %4567 = vmatprep.subr.mxu0 0.0
  %4568 = vmatpush1.msra.mxu0 %v57
  %4569 = vmatprep.subr.mxu0 0.0
  %4570 = vmatpush1.msra.mxu0 %v58
  %4571 = vmatprep.subr.mxu0 0.0
  %4572 = vmatpush1.msra.mxu0 %v59
  %4573 = vmatprep.subr.mxu0 0.0
  %4574 = vmatpush1.msra.mxu0 %v60
  %4575 = vmatprep.subr.mxu0 0.0
  %4576 = vmatpush1.msra.mxu0 %v61
  %4577 = vmatprep.subr.mxu0 0.0
  %4578 = vmatpush1.msra.mxu0 %v62
  %4579 = vmatprep.subr.mxu0 0.0
  %4580 = vmatpush1.msra.mxu0 %v63
  %4581 = vmatprep.subr.mxu0 0.0
  %4582 = vmatpush1.msra.mxu0 %v64
  %4583 = vmatprep.subr.mxu0 0.0
  %4584 = vmatpush1.msra.mxu0 %v65
  %4585 = vmatprep.subr.mxu0 0.0
  %4586 = vmatpush1.msra.mxu0 %v66
  %4587 = vmatprep.subr.mxu0 0.0
  %4588 = vmatpush1.msra.mxu0 %v67
  %4589 = vmatprep.subr.mxu0 0.0
  %4590 = vmatpush1.msra.mxu0 %v68
  %4591 = vmatprep.subr.mxu0 0.0
  %4592 = vmatpush1.msra.mxu0 %v69
  %4593 = vmatprep.subr.mxu0 0.0
  %4594 = vmatpush1.msra.mxu0 %v70
  %4595 = vmatprep.subr.mxu0 0.0
  %4596 = vmatpush1.msra.mxu0 %v71
  %4597 = vmatprep.subr.mxu0 0.0
  %4598 = vmatpush1.msra.mxu0 0.0
  %4599 = vmatprep.subr.mxu0 0.0
  %4600 = vmatpush1.msra.mxu0 0.0
  %4601 = vmatprep.subr.mxu0 0.0
  %4602 = vmatpush1.msra.mxu0 0.0
  %4603 = vmatprep.subr.mxu0 0.0
  %4604 = vmatpush1.msra.mxu0 0.0
  %4605 = vmatprep.subr.mxu0 0.0
  %4606 = vmatpush1.msra.mxu0 0.0
  %4607 = vmatprep.subr.mxu0 0.0
  %4608 = vmatpush1.msra.mxu0 0.0
  %4609 = vmatprep.subr.mxu0 0.0
  %4610 = vmatpush1.msra.mxu0 0.0
  %4611 = vmatprep.subr.mxu0 0.0
  %4612 = vmatpush1.msra.mxu0 0.0
  %4613 = vmatprep.subr.mxu0 0.0
  %4614 = vmatpush1.msra.mxu0 0.0
  %4615 = vmatprep.subr.mxu0 0.0
  %4616 = vmatpush1.msra.mxu0 0.0
  %4617 = vmatprep.subr.mxu0 0.0
  %4618 = vmatpush1.msra.mxu0 0.0
  %4619 = vmatprep.subr.mxu0 0.0
  %4620 = vmatpush1.msra.mxu0 0.0
  %4621 = vmatprep.subr.mxu0 0.0
  %4622 = vmatpush1.msra.mxu0 0.0
  %4623 = vmatprep.subr.mxu0 0.0
  %4624 = vmatpush1.msra.mxu0 0.0
  %4625 = vmatprep.subr.mxu0 0.0
  %4626 = vmatpush1.msra.mxu0 0.0
  %4627 = vmatprep.subr.mxu0 0.0
  %4628 = vmatpush1.msra.mxu0 0.0
  %4629 = vmatprep.mubr.f32.mxu0 0.0
  %4630 = vmatmul.mubr.f32.gmra.mrb[0].mxu0 %v4563
  %v4631 = vpop.f32.mrb[0].mxu0
  %v4632 = vadd.f32 0.0, %v4631
  %v4633 = vpop.f32.mrb[0].mxu0
  %4634 = vmatprep.mubr.f32.mxu0 0.0
  %4635 = vmatmul.mubr.f32.gmra.mrb[0].mxu0 %v4564
  %v4636 = vpop.f32.mrb[0].mxu0
  %v4637 = vadd.f32 0.0, %v4636
  %v4638 = vpop.f32.mrb[0].mxu0
  %4639 = vdwg.mxu0
  %v4640 = vsel %vm406, %v4632, -inf
  %v4641 = vrot.slane %v4640, 4
  %v4642 = vmax.f32 %v4640, %v4641
  %v4643 = vrot.slane %v4642, 2
  %v4644 = vmax.f32 %v4642, %v4643
  %v4645 = vrot.slane %v4644, 1
  %v4646 = vmax.f32 %v4644, %v4645
  %v4647 = vsel %vm406, %v4637, -inf
  %v4648 = vrot.slane %v4647, 4
  %v4649 = vmax.f32 %v4647, %v4648
  %v4650 = vrot.slane %v4649, 2
  %v4651 = vmax.f32 %v4649, %v4650
  %v4652 = vrot.slane %v4651, 1
  %v4653 = vmax.f32 %v4651, %v4652
  %v4654 = vsub.f32 %v4632, %v4646
  %v4655 = vsub.f32 %v4637, %v4653
  %v4656 = vmul.f32 %v4654, 1.442695
  %v4657 = vpow.pop %v4656
  %v4658 = vmul.f32 %v4655, 1.442695
  %v4659 = vpow.pop %v4658
  %v4660 = vsel %vm406, %v4657, 0.0
  %v4661 = vrot.slane %v4660, 4
  %v4662 = vadd.f32 %v4660, %v4661
  %v4663 = vrot.slane %v4662, 2
  %v4664 = vadd.f32 %v4662, %v4663
  %v4665 = vrot.slane %v4664, 1
  %v4666 = vadd.f32 %v4664, %v4665
  %v4667 = vsel %vm406, %v4659, 0.0
  %v4668 = vrot.slane %v4667, 4
  %v4669 = vadd.f32 %v4667, %v4668
  %v4670 = vrot.slane %v4669, 2
  %v4671 = vadd.f32 %v4669, %v4670
  %v4672 = vrot.slane %v4671, 1
  %v4673 = vadd.f32 %v4671, %v4672
  %v4674 = vrcp.pop %v4666
  %v4675 = vrcp.pop %v4673
  %v4676 = vmul.f32 %v4657, %v4674
  %v4677 = vmul.f32 %v4659, %v4675
  %4678 = vxpose.xlu0.b32.start [1/16] %v4676, 128
  %4679 = vxpose.xlu0.b32.cont [2/16] 0.0, 128
  %4680 = vxpose.xlu0.b32.cont [3/16] 0.0, 128
  %4681 = vxpose.xlu0.b32.cont [4/16] 0.0, 128
  %4682 = vxpose.xlu0.b32.cont [5/16] 0.0, 128
  %4683 = vxpose.xlu0.b32.cont [6/16] 0.0, 128
  %4684 = vxpose.xlu0.b32.cont [7/16] 0.0, 128
  %4685 = vxpose.xlu0.b32.cont [8/16] 0.0, 128
  %4686 = vxpose.xlu0.b32.cont [9/16] 0.0, 128
  %4687 = vxpose.xlu0.b32.cont [10/16] 0.0, 128
  %4688 = vxpose.xlu0.b32.cont [11/16] 0.0, 128
  %4689 = vxpose.xlu0.b32.cont [12/16] 0.0, 128
  %4690 = vxpose.xlu0.b32.cont [13/16] 0.0, 128
  %4691 = vxpose.xlu0.b32.cont [14/16] 0.0, 128
  %4692 = vxpose.xlu0.b32.cont [15/16] 0.0, 128
  %4693 = vxpose.xlu0.b32.end [16/16] 0.0, 128
  %v4694 = vpop.trf.xlu0
  %v4695 = vpop.trf.xlu0
  %v4696 = vpop.trf.xlu0
  %v4697 = vpop.trf.xlu0
  %v4698 = vpop.trf.xlu0
  %v4699 = vpop.trf.xlu0
  %v4700 = vpop.trf.xlu0
  %v4701 = vpop.trf.xlu0
  %v4702 = vpop.trf.xlu0
  %v4703 = vpop.trf.xlu0
  %v4704 = vpop.trf.xlu0
  %v4705 = vpop.trf.xlu0
  %v4706 = vpop.trf.xlu0
  %v4707 = vpop.trf.xlu0
  %v4708 = vpop.trf.xlu0
  %v4709 = vpop.trf.xlu0
  %v4711 = vsel %vm477, %v4694, 0
  %4713 = vmatprep.subr.mxu0 0.0
  %4714 = vmatpush1.msra.mxu0 %v35
  %4715 = vmatprep.subr.mxu0 0.0
  %4716 = vmatpush1.msra.mxu0 0.0
  %4717 = vmatprep.subr.mxu0 0.0
  %4718 = vmatpush1.msra.mxu0 0.0
  %4719 = vmatprep.subr.mxu0 0.0
  %4720 = vmatpush1.msra.mxu0 0.0
  %4721 = vmatprep.subr.mxu0 0.0
  %4722 = vmatpush1.msra.mxu0 0.0
  %4723 = vmatprep.subr.mxu0 0.0
  %4724 = vmatpush1.msra.mxu0 0.0
  %4725 = vmatprep.subr.mxu0 0.0
  %4726 = vmatpush1.msra.mxu0 0.0
  %4727 = vmatprep.subr.mxu0 0.0
  %4728 = vmatpush1.msra.mxu0 0.0
  %4729 = vmatprep.subr.mxu0 0.0
  %4730 = vmatpush1.msra.mxu0 0.0
  %4731 = vmatprep.subr.mxu0 0.0
  %4732 = vmatpush1.msra.mxu0 0.0
  %4733 = vmatprep.subr.mxu0 0.0
  %4734 = vmatpush1.msra.mxu0 0.0
  %4735 = vmatprep.subr.mxu0 0.0
  %4736 = vmatpush1.msra.mxu0 0.0
  %4737 = vmatprep.subr.mxu0 0.0
  %4738 = vmatpush1.msra.mxu0 0.0
  %4739 = vmatprep.subr.mxu0 0.0
  %4740 = vmatpush1.msra.mxu0 0.0
  %4741 = vmatprep.subr.mxu0 0.0
  %4742 = vmatpush1.msra.mxu0 0.0
  %4743 = vmatprep.subr.mxu0 0.0
  %4744 = vmatpush1.msra.mxu0 0.0
  %4745 = vmatprep.subr.mxu0 0.0
  %4746 = vmatpush1.msra.mxu0 0.0
  %4747 = vmatprep.subr.mxu0 0.0
  %4748 = vmatpush1.msra.mxu0 0.0
  %4749 = vmatprep.subr.mxu0 0.0
  %4750 = vmatpush1.msra.mxu0 0.0
  %4751 = vmatprep.subr.mxu0 0.0
  %4752 = vmatpush1.msra.mxu0 0.0
  %4753 = vmatprep.subr.mxu0 0.0
  %4754 = vmatpush1.msra.mxu0 0.0
  %4755 = vmatprep.subr.mxu0 0.0
  %4756 = vmatpush1.msra.mxu0 0.0
  %4757 = vmatprep.subr.mxu0 0.0
  %4758 = vmatpush1.msra.mxu0 0.0
  %4759 = vmatprep.subr.mxu0 0.0
  %4760 = vmatpush1.msra.mxu0 0.0
  %4761 = vmatprep.subr.mxu0 0.0
  %4762 = vmatpush1.msra.mxu0 0.0
  %4763 = vmatprep.subr.mxu0 0.0
  %4764 = vmatpush1.msra.mxu0 0.0
  %4765 = vmatprep.subr.mxu0 0.0
  %4766 = vmatpush1.msra.mxu0 0.0
  %4767 = vmatprep.subr.mxu0 0.0
  %4768 = vmatpush1.msra.mxu0 0.0
  %4769 = vmatprep.subr.mxu0 0.0
  %4770 = vmatpush1.msra.mxu0 0.0
  %4771 = vmatprep.subr.mxu0 0.0
  %4772 = vmatpush1.msra.mxu0 0.0
  %4773 = vmatprep.subr.mxu0 0.0
  %4774 = vmatpush1.msra.mxu0 0.0
  %4775 = vmatprep.subr.mxu0 0.0
  %4776 = vmatpush1.msra.mxu0 0.0
  %4777 = vmatprep.mubr.f32.mxu0 0.0
  %4778 = vmatmul.mubr.f32.gmra.mrb[0].mxu0 %v4711
  %v4779 = vpop.f32.mrb[0].mxu0
  %v4780 = vadd.f32 0.0, %v4779
  %v4781 = vpop.f32.mrb[0].mxu0
  %4782 = vdwg.mxu0
  %4783 = vxpose.xlu0.b32.start [1/16] %v4677, 128
  %4784 = vxpose.xlu0.b32.cont [2/16] 0.0, 128
  %4785 = vxpose.xlu0.b32.cont [3/16] 0.0, 128
  %4786 = vxpose.xlu0.b32.cont [4/16] 0.0, 128
  %4787 = vxpose.xlu0.b32.cont [5/16] 0.0, 128
  %4788 = vxpose.xlu0.b32.cont [6/16] 0.0, 128
  %4789 = vxpose.xlu0.b32.cont [7/16] 0.0, 128
  %4790 = vxpose.xlu0.b32.cont [8/16] 0.0, 128
  %4791 = vxpose.xlu0.b32.cont [9/16] 0.0, 128
  %4792 = vxpose.xlu0.b32.cont [10/16] 0.0, 128
  %4793 = vxpose.xlu0.b32.cont [11/16] 0.0, 128
  %4794 = vxpose.xlu0.b32.cont [12/16] 0.0, 128
  %4795 = vxpose.xlu0.b32.cont [13/16] 0.0, 128
  %4796 = vxpose.xlu0.b32.cont [14/16] 0.0, 128
  %4797 = vxpose.xlu0.b32.cont [15/16] 0.0, 128
  %4798 = vxpose.xlu0.b32.end [16/16] 0.0, 128
  %v4799 = vpop.trf.xlu0
  %v4800 = vpop.trf.xlu0
  %v4801 = vpop.trf.xlu0
  %v4802 = vpop.trf.xlu0
  %v4803 = vpop.trf.xlu0
  %v4804 = vpop.trf.xlu0
  %v4805 = vpop.trf.xlu0
  %v4806 = vpop.trf.xlu0
  %v4807 = vpop.trf.xlu0
  %v4808 = vpop.trf.xlu0
  %v4809 = vpop.trf.xlu0
  %v4810 = vpop.trf.xlu0
  %v4811 = vpop.trf.xlu0
  %v4812 = vpop.trf.xlu0
  %v4813 = vpop.trf.xlu0
  %v4814 = vpop.trf.xlu0
  %v4816 = vsel %vm477, %v4799, 0
  %4818 = vmatprep.subr.mxu0 0.0
  %4819 = vmatpush1.msra.mxu0 %v36
  %4820 = vmatprep.subr.mxu0 0.0
  %4821 = vmatpush1.msra.mxu0 0.0
  %4822 = vmatprep.subr.mxu0 0.0
  %4823 = vmatpush1.msra.mxu0 0.0
  %4824 = vmatprep.subr.mxu0 0.0
  %4825 = vmatpush1.msra.mxu0 0.0
  %4826 = vmatprep.subr.mxu0 0.0
  %4827 = vmatpush1.msra.mxu0 0.0
  %4828 = vmatprep.subr.mxu0 0.0
  %4829 = vmatpush1.msra.mxu0 0.0
  %4830 = vmatprep.subr.mxu0 0.0
  %4831 = vmatpush1.msra.mxu0 0.0
  %4832 = vmatprep.subr.mxu0 0.0
  %4833 = vmatpush1.msra.mxu0 0.0
  %4834 = vmatprep.subr.mxu0 0.0
  %4835 = vmatpush1.msra.mxu0 0.0
  %4836 = vmatprep.subr.mxu0 0.0
  %4837 = vmatpush1.msra.mxu0 0.0
  %4838 = vmatprep.subr.mxu0 0.0
  %4839 = vmatpush1.msra.mxu0 0.0
  %4840 = vmatprep.subr.mxu0 0.0
  %4841 = vmatpush1.msra.mxu0 0.0
  %4842 = vmatprep.subr.mxu0 0.0
  %4843 = vmatpush1.msra.mxu0 0.0
  %4844 = vmatprep.subr.mxu0 0.0
  %4845 = vmatpush1.msra.mxu0 0.0
  %4846 = vmatprep.subr.mxu0 0.0
  %4847 = vmatpush1.msra.mxu0 0.0
  %4848 = vmatprep.subr.mxu0 0.0
  %4849 = vmatpush1.msra.mxu0 0.0
  %4850 = vmatprep.subr.mxu0 0.0
  %4851 = vmatpush1.msra.mxu0 0.0
  %4852 = vmatprep.subr.mxu0 0.0
  %4853 = vmatpush1.msra.mxu0 0.0
  %4854 = vmatprep.subr.mxu0 0.0
  %4855 = vmatpush1.msra.mxu0 0.0
  %4856 = vmatprep.subr.mxu0 0.0
  %4857 = vmatpush1.msra.mxu0 0.0
  %4858 = vmatprep.subr.mxu0 0.0
  %4859 = vmatpush1.msra.mxu0 0.0
  %4860 = vmatprep.subr.mxu0 0.0
  %4861 = vmatpush1.msra.mxu0 0.0
  %4862 = vmatprep.subr.mxu0 0.0
  %4863 = vmatpush1.msra.mxu0 0.0
  %4864 = vmatprep.subr.mxu0 0.0
  %4865 = vmatpush1.msra.mxu0 0.0
  %4866 = vmatprep.subr.mxu0 0.0
  %4867 = vmatpush1.msra.mxu0 0.0
  %4868 = vmatprep.subr.mxu0 0.0
  %4869 = vmatpush1.msra.mxu0 0.0
  %4870 = vmatprep.subr.mxu0 0.0
  %4871 = vmatpush1.msra.mxu0 0.0
  %4872 = vmatprep.subr.mxu0 0.0
  %4873 = vmatpush1.msra.mxu0 0.0
  %4874 = vmatprep.subr.mxu0 0.0
  %4875 = vmatpush1.msra.mxu0 0.0
  %4876 = vmatprep.subr.mxu0 0.0
  %4877 = vmatpush1.msra.mxu0 0.0
  %4878 = vmatprep.subr.mxu0 0.0
  %4879 = vmatpush1.msra.mxu0 0.0
  %4880 = vmatprep.subr.mxu0 0.0
  %4881 = vmatpush1.msra.mxu0 0.0
  %4882 = vmatprep.mubr.f32.mxu0 0.0
  %4883 = vmatmul.mubr.f32.gmra.mrb[0].mxu0 %v4816
  %v4884 = vpop.f32.mrb[0].mxu0
  %v4885 = vadd.f32 0.0, %v4884
  %v4886 = vpop.f32.mrb[0].mxu0
  %4887 = vdwg.mxu0
  %v4890 = vrot.slane %v4885, 7
  %v4891 = vsel %vm659, %v4890, %v4780
  %s4893 = scalar_lea.vmem %s2, 48
  %v4894 = vld [vmem:[%s4893] sm:$0xff]
  %v4896 = vcombine.high %v4894, %v4894
  %v4898 = vunpack.c.l.s4 1983009808
  %v4899 = vunpack.c.0.s8 %v4898
  %v4900 = vlaneseq
  %v4901 = vshrl.u32 %v4900, 7
  %v4902 = vsub.s32 %v4899, %v4901
  %v4903 = vrot.slane %v4894, %v4902
  %v4905 = vunpack.c.l.s4 1983009808
  %v4906 = vunpack.c.0.s8 %v4905
  %v4907 = vlaneseq
  %v4908 = vshrl.u32 %v4907, 7
  %v4909 = vsub.s32 %v4906, %v4908
  %v4910 = vrot.slane %v4896, %v4909
  %v4911 = vcombine.high %v4903, %v4903
  %v4912 = vcombine.high %v4910, %v4910
  %4917 = vmatprep.subr.mxu0 %v73
  %4918 = vmatpush1.msra.mxu0 %v72
  %4919 = vmatprep.subr.mxu0 %v77
  %4920 = vmatpush1.msra.mxu0 %v76
  %4921 = vmatprep.subr.mxu0 %v81
  %4922 = vmatpush1.msra.mxu0 %v80
  %4923 = vmatprep.subr.mxu0 %v85
  %4924 = vmatpush1.msra.mxu0 %v84
  %4925 = vmatprep.subr.mxu0 %v89
  %4926 = vmatpush1.msra.mxu0 %v88
  %4927 = vmatprep.subr.mxu0 %v93
  %4928 = vmatpush1.msra.mxu0 %v92
  %4929 = vmatprep.subr.mxu0 %v97
  %4930 = vmatpush1.msra.mxu0 %v96
  %4931 = vmatprep.subr.mxu0 %v101
  %4932 = vmatpush1.msra.mxu0 %v100
  %4933 = vmatprep.subr.mxu0 %v105
  %4934 = vmatpush1.msra.mxu0 %v104
  %4935 = vmatprep.subr.mxu0 %v109
  %4936 = vmatpush1.msra.mxu0 %v108
  %4937 = vmatprep.subr.mxu0 %v113
  %4938 = vmatpush1.msra.mxu0 %v112
  %4939 = vmatprep.subr.mxu0 %v117
  %4940 = vmatpush1.msra.mxu0 %v116
  %4941 = vmatprep.subr.mxu0 %v121
  %4942 = vmatpush1.msra.mxu0 %v120
  %4943 = vmatprep.subr.mxu0 %v125
  %4944 = vmatpush1.msra.mxu0 %v124
  %4945 = vmatprep.subr.mxu0 %v129
  %4946 = vmatpush1.msra.mxu0 %v128
  %4947 = vmatprep.subr.mxu0 %v133
  %4948 = vmatpush1.msra.mxu0 %v132
  %4949 = vmatprep.subr.mxu0 %v137
  %4950 = vmatpush1.msra.mxu0 %v136
  %4951 = vmatprep.subr.mxu0 %v141
  %4952 = vmatpush1.msra.mxu0 %v140
  %4953 = vmatprep.subr.mxu0 %v145
  %4954 = vmatpush1.msra.mxu0 %v144
  %4955 = vmatprep.subr.mxu0 %v149
  %4956 = vmatpush1.msra.mxu0 %v148
  %4957 = vmatprep.subr.mxu0 %v153
  %4958 = vmatpush1.msra.mxu0 %v152
  %4959 = vmatprep.subr.mxu0 %v157
  %4960 = vmatpush1.msra.mxu0 %v156
  %4961 = vmatprep.subr.mxu0 %v161
  %4962 = vmatpush1.msra.mxu0 %v160
  %4963 = vmatprep.subr.mxu0 %v165
  %4964 = vmatpush1.msra.mxu0 %v164
  %4965 = vmatprep.subr.mxu0 %v169
  %4966 = vmatpush1.msra.mxu0 %v168
  %4967 = vmatprep.subr.mxu0 %v173
  %4968 = vmatpush1.msra.mxu0 %v172
  %4969 = vmatprep.subr.mxu0 %v177
  %4970 = vmatpush1.msra.mxu0 %v176
  %4971 = vmatprep.subr.mxu0 %v181
  %4972 = vmatpush1.msra.mxu0 %v180
  %4973 = vmatprep.subr.mxu0 %v185
  %4974 = vmatpush1.msra.mxu0 %v184
  %4975 = vmatprep.subr.mxu0 %v189
  %4976 = vmatpush1.msra.mxu0 %v188
  %4977 = vmatprep.subr.mxu0 %v193
  %4978 = vmatpush1.msra.mxu0 %v192
  %4979 = vmatprep.subr.mxu0 %v197
  %4980 = vmatpush1.msra.mxu0 %v196
  %4981 = vmatprep.mubr.f32.mxu0 %v4385
  %4982 = vmatmul.mubr.f32.gmra.mrb[0].mxu0 %v4891
  %v4983 = vpop.f32.mrb[0].mxu0
  %v4984 = vadd.f32 %v4903, %v4983
  %v4985 = vpop.f32.mrb[0].mxu0
  %v4986 = vadd.f32 %v4911, %v4985
  %4987 = vdwg.mxu0
  %4988 = vmatprep.subr.mxu0 %v75
  %4989 = vmatpush1.msra.mxu0 %v74
  %4990 = vmatprep.subr.mxu0 %v79
  %4991 = vmatpush1.msra.mxu0 %v78
  %4992 = vmatprep.subr.mxu0 %v83
  %4993 = vmatpush1.msra.mxu0 %v82
  %4994 = vmatprep.subr.mxu0 %v87
  %4995 = vmatpush1.msra.mxu0 %v86
  %4996 = vmatprep.subr.mxu0 %v91
  %4997 = vmatpush1.msra.mxu0 %v90
  %4998 = vmatprep.subr.mxu0 %v95
  %4999 = vmatpush1.msra.mxu0 %v94
  %5000 = vmatprep.subr.mxu0 %v99
  %5001 = vmatpush1.msra.mxu0 %v98
  %5002 = vmatprep.subr.mxu0 %v103
  %5003 = vmatpush1.msra.mxu0 %v102
  %5004 = vmatprep.subr.mxu0 %v107
  %5005 = vmatpush1.msra.mxu0 %v106
  %5006 = vmatprep.subr.mxu0 %v111
  %5007 = vmatpush1.msra.mxu0 %v110
  %5008 = vmatprep.subr.mxu0 %v115
  %5009 = vmatpush1.msra.mxu0 %v114
  %5010 = vmatprep.subr.mxu0 %v119
  %5011 = vmatpush1.msra.mxu0 %v118
  %5012 = vmatprep.subr.mxu0 %v123
  %5013 = vmatpush1.msra.mxu0 %v122
  %5014 = vmatprep.subr.mxu0 %v127
  %5015 = vmatpush1.msra.mxu0 %v126
  %5016 = vmatprep.subr.mxu0 %v131
  %5017 = vmatpush1.msra.mxu0 %v130
  %5018 = vmatprep.subr.mxu0 %v135
  %5019 = vmatpush1.msra.mxu0 %v134
  %5020 = vmatprep.subr.mxu0 %v139
  %5021 = vmatpush1.msra.mxu0 %v138
  %5022 = vmatprep.subr.mxu0 %v143
  %5023 = vmatpush1.msra.mxu0 %v142
  %5024 = vmatprep.subr.mxu0 %v147
  %5025 = vmatpush1.msra.mxu0 %v146
  %5026 = vmatprep.subr.mxu0 %v151
  %5027 = vmatpush1.msra.mxu0 %v150
  %5028 = vmatprep.subr.mxu0 %v155
  %5029 = vmatpush1.msra.mxu0 %v154
  %5030 = vmatprep.subr.mxu0 %v159
  %5031 = vmatpush1.msra.mxu0 %v158
  %5032 = vmatprep.subr.mxu0 %v163
  %5033 = vmatpush1.msra.mxu0 %v162
  %5034 = vmatprep.subr.mxu0 %v167
  %5035 = vmatpush1.msra.mxu0 %v166
  %5036 = vmatprep.subr.mxu0 %v171
  %5037 = vmatpush1.msra.mxu0 %v170
  %5038 = vmatprep.subr.mxu0 %v175
  %5039 = vmatpush1.msra.mxu0 %v174
  %5040 = vmatprep.subr.mxu0 %v179
  %5041 = vmatpush1.msra.mxu0 %v178
  %5042 = vmatprep.subr.mxu0 %v183
  %5043 = vmatpush1.msra.mxu0 %v182
  %5044 = vmatprep.subr.mxu0 %v187
  %5045 = vmatpush1.msra.mxu0 %v186
  %5046 = vmatprep.subr.mxu0 %v191
  %5047 = vmatpush1.msra.mxu0 %v190
  %5048 = vmatprep.subr.mxu0 %v195
  %5049 = vmatpush1.msra.mxu0 %v194
  %5050 = vmatprep.subr.mxu0 %v199
  %5051 = vmatpush1.msra.mxu0 %v198
  %5052 = vmatprep.mubr.f32.mxu0 %v4385
  %5053 = vmatmul.mubr.f32.gmra.mrb[0].mxu0 %v4891
  %v5054 = vpop.f32.mrb[0].mxu0
  %v5055 = vadd.f32 %v4910, %v5054
  %v5056 = vpop.f32.mrb[0].mxu0
  %v5057 = vadd.f32 %v4912, %v5056
  %5058 = vdwg.mxu0
  %v5059 = vadd.f32 %v4984, %v831
  %v5060 = vadd.f32 %v4986, %v835
  %v5061 = vadd.f32 %v5055, %v839
  %v5062 = vadd.f32 %v5057, %v843
  %v5063 = vxor.u32 %v5059, 2147483648
  %v5064 = vmul.f32 %v5063, 1.442695
  %v5065 = vpow.pop %v5064
  %v5066 = vadd.f32 %v5065, 1.0
  %v5067 = vrcp.pop %v5066
  %v5068 = vmul.f32 1.0, %v5067
  %v5069 = vxor.u32 %v5060, 2147483648
  %v5070 = vmul.f32 %v5069, 1.442695
  %v5071 = vpow.pop %v5070
  %v5072 = vadd.f32 %v5071, 1.0
  %v5073 = vrcp.pop %v5072
  %v5074 = vmul.f32 1.0, %v5073
  %v5075 = vtanh.pop %v5061
  %v5076 = vxor.u32 %v5062, 2147483648
  %v5077 = vmul.f32 %v5076, 1.442695
  %v5078 = vpow.pop %v5077
  %v5079 = vadd.f32 %v5078, 1.0
  %v5080 = vrcp.pop %v5079
  %v5081 = vmul.f32 1.0, %v5080
  %v5082 = vmul.f32 %v5074, %v4383
  %v5083 = vmul.f32 %v5068, %v5075
  %v5084 = vadd.f32 %v5082, %v5083
  %v5085 = vtanh.pop %v5084
  %v5086 = vmul.f32 %v5081, %v5085
  %5087 = vmatprep.subr.mxu0 0.0
  %5088 = vmatpush1.msra.mxu0 %v201
  %5089 = vmatprep.subr.mxu0 0.0
  %5090 = vmatpush1.msra.mxu0 %v202
  %5091 = vmatprep.subr.mxu0 0.0
  %5092 = vmatpush1.msra.mxu0 %v203
  %5093 = vmatprep.subr.mxu0 0.0
  %5094 = vmatpush1.msra.mxu0 %v204
  %5095 = vmatprep.subr.mxu0 0.0
  %5096 = vmatpush1.msra.mxu0 %v205
  %5097 = vmatprep.subr.mxu0 0.0
  %5098 = vmatpush1.msra.mxu0 %v206
  %5099 = vmatprep.subr.mxu0 0.0
  %5100 = vmatpush1.msra.mxu0 %v207
  %5101 = vmatprep.subr.mxu0 0.0
  %5102 = vmatpush1.msra.mxu0 %v208
  %5103 = vmatprep.subr.mxu0 0.0
  %5104 = vmatpush1.msra.mxu0 %v209
  %5105 = vmatprep.subr.mxu0 0.0
  %5106 = vmatpush1.msra.mxu0 %v210
  %5107 = vmatprep.subr.mxu0 0.0
  %5108 = vmatpush1.msra.mxu0 %v211
  %5109 = vmatprep.subr.mxu0 0.0
  %5110 = vmatpush1.msra.mxu0 %v212
  %5111 = vmatprep.subr.mxu0 0.0
  %5112 = vmatpush1.msra.mxu0 %v213
  %5113 = vmatprep.subr.mxu0 0.0
  %5114 = vmatpush1.msra.mxu0 %v214
  %5115 = vmatprep.subr.mxu0 0.0
  %5116 = vmatpush1.msra.mxu0 %v215
  %5117 = vmatprep.subr.mxu0 0.0
  %5118 = vmatpush1.msra.mxu0 %v216
  %5119 = vmatprep.subr.mxu0 0.0
  %5120 = vmatpush1.msra.mxu0 0.0
  %5121 = vmatprep.subr.mxu0 0.0
  %5122 = vmatpush1.msra.mxu0 0.0
  %5123 = vmatprep.subr.mxu0 0.0
  %5124 = vmatpush1.msra.mxu0 0.0
  %5125 = vmatprep.subr.mxu0 0.0
  %5126 = vmatpush1.msra.mxu0 0.0
  %5127 = vmatprep.subr.mxu0 0.0
  %5128 = vmatpush1.msra.mxu0 0.0
  %5129 = vmatprep.subr.mxu0 0.0
  %5130 = vmatpush1.msra.mxu0 0.0
  %5131 = vmatprep.subr.mxu0 0.0
  %5132 = vmatpush1.msra.mxu0 0.0
  %5133 = vmatprep.subr.mxu0 0.0
  %5134 = vmatpush1.msra.mxu0 0.0
  %5135 = vmatprep.subr.mxu0 0.0
  %5136 = vmatpush1.msra.mxu0 0.0
  %5137 = vmatprep.subr.mxu0 0.0
  %5138 = vmatpush1.msra.mxu0 0.0
  %5139 = vmatprep.subr.mxu0 0.0
  %5140 = vmatpush1.msra.mxu0 0.0
  %5141 = vmatprep.subr.mxu0 0.0
  %5142 = vmatpush1.msra.mxu0 0.0
  %5143 = vmatprep.subr.mxu0 0.0
  %5144 = vmatpush1.msra.mxu0 0.0
  %5145 = vmatprep.subr.mxu0 0.0
  %5146 = vmatpush1.msra.mxu0 0.0
  %5147 = vmatprep.subr.mxu0 0.0
  %5148 = vmatpush1.msra.mxu0 0.0
  %5149 = vmatprep.subr.mxu0 0.0
  %5150 = vmatpush1.msra.mxu0 0.0
  %5151 = vmatprep.mubr.f32.mxu0 0.0
  %5152 = vmatmul.mubr.f32.gmra.mrb[0].mxu0 %v5086
  %v5153 = vpop.f32.mrb[0].mxu0
  %v5154 = vadd.f32 %v880, %v5153
  %v5155 = vpop.f32.mrb[0].mxu0
  %5156 = vdwg.mxu0
  %s5157 = scalar_lea.vmem %s10, 12
  %5158 = vst [vmem:[%s5157] sm:$0x3] %v5154
  %5159 = vmatprep.subr.mxu0 0.0
  %5160 = vmatpush1.msra.mxu0 %v39
  %5161 = vmatprep.subr.mxu0 0.0
  %5162 = vmatpush1.msra.mxu0 %v40
  %5163 = vmatprep.subr.mxu0 0.0
  %5164 = vmatpush1.msra.mxu0 %v41
  %5165 = vmatprep.subr.mxu0 0.0
  %5166 = vmatpush1.msra.mxu0 %v42
  %5167 = vmatprep.subr.mxu0 0.0
  %5168 = vmatpush1.msra.mxu0 %v43
  %5169 = vmatprep.subr.mxu0 0.0
  %5170 = vmatpush1.msra.mxu0 %v44
  %5171 = vmatprep.subr.mxu0 0.0
  %5172 = vmatpush1.msra.mxu0 %v45
  %5173 = vmatprep.subr.mxu0 0.0
  %5174 = vmatpush1.msra.mxu0 %v46
  %5175 = vmatprep.subr.mxu0 0.0
  %5176 = vmatpush1.msra.mxu0 %v47
  %5177 = vmatprep.subr.mxu0 0.0
  %5178 = vmatpush1.msra.mxu0 %v48
  %5179 = vmatprep.subr.mxu0 0.0
  %5180 = vmatpush1.msra.mxu0 %v49
  %5181 = vmatprep.subr.mxu0 0.0
  %5182 = vmatpush1.msra.mxu0 %v50
  %5183 = vmatprep.subr.mxu0 0.0
  %5184 = vmatpush1.msra.mxu0 %v51
  %5185 = vmatprep.subr.mxu0 0.0
  %5186 = vmatpush1.msra.mxu0 %v52
  %5187 = vmatprep.subr.mxu0 0.0
  %5188 = vmatpush1.msra.mxu0 %v53
  %5189 = vmatprep.subr.mxu0 0.0
  %5190 = vmatpush1.msra.mxu0 %v54
  %5191 = vmatprep.subr.mxu0 0.0
  %5192 = vmatpush1.msra.mxu0 0.0
  %5193 = vmatprep.subr.mxu0 0.0
  %5194 = vmatpush1.msra.mxu0 0.0
  %5195 = vmatprep.subr.mxu0 0.0
  %5196 = vmatpush1.msra.mxu0 0.0
  %5197 = vmatprep.subr.mxu0 0.0
  %5198 = vmatpush1.msra.mxu0 0.0
  %5199 = vmatprep.subr.mxu0 0.0
  %5200 = vmatpush1.msra.mxu0 0.0
  %5201 = vmatprep.subr.mxu0 0.0
  %5202 = vmatpush1.msra.mxu0 0.0
  %5203 = vmatprep.subr.mxu0 0.0
  %5204 = vmatpush1.msra.mxu0 0.0
  %5205 = vmatprep.subr.mxu0 0.0
  %5206 = vmatpush1.msra.mxu0 0.0
  %5207 = vmatprep.subr.mxu0 0.0
  %5208 = vmatpush1.msra.mxu0 0.0
  %5209 = vmatprep.subr.mxu0 0.0
  %5210 = vmatpush1.msra.mxu0 0.0
  %5211 = vmatprep.subr.mxu0 0.0
  %5212 = vmatpush1.msra.mxu0 0.0
  %5213 = vmatprep.subr.mxu0 0.0
  %5214 = vmatpush1.msra.mxu0 0.0
  %5215 = vmatprep.subr.mxu0 0.0
  %5216 = vmatpush1.msra.mxu0 0.0
  %5217 = vmatprep.subr.mxu0 0.0
  %5218 = vmatpush1.msra.mxu0 0.0
  %5219 = vmatprep.subr.mxu0 0.0
  %5220 = vmatpush1.msra.mxu0 0.0
  %5221 = vmatprep.subr.mxu0 0.0
  %5222 = vmatpush1.msra.mxu0 0.0
  %5223 = vmatprep.mubr.f32.mxu0 0.0
  %5224 = vmatmul.mubr.f32.gmra.mrb[0].mxu0 %v5086
  %v5225 = vpop.f32.mrb[0].mxu0
  %v5226 = vadd.f32 %v222, %v5225
  %v5227 = vpop.f32.mrb[0].mxu0
  %5228 = vdwg.mxu0
  %v5231 = vunpack.c.l.s4 1966171168
  %v5232 = vunpack.c.0.s8 %v5231
  %v5233 = vlaneseq
  %v5234 = vshrl.u32 %v5233, 7
  %v5235 = vsub.s32 %v5232, %v5234
  %v5236 = vrot.slane %v5226, %v5235
  %v5237 = vcombine.high %v5236, %v5236
  %v5239 = vunpack.c.l.s4 1966171168
  %v5240 = vunpack.c.0.s8 %v5239
  %v5241 = vlaneseq
  %v5242 = vshrl.u32 %v5241, 7
  %v5243 = vsub.s32 %v5240, %v5242
  %v5244 = vrot.slane %v5236, %v5243
  %v5246 = vunpack.c.l.s4 1966171168
  %v5247 = vunpack.c.0.s8 %v5246
  %v5248 = vlaneseq
  %v5249 = vshrl.u32 %v5248, 7
  %v5250 = vsub.s32 %v5247, %v5249
  %v5251 = vrot.slane %v5237, %v5250
  %v5252 = vlaneseq
  %v5253 = vshrl.u32 %v5252, 7
  %v5254 = vsub.s32 0, %v5253
  %v5255 = vrot.slane %v5244, %v5254
  %v5256 = vlaneseq
  %v5257 = vshrl.u32 %v5256, 7
  %v5258 = vsub.s32 0, %v5257
  %v5259 = vrot.slane %v5251, %v5258
  %v5262 = vadd.f32 %v37, %v5255
  %v5263 = vadd.f32 %v38, %v5259
  %v5264 = vtanh.pop %v5262
  %v5265 = vtanh.pop %v5263
  %5266 = vmatprep.subr.mxu0 0.0
  %5267 = vmatpush1.msra.mxu0 %v56
  %5268 = vmatprep.subr.mxu0 0.0
  %5269 = vmatpush1.msra.mxu0 %v57
  %5270 = vmatprep.subr.mxu0 0.0
  %5271 = vmatpush1.msra.mxu0 %v58
  %5272 = vmatprep.subr.mxu0 0.0
  %5273 = vmatpush1.msra.mxu0 %v59
  %5274 = vmatprep.subr.mxu0 0.0
  %5275 = vmatpush1.msra.mxu0 %v60
  %5276 = vmatprep.subr.mxu0 0.0
  %5277 = vmatpush1.msra.mxu0 %v61
  %5278 = vmatprep.subr.mxu0 0.0
  %5279 = vmatpush1.msra.mxu0 %v62
  %5280 = vmatprep.subr.mxu0 0.0
  %5281 = vmatpush1.msra.mxu0 %v63
  %5282 = vmatprep.subr.mxu0 0.0
  %5283 = vmatpush1.msra.mxu0 %v64
  %5284 = vmatprep.subr.mxu0 0.0
  %5285 = vmatpush1.msra.mxu0 %v65
  %5286 = vmatprep.subr.mxu0 0.0
  %5287 = vmatpush1.msra.mxu0 %v66
  %5288 = vmatprep.subr.mxu0 0.0
  %5289 = vmatpush1.msra.mxu0 %v67
  %5290 = vmatprep.subr.mxu0 0.0
  %5291 = vmatpush1.msra.mxu0 %v68
  %5292 = vmatprep.subr.mxu0 0.0
  %5293 = vmatpush1.msra.mxu0 %v69
  %5294 = vmatprep.subr.mxu0 0.0
  %5295 = vmatpush1.msra.mxu0 %v70
  %5296 = vmatprep.subr.mxu0 0.0
  %5297 = vmatpush1.msra.mxu0 %v71
  %5298 = vmatprep.subr.mxu0 0.0
  %5299 = vmatpush1.msra.mxu0 0.0
  %5300 = vmatprep.subr.mxu0 0.0
  %5301 = vmatpush1.msra.mxu0 0.0
  %5302 = vmatprep.subr.mxu0 0.0
  %5303 = vmatpush1.msra.mxu0 0.0
  %5304 = vmatprep.subr.mxu0 0.0
  %5305 = vmatpush1.msra.mxu0 0.0
  %5306 = vmatprep.subr.mxu0 0.0
  %5307 = vmatpush1.msra.mxu0 0.0
  %5308 = vmatprep.subr.mxu0 0.0
  %5309 = vmatpush1.msra.mxu0 0.0
  %5310 = vmatprep.subr.mxu0 0.0
  %5311 = vmatpush1.msra.mxu0 0.0
  %5312 = vmatprep.subr.mxu0 0.0
  %5313 = vmatpush1.msra.mxu0 0.0
  %5314 = vmatprep.subr.mxu0 0.0
  %5315 = vmatpush1.msra.mxu0 0.0
  %5316 = vmatprep.subr.mxu0 0.0
  %5317 = vmatpush1.msra.mxu0 0.0
  %5318 = vmatprep.subr.mxu0 0.0
  %5319 = vmatpush1.msra.mxu0 0.0
  %5320 = vmatprep.subr.mxu0 0.0
  %5321 = vmatpush1.msra.mxu0 0.0
  %5322 = vmatprep.subr.mxu0 0.0
  %5323 = vmatpush1.msra.mxu0 0.0
  %5324 = vmatprep.subr.mxu0 0.0
  %5325 = vmatpush1.msra.mxu0 0.0
  %5326 = vmatprep.subr.mxu0 0.0
  %5327 = vmatpush1.msra.mxu0 0.0
  %5328 = vmatprep.subr.mxu0 0.0
  %5329 = vmatpush1.msra.mxu0 0.0
  %5330 = vmatprep.mubr.f32.mxu0 0.0
  %5331 = vmatmul.mubr.f32.gmra.mrb[0].mxu0 %v5264
  %v5332 = vpop.f32.mrb[0].mxu0
  %v5333 = vadd.f32 0.0, %v5332
  %v5334 = vpop.f32.mrb[0].mxu0
  %5335 = vmatprep.mubr.f32.mxu0 0.0
  %5336 = vmatmul.mubr.f32.gmra.mrb[0].mxu0 %v5265
  %v5337 = vpop.f32.mrb[0].mxu0
  %v5338 = vadd.f32 0.0, %v5337
  %v5339 = vpop.f32.mrb[0].mxu0
  %5340 = vdwg.mxu0
  %v5341 = vsel %vm406, %v5333, -inf
  %v5342 = vrot.slane %v5341, 4
  %v5343 = vmax.f32 %v5341, %v5342
  %v5344 = vrot.slane %v5343, 2
  %v5345 = vmax.f32 %v5343, %v5344
  %v5346 = vrot.slane %v5345, 1
  %v5347 = vmax.f32 %v5345, %v5346
  %v5348 = vsel %vm406, %v5338, -inf
  %v5349 = vrot.slane %v5348, 4
  %v5350 = vmax.f32 %v5348, %v5349
  %v5351 = vrot.slane %v5350, 2
  %v5352 = vmax.f32 %v5350, %v5351
  %v5353 = vrot.slane %v5352, 1
  %v5354 = vmax.f32 %v5352, %v5353
  %v5355 = vsub.f32 %v5333, %v5347
  %v5356 = vsub.f32 %v5338, %v5354
  %v5357 = vmul.f32 %v5355, 1.442695
  %v5358 = vpow.pop %v5357
  %v5359 = vmul.f32 %v5356, 1.442695
  %v5360 = vpow.pop %v5359
  %v5361 = vsel %vm406, %v5358, 0.0
  %v5362 = vrot.slane %v5361, 4
  %v5363 = vadd.f32 %v5361, %v5362
  %v5364 = vrot.slane %v5363, 2
  %v5365 = vadd.f32 %v5363, %v5364
  %v5366 = vrot.slane %v5365, 1
  %v5367 = vadd.f32 %v5365, %v5366
  %v5368 = vsel %vm406, %v5360, 0.0
  %v5369 = vrot.slane %v5368, 4
  %v5370 = vadd.f32 %v5368, %v5369
  %v5371 = vrot.slane %v5370, 2
  %v5372 = vadd.f32 %v5370, %v5371
  %v5373 = vrot.slane %v5372, 1
  %v5374 = vadd.f32 %v5372, %v5373
  %v5375 = vrcp.pop %v5367
  %v5376 = vrcp.pop %v5374
  %v5377 = vmul.f32 %v5358, %v5375
  %v5378 = vmul.f32 %v5360, %v5376
  %5379 = vxpose.xlu0.b32.start [1/16] %v5377, 128
  %5380 = vxpose.xlu0.b32.cont [2/16] 0.0, 128
  %5381 = vxpose.xlu0.b32.cont [3/16] 0.0, 128
  %5382 = vxpose.xlu0.b32.cont [4/16] 0.0, 128
  %5383 = vxpose.xlu0.b32.cont [5/16] 0.0, 128
  %5384 = vxpose.xlu0.b32.cont [6/16] 0.0, 128
  %5385 = vxpose.xlu0.b32.cont [7/16] 0.0, 128
  %5386 = vxpose.xlu0.b32.cont [8/16] 0.0, 128
  %5387 = vxpose.xlu0.b32.cont [9/16] 0.0, 128
  %5388 = vxpose.xlu0.b32.cont [10/16] 0.0, 128
  %5389 = vxpose.xlu0.b32.cont [11/16] 0.0, 128
  %5390 = vxpose.xlu0.b32.cont [12/16] 0.0, 128
  %5391 = vxpose.xlu0.b32.cont [13/16] 0.0, 128
  %5392 = vxpose.xlu0.b32.cont [14/16] 0.0, 128
  %5393 = vxpose.xlu0.b32.cont [15/16] 0.0, 128
  %5394 = vxpose.xlu0.b32.end [16/16] 0.0, 128
  %v5395 = vpop.trf.xlu0
  %v5396 = vpop.trf.xlu0
  %v5397 = vpop.trf.xlu0
  %v5398 = vpop.trf.xlu0
  %v5399 = vpop.trf.xlu0
  %v5400 = vpop.trf.xlu0
  %v5401 = vpop.trf.xlu0
  %v5402 = vpop.trf.xlu0
  %v5403 = vpop.trf.xlu0
  %v5404 = vpop.trf.xlu0
  %v5405 = vpop.trf.xlu0
  %v5406 = vpop.trf.xlu0
  %v5407 = vpop.trf.xlu0
  %v5408 = vpop.trf.xlu0
  %v5409 = vpop.trf.xlu0
  %v5410 = vpop.trf.xlu0
  %v5412 = vsel %vm477, %v5395, 0
  %5414 = vmatprep.subr.mxu0 0.0
  %5415 = vmatpush1.msra.mxu0 %v35
  %5416 = vmatprep.subr.mxu0 0.0
  %5417 = vmatpush1.msra.mxu0 0.0
  %5418 = vmatprep.subr.mxu0 0.0
  %5419 = vmatpush1.msra.mxu0 0.0
  %5420 = vmatprep.subr.mxu0 0.0
  %5421 = vmatpush1.msra.mxu0 0.0
  %5422 = vmatprep.subr.mxu0 0.0
  %5423 = vmatpush1.msra.mxu0 0.0
  %5424 = vmatprep.subr.mxu0 0.0
  %5425 = vmatpush1.msra.mxu0 0.0
  %5426 = vmatprep.subr.mxu0 0.0
  %5427 = vmatpush1.msra.mxu0 0.0
  %5428 = vmatprep.subr.mxu0 0.0
  %5429 = vmatpush1.msra.mxu0 0.0
  %5430 = vmatprep.subr.mxu0 0.0
  %5431 = vmatpush1.msra.mxu0 0.0
  %5432 = vmatprep.subr.mxu0 0.0
  %5433 = vmatpush1.msra.mxu0 0.0
  %5434 = vmatprep.subr.mxu0 0.0
  %5435 = vmatpush1.msra.mxu0 0.0
  %5436 = vmatprep.subr.mxu0 0.0
  %5437 = vmatpush1.msra.mxu0 0.0
  %5438 = vmatprep.subr.mxu0 0.0
  %5439 = vmatpush1.msra.mxu0 0.0
  %5440 = vmatprep.subr.mxu0 0.0
  %5441 = vmatpush1.msra.mxu0 0.0
  %5442 = vmatprep.subr.mxu0 0.0
  %5443 = vmatpush1.msra.mxu0 0.0
  %5444 = vmatprep.subr.mxu0 0.0
  %5445 = vmatpush1.msra.mxu0 0.0
  %5446 = vmatprep.subr.mxu0 0.0
  %5447 = vmatpush1.msra.mxu0 0.0
  %5448 = vmatprep.subr.mxu0 0.0
  %5449 = vmatpush1.msra.mxu0 0.0
  %5450 = vmatprep.subr.mxu0 0.0
  %5451 = vmatpush1.msra.mxu0 0.0
  %5452 = vmatprep.subr.mxu0 0.0
  %5453 = vmatpush1.msra.mxu0 0.0
  %5454 = vmatprep.subr.mxu0 0.0
  %5455 = vmatpush1.msra.mxu0 0.0
  %5456 = vmatprep.subr.mxu0 0.0
  %5457 = vmatpush1.msra.mxu0 0.0
  %5458 = vmatprep.subr.mxu0 0.0
  %5459 = vmatpush1.msra.mxu0 0.0
  %5460 = vmatprep.subr.mxu0 0.0
  %5461 = vmatpush1.msra.mxu0 0.0
  %5462 = vmatprep.subr.mxu0 0.0
  %5463 = vmatpush1.msra.mxu0 0.0
  %5464 = vmatprep.subr.mxu0 0.0
  %5465 = vmatpush1.msra.mxu0 0.0
  %5466 = vmatprep.subr.mxu0 0.0
  %5467 = vmatpush1.msra.mxu0 0.0
  %5468 = vmatprep.subr.mxu0 0.0
  %5469 = vmatpush1.msra.mxu0 0.0
  %5470 = vmatprep.subr.mxu0 0.0
  %5471 = vmatpush1.msra.mxu0 0.0
  %5472 = vmatprep.subr.mxu0 0.0
  %5473 = vmatpush1.msra.mxu0 0.0
  %5474 = vmatprep.subr.mxu0 0.0
  %5475 = vmatpush1.msra.mxu0 0.0
  %5476 = vmatprep.subr.mxu0 0.0
  %5477 = vmatpush1.msra.mxu0 0.0
  %5478 = vmatprep.mubr.f32.mxu0 0.0
  %5479 = vmatmul.mubr.f32.gmra.mrb[0].mxu0 %v5412
  %v5480 = vpop.f32.mrb[0].mxu0
  %v5481 = vadd.f32 0.0, %v5480
  %v5482 = vpop.f32.mrb[0].mxu0
  %5483 = vdwg.mxu0
  %5484 = vxpose.xlu0.b32.start [1/16] %v5378, 128
  %5485 = vxpose.xlu0.b32.cont [2/16] 0.0, 128
  %5486 = vxpose.xlu0.b32.cont [3/16] 0.0, 128
  %5487 = vxpose.xlu0.b32.cont [4/16] 0.0, 128
  %5488 = vxpose.xlu0.b32.cont [5/16] 0.0, 128
  %5489 = vxpose.xlu0.b32.cont [6/16] 0.0, 128
  %5490 = vxpose.xlu0.b32.cont [7/16] 0.0, 128
  %5491 = vxpose.xlu0.b32.cont [8/16] 0.0, 128
  %5492 = vxpose.xlu0.b32.cont [9/16] 0.0, 128
  %5493 = vxpose.xlu0.b32.cont [10/16] 0.0, 128
  %5494 = vxpose.xlu0.b32.cont [11/16] 0.0, 128
  %5495 = vxpose.xlu0.b32.cont [12/16] 0.0, 128
  %5496 = vxpose.xlu0.b32.cont [13/16] 0.0, 128
  %5497 = vxpose.xlu0.b32.cont [14/16] 0.0, 128
  %5498 = vxpose.xlu0.b32.cont [15/16] 0.0, 128
  %5499 = vxpose.xlu0.b32.end [16/16] 0.0, 128
  %v5500 = vpop.trf.xlu0
  %v5501 = vpop.trf.xlu0
  %v5502 = vpop.trf.xlu0
  %v5503 = vpop.trf.xlu0
  %v5504 = vpop.trf.xlu0
  %v5505 = vpop.trf.xlu0
  %v5506 = vpop.trf.xlu0
  %v5507 = vpop.trf.xlu0
  %v5508 = vpop.trf.xlu0
  %v5509 = vpop.trf.xlu0
  %v5510 = vpop.trf.xlu0
  %v5511 = vpop.trf.xlu0
  %v5512 = vpop.trf.xlu0
  %v5513 = vpop.trf.xlu0
  %v5514 = vpop.trf.xlu0
  %v5515 = vpop.trf.xlu0
  %v5517 = vsel %vm477, %v5500, 0
  %5519 = vmatprep.subr.mxu0 0.0
  %5520 = vmatpush1.msra.mxu0 %v36
  %5521 = vmatprep.subr.mxu0 0.0
  %5522 = vmatpush1.msra.mxu0 0.0
  %5523 = vmatprep.subr.mxu0 0.0
  %5524 = vmatpush1.msra.mxu0 0.0
  %5525 = vmatprep.subr.mxu0 0.0
  %5526 = vmatpush1.msra.mxu0 0.0
  %5527 = vmatprep.subr.mxu0 0.0
  %5528 = vmatpush1.msra.mxu0 0.0
  %5529 = vmatprep.subr.mxu0 0.0
  %5530 = vmatpush1.msra.mxu0 0.0
  %5531 = vmatprep.subr.mxu0 0.0
  %5532 = vmatpush1.msra.mxu0 0.0
  %5533 = vmatprep.subr.mxu0 0.0
  %5534 = vmatpush1.msra.mxu0 0.0
  %5535 = vmatprep.subr.mxu0 0.0
  %5536 = vmatpush1.msra.mxu0 0.0
  %5537 = vmatprep.subr.mxu0 0.0
  %5538 = vmatpush1.msra.mxu0 0.0
  %5539 = vmatprep.subr.mxu0 0.0
  %5540 = vmatpush1.msra.mxu0 0.0
  %5541 = vmatprep.subr.mxu0 0.0
  %5542 = vmatpush1.msra.mxu0 0.0
  %5543 = vmatprep.subr.mxu0 0.0
  %5544 = vmatpush1.msra.mxu0 0.0
  %5545 = vmatprep.subr.mxu0 0.0
  %5546 = vmatpush1.msra.mxu0 0.0
  %5547 = vmatprep.subr.mxu0 0.0
  %5548 = vmatpush1.msra.mxu0 0.0
  %5549 = vmatprep.subr.mxu0 0.0
  %5550 = vmatpush1.msra.mxu0 0.0
  %5551 = vmatprep.subr.mxu0 0.0
  %5552 = vmatpush1.msra.mxu0 0.0
  %5553 = vmatprep.subr.mxu0 0.0
  %5554 = vmatpush1.msra.mxu0 0.0
  %5555 = vmatprep.subr.mxu0 0.0
  %5556 = vmatpush1.msra.mxu0 0.0
  %5557 = vmatprep.subr.mxu0 0.0
  %5558 = vmatpush1.msra.mxu0 0.0
  %5559 = vmatprep.subr.mxu0 0.0
  %5560 = vmatpush1.msra.mxu0 0.0
  %5561 = vmatprep.subr.mxu0 0.0
  %5562 = vmatpush1.msra.mxu0 0.0
  %5563 = vmatprep.subr.mxu0 0.0
  %5564 = vmatpush1.msra.mxu0 0.0
  %5565 = vmatprep.subr.mxu0 0.0
  %5566 = vmatpush1.msra.mxu0 0.0
  %5567 = vmatprep.subr.mxu0 0.0
  %5568 = vmatpush1.msra.mxu0 0.0
  %5569 = vmatprep.subr.mxu0 0.0
  %5570 = vmatpush1.msra.mxu0 0.0
  %5571 = vmatprep.subr.mxu0 0.0
  %5572 = vmatpush1.msra.mxu0 0.0
  %5573 = vmatprep.subr.mxu0 0.0
  %5574 = vmatpush1.msra.mxu0 0.0
  %5575 = vmatprep.subr.mxu0 0.0
  %5576 = vmatpush1.msra.mxu0 0.0
  %5577 = vmatprep.subr.mxu0 0.0
  %5578 = vmatpush1.msra.mxu0 0.0
  %5579 = vmatprep.subr.mxu0 0.0
  %5580 = vmatpush1.msra.mxu0 0.0
  %5581 = vmatprep.subr.mxu0 0.0
  %5582 = vmatpush1.msra.mxu0 0.0
  %5583 = vmatprep.mubr.f32.mxu0 0.0
  %5584 = vmatmul.mubr.f32.gmra.mrb[0].mxu0 %v5517
  %v5585 = vpop.f32.mrb[0].mxu0
  %v5586 = vadd.f32 0.0, %v5585
  %v5587 = vpop.f32.mrb[0].mxu0
  %5588 = vdwg.mxu0
  %v5591 = vrot.slane %v5586, 7
  %v5592 = vsel %vm659, %v5591, %v5481
  %s5594 = scalar_lea.vmem %s2, 56
  %v5595 = vld [vmem:[%s5594] sm:$0xff]
  %v5597 = vcombine.high %v5595, %v5595
  %v5599 = vunpack.c.l.s4 1983009808
  %v5600 = vunpack.c.0.s8 %v5599
  %v5601 = vlaneseq
  %v5602 = vshrl.u32 %v5601, 7
  %v5603 = vsub.s32 %v5600, %v5602
  %v5604 = vrot.slane %v5595, %v5603
  %v5606 = vunpack.c.l.s4 1983009808
  %v5607 = vunpack.c.0.s8 %v5606
  %v5608 = vlaneseq
  %v5609 = vshrl.u32 %v5608, 7
  %v5610 = vsub.s32 %v5607, %v5609
  %v5611 = vrot.slane %v5597, %v5610
  %v5612 = vcombine.high %v5604, %v5604
  %v5613 = vcombine.high %v5611, %v5611
  %5618 = vmatprep.subr.mxu0 %v73
  %5619 = vmatpush1.msra.mxu0 %v72
  %5620 = vmatprep.subr.mxu0 %v77
  %5621 = vmatpush1.msra.mxu0 %v76
  %5622 = vmatprep.subr.mxu0 %v81
  %5623 = vmatpush1.msra.mxu0 %v80
  %5624 = vmatprep.subr.mxu0 %v85
  %5625 = vmatpush1.msra.mxu0 %v84
  %5626 = vmatprep.subr.mxu0 %v89
  %5627 = vmatpush1.msra.mxu0 %v88
  %5628 = vmatprep.subr.mxu0 %v93
  %5629 = vmatpush1.msra.mxu0 %v92
  %5630 = vmatprep.subr.mxu0 %v97
  %5631 = vmatpush1.msra.mxu0 %v96
  %5632 = vmatprep.subr.mxu0 %v101
  %5633 = vmatpush1.msra.mxu0 %v100
  %5634 = vmatprep.subr.mxu0 %v105
  %5635 = vmatpush1.msra.mxu0 %v104
  %5636 = vmatprep.subr.mxu0 %v109
  %5637 = vmatpush1.msra.mxu0 %v108
  %5638 = vmatprep.subr.mxu0 %v113
  %5639 = vmatpush1.msra.mxu0 %v112
  %5640 = vmatprep.subr.mxu0 %v117
  %5641 = vmatpush1.msra.mxu0 %v116
  %5642 = vmatprep.subr.mxu0 %v121
  %5643 = vmatpush1.msra.mxu0 %v120
  %5644 = vmatprep.subr.mxu0 %v125
  %5645 = vmatpush1.msra.mxu0 %v124
  %5646 = vmatprep.subr.mxu0 %v129
  %5647 = vmatpush1.msra.mxu0 %v128
  %5648 = vmatprep.subr.mxu0 %v133
  %5649 = vmatpush1.msra.mxu0 %v132
  %5650 = vmatprep.subr.mxu0 %v137
  %5651 = vmatpush1.msra.mxu0 %v136
  %5652 = vmatprep.subr.mxu0 %v141
  %5653 = vmatpush1.msra.mxu0 %v140
  %5654 = vmatprep.subr.mxu0 %v145
  %5655 = vmatpush1.msra.mxu0 %v144
  %5656 = vmatprep.subr.mxu0 %v149
  %5657 = vmatpush1.msra.mxu0 %v148
  %5658 = vmatprep.subr.mxu0 %v153
  %5659 = vmatpush1.msra.mxu0 %v152
  %5660 = vmatprep.subr.mxu0 %v157
  %5661 = vmatpush1.msra.mxu0 %v156
  %5662 = vmatprep.subr.mxu0 %v161
  %5663 = vmatpush1.msra.mxu0 %v160
  %5664 = vmatprep.subr.mxu0 %v165
  %5665 = vmatpush1.msra.mxu0 %v164
  %5666 = vmatprep.subr.mxu0 %v169
  %5667 = vmatpush1.msra.mxu0 %v168
  %5668 = vmatprep.subr.mxu0 %v173
  %5669 = vmatpush1.msra.mxu0 %v172
  %5670 = vmatprep.subr.mxu0 %v177
  %5671 = vmatpush1.msra.mxu0 %v176
  %5672 = vmatprep.subr.mxu0 %v181
  %5673 = vmatpush1.msra.mxu0 %v180
  %5674 = vmatprep.subr.mxu0 %v185
  %5675 = vmatpush1.msra.mxu0 %v184
  %5676 = vmatprep.subr.mxu0 %v189
  %5677 = vmatpush1.msra.mxu0 %v188
  %5678 = vmatprep.subr.mxu0 %v193
  %5679 = vmatpush1.msra.mxu0 %v192
  %5680 = vmatprep.subr.mxu0 %v197
  %5681 = vmatpush1.msra.mxu0 %v196
  %5682 = vmatprep.mubr.f32.mxu0 %v5086
  %5683 = vmatmul.mubr.f32.gmra.mrb[0].mxu0 %v5592
  %v5684 = vpop.f32.mrb[0].mxu0
  %v5685 = vadd.f32 %v5604, %v5684
  %v5686 = vpop.f32.mrb[0].mxu0
  %v5687 = vadd.f32 %v5612, %v5686
  %5688 = vdwg.mxu0
  %5689 = vmatprep.subr.mxu0 %v75
  %5690 = vmatpush1.msra.mxu0 %v74
  %5691 = vmatprep.subr.mxu0 %v79
  %5692 = vmatpush1.msra.mxu0 %v78
  %5693 = vmatprep.subr.mxu0 %v83
  %5694 = vmatpush1.msra.mxu0 %v82
  %5695 = vmatprep.subr.mxu0 %v87
  %5696 = vmatpush1.msra.mxu0 %v86
  %5697 = vmatprep.subr.mxu0 %v91
  %5698 = vmatpush1.msra.mxu0 %v90
  %5699 = vmatprep.subr.mxu0 %v95
  %5700 = vmatpush1.msra.mxu0 %v94
  %5701 = vmatprep.subr.mxu0 %v99
  %5702 = vmatpush1.msra.mxu0 %v98
  %5703 = vmatprep.subr.mxu0 %v103
  %5704 = vmatpush1.msra.mxu0 %v102
  %5705 = vmatprep.subr.mxu0 %v107
  %5706 = vmatpush1.msra.mxu0 %v106
  %5707 = vmatprep.subr.mxu0 %v111
  %5708 = vmatpush1.msra.mxu0 %v110
  %5709 = vmatprep.subr.mxu0 %v115
  %5710 = vmatpush1.msra.mxu0 %v114
  %5711 = vmatprep.subr.mxu0 %v119
  %5712 = vmatpush1.msra.mxu0 %v118
  %5713 = vmatprep.subr.mxu0 %v123
  %5714 = vmatpush1.msra.mxu0 %v122
  %5715 = vmatprep.subr.mxu0 %v127
  %5716 = vmatpush1.msra.mxu0 %v126
  %5717 = vmatprep.subr.mxu0 %v131
  %5718 = vmatpush1.msra.mxu0 %v130
  %5719 = vmatprep.subr.mxu0 %v135
  %5720 = vmatpush1.msra.mxu0 %v134
  %5721 = vmatprep.subr.mxu0 %v139
  %5722 = vmatpush1.msra.mxu0 %v138
  %5723 = vmatprep.subr.mxu0 %v143
  %5724 = vmatpush1.msra.mxu0 %v142
  %5725 = vmatprep.subr.mxu0 %v147
  %5726 = vmatpush1.msra.mxu0 %v146
  %5727 = vmatprep.subr.mxu0 %v151
  %5728 = vmatpush1.msra.mxu0 %v150
  %5729 = vmatprep.subr.mxu0 %v155
  %5730 = vmatpush1.msra.mxu0 %v154
  %5731 = vmatprep.subr.mxu0 %v159
  %5732 = vmatpush1.msra.mxu0 %v158
  %5733 = vmatprep.subr.mxu0 %v163
  %5734 = vmatpush1.msra.mxu0 %v162
  %5735 = vmatprep.subr.mxu0 %v167
  %5736 = vmatpush1.msra.mxu0 %v166
  %5737 = vmatprep.subr.mxu0 %v171
  %5738 = vmatpush1.msra.mxu0 %v170
  %5739 = vmatprep.subr.mxu0 %v175
  %5740 = vmatpush1.msra.mxu0 %v174
  %5741 = vmatprep.subr.mxu0 %v179
  %5742 = vmatpush1.msra.mxu0 %v178
  %5743 = vmatprep.subr.mxu0 %v183
  %5744 = vmatpush1.msra.mxu0 %v182
  %5745 = vmatprep.subr.mxu0 %v187
  %5746 = vmatpush1.msra.mxu0 %v186
  %5747 = vmatprep.subr.mxu0 %v191
  %5748 = vmatpush1.msra.mxu0 %v190
  %5749 = vmatprep.subr.mxu0 %v195
  %5750 = vmatpush1.msra.mxu0 %v194
  %5751 = vmatprep.subr.mxu0 %v199
  %5752 = vmatpush1.msra.mxu0 %v198
  %5753 = vmatprep.mubr.f32.mxu0 %v5086
  %5754 = vmatmul.mubr.f32.gmra.mrb[0].mxu0 %v5592
  %v5755 = vpop.f32.mrb[0].mxu0
  %v5756 = vadd.f32 %v5611, %v5755
  %v5757 = vpop.f32.mrb[0].mxu0
  %v5758 = vadd.f32 %v5613, %v5757
  %5759 = vdwg.mxu0
  %v5760 = vadd.f32 %v5685, %v831
  %v5761 = vadd.f32 %v5687, %v835
  %v5762 = vadd.f32 %v5756, %v839
  %v5763 = vadd.f32 %v5758, %v843
  %v5764 = vxor.u32 %v5760, 2147483648
  %v5765 = vmul.f32 %v5764, 1.442695
  %v5766 = vpow.pop %v5765
  %v5767 = vadd.f32 %v5766, 1.0
  %v5768 = vrcp.pop %v5767
  %v5769 = vmul.f32 1.0, %v5768
  %v5770 = vxor.u32 %v5761, 2147483648
  %v5771 = vmul.f32 %v5770, 1.442695
  %v5772 = vpow.pop %v5771
  %v5773 = vadd.f32 %v5772, 1.0
  %v5774 = vrcp.pop %v5773
  %v5775 = vmul.f32 1.0, %v5774
  %v5776 = vtanh.pop %v5762
  %v5777 = vxor.u32 %v5763, 2147483648
  %v5778 = vmul.f32 %v5777, 1.442695
  %v5779 = vpow.pop %v5778
  %v5780 = vadd.f32 %v5779, 1.0
  %v5781 = vrcp.pop %v5780
  %v5782 = vmul.f32 1.0, %v5781
  %v5783 = vmul.f32 %v5775, %v5084
  %v5784 = vmul.f32 %v5769, %v5776
  %v5785 = vadd.f32 %v5783, %v5784
  %v5786 = vtanh.pop %v5785
  %v5787 = vmul.f32 %v5782, %v5786
  %5788 = vmatprep.subr.mxu0 0.0
  %5789 = vmatpush1.msra.mxu0 %v201
  %5790 = vmatprep.subr.mxu0 0.0
  %5791 = vmatpush1.msra.mxu0 %v202
  %5792 = vmatprep.subr.mxu0 0.0
  %5793 = vmatpush1.msra.mxu0 %v203
  %5794 = vmatprep.subr.mxu0 0.0
  %5795 = vmatpush1.msra.mxu0 %v204
  %5796 = vmatprep.subr.mxu0 0.0
  %5797 = vmatpush1.msra.mxu0 %v205
  %5798 = vmatprep.subr.mxu0 0.0
  %5799 = vmatpush1.msra.mxu0 %v206
  %5800 = vmatprep.subr.mxu0 0.0
  %5801 = vmatpush1.msra.mxu0 %v207
  %5802 = vmatprep.subr.mxu0 0.0
  %5803 = vmatpush1.msra.mxu0 %v208
  %5804 = vmatprep.subr.mxu0 0.0
  %5805 = vmatpush1.msra.mxu0 %v209
  %5806 = vmatprep.subr.mxu0 0.0
  %5807 = vmatpush1.msra.mxu0 %v210
  %5808 = vmatprep.subr.mxu0 0.0
  %5809 = vmatpush1.msra.mxu0 %v211
  %5810 = vmatprep.subr.mxu0 0.0
  %5811 = vmatpush1.msra.mxu0 %v212
  %5812 = vmatprep.subr.mxu0 0.0
  %5813 = vmatpush1.msra.mxu0 %v213
  %5814 = vmatprep.subr.mxu0 0.0
  %5815 = vmatpush1.msra.mxu0 %v214
  %5816 = vmatprep.subr.mxu0 0.0
  %5817 = vmatpush1.msra.mxu0 %v215
  %5818 = vmatprep.subr.mxu0 0.0
  %5819 = vmatpush1.msra.mxu0 %v216
  %5820 = vmatprep.subr.mxu0 0.0
  %5821 = vmatpush1.msra.mxu0 0.0
  %5822 = vmatprep.subr.mxu0 0.0
  %5823 = vmatpush1.msra.mxu0 0.0
  %5824 = vmatprep.subr.mxu0 0.0
  %5825 = vmatpush1.msra.mxu0 0.0
  %5826 = vmatprep.subr.mxu0 0.0
  %5827 = vmatpush1.msra.mxu0 0.0
  %5828 = vmatprep.subr.mxu0 0.0
  %5829 = vmatpush1.msra.mxu0 0.0
  %5830 = vmatprep.subr.mxu0 0.0
  %5831 = vmatpush1.msra.mxu0 0.0
  %5832 = vmatprep.subr.mxu0 0.0
  %5833 = vmatpush1.msra.mxu0 0.0
  %5834 = vmatprep.subr.mxu0 0.0
  %5835 = vmatpush1.msra.mxu0 0.0
  %5836 = vmatprep.subr.mxu0 0.0
  %5837 = vmatpush1.msra.mxu0 0.0
  %5838 = vmatprep.subr.mxu0 0.0
  %5839 = vmatpush1.msra.mxu0 0.0
  %5840 = vmatprep.subr.mxu0 0.0
  %5841 = vmatpush1.msra.mxu0 0.0
  %5842 = vmatprep.subr.mxu0 0.0
  %5843 = vmatpush1.msra.mxu0 0.0
  %5844 = vmatprep.subr.mxu0 0.0
  %5845 = vmatpush1.msra.mxu0 0.0
  %5846 = vmatprep.subr.mxu0 0.0
  %5847 = vmatpush1.msra.mxu0 0.0
  %5848 = vmatprep.subr.mxu0 0.0
  %5849 = vmatpush1.msra.mxu0 0.0
  %5850 = vmatprep.subr.mxu0 0.0
  %5851 = vmatpush1.msra.mxu0 0.0
  %5852 = vmatprep.mubr.f32.mxu0 0.0
  %5853 = vmatmul.mubr.f32.gmra.mrb[0].mxu0 %v5787
  %v5854 = vpop.f32.mrb[0].mxu0
  %v5855 = vadd.f32 %v880, %v5854
  %v5856 = vpop.f32.mrb[0].mxu0
  %5857 = vdwg.mxu0
  %s5858 = scalar_lea.vmem %s10, 14
  %5859 = vst [vmem:[%s5858] sm:$0x3] %v5855
  // Predicated region
  $region42: #{attention_forward.1} parent=0 // pred_check
    _
  $region43: #{attention_forward.1} parent=0 // pred_check_branch
    %5861 = sbr.rel (0) target = $region45
  $region44: #{attention_forward.1} parent=0 // pred_region
    _
  $region45: #{attention_forward.1} parent=0 // pred_fallthru
    _
  // Predicated region
  $region46: #{attention_forward.1} parent=0 // pred_check
    _
  $region47: #{attention_forward.1} parent=0 // pred_check_branch
    %5863 = sbr.rel (0) target = $region49
  $region48: #{attention_forward.1} parent=0 // pred_region
    _
  $region49: #{attention_forward.1} parent=0 // pred_fallthru
    _

</llo_original>
